<compile_context>
chip_gen: v5e
topology: v5e:2x2
jax: 0.10.0
libtpu: 0.0.40
codegen_flags: <defaults>
</compile_context>

<pallas_src>
import math
import functools

import jax
import jax.numpy as jnp
from jax.experimental import pallas as pl
from jax.experimental.pallas import tpu as pltpu

BN_EPS = 1e-5  # torch.nn.BatchNorm2d default eps


def _conv_block(w_ref, xpad_ref, patch_ref, conv_ref, wpool_ref, write_row,
                *, N, H, W, Cin, Cout):
    """3x3 'same' conv (single im2col matmul) + BN(train, gamma=1, beta=0)
    + ReLU + MaxPool2d(2).

    xpad_ref must already hold the zero-padded NHWC input (N, H+2, W+2, Cin).
    Pooled output rows are handed to write_row(n, hp, value[(W//2, Cout)]).
    """
    NHW = N * H * W

    # ---- im2col: 9 shifted windows -> (N*H*W, 9*Cin) patch matrix in VMEM ----
    for t, (kh, kw) in enumerate([(a, b) for a in range(3) for b in range(3)]):
        tap = xpad_ref[:, kh:kh + H, kw:kw + W, :].reshape(NHW, Cin)
        patch_ref[:, t * Cin:(t + 1) * Cin] = tap

    # ---- one MXU matmul per layer, K = 9*Cin, bf16 in / f32 accumulate -------
    y = jnp.dot(patch_ref[...].astype(jnp.bfloat16), w_ref[...],
                preferred_element_type=jnp.float32)            # (N*H*W, Cout)

    # ---- BatchNorm2d, training mode, weight=1 / bias=0 (init_layer) ----------
    # One-pass batch statistics (biased variance).  The conv bias is omitted on
    # purpose: it is a per-channel constant and is exactly cancelled by the
    # mean subtraction below.
    mean = jnp.mean(y, axis=0, keepdims=True)
    var = jnp.mean(y * y, axis=0, keepdims=True) - mean * mean
    y = (y - mean) * jax.lax.rsqrt(var + BN_EPS)

    # ---- ReLU -----------------------------------------------------------------
    y = jnp.maximum(y, 0.0)

    # ---- MaxPool2d(2) epilogue (data never leaves VMEM) -----------------------
    conv_ref[...] = y.reshape(N * H, W, Cout)       # rows ordered (n, h)
    # pool along W: max of adjacent columns
    for wp in range(W // 2):
        wl = conv_ref[:, 2 * wp, :]                 # (N*H, Cout)
        wr = conv_ref[:, 2 * wp + 1, :]
        wpool_ref[:, wp, :] = jnp.maximum(wl, wr)
    # pool along H: max of adjacent rows, written straight to the destination
    for n in range(N):
        for hp in range(H // 2):
            top = wpool_ref[n * H + 2 * hp]         # (W//2, Cout)
            bot = wpool_ref[n * H + 2 * hp + 1]
            write_row(n, hp, jnp.maximum(top, bot))


def _convnet2_kernel(x_ref, w1_ref, w2_ref, o_ref,
                     xpad1_ref, patch1_ref, conv1_ref, wpool1_ref,
                     xpad2_ref, patch2_ref, conv2_ref, wpool2_ref,
                     *, N, H, W, C0, C1, C2):
    H2, W2, H3, W3 = H // 2, W // 2, H // 4, W // 4

    # zero-initialise the padded activation buffers (conv padding = 1)
    xpad1_ref[...] = jnp.zeros_like(xpad1_ref)
    xpad2_ref[...] = jnp.zeros_like(xpad2_ref)
    xpad1_ref[:, 1:H + 1, 1:W + 1, :] = x_ref[...]

    # ---- block 1: conv(C0->C1) + BN + ReLU + pool; pooled rows land directly
    #      inside the zero-padded input buffer of block 2.
    def write_block1(n, hp, row):                   # row: (W2, C1)
        xpad2_ref[n, hp + 1, 1:W2 + 1, :] = row

    _conv_block(w1_ref, xpad1_ref, patch1_ref, conv1_ref, wpool1_ref,
                write_block1, N=N, H=H, W=W, Cin=C0, Cout=C1)

    # ---- block 2: conv(C1->C2) + BN + ReLU + pool; pooled rows go to output.
    def write_block2(n, hp, row):                   # row: (W3, C2)
        o_ref[n * H3 + hp] = row

    _conv_block(w2_ref, xpad2_ref, patch2_ref, conv2_ref, wpool2_ref,
                write_block2, N=N, H=H2, W=W2, Cin=C1, Cout=C2)


def convnet_forward(x_nchw, params, flatten=True):
    """Reproduces ConvNet.forward for the default (else-branch) construction:
    ConvBlock = Conv(3x3, pad=1) -> BN(training) -> ReLU -> MaxPool2d(2),
    followed by torch-style Flatten.  Fused into one pallas_call (depth == 2)."""
    assert len(params) == 2, "fused kernel is specialised to depth=2"
    (w1, _b1), (w2, _b2) = params  # conv biases unused: cancelled by train-mode BN

    x = jnp.transpose(x_nchw, (0, 2, 3, 1)).astype(jnp.float32)   # NCHW -> NHWC
    N, H, W, C0 = x.shape
    C1, C2 = w1.shape[-1], w2.shape[-1]
    H2, W2, H3, W3 = H // 2, W // 2, H // 4, W // 4

    # im2col weights: (3,3,Cin,Cout) -> (9*Cin, Cout), rows ordered (kh,kw,cin);
    # bf16 for the MXU (accumulation stays f32 inside the kernel).
    w1_mat = w1.reshape(9 * C0, C1).astype(jnp.bfloat16)
    w2_mat = w2.reshape(9 * C1, C2).astype(jnp.bfloat16)

    kernel = functools.partial(_convnet2_kernel,
                               N=N, H=H, W=W, C0=C0, C1=C1, C2=C2)
    vmem = pl.BlockSpec(memory_space=pltpu.MemorySpace.VMEM)
    out = pl.pallas_call(
        kernel,
        out_shape=jax.ShapeDtypeStruct((N * H3, W3, C2), jnp.float32),
        in_specs=[vmem, vmem, vmem],
        out_specs=vmem,
        scratch_shapes=[
            pltpu.VMEM((N, H + 2, W + 2, C0), jnp.float32),     # xpad1
            pltpu.VMEM((N * H * W, 9 * C0), jnp.float32),       # patch1 (im2col)
            pltpu.VMEM((N * H, W, C1), jnp.float32),            # conv1 (pre-pool)
            pltpu.VMEM((N * H, W2, C1), jnp.float32),           # wpool1
            pltpu.VMEM((N, H2 + 2, W2 + 2, C1), jnp.float32),   # xpad2
            pltpu.VMEM((N * H2 * W2, 9 * C1), jnp.float32),     # patch2 (im2col)
            pltpu.VMEM((N * H2, W2, C2), jnp.float32),          # conv2 (pre-pool)
            pltpu.VMEM((N * H2, W3, C2), jnp.float32),          # wpool2
        ],
    )(x, w1_mat, w2_mat)

    y = out.reshape(N, H3, W3, C2)           # NHWC, pooled twice
    y = jnp.transpose(y, (0, 3, 1, 2))       # -> NCHW (matches torch layout)
    if flatten:
        y = y.reshape(N, -1)                 # torch Flatten: x.view(N, -1)
    return y


def init_convnet_params(key, depth=2, init_num_channels=8):
    """Deterministic synthetic init matching the module's __init__ shapes:
    conv weight ~ N(0, sqrt(2 / (3*3*outdim))), conv bias ~ U(-1/sqrt(fan_in), .).
    Weights are stored HWIO: (3, 3, Cin, Cout)."""
    params = []
    for i in range(depth):
        indim = 3 if i == 0 else init_num_channels * int(math.pow(2, i - 1))
        outdim = init_num_channels if i == 0 else init_num_channels * int(math.pow(2, i))
        key, kw, kb = jax.random.split(key, 3)
        n = 3 * 3 * outdim
        w = jax.random.normal(kw, (3, 3, indim, outdim), jnp.float32) * math.sqrt(2.0 / n)
        bound = 1.0 / math.sqrt(indim * 3 * 3)
        bias = jax.random.uniform(kb, (outdim,), jnp.float32, -bound, bound)
        params.append((w, bias))  # bias kept for shape parity; BN cancels it exactly
    return params


if __name__ == "__main__":
    key = jax.random.PRNGKey(0)
    kx, kp = jax.random.split(key)

    # NCHW input, RGB, 16x16 spatial (small shapes consistent with the module).
    x = jax.random.normal(kx, (2, 3, 16, 16), jnp.float32)
    params = init_convnet_params(kp, depth=2, init_num_channels=8)

    fwd = jax.jit(convnet_forward, static_argnames=("flatten",))
    out = fwd(x, params, flatten=True)
    out = jax.block_until_ready(out)

    # depth=2, init_num_channels=8 -> channels (8, 16), spatial 16 -> 8 -> 4
    assert out.shape == (2, 16 * 4 * 4), out.shape
    assert out.dtype == jnp.float32
    print("KERNEL_OK")
</pallas_src>

<mosaic_0001>
module attributes {stable_mosaic.version = 11 : i64} {
  func.func @_convnet2_kernel(%arg0: memref<2x16x16x3xf32, #tpu.memory_space<vmem>>, %arg1: memref<27x8xbf16, #tpu.memory_space<vmem>>, %arg2: memref<72x16xbf16, #tpu.memory_space<vmem>>, %arg3: memref<8x4x16xf32, #tpu.memory_space<vmem>>, %arg4: memref<2x18x18x3xf32, #tpu.memory_space<vmem>>, %arg5: memref<512x27xf32, #tpu.memory_space<vmem>>, %arg6: memref<32x16x8xf32, #tpu.memory_space<vmem>>, %arg7: memref<32x8x8xf32, #tpu.memory_space<vmem>>, %arg8: memref<2x10x10x8xf32, #tpu.memory_space<vmem>>, %arg9: memref<128x72xf32, #tpu.memory_space<vmem>>, %arg10: memref<16x8x16xf32, #tpu.memory_space<vmem>>, %arg11: memref<16x4x16xf32, #tpu.memory_space<vmem>>) attributes {dimension_semantics = [], scalar_prefetch = 0 : i64, scratch_operands = 8 : i64, tpu.core_type = #tpu.core_type<tc>} {
    %cst = arith.constant 0.000000e+00 : f32
    %0 = vector.broadcast %cst : f32 to vector<2x18x18x3xf32>
    %c0 = arith.constant 0 : index
    %c0_0 = arith.constant 0 : index
    %c0_1 = arith.constant 0 : index
    %c0_2 = arith.constant 0 : index
    %1 = vector.load %arg4[%c0, %c0_0, %c0_1, %c0_2] : memref<2x18x18x3xf32, #tpu.memory_space<vmem>>, vector<2x18x18x3xf32>
    tpu.vector_store %arg4[%c0, %c0_0, %c0_1, %c0_2], %0 {strides = array<i32>} : memref<2x18x18x3xf32, #tpu.memory_space<vmem>>, vector<2x18x18x3xf32>,
    %cst_3 = arith.constant 0.000000e+00 : f32
    %2 = vector.broadcast %cst_3 : f32 to vector<2x10x10x8xf32>
    %c0_4 = arith.constant 0 : index
    %c0_5 = arith.constant 0 : index
    %c0_6 = arith.constant 0 : index
    %c0_7 = arith.constant 0 : index
    %3 = vector.load %arg8[%c0_4, %c0_5, %c0_6, %c0_7] : memref<2x10x10x8xf32, #tpu.memory_space<vmem>>, vector<2x10x10x8xf32>
    tpu.vector_store %arg8[%c0_4, %c0_5, %c0_6, %c0_7], %2 {strides = array<i32>} : memref<2x10x10x8xf32, #tpu.memory_space<vmem>>, vector<2x10x10x8xf32>,
    %c0_8 = arith.constant 0 : index
    %c0_9 = arith.constant 0 : index
    %c0_10 = arith.constant 0 : index
    %c0_11 = arith.constant 0 : index
    %4 = vector.load %arg0[%c0_8, %c0_9, %c0_10, %c0_11] : memref<2x16x16x3xf32, #tpu.memory_space<vmem>>, vector<2x16x16x3xf32>
    %c0_12 = arith.constant 0 : index
    %c1 = arith.constant 1 : index
    %c1_13 = arith.constant 1 : index
    %c0_14 = arith.constant 0 : index
    %5 = vector.load %arg4[%c0_12, %c1, %c1_13, %c0_14] : memref<2x18x18x3xf32, #tpu.memory_space<vmem>>, vector<2x16x16x3xf32>
    tpu.vector_store %arg4[%c0_12, %c1, %c1_13, %c0_14], %4 {strides = array<i32>} : memref<2x18x18x3xf32, #tpu.memory_space<vmem>>, vector<2x16x16x3xf32>,
    %c0_15 = arith.constant 0 : index
    %c0_16 = arith.constant 0 : index
    %c0_17 = arith.constant 0 : index
    %c0_18 = arith.constant 0 : index
    %6 = vector.load %arg4[%c0_15, %c0_16, %c0_17, %c0_18] : memref<2x18x18x3xf32, #tpu.memory_space<vmem>>, vector<2x16x16x3xf32>
    %7 = vector.shape_cast %6 : vector<2x16x16x3xf32> to vector<512x3xf32>
    %c0_19 = arith.constant 0 : index
    %c0_20 = arith.constant 0 : index
    %8 = vector.load %arg5[%c0_19, %c0_20] : memref<512x27xf32, #tpu.memory_space<vmem>>, vector<512x3xf32>
    tpu.vector_store %arg5[%c0_19, %c0_20], %7 {strides = array<i32>} : memref<512x27xf32, #tpu.memory_space<vmem>>, vector<512x3xf32>,
    %c0_21 = arith.constant 0 : index
    %c0_22 = arith.constant 0 : index
    %c1_23 = arith.constant 1 : index
    %c0_24 = arith.constant 0 : index
    %9 = vector.load %arg4[%c0_21, %c0_22, %c1_23, %c0_24] : memref<2x18x18x3xf32, #tpu.memory_space<vmem>>, vector<2x16x16x3xf32>
    %10 = vector.shape_cast %9 : vector<2x16x16x3xf32> to vector<512x3xf32>
    %c0_25 = arith.constant 0 : index
    %c3 = arith.constant 3 : index
    %11 = vector.load %arg5[%c0_25, %c3] : memref<512x27xf32, #tpu.memory_space<vmem>>, vector<512x3xf32>
    tpu.vector_store %arg5[%c0_25, %c3], %10 {strides = array<i32>} : memref<512x27xf32, #tpu.memory_space<vmem>>, vector<512x3xf32>,
    %c0_26 = arith.constant 0 : index
    %c0_27 = arith.constant 0 : index
    %c2 = arith.constant 2 : index
    %c0_28 = arith.constant 0 : index
    %12 = vector.load %arg4[%c0_26, %c0_27, %c2, %c0_28] : memref<2x18x18x3xf32, #tpu.memory_space<vmem>>, vector<2x16x16x3xf32>
    %13 = vector.shape_cast %12 : vector<2x16x16x3xf32> to vector<512x3xf32>
    %c0_29 = arith.constant 0 : index
    %c6 = arith.constant 6 : index
    %14 = vector.load %arg5[%c0_29, %c6] : memref<512x27xf32, #tpu.memory_space<vmem>>, vector<512x3xf32>
    tpu.vector_store %arg5[%c0_29, %c6], %13 {strides = array<i32>} : memref<512x27xf32, #tpu.memory_space<vmem>>, vector<512x3xf32>,
    %c0_30 = arith.constant 0 : index
    %c1_31 = arith.constant 1 : index
    %c0_32 = arith.constant 0 : index
    %c0_33 = arith.constant 0 : index
    %15 = vector.load %arg4[%c0_30, %c1_31, %c0_32, %c0_33] : memref<2x18x18x3xf32, #tpu.memory_space<vmem>>, vector<2x16x16x3xf32>
    %16 = vector.shape_cast %15 : vector<2x16x16x3xf32> to vector<512x3xf32>
    %c0_34 = arith.constant 0 : index
    %c9 = arith.constant 9 : index
    %17 = vector.load %arg5[%c0_34, %c9] : memref<512x27xf32, #tpu.memory_space<vmem>>, vector<512x3xf32>
    tpu.vector_store %arg5[%c0_34, %c9], %16 {strides = array<i32>} : memref<512x27xf32, #tpu.memory_space<vmem>>, vector<512x3xf32>,
    %c0_35 = arith.constant 0 : index
    %c1_36 = arith.constant 1 : index
    %c1_37 = arith.constant 1 : index
    %c0_38 = arith.constant 0 : index
    %18 = vector.load %arg4[%c0_35, %c1_36, %c1_37, %c0_38] : memref<2x18x18x3xf32, #tpu.memory_space<vmem>>, vector<2x16x16x3xf32>
    %19 = vector.shape_cast %18 : vector<2x16x16x3xf32> to vector<512x3xf32>
    %c0_39 = arith.constant 0 : index
    %c12 = arith.constant 12 : index
    %20 = vector.load %arg5[%c0_39, %c12] : memref<512x27xf32, #tpu.memory_space<vmem>>, vector<512x3xf32>
    tpu.vector_store %arg5[%c0_39, %c12], %19 {strides = array<i32>} : memref<512x27xf32, #tpu.memory_space<vmem>>, vector<512x3xf32>,
    %c0_40 = arith.constant 0 : index
    %c1_41 = arith.constant 1 : index
    %c2_42 = arith.constant 2 : index
    %c0_43 = arith.constant 0 : index
    %21 = vector.load %arg4[%c0_40, %c1_41, %c2_42, %c0_43] : memref<2x18x18x3xf32, #tpu.memory_space<vmem>>, vector<2x16x16x3xf32>
    %22 = vector.shape_cast %21 : vector<2x16x16x3xf32> to vector<512x3xf32>
    %c0_44 = arith.constant 0 : index
    %c15 = arith.constant 15 : index
    %23 = vector.load %arg5[%c0_44, %c15] : memref<512x27xf32, #tpu.memory_space<vmem>>, vector<512x3xf32>
    tpu.vector_store %arg5[%c0_44, %c15], %22 {strides = array<i32>} : memref<512x27xf32, #tpu.memory_space<vmem>>, vector<512x3xf32>,
    %c0_45 = arith.constant 0 : index
    %c2_46 = arith.constant 2 : index
    %c0_47 = arith.constant 0 : index
    %c0_48 = arith.constant 0 : index
    %24 = vector.load %arg4[%c0_45, %c2_46, %c0_47, %c0_48] : memref<2x18x18x3xf32, #tpu.memory_space<vmem>>, vector<2x16x16x3xf32>
    %25 = vector.shape_cast %24 : vector<2x16x16x3xf32> to vector<512x3xf32>
    %c0_49 = arith.constant 0 : index
    %c18 = arith.constant 18 : index
    %26 = vector.load %arg5[%c0_49, %c18] : memref<512x27xf32, #tpu.memory_space<vmem>>, vector<512x3xf32>
    tpu.vector_store %arg5[%c0_49, %c18], %25 {strides = array<i32>} : memref<512x27xf32, #tpu.memory_space<vmem>>, vector<512x3xf32>,
    %c0_50 = arith.constant 0 : index
    %c2_51 = arith.constant 2 : index
    %c1_52 = arith.constant 1 : index
    %c0_53 = arith.constant 0 : index
    %27 = vector.load %arg4[%c0_50, %c2_51, %c1_52, %c0_53] : memref<2x18x18x3xf32, #tpu.memory_space<vmem>>, vector<2x16x16x3xf32>
    %28 = vector.shape_cast %27 : vector<2x16x16x3xf32> to vector<512x3xf32>
    %c0_54 = arith.constant 0 : index
    %c21 = arith.constant 21 : index
    %29 = vector.load %arg5[%c0_54, %c21] : memref<512x27xf32, #tpu.memory_space<vmem>>, vector<512x3xf32>
    tpu.vector_store %arg5[%c0_54, %c21], %28 {strides = array<i32>} : memref<512x27xf32, #tpu.memory_space<vmem>>, vector<512x3xf32>,
    %c0_55 = arith.constant 0 : index
    %c2_56 = arith.constant 2 : index
    %c2_57 = arith.constant 2 : index
    %c0_58 = arith.constant 0 : index
    %30 = vector.load %arg4[%c0_55, %c2_56, %c2_57, %c0_58] : memref<2x18x18x3xf32, #tpu.memory_space<vmem>>, vector<2x16x16x3xf32>
    %31 = vector.shape_cast %30 : vector<2x16x16x3xf32> to vector<512x3xf32>
    %c0_59 = arith.constant 0 : index
    %c24 = arith.constant 24 : index
    %32 = vector.load %arg5[%c0_59, %c24] : memref<512x27xf32, #tpu.memory_space<vmem>>, vector<512x3xf32>
    tpu.vector_store %arg5[%c0_59, %c24], %31 {strides = array<i32>} : memref<512x27xf32, #tpu.memory_space<vmem>>, vector<512x3xf32>,
    %c0_60 = arith.constant 0 : index
    %c0_61 = arith.constant 0 : index
    %33 = vector.load %arg5[%c0_60, %c0_61] : memref<512x27xf32, #tpu.memory_space<vmem>>, vector<512x27xf32>
    %34 = arith.truncf %33 : vector<512x27xf32> to vector<512x27xbf16>
    %c0_62 = arith.constant 0 : index
    %c0_63 = arith.constant 0 : index
    %35 = vector.load %arg1[%c0_62, %c0_63] : memref<27x8xbf16, #tpu.memory_space<vmem>>, vector<27x8xbf16>
    %cst_64 = arith.constant dense<0.000000e+00> : vector<512x8xf32>
    %36 = tpu.matmul %34, %35, %cst_64 {dimension_numbers = #tpu.dot_dimension_numbers<[1], [0], [0], [1], [0, 0, 1, 1], [], []>} : vector<512x27xbf16>, vector<27x8xbf16>, vector<512x8xf32> -> vector<512x8xf32>
    %cst_65 = arith.constant dense<0.000000e+00> : vector<8xf32>
    %37 = vector.multi_reduction <add>, %36, %cst_65 [0] : vector<512x8xf32> to vector<8xf32>
    %38 = vector.shape_cast %37 : vector<8xf32> to vector<1x8xf32>
    %cst_66 = arith.constant 5.120000e+02 : f32
    %39 = vector.broadcast %cst_66 : f32 to vector<1x8xf32>
    %40 = arith.divf %38, %39 : vector<1x8xf32>
    %41 = arith.mulf %36, %36 : vector<512x8xf32>
    %cst_67 = arith.constant dense<0.000000e+00> : vector<8xf32>
    %42 = vector.multi_reduction <add>, %41, %cst_67 [0] : vector<512x8xf32> to vector<8xf32>
    %43 = vector.shape_cast %42 : vector<8xf32> to vector<1x8xf32>
    %cst_68 = arith.constant 5.120000e+02 : f32
    %44 = vector.broadcast %cst_68 : f32 to vector<1x8xf32>
    %45 = arith.divf %43, %44 : vector<1x8xf32>
    %46 = arith.mulf %40, %40 : vector<1x8xf32>
    %47 = arith.subf %45, %46 : vector<1x8xf32>
    %48 = vector.broadcast %40 : vector<1x8xf32> to vector<512x8xf32>
    %49 = arith.subf %36, %48 : vector<512x8xf32>
    %cst_69 = arith.constant 9.99999974E-6 : f32
    %50 = vector.broadcast %cst_69 : f32 to vector<1x8xf32>
    %51 = arith.addf %47, %50 : vector<1x8xf32>
    %52 = math.rsqrt %51 : vector<1x8xf32>
    %53 = vector.broadcast %52 : vector<1x8xf32> to vector<512x8xf32>
    %54 = arith.mulf %49, %53 : vector<512x8xf32>
    %cst_70 = arith.constant 0.000000e+00 : f32
    %55 = vector.broadcast %cst_70 : f32 to vector<512x8xf32>
    %56 = arith.maximumf %54, %55 : vector<512x8xf32>
    %57 = vector.shape_cast %56 : vector<512x8xf32> to vector<32x16x8xf32>
    %c0_71 = arith.constant 0 : index
    %c0_72 = arith.constant 0 : index
    %c0_73 = arith.constant 0 : index
    %58 = vector.load %arg6[%c0_71, %c0_72, %c0_73] : memref<32x16x8xf32, #tpu.memory_space<vmem>>, vector<32x16x8xf32>
    tpu.vector_store %arg6[%c0_71, %c0_72, %c0_73], %57 {strides = array<i32>} : memref<32x16x8xf32, #tpu.memory_space<vmem>>, vector<32x16x8xf32>,
    %c0_74 = arith.constant 0 : index
    %c0_75 = arith.constant 0 : index
    %c0_76 = arith.constant 0 : index
    %59 = vector.load %arg6[%c0_74, %c0_75, %c0_76] : memref<32x16x8xf32, #tpu.memory_space<vmem>>, vector<32x1x8xf32>
    %60 = vector.shape_cast %59 : vector<32x1x8xf32> to vector<32x8xf32>
    %c0_77 = arith.constant 0 : index
    %c1_78 = arith.constant 1 : index
    %c0_79 = arith.constant 0 : index
    %61 = vector.load %arg6[%c0_77, %c1_78, %c0_79] : memref<32x16x8xf32, #tpu.memory_space<vmem>>, vector<32x1x8xf32>
    %62 = vector.shape_cast %61 : vector<32x1x8xf32> to vector<32x8xf32>
    %63 = arith.maximumf %60, %62 : vector<32x8xf32>
    %c0_80 = arith.constant 0 : index
    %c0_81 = arith.constant 0 : index
    %c0_82 = arith.constant 0 : index
    %64 = vector.load %arg7[%c0_80, %c0_81, %c0_82] : memref<32x8x8xf32, #tpu.memory_space<vmem>>, vector<32x1x8xf32>
    %65 = vector.shape_cast %64 : vector<32x1x8xf32> to vector<32x8xf32>
    %66 = vector.shape_cast %63 : vector<32x8xf32> to vector<32x1x8xf32>
    tpu.vector_store %arg7[%c0_80, %c0_81, %c0_82], %66 {strides = array<i32>} : memref<32x8x8xf32, #tpu.memory_space<vmem>>, vector<32x1x8xf32>,
    %c0_83 = arith.constant 0 : index
    %c2_84 = arith.constant 2 : index
    %c0_85 = arith.constant 0 : index
    %67 = vector.load %arg6[%c0_83, %c2_84, %c0_85] : memref<32x16x8xf32, #tpu.memory_space<vmem>>, vector<32x1x8xf32>
    %68 = vector.shape_cast %67 : vector<32x1x8xf32> to vector<32x8xf32>
    %c0_86 = arith.constant 0 : index
    %c3_87 = arith.constant 3 : index
    %c0_88 = arith.constant 0 : index
    %69 = vector.load %arg6[%c0_86, %c3_87, %c0_88] : memref<32x16x8xf32, #tpu.memory_space<vmem>>, vector<32x1x8xf32>
    %70 = vector.shape_cast %69 : vector<32x1x8xf32> to vector<32x8xf32>
    %71 = arith.maximumf %68, %70 : vector<32x8xf32>
    %c0_89 = arith.constant 0 : index
    %c1_90 = arith.constant 1 : index
    %c0_91 = arith.constant 0 : index
    %72 = vector.load %arg7[%c0_89, %c1_90, %c0_91] : memref<32x8x8xf32, #tpu.memory_space<vmem>>, vector<32x1x8xf32>
    %73 = vector.shape_cast %72 : vector<32x1x8xf32> to vector<32x8xf32>
    %74 = vector.shape_cast %71 : vector<32x8xf32> to vector<32x1x8xf32>
    tpu.vector_store %arg7[%c0_89, %c1_90, %c0_91], %74 {strides = array<i32>} : memref<32x8x8xf32, #tpu.memory_space<vmem>>, vector<32x1x8xf32>,
    %c0_92 = arith.constant 0 : index
    %c4 = arith.constant 4 : index
    %c0_93 = arith.constant 0 : index
    %75 = vector.load %arg6[%c0_92, %c4, %c0_93] : memref<32x16x8xf32, #tpu.memory_space<vmem>>, vector<32x1x8xf32>
    %76 = vector.shape_cast %75 : vector<32x1x8xf32> to vector<32x8xf32>
    %c0_94 = arith.constant 0 : index
    %c5 = arith.constant 5 : index
    %c0_95 = arith.constant 0 : index
    %77 = vector.load %arg6[%c0_94, %c5, %c0_95] : memref<32x16x8xf32, #tpu.memory_space<vmem>>, vector<32x1x8xf32>
    %78 = vector.shape_cast %77 : vector<32x1x8xf32> to vector<32x8xf32>
    %79 = arith.maximumf %76, %78 : vector<32x8xf32>
    %c0_96 = arith.constant 0 : index
    %c2_97 = arith.constant 2 : index
    %c0_98 = arith.constant 0 : index
    %80 = vector.load %arg7[%c0_96, %c2_97, %c0_98] : memref<32x8x8xf32, #tpu.memory_space<vmem>>, vector<32x1x8xf32>
    %81 = vector.shape_cast %80 : vector<32x1x8xf32> to vector<32x8xf32>
    %82 = vector.shape_cast %79 : vector<32x8xf32> to vector<32x1x8xf32>
    tpu.vector_store %arg7[%c0_96, %c2_97, %c0_98], %82 {strides = array<i32>} : memref<32x8x8xf32, #tpu.memory_space<vmem>>, vector<32x1x8xf32>,
    %c0_99 = arith.constant 0 : index
    %c6_100 = arith.constant 6 : index
    %c0_101 = arith.constant 0 : index
    %83 = vector.load %arg6[%c0_99, %c6_100, %c0_101] : memref<32x16x8xf32, #tpu.memory_space<vmem>>, vector<32x1x8xf32>
    %84 = vector.shape_cast %83 : vector<32x1x8xf32> to vector<32x8xf32>
    %c0_102 = arith.constant 0 : index
    %c7 = arith.constant 7 : index
    %c0_103 = arith.constant 0 : index
    %85 = vector.load %arg6[%c0_102, %c7, %c0_103] : memref<32x16x8xf32, #tpu.memory_space<vmem>>, vector<32x1x8xf32>
    %86 = vector.shape_cast %85 : vector<32x1x8xf32> to vector<32x8xf32>
    %87 = arith.maximumf %84, %86 : vector<32x8xf32>
    %c0_104 = arith.constant 0 : index
    %c3_105 = arith.constant 3 : index
    %c0_106 = arith.constant 0 : index
    %88 = vector.load %arg7[%c0_104, %c3_105, %c0_106] : memref<32x8x8xf32, #tpu.memory_space<vmem>>, vector<32x1x8xf32>
    %89 = vector.shape_cast %88 : vector<32x1x8xf32> to vector<32x8xf32>
    %90 = vector.shape_cast %87 : vector<32x8xf32> to vector<32x1x8xf32>
    tpu.vector_store %arg7[%c0_104, %c3_105, %c0_106], %90 {strides = array<i32>} : memref<32x8x8xf32, #tpu.memory_space<vmem>>, vector<32x1x8xf32>,
    %c0_107 = arith.constant 0 : index
    %c8 = arith.constant 8 : index
    %c0_108 = arith.constant 0 : index
    %91 = vector.load %arg6[%c0_107, %c8, %c0_108] : memref<32x16x8xf32, #tpu.memory_space<vmem>>, vector<32x1x8xf32>
    %92 = vector.shape_cast %91 : vector<32x1x8xf32> to vector<32x8xf32>
    %c0_109 = arith.constant 0 : index
    %c9_110 = arith.constant 9 : index
    %c0_111 = arith.constant 0 : index
    %93 = vector.load %arg6[%c0_109, %c9_110, %c0_111] : memref<32x16x8xf32, #tpu.memory_space<vmem>>, vector<32x1x8xf32>
    %94 = vector.shape_cast %93 : vector<32x1x8xf32> to vector<32x8xf32>
    %95 = arith.maximumf %92, %94 : vector<32x8xf32>
    %c0_112 = arith.constant 0 : index
    %c4_113 = arith.constant 4 : index
    %c0_114 = arith.constant 0 : index
    %96 = vector.load %arg7[%c0_112, %c4_113, %c0_114] : memref<32x8x8xf32, #tpu.memory_space<vmem>>, vector<32x1x8xf32>
    %97 = vector.shape_cast %96 : vector<32x1x8xf32> to vector<32x8xf32>
    %98 = vector.shape_cast %95 : vector<32x8xf32> to vector<32x1x8xf32>
    tpu.vector_store %arg7[%c0_112, %c4_113, %c0_114], %98 {strides = array<i32>} : memref<32x8x8xf32, #tpu.memory_space<vmem>>, vector<32x1x8xf32>,
    %c0_115 = arith.constant 0 : index
    %c10 = arith.constant 10 : index
    %c0_116 = arith.constant 0 : index
    %99 = vector.load %arg6[%c0_115, %c10, %c0_116] : memref<32x16x8xf32, #tpu.memory_space<vmem>>, vector<32x1x8xf32>
    %100 = vector.shape_cast %99 : vector<32x1x8xf32> to vector<32x8xf32>
    %c0_117 = arith.constant 0 : index
    %c11 = arith.constant 11 : index
    %c0_118 = arith.constant 0 : index
    %101 = vector.load %arg6[%c0_117, %c11, %c0_118] : memref<32x16x8xf32, #tpu.memory_space<vmem>>, vector<32x1x8xf32>
    %102 = vector.shape_cast %101 : vector<32x1x8xf32> to vector<32x8xf32>
    %103 = arith.maximumf %100, %102 : vector<32x8xf32>
    %c0_119 = arith.constant 0 : index
    %c5_120 = arith.constant 5 : index
    %c0_121 = arith.constant 0 : index
    %104 = vector.load %arg7[%c0_119, %c5_120, %c0_121] : memref<32x8x8xf32, #tpu.memory_space<vmem>>, vector<32x1x8xf32>
    %105 = vector.shape_cast %104 : vector<32x1x8xf32> to vector<32x8xf32>
    %106 = vector.shape_cast %103 : vector<32x8xf32> to vector<32x1x8xf32>
    tpu.vector_store %arg7[%c0_119, %c5_120, %c0_121], %106 {strides = array<i32>} : memref<32x8x8xf32, #tpu.memory_space<vmem>>, vector<32x1x8xf32>,
    %c0_122 = arith.constant 0 : index
    %c12_123 = arith.constant 12 : index
    %c0_124 = arith.constant 0 : index
    %107 = vector.load %arg6[%c0_122, %c12_123, %c0_124] : memref<32x16x8xf32, #tpu.memory_space<vmem>>, vector<32x1x8xf32>
    %108 = vector.shape_cast %107 : vector<32x1x8xf32> to vector<32x8xf32>
    %c0_125 = arith.constant 0 : index
    %c13 = arith.constant 13 : index
    %c0_126 = arith.constant 0 : index
    %109 = vector.load %arg6[%c0_125, %c13, %c0_126] : memref<32x16x8xf32, #tpu.memory_space<vmem>>, vector<32x1x8xf32>
    %110 = vector.shape_cast %109 : vector<32x1x8xf32> to vector<32x8xf32>
    %111 = arith.maximumf %108, %110 : vector<32x8xf32>
    %c0_127 = arith.constant 0 : index
    %c6_128 = arith.constant 6 : index
    %c0_129 = arith.constant 0 : index
    %112 = vector.load %arg7[%c0_127, %c6_128, %c0_129] : memref<32x8x8xf32, #tpu.memory_space<vmem>>, vector<32x1x8xf32>
    %113 = vector.shape_cast %112 : vector<32x1x8xf32> to vector<32x8xf32>
    %114 = vector.shape_cast %111 : vector<32x8xf32> to vector<32x1x8xf32>
    tpu.vector_store %arg7[%c0_127, %c6_128, %c0_129], %114 {strides = array<i32>} : memref<32x8x8xf32, #tpu.memory_space<vmem>>, vector<32x1x8xf32>,
    %c0_130 = arith.constant 0 : index
    %c14 = arith.constant 14 : index
    %c0_131 = arith.constant 0 : index
    %115 = vector.load %arg6[%c0_130, %c14, %c0_131] : memref<32x16x8xf32, #tpu.memory_space<vmem>>, vector<32x1x8xf32>
    %116 = vector.shape_cast %115 : vector<32x1x8xf32> to vector<32x8xf32>
    %c0_132 = arith.constant 0 : index
    %c15_133 = arith.constant 15 : index
    %c0_134 = arith.constant 0 : index
    %117 = vector.load %arg6[%c0_132, %c15_133, %c0_134] : memref<32x16x8xf32, #tpu.memory_space<vmem>>, vector<32x1x8xf32>
    %118 = vector.shape_cast %117 : vector<32x1x8xf32> to vector<32x8xf32>
    %119 = arith.maximumf %116, %118 : vector<32x8xf32>
    %c0_135 = arith.constant 0 : index
    %c7_136 = arith.constant 7 : index
    %c0_137 = arith.constant 0 : index
    %120 = vector.load %arg7[%c0_135, %c7_136, %c0_137] : memref<32x8x8xf32, #tpu.memory_space<vmem>>, vector<32x1x8xf32>
    %121 = vector.shape_cast %120 : vector<32x1x8xf32> to vector<32x8xf32>
    %122 = vector.shape_cast %119 : vector<32x8xf32> to vector<32x1x8xf32>
    tpu.vector_store %arg7[%c0_135, %c7_136, %c0_137], %122 {strides = array<i32>} : memref<32x8x8xf32, #tpu.memory_space<vmem>>, vector<32x1x8xf32>,
    %c0_138 = arith.constant 0 : index
    %c0_139 = arith.constant 0 : index
    %c0_140 = arith.constant 0 : index
    %123 = vector.load %arg7[%c0_138, %c0_139, %c0_140] : memref<32x8x8xf32, #tpu.memory_space<vmem>>, vector<1x8x8xf32>
    %124 = vector.shape_cast %123 : vector<1x8x8xf32> to vector<8x8xf32>
    %c1_141 = arith.constant 1 : index
    %c0_142 = arith.constant 0 : index
    %c0_143 = arith.constant 0 : index
    %125 = vector.load %arg7[%c1_141, %c0_142, %c0_143] : memref<32x8x8xf32, #tpu.memory_space<vmem>>, vector<1x8x8xf32>
    %126 = vector.shape_cast %125 : vector<1x8x8xf32> to vector<8x8xf32>
    %127 = arith.maximumf %124, %126 : vector<8x8xf32>
    %c0_144 = arith.constant 0 : index
    %c1_145 = arith.constant 1 : index
    %c1_146 = arith.constant 1 : index
    %c0_147 = arith.constant 0 : index
    %128 = vector.load %arg8[%c0_144, %c1_145, %c1_146, %c0_147] : memref<2x10x10x8xf32, #tpu.memory_space<vmem>>, vector<1x1x8x8xf32>
    %129 = vector.shape_cast %128 : vector<1x1x8x8xf32> to vector<8x8xf32>
    %130 = vector.shape_cast %127 : vector<8x8xf32> to vector<1x1x8x8xf32>
    tpu.vector_store %arg8[%c0_144, %c1_145, %c1_146, %c0_147], %130 {strides = array<i32>} : memref<2x10x10x8xf32, #tpu.memory_space<vmem>>, vector<1x1x8x8xf32>,
    %c2_148 = arith.constant 2 : index
    %c0_149 = arith.constant 0 : index
    %c0_150 = arith.constant 0 : index
    %131 = vector.load %arg7[%c2_148, %c0_149, %c0_150] : memref<32x8x8xf32, #tpu.memory_space<vmem>>, vector<1x8x8xf32>
    %132 = vector.shape_cast %131 : vector<1x8x8xf32> to vector<8x8xf32>
    %c3_151 = arith.constant 3 : index
    %c0_152 = arith.constant 0 : index
    %c0_153 = arith.constant 0 : index
    %133 = vector.load %arg7[%c3_151, %c0_152, %c0_153] : memref<32x8x8xf32, #tpu.memory_space<vmem>>, vector<1x8x8xf32>
    %134 = vector.shape_cast %133 : vector<1x8x8xf32> to vector<8x8xf32>
    %135 = arith.maximumf %132, %134 : vector<8x8xf32>
    %c0_154 = arith.constant 0 : index
    %c2_155 = arith.constant 2 : index
    %c1_156 = arith.constant 1 : index
    %c0_157 = arith.constant 0 : index
    %136 = vector.load %arg8[%c0_154, %c2_155, %c1_156, %c0_157] : memref<2x10x10x8xf32, #tpu.memory_space<vmem>>, vector<1x1x8x8xf32>
    %137 = vector.shape_cast %136 : vector<1x1x8x8xf32> to vector<8x8xf32>
    %138 = vector.shape_cast %135 : vector<8x8xf32> to vector<1x1x8x8xf32>
    tpu.vector_store %arg8[%c0_154, %c2_155, %c1_156, %c0_157], %138 {strides = array<i32>} : memref<2x10x10x8xf32, #tpu.memory_space<vmem>>, vector<1x1x8x8xf32>,
    %c4_158 = arith.constant 4 : index
    %c0_159 = arith.constant 0 : index
    %c0_160 = arith.constant 0 : index
    %139 = vector.load %arg7[%c4_158, %c0_159, %c0_160] : memref<32x8x8xf32, #tpu.memory_space<vmem>>, vector<1x8x8xf32>
    %140 = vector.shape_cast %139 : vector<1x8x8xf32> to vector<8x8xf32>
    %c5_161 = arith.constant 5 : index
    %c0_162 = arith.constant 0 : index
    %c0_163 = arith.constant 0 : index
    %141 = vector.load %arg7[%c5_161, %c0_162, %c0_163] : memref<32x8x8xf32, #tpu.memory_space<vmem>>, vector<1x8x8xf32>
    %142 = vector.shape_cast %141 : vector<1x8x8xf32> to vector<8x8xf32>
    %143 = arith.maximumf %140, %142 : vector<8x8xf32>
    %c0_164 = arith.constant 0 : index
    %c3_165 = arith.constant 3 : index
    %c1_166 = arith.constant 1 : index
    %c0_167 = arith.constant 0 : index
    %144 = vector.load %arg8[%c0_164, %c3_165, %c1_166, %c0_167] : memref<2x10x10x8xf32, #tpu.memory_space<vmem>>, vector<1x1x8x8xf32>
    %145 = vector.shape_cast %144 : vector<1x1x8x8xf32> to vector<8x8xf32>
    %146 = vector.shape_cast %143 : vector<8x8xf32> to vector<1x1x8x8xf32>
    tpu.vector_store %arg8[%c0_164, %c3_165, %c1_166, %c0_167], %146 {strides = array<i32>} : memref<2x10x10x8xf32, #tpu.memory_space<vmem>>, vector<1x1x8x8xf32>,
    %c6_168 = arith.constant 6 : index
    %c0_169 = arith.constant 0 : index
    %c0_170 = arith.constant 0 : index
    %147 = vector.load %arg7[%c6_168, %c0_169, %c0_170] : memref<32x8x8xf32, #tpu.memory_space<vmem>>, vector<1x8x8xf32>
    %148 = vector.shape_cast %147 : vector<1x8x8xf32> to vector<8x8xf32>
    %c7_171 = arith.constant 7 : index
    %c0_172 = arith.constant 0 : index
    %c0_173 = arith.constant 0 : index
    %149 = vector.load %arg7[%c7_171, %c0_172, %c0_173] : memref<32x8x8xf32, #tpu.memory_space<vmem>>, vector<1x8x8xf32>
    %150 = vector.shape_cast %149 : vector<1x8x8xf32> to vector<8x8xf32>
    %151 = arith.maximumf %148, %150 : vector<8x8xf32>
    %c0_174 = arith.constant 0 : index
    %c4_175 = arith.constant 4 : index
    %c1_176 = arith.constant 1 : index
    %c0_177 = arith.constant 0 : index
    %152 = vector.load %arg8[%c0_174, %c4_175, %c1_176, %c0_177] : memref<2x10x10x8xf32, #tpu.memory_space<vmem>>, vector<1x1x8x8xf32>
    %153 = vector.shape_cast %152 : vector<1x1x8x8xf32> to vector<8x8xf32>
    %154 = vector.shape_cast %151 : vector<8x8xf32> to vector<1x1x8x8xf32>
    tpu.vector_store %arg8[%c0_174, %c4_175, %c1_176, %c0_177], %154 {strides = array<i32>} : memref<2x10x10x8xf32, #tpu.memory_space<vmem>>, vector<1x1x8x8xf32>,
    %c8_178 = arith.constant 8 : index
    %c0_179 = arith.constant 0 : index
    %c0_180 = arith.constant 0 : index
    %155 = vector.load %arg7[%c8_178, %c0_179, %c0_180] : memref<32x8x8xf32, #tpu.memory_space<vmem>>, vector<1x8x8xf32>
    %156 = vector.shape_cast %155 : vector<1x8x8xf32> to vector<8x8xf32>
    %c9_181 = arith.constant 9 : index
    %c0_182 = arith.constant 0 : index
    %c0_183 = arith.constant 0 : index
    %157 = vector.load %arg7[%c9_181, %c0_182, %c0_183] : memref<32x8x8xf32, #tpu.memory_space<vmem>>, vector<1x8x8xf32>
    %158 = vector.shape_cast %157 : vector<1x8x8xf32> to vector<8x8xf32>
    %159 = arith.maximumf %156, %158 : vector<8x8xf32>
    %c0_184 = arith.constant 0 : index
    %c5_185 = arith.constant 5 : index
    %c1_186 = arith.constant 1 : index
    %c0_187 = arith.constant 0 : index
    %160 = vector.load %arg8[%c0_184, %c5_185, %c1_186, %c0_187] : memref<2x10x10x8xf32, #tpu.memory_space<vmem>>, vector<1x1x8x8xf32>
    %161 = vector.shape_cast %160 : vector<1x1x8x8xf32> to vector<8x8xf32>
    %162 = vector.shape_cast %159 : vector<8x8xf32> to vector<1x1x8x8xf32>
    tpu.vector_store %arg8[%c0_184, %c5_185, %c1_186, %c0_187], %162 {strides = array<i32>} : memref<2x10x10x8xf32, #tpu.memory_space<vmem>>, vector<1x1x8x8xf32>,
    %c10_188 = arith.constant 10 : index
    %c0_189 = arith.constant 0 : index
    %c0_190 = arith.constant 0 : index
    %163 = vector.load %arg7[%c10_188, %c0_189, %c0_190] : memref<32x8x8xf32, #tpu.memory_space<vmem>>, vector<1x8x8xf32>
    %164 = vector.shape_cast %163 : vector<1x8x8xf32> to vector<8x8xf32>
    %c11_191 = arith.constant 11 : index
    %c0_192 = arith.constant 0 : index
    %c0_193 = arith.constant 0 : index
    %165 = vector.load %arg7[%c11_191, %c0_192, %c0_193] : memref<32x8x8xf32, #tpu.memory_space<vmem>>, vector<1x8x8xf32>
    %166 = vector.shape_cast %165 : vector<1x8x8xf32> to vector<8x8xf32>
    %167 = arith.maximumf %164, %166 : vector<8x8xf32>
    %c0_194 = arith.constant 0 : index
    %c6_195 = arith.constant 6 : index
    %c1_196 = arith.constant 1 : index
    %c0_197 = arith.constant 0 : index
    %168 = vector.load %arg8[%c0_194, %c6_195, %c1_196, %c0_197] : memref<2x10x10x8xf32, #tpu.memory_space<vmem>>, vector<1x1x8x8xf32>
    %169 = vector.shape_cast %168 : vector<1x1x8x8xf32> to vector<8x8xf32>
    %170 = vector.shape_cast %167 : vector<8x8xf32> to vector<1x1x8x8xf32>
    tpu.vector_store %arg8[%c0_194, %c6_195, %c1_196, %c0_197], %170 {strides = array<i32>} : memref<2x10x10x8xf32, #tpu.memory_space<vmem>>, vector<1x1x8x8xf32>,
    %c12_198 = arith.constant 12 : index
    %c0_199 = arith.constant 0 : index
    %c0_200 = arith.constant 0 : index
    %171 = vector.load %arg7[%c12_198, %c0_199, %c0_200] : memref<32x8x8xf32, #tpu.memory_space<vmem>>, vector<1x8x8xf32>
    %172 = vector.shape_cast %171 : vector<1x8x8xf32> to vector<8x8xf32>
    %c13_201 = arith.constant 13 : index
    %c0_202 = arith.constant 0 : index
    %c0_203 = arith.constant 0 : index
    %173 = vector.load %arg7[%c13_201, %c0_202, %c0_203] : memref<32x8x8xf32, #tpu.memory_space<vmem>>, vector<1x8x8xf32>
    %174 = vector.shape_cast %173 : vector<1x8x8xf32> to vector<8x8xf32>
    %175 = arith.maximumf %172, %174 : vector<8x8xf32>
    %c0_204 = arith.constant 0 : index
    %c7_205 = arith.constant 7 : index
    %c1_206 = arith.constant 1 : index
    %c0_207 = arith.constant 0 : index
    %176 = vector.load %arg8[%c0_204, %c7_205, %c1_206, %c0_207] : memref<2x10x10x8xf32, #tpu.memory_space<vmem>>, vector<1x1x8x8xf32>
    %177 = vector.shape_cast %176 : vector<1x1x8x8xf32> to vector<8x8xf32>
    %178 = vector.shape_cast %175 : vector<8x8xf32> to vector<1x1x8x8xf32>
    tpu.vector_store %arg8[%c0_204, %c7_205, %c1_206, %c0_207], %178 {strides = array<i32>} : memref<2x10x10x8xf32, #tpu.memory_space<vmem>>, vector<1x1x8x8xf32>,
    %c14_208 = arith.constant 14 : index
    %c0_209 = arith.constant 0 : index
    %c0_210 = arith.constant 0 : index
    %179 = vector.load %arg7[%c14_208, %c0_209, %c0_210] : memref<32x8x8xf32, #tpu.memory_space<vmem>>, vector<1x8x8xf32>
    %180 = vector.shape_cast %179 : vector<1x8x8xf32> to vector<8x8xf32>
    %c15_211 = arith.constant 15 : index
    %c0_212 = arith.constant 0 : index
    %c0_213 = arith.constant 0 : index
    %181 = vector.load %arg7[%c15_211, %c0_212, %c0_213] : memref<32x8x8xf32, #tpu.memory_space<vmem>>, vector<1x8x8xf32>
    %182 = vector.shape_cast %181 : vector<1x8x8xf32> to vector<8x8xf32>
    %183 = arith.maximumf %180, %182 : vector<8x8xf32>
    %c0_214 = arith.constant 0 : index
    %c8_215 = arith.constant 8 : index
    %c1_216 = arith.constant 1 : index
    %c0_217 = arith.constant 0 : index
    %184 = vector.load %arg8[%c0_214, %c8_215, %c1_216, %c0_217] : memref<2x10x10x8xf32, #tpu.memory_space<vmem>>, vector<1x1x8x8xf32>
    %185 = vector.shape_cast %184 : vector<1x1x8x8xf32> to vector<8x8xf32>
    %186 = vector.shape_cast %183 : vector<8x8xf32> to vector<1x1x8x8xf32>
    tpu.vector_store %arg8[%c0_214, %c8_215, %c1_216, %c0_217], %186 {strides = array<i32>} : memref<2x10x10x8xf32, #tpu.memory_space<vmem>>, vector<1x1x8x8xf32>,
    %c16 = arith.constant 16 : index
    %c0_218 = arith.constant 0 : index
    %c0_219 = arith.constant 0 : index
    %187 = vector.load %arg7[%c16, %c0_218, %c0_219] : memref<32x8x8xf32, #tpu.memory_space<vmem>>, vector<1x8x8xf32>
    %188 = vector.shape_cast %187 : vector<1x8x8xf32> to vector<8x8xf32>
    %c17 = arith.constant 17 : index
    %c0_220 = arith.constant 0 : index
    %c0_221 = arith.constant 0 : index
    %189 = vector.load %arg7[%c17, %c0_220, %c0_221] : memref<32x8x8xf32, #tpu.memory_space<vmem>>, vector<1x8x8xf32>
    %190 = vector.shape_cast %189 : vector<1x8x8xf32> to vector<8x8xf32>
    %191 = arith.maximumf %188, %190 : vector<8x8xf32>
    %c1_222 = arith.constant 1 : index
    %c1_223 = arith.constant 1 : index
    %c1_224 = arith.constant 1 : index
    %c0_225 = arith.constant 0 : index
    %192 = vector.load %arg8[%c1_222, %c1_223, %c1_224, %c0_225] : memref<2x10x10x8xf32, #tpu.memory_space<vmem>>, vector<1x1x8x8xf32>
    %193 = vector.shape_cast %192 : vector<1x1x8x8xf32> to vector<8x8xf32>
    %194 = vector.shape_cast %191 : vector<8x8xf32> to vector<1x1x8x8xf32>
    tpu.vector_store %arg8[%c1_222, %c1_223, %c1_224, %c0_225], %194 {strides = array<i32>} : memref<2x10x10x8xf32, #tpu.memory_space<vmem>>, vector<1x1x8x8xf32>,
    %c18_226 = arith.constant 18 : index
    %c0_227 = arith.constant 0 : index
    %c0_228 = arith.constant 0 : index
    %195 = vector.load %arg7[%c18_226, %c0_227, %c0_228] : memref<32x8x8xf32, #tpu.memory_space<vmem>>, vector<1x8x8xf32>
    %196 = vector.shape_cast %195 : vector<1x8x8xf32> to vector<8x8xf32>
    %c19 = arith.constant 19 : index
    %c0_229 = arith.constant 0 : index
    %c0_230 = arith.constant 0 : index
    %197 = vector.load %arg7[%c19, %c0_229, %c0_230] : memref<32x8x8xf32, #tpu.memory_space<vmem>>, vector<1x8x8xf32>
    %198 = vector.shape_cast %197 : vector<1x8x8xf32> to vector<8x8xf32>
    %199 = arith.maximumf %196, %198 : vector<8x8xf32>
    %c1_231 = arith.constant 1 : index
    %c2_232 = arith.constant 2 : index
    %c1_233 = arith.constant 1 : index
    %c0_234 = arith.constant 0 : index
    %200 = vector.load %arg8[%c1_231, %c2_232, %c1_233, %c0_234] : memref<2x10x10x8xf32, #tpu.memory_space<vmem>>, vector<1x1x8x8xf32>
    %201 = vector.shape_cast %200 : vector<1x1x8x8xf32> to vector<8x8xf32>
    %202 = vector.shape_cast %199 : vector<8x8xf32> to vector<1x1x8x8xf32>
    tpu.vector_store %arg8[%c1_231, %c2_232, %c1_233, %c0_234], %202 {strides = array<i32>} : memref<2x10x10x8xf32, #tpu.memory_space<vmem>>, vector<1x1x8x8xf32>,
    %c20 = arith.constant 20 : index
    %c0_235 = arith.constant 0 : index
    %c0_236 = arith.constant 0 : index
    %203 = vector.load %arg7[%c20, %c0_235, %c0_236] : memref<32x8x8xf32, #tpu.memory_space<vmem>>, vector<1x8x8xf32>
    %204 = vector.shape_cast %203 : vector<1x8x8xf32> to vector<8x8xf32>
    %c21_237 = arith.constant 21 : index
    %c0_238 = arith.constant 0 : index
    %c0_239 = arith.constant 0 : index
    %205 = vector.load %arg7[%c21_237, %c0_238, %c0_239] : memref<32x8x8xf32, #tpu.memory_space<vmem>>, vector<1x8x8xf32>
    %206 = vector.shape_cast %205 : vector<1x8x8xf32> to vector<8x8xf32>
    %207 = arith.maximumf %204, %206 : vector<8x8xf32>
    %c1_240 = arith.constant 1 : index
    %c3_241 = arith.constant 3 : index
    %c1_242 = arith.constant 1 : index
    %c0_243 = arith.constant 0 : index
    %208 = vector.load %arg8[%c1_240, %c3_241, %c1_242, %c0_243] : memref<2x10x10x8xf32, #tpu.memory_space<vmem>>, vector<1x1x8x8xf32>
    %209 = vector.shape_cast %208 : vector<1x1x8x8xf32> to vector<8x8xf32>
    %210 = vector.shape_cast %207 : vector<8x8xf32> to vector<1x1x8x8xf32>
    tpu.vector_store %arg8[%c1_240, %c3_241, %c1_242, %c0_243], %210 {strides = array<i32>} : memref<2x10x10x8xf32, #tpu.memory_space<vmem>>, vector<1x1x8x8xf32>,
    %c22 = arith.constant 22 : index
    %c0_244 = arith.constant 0 : index
    %c0_245 = arith.constant 0 : index
    %211 = vector.load %arg7[%c22, %c0_244, %c0_245] : memref<32x8x8xf32, #tpu.memory_space<vmem>>, vector<1x8x8xf32>
    %212 = vector.shape_cast %211 : vector<1x8x8xf32> to vector<8x8xf32>
    %c23 = arith.constant 23 : index
    %c0_246 = arith.constant 0 : index
    %c0_247 = arith.constant 0 : index
    %213 = vector.load %arg7[%c23, %c0_246, %c0_247] : memref<32x8x8xf32, #tpu.memory_space<vmem>>, vector<1x8x8xf32>
    %214 = vector.shape_cast %213 : vector<1x8x8xf32> to vector<8x8xf32>
    %215 = arith.maximumf %212, %214 : vector<8x8xf32>
    %c1_248 = arith.constant 1 : index
    %c4_249 = arith.constant 4 : index
    %c1_250 = arith.constant 1 : index
    %c0_251 = arith.constant 0 : index
    %216 = vector.load %arg8[%c1_248, %c4_249, %c1_250, %c0_251] : memref<2x10x10x8xf32, #tpu.memory_space<vmem>>, vector<1x1x8x8xf32>
    %217 = vector.shape_cast %216 : vector<1x1x8x8xf32> to vector<8x8xf32>
    %218 = vector.shape_cast %215 : vector<8x8xf32> to vector<1x1x8x8xf32>
    tpu.vector_store %arg8[%c1_248, %c4_249, %c1_250, %c0_251], %218 {strides = array<i32>} : memref<2x10x10x8xf32, #tpu.memory_space<vmem>>, vector<1x1x8x8xf32>,
    %c24_252 = arith.constant 24 : index
    %c0_253 = arith.constant 0 : index
    %c0_254 = arith.constant 0 : index
    %219 = vector.load %arg7[%c24_252, %c0_253, %c0_254] : memref<32x8x8xf32, #tpu.memory_space<vmem>>, vector<1x8x8xf32>
    %220 = vector.shape_cast %219 : vector<1x8x8xf32> to vector<8x8xf32>
    %c25 = arith.constant 25 : index
    %c0_255 = arith.constant 0 : index
    %c0_256 = arith.constant 0 : index
    %221 = vector.load %arg7[%c25, %c0_255, %c0_256] : memref<32x8x8xf32, #tpu.memory_space<vmem>>, vector<1x8x8xf32>
    %222 = vector.shape_cast %221 : vector<1x8x8xf32> to vector<8x8xf32>
    %223 = arith.maximumf %220, %222 : vector<8x8xf32>
    %c1_257 = arith.constant 1 : index
    %c5_258 = arith.constant 5 : index
    %c1_259 = arith.constant 1 : index
    %c0_260 = arith.constant 0 : index
    %224 = vector.load %arg8[%c1_257, %c5_258, %c1_259, %c0_260] : memref<2x10x10x8xf32, #tpu.memory_space<vmem>>, vector<1x1x8x8xf32>
    %225 = vector.shape_cast %224 : vector<1x1x8x8xf32> to vector<8x8xf32>
    %226 = vector.shape_cast %223 : vector<8x8xf32> to vector<1x1x8x8xf32>
    tpu.vector_store %arg8[%c1_257, %c5_258, %c1_259, %c0_260], %226 {strides = array<i32>} : memref<2x10x10x8xf32, #tpu.memory_space<vmem>>, vector<1x1x8x8xf32>,
    %c26 = arith.constant 26 : index
    %c0_261 = arith.constant 0 : index
    %c0_262 = arith.constant 0 : index
    %227 = vector.load %arg7[%c26, %c0_261, %c0_262] : memref<32x8x8xf32, #tpu.memory_space<vmem>>, vector<1x8x8xf32>
    %228 = vector.shape_cast %227 : vector<1x8x8xf32> to vector<8x8xf32>
    %c27 = arith.constant 27 : index
    %c0_263 = arith.constant 0 : index
    %c0_264 = arith.constant 0 : index
    %229 = vector.load %arg7[%c27, %c0_263, %c0_264] : memref<32x8x8xf32, #tpu.memory_space<vmem>>, vector<1x8x8xf32>
    %230 = vector.shape_cast %229 : vector<1x8x8xf32> to vector<8x8xf32>
    %231 = arith.maximumf %228, %230 : vector<8x8xf32>
    %c1_265 = arith.constant 1 : index
    %c6_266 = arith.constant 6 : index
    %c1_267 = arith.constant 1 : index
    %c0_268 = arith.constant 0 : index
    %232 = vector.load %arg8[%c1_265, %c6_266, %c1_267, %c0_268] : memref<2x10x10x8xf32, #tpu.memory_space<vmem>>, vector<1x1x8x8xf32>
    %233 = vector.shape_cast %232 : vector<1x1x8x8xf32> to vector<8x8xf32>
    %234 = vector.shape_cast %231 : vector<8x8xf32> to vector<1x1x8x8xf32>
    tpu.vector_store %arg8[%c1_265, %c6_266, %c1_267, %c0_268], %234 {strides = array<i32>} : memref<2x10x10x8xf32, #tpu.memory_space<vmem>>, vector<1x1x8x8xf32>,
    %c28 = arith.constant 28 : index
    %c0_269 = arith.constant 0 : index
    %c0_270 = arith.constant 0 : index
    %235 = vector.load %arg7[%c28, %c0_269, %c0_270] : memref<32x8x8xf32, #tpu.memory_space<vmem>>, vector<1x8x8xf32>
    %236 = vector.shape_cast %235 : vector<1x8x8xf32> to vector<8x8xf32>
    %c29 = arith.constant 29 : index
    %c0_271 = arith.constant 0 : index
    %c0_272 = arith.constant 0 : index
    %237 = vector.load %arg7[%c29, %c0_271, %c0_272] : memref<32x8x8xf32, #tpu.memory_space<vmem>>, vector<1x8x8xf32>
    %238 = vector.shape_cast %237 : vector<1x8x8xf32> to vector<8x8xf32>
    %239 = arith.maximumf %236, %238 : vector<8x8xf32>
    %c1_273 = arith.constant 1 : index
    %c7_274 = arith.constant 7 : index
    %c1_275 = arith.constant 1 : index
    %c0_276 = arith.constant 0 : index
    %240 = vector.load %arg8[%c1_273, %c7_274, %c1_275, %c0_276] : memref<2x10x10x8xf32, #tpu.memory_space<vmem>>, vector<1x1x8x8xf32>
    %241 = vector.shape_cast %240 : vector<1x1x8x8xf32> to vector<8x8xf32>
    %242 = vector.shape_cast %239 : vector<8x8xf32> to vector<1x1x8x8xf32>
    tpu.vector_store %arg8[%c1_273, %c7_274, %c1_275, %c0_276], %242 {strides = array<i32>} : memref<2x10x10x8xf32, #tpu.memory_space<vmem>>, vector<1x1x8x8xf32>,
    %c30 = arith.constant 30 : index
    %c0_277 = arith.constant 0 : index
    %c0_278 = arith.constant 0 : index
    %243 = vector.load %arg7[%c30, %c0_277, %c0_278] : memref<32x8x8xf32, #tpu.memory_space<vmem>>, vector<1x8x8xf32>
    %244 = vector.shape_cast %243 : vector<1x8x8xf32> to vector<8x8xf32>
    %c31 = arith.constant 31 : index
    %c0_279 = arith.constant 0 : index
    %c0_280 = arith.constant 0 : index
    %245 = vector.load %arg7[%c31, %c0_279, %c0_280] : memref<32x8x8xf32, #tpu.memory_space<vmem>>, vector<1x8x8xf32>
    %246 = vector.shape_cast %245 : vector<1x8x8xf32> to vector<8x8xf32>
    %247 = arith.maximumf %244, %246 : vector<8x8xf32>
    %c1_281 = arith.constant 1 : index
    %c8_282 = arith.constant 8 : index
    %c1_283 = arith.constant 1 : index
    %c0_284 = arith.constant 0 : index
    %248 = vector.load %arg8[%c1_281, %c8_282, %c1_283, %c0_284] : memref<2x10x10x8xf32, #tpu.memory_space<vmem>>, vector<1x1x8x8xf32>
    %249 = vector.shape_cast %248 : vector<1x1x8x8xf32> to vector<8x8xf32>
    %250 = vector.shape_cast %247 : vector<8x8xf32> to vector<1x1x8x8xf32>
    tpu.vector_store %arg8[%c1_281, %c8_282, %c1_283, %c0_284], %250 {strides = array<i32>} : memref<2x10x10x8xf32, #tpu.memory_space<vmem>>, vector<1x1x8x8xf32>,
    %c0_285 = arith.constant 0 : index
    %c0_286 = arith.constant 0 : index
    %c0_287 = arith.constant 0 : index
    %c0_288 = arith.constant 0 : index
    %251 = vector.load %arg8[%c0_285, %c0_286, %c0_287, %c0_288] : memref<2x10x10x8xf32, #tpu.memory_space<vmem>>, vector<2x8x8x8xf32>
    %252 = vector.shape_cast %251 : vector<2x8x8x8xf32> to vector<128x8xf32>
    %c0_289 = arith.constant 0 : index
    %c0_290 = arith.constant 0 : index
    %253 = vector.load %arg9[%c0_289, %c0_290] : memref<128x72xf32, #tpu.memory_space<vmem>>, vector<128x8xf32>
    tpu.vector_store %arg9[%c0_289, %c0_290], %252 {strides = array<i32>} : memref<128x72xf32, #tpu.memory_space<vmem>>, vector<128x8xf32>,
    %c0_291 = arith.constant 0 : index
    %c0_292 = arith.constant 0 : index
    %c1_293 = arith.constant 1 : index
    %c0_294 = arith.constant 0 : index
    %254 = vector.load %arg8[%c0_291, %c0_292, %c1_293, %c0_294] : memref<2x10x10x8xf32, #tpu.memory_space<vmem>>, vector<2x8x8x8xf32>
    %255 = vector.shape_cast %254 : vector<2x8x8x8xf32> to vector<128x8xf32>
    %c0_295 = arith.constant 0 : index
    %c8_296 = arith.constant 8 : index
    %256 = vector.load %arg9[%c0_295, %c8_296] : memref<128x72xf32, #tpu.memory_space<vmem>>, vector<128x8xf32>
    tpu.vector_store %arg9[%c0_295, %c8_296], %255 {strides = array<i32>} : memref<128x72xf32, #tpu.memory_space<vmem>>, vector<128x8xf32>,
    %c0_297 = arith.constant 0 : index
    %c0_298 = arith.constant 0 : index
    %c2_299 = arith.constant 2 : index
    %c0_300 = arith.constant 0 : index
    %257 = vector.load %arg8[%c0_297, %c0_298, %c2_299, %c0_300] : memref<2x10x10x8xf32, #tpu.memory_space<vmem>>, vector<2x8x8x8xf32>
    %258 = vector.shape_cast %257 : vector<2x8x8x8xf32> to vector<128x8xf32>
    %c0_301 = arith.constant 0 : index
    %c16_302 = arith.constant 16 : index
    %259 = vector.load %arg9[%c0_301, %c16_302] : memref<128x72xf32, #tpu.memory_space<vmem>>, vector<128x8xf32>
    tpu.vector_store %arg9[%c0_301, %c16_302], %258 {strides = array<i32>} : memref<128x72xf32, #tpu.memory_space<vmem>>, vector<128x8xf32>,
    %c0_303 = arith.constant 0 : index
    %c1_304 = arith.constant 1 : index
    %c0_305 = arith.constant 0 : index
    %c0_306 = arith.constant 0 : index
    %260 = vector.load %arg8[%c0_303, %c1_304, %c0_305, %c0_306] : memref<2x10x10x8xf32, #tpu.memory_space<vmem>>, vector<2x8x8x8xf32>
    %261 = vector.shape_cast %260 : vector<2x8x8x8xf32> to vector<128x8xf32>
    %c0_307 = arith.constant 0 : index
    %c24_308 = arith.constant 24 : index
    %262 = vector.load %arg9[%c0_307, %c24_308] : memref<128x72xf32, #tpu.memory_space<vmem>>, vector<128x8xf32>
    tpu.vector_store %arg9[%c0_307, %c24_308], %261 {strides = array<i32>} : memref<128x72xf32, #tpu.memory_space<vmem>>, vector<128x8xf32>,
    %c0_309 = arith.constant 0 : index
    %c1_310 = arith.constant 1 : index
    %c1_311 = arith.constant 1 : index
    %c0_312 = arith.constant 0 : index
    %263 = vector.load %arg8[%c0_309, %c1_310, %c1_311, %c0_312] : memref<2x10x10x8xf32, #tpu.memory_space<vmem>>, vector<2x8x8x8xf32>
    %264 = vector.shape_cast %263 : vector<2x8x8x8xf32> to vector<128x8xf32>
    %c0_313 = arith.constant 0 : index
    %c32 = arith.constant 32 : index
    %265 = vector.load %arg9[%c0_313, %c32] : memref<128x72xf32, #tpu.memory_space<vmem>>, vector<128x8xf32>
    tpu.vector_store %arg9[%c0_313, %c32], %264 {strides = array<i32>} : memref<128x72xf32, #tpu.memory_space<vmem>>, vector<128x8xf32>,
    %c0_314 = arith.constant 0 : index
    %c1_315 = arith.constant 1 : index
    %c2_316 = arith.constant 2 : index
    %c0_317 = arith.constant 0 : index
    %266 = vector.load %arg8[%c0_314, %c1_315, %c2_316, %c0_317] : memref<2x10x10x8xf32, #tpu.memory_space<vmem>>, vector<2x8x8x8xf32>
    %267 = vector.shape_cast %266 : vector<2x8x8x8xf32> to vector<128x8xf32>
    %c0_318 = arith.constant 0 : index
    %c40 = arith.constant 40 : index
    %268 = vector.load %arg9[%c0_318, %c40] : memref<128x72xf32, #tpu.memory_space<vmem>>, vector<128x8xf32>
    tpu.vector_store %arg9[%c0_318, %c40], %267 {strides = array<i32>} : memref<128x72xf32, #tpu.memory_space<vmem>>, vector<128x8xf32>,
    %c0_319 = arith.constant 0 : index
    %c2_320 = arith.constant 2 : index
    %c0_321 = arith.constant 0 : index
    %c0_322 = arith.constant 0 : index
    %269 = vector.load %arg8[%c0_319, %c2_320, %c0_321, %c0_322] : memref<2x10x10x8xf32, #tpu.memory_space<vmem>>, vector<2x8x8x8xf32>
    %270 = vector.shape_cast %269 : vector<2x8x8x8xf32> to vector<128x8xf32>
    %c0_323 = arith.constant 0 : index
    %c48 = arith.constant 48 : index
    %271 = vector.load %arg9[%c0_323, %c48] : memref<128x72xf32, #tpu.memory_space<vmem>>, vector<128x8xf32>
    tpu.vector_store %arg9[%c0_323, %c48], %270 {strides = array<i32>} : memref<128x72xf32, #tpu.memory_space<vmem>>, vector<128x8xf32>,
    %c0_324 = arith.constant 0 : index
    %c2_325 = arith.constant 2 : index
    %c1_326 = arith.constant 1 : index
    %c0_327 = arith.constant 0 : index
    %272 = vector.load %arg8[%c0_324, %c2_325, %c1_326, %c0_327] : memref<2x10x10x8xf32, #tpu.memory_space<vmem>>, vector<2x8x8x8xf32>
    %273 = vector.shape_cast %272 : vector<2x8x8x8xf32> to vector<128x8xf32>
    %c0_328 = arith.constant 0 : index
    %c56 = arith.constant 56 : index
    %274 = vector.load %arg9[%c0_328, %c56] : memref<128x72xf32, #tpu.memory_space<vmem>>, vector<128x8xf32>
    tpu.vector_store %arg9[%c0_328, %c56], %273 {strides = array<i32>} : memref<128x72xf32, #tpu.memory_space<vmem>>, vector<128x8xf32>,
    %c0_329 = arith.constant 0 : index
    %c2_330 = arith.constant 2 : index
    %c2_331 = arith.constant 2 : index
    %c0_332 = arith.constant 0 : index
    %275 = vector.load %arg8[%c0_329, %c2_330, %c2_331, %c0_332] : memref<2x10x10x8xf32, #tpu.memory_space<vmem>>, vector<2x8x8x8xf32>
    %276 = vector.shape_cast %275 : vector<2x8x8x8xf32> to vector<128x8xf32>
    %c0_333 = arith.constant 0 : index
    %c64 = arith.constant 64 : index
    %277 = vector.load %arg9[%c0_333, %c64] : memref<128x72xf32, #tpu.memory_space<vmem>>, vector<128x8xf32>
    tpu.vector_store %arg9[%c0_333, %c64], %276 {strides = array<i32>} : memref<128x72xf32, #tpu.memory_space<vmem>>, vector<128x8xf32>,
    %c0_334 = arith.constant 0 : index
    %c0_335 = arith.constant 0 : index
    %278 = vector.load %arg9[%c0_334, %c0_335] : memref<128x72xf32, #tpu.memory_space<vmem>>, vector<128x72xf32>
    %279 = arith.truncf %278 : vector<128x72xf32> to vector<128x72xbf16>
    %c0_336 = arith.constant 0 : index
    %c0_337 = arith.constant 0 : index
    %280 = vector.load %arg2[%c0_336, %c0_337] : memref<72x16xbf16, #tpu.memory_space<vmem>>, vector<72x16xbf16>
    %cst_338 = arith.constant dense<0.000000e+00> : vector<128x16xf32>
    %281 = tpu.matmul %279, %280, %cst_338 {dimension_numbers = #tpu.dot_dimension_numbers<[1], [0], [0], [1], [0, 0, 1, 1], [], []>} : vector<128x72xbf16>, vector<72x16xbf16>, vector<128x16xf32> -> vector<128x16xf32>
    %cst_339 = arith.constant dense<0.000000e+00> : vector<16xf32>
    %282 = vector.multi_reduction <add>, %281, %cst_339 [0] : vector<128x16xf32> to vector<16xf32>
    %283 = vector.shape_cast %282 : vector<16xf32> to vector<1x16xf32>
    %cst_340 = arith.constant 1.280000e+02 : f32
    %284 = vector.broadcast %cst_340 : f32 to vector<1x16xf32>
    %285 = arith.divf %283, %284 : vector<1x16xf32>
    %286 = arith.mulf %281, %281 : vector<128x16xf32>
    %cst_341 = arith.constant dense<0.000000e+00> : vector<16xf32>
    %287 = vector.multi_reduction <add>, %286, %cst_341 [0] : vector<128x16xf32> to vector<16xf32>
    %288 = vector.shape_cast %287 : vector<16xf32> to vector<1x16xf32>
    %cst_342 = arith.constant 1.280000e+02 : f32
    %289 = vector.broadcast %cst_342 : f32 to vector<1x16xf32>
    %290 = arith.divf %288, %289 : vector<1x16xf32>
    %291 = arith.mulf %285, %285 : vector<1x16xf32>
    %292 = arith.subf %290, %291 : vector<1x16xf32>
    %293 = vector.broadcast %285 : vector<1x16xf32> to vector<128x16xf32>
    %294 = arith.subf %281, %293 : vector<128x16xf32>
    %cst_343 = arith.constant 9.99999974E-6 : f32
    %295 = vector.broadcast %cst_343 : f32 to vector<1x16xf32>
    %296 = arith.addf %292, %295 : vector<1x16xf32>
    %297 = math.rsqrt %296 : vector<1x16xf32>
    %298 = vector.broadcast %297 : vector<1x16xf32> to vector<128x16xf32>
    %299 = arith.mulf %294, %298 : vector<128x16xf32>
    %cst_344 = arith.constant 0.000000e+00 : f32
    %300 = vector.broadcast %cst_344 : f32 to vector<128x16xf32>
    %301 = arith.maximumf %299, %300 : vector<128x16xf32>
    %302 = vector.shape_cast %301 : vector<128x16xf32> to vector<16x8x16xf32>
    %c0_345 = arith.constant 0 : index
    %c0_346 = arith.constant 0 : index
    %c0_347 = arith.constant 0 : index
    %303 = vector.load %arg10[%c0_345, %c0_346, %c0_347] : memref<16x8x16xf32, #tpu.memory_space<vmem>>, vector<16x8x16xf32>
    tpu.vector_store %arg10[%c0_345, %c0_346, %c0_347], %302 {strides = array<i32>} : memref<16x8x16xf32, #tpu.memory_space<vmem>>, vector<16x8x16xf32>,
    %c0_348 = arith.constant 0 : index
    %c0_349 = arith.constant 0 : index
    %c0_350 = arith.constant 0 : index
    %304 = vector.load %arg10[%c0_348, %c0_349, %c0_350] : memref<16x8x16xf32, #tpu.memory_space<vmem>>, vector<16x1x16xf32>
    %305 = vector.shape_cast %304 : vector<16x1x16xf32> to vector<16x16xf32>
    %c0_351 = arith.constant 0 : index
    %c1_352 = arith.constant 1 : index
    %c0_353 = arith.constant 0 : index
    %306 = vector.load %arg10[%c0_351, %c1_352, %c0_353] : memref<16x8x16xf32, #tpu.memory_space<vmem>>, vector<16x1x16xf32>
    %307 = vector.shape_cast %306 : vector<16x1x16xf32> to vector<16x16xf32>
    %308 = arith.maximumf %305, %307 : vector<16x16xf32>
    %c0_354 = arith.constant 0 : index
    %c0_355 = arith.constant 0 : index
    %c0_356 = arith.constant 0 : index
    %309 = vector.load %arg11[%c0_354, %c0_355, %c0_356] : memref<16x4x16xf32, #tpu.memory_space<vmem>>, vector<16x1x16xf32>
    %310 = vector.shape_cast %309 : vector<16x1x16xf32> to vector<16x16xf32>
    %311 = vector.shape_cast %308 : vector<16x16xf32> to vector<16x1x16xf32>
    tpu.vector_store %arg11[%c0_354, %c0_355, %c0_356], %311 {strides = array<i32>} : memref<16x4x16xf32, #tpu.memory_space<vmem>>, vector<16x1x16xf32>,
    %c0_357 = arith.constant 0 : index
    %c2_358 = arith.constant 2 : index
    %c0_359 = arith.constant 0 : index
    %312 = vector.load %arg10[%c0_357, %c2_358, %c0_359] : memref<16x8x16xf32, #tpu.memory_space<vmem>>, vector<16x1x16xf32>
    %313 = vector.shape_cast %312 : vector<16x1x16xf32> to vector<16x16xf32>
    %c0_360 = arith.constant 0 : index
    %c3_361 = arith.constant 3 : index
    %c0_362 = arith.constant 0 : index
    %314 = vector.load %arg10[%c0_360, %c3_361, %c0_362] : memref<16x8x16xf32, #tpu.memory_space<vmem>>, vector<16x1x16xf32>
    %315 = vector.shape_cast %314 : vector<16x1x16xf32> to vector<16x16xf32>
    %316 = arith.maximumf %313, %315 : vector<16x16xf32>
    %c0_363 = arith.constant 0 : index
    %c1_364 = arith.constant 1 : index
    %c0_365 = arith.constant 0 : index
    %317 = vector.load %arg11[%c0_363, %c1_364, %c0_365] : memref<16x4x16xf32, #tpu.memory_space<vmem>>, vector<16x1x16xf32>
    %318 = vector.shape_cast %317 : vector<16x1x16xf32> to vector<16x16xf32>
    %319 = vector.shape_cast %316 : vector<16x16xf32> to vector<16x1x16xf32>
    tpu.vector_store %arg11[%c0_363, %c1_364, %c0_365], %319 {strides = array<i32>} : memref<16x4x16xf32, #tpu.memory_space<vmem>>, vector<16x1x16xf32>,
    %c0_366 = arith.constant 0 : index
    %c4_367 = arith.constant 4 : index
    %c0_368 = arith.constant 0 : index
    %320 = vector.load %arg10[%c0_366, %c4_367, %c0_368] : memref<16x8x16xf32, #tpu.memory_space<vmem>>, vector<16x1x16xf32>
    %321 = vector.shape_cast %320 : vector<16x1x16xf32> to vector<16x16xf32>
    %c0_369 = arith.constant 0 : index
    %c5_370 = arith.constant 5 : index
    %c0_371 = arith.constant 0 : index
    %322 = vector.load %arg10[%c0_369, %c5_370, %c0_371] : memref<16x8x16xf32, #tpu.memory_space<vmem>>, vector<16x1x16xf32>
    %323 = vector.shape_cast %322 : vector<16x1x16xf32> to vector<16x16xf32>
    %324 = arith.maximumf %321, %323 : vector<16x16xf32>
    %c0_372 = arith.constant 0 : index
    %c2_373 = arith.constant 2 : index
    %c0_374 = arith.constant 0 : index
    %325 = vector.load %arg11[%c0_372, %c2_373, %c0_374] : memref<16x4x16xf32, #tpu.memory_space<vmem>>, vector<16x1x16xf32>
    %326 = vector.shape_cast %325 : vector<16x1x16xf32> to vector<16x16xf32>
    %327 = vector.shape_cast %324 : vector<16x16xf32> to vector<16x1x16xf32>
    tpu.vector_store %arg11[%c0_372, %c2_373, %c0_374], %327 {strides = array<i32>} : memref<16x4x16xf32, #tpu.memory_space<vmem>>, vector<16x1x16xf32>,
    %c0_375 = arith.constant 0 : index
    %c6_376 = arith.constant 6 : index
    %c0_377 = arith.constant 0 : index
    %328 = vector.load %arg10[%c0_375, %c6_376, %c0_377] : memref<16x8x16xf32, #tpu.memory_space<vmem>>, vector<16x1x16xf32>
    %329 = vector.shape_cast %328 : vector<16x1x16xf32> to vector<16x16xf32>
    %c0_378 = arith.constant 0 : index
    %c7_379 = arith.constant 7 : index
    %c0_380 = arith.constant 0 : index
    %330 = vector.load %arg10[%c0_378, %c7_379, %c0_380] : memref<16x8x16xf32, #tpu.memory_space<vmem>>, vector<16x1x16xf32>
    %331 = vector.shape_cast %330 : vector<16x1x16xf32> to vector<16x16xf32>
    %332 = arith.maximumf %329, %331 : vector<16x16xf32>
    %c0_381 = arith.constant 0 : index
    %c3_382 = arith.constant 3 : index
    %c0_383 = arith.constant 0 : index
    %333 = vector.load %arg11[%c0_381, %c3_382, %c0_383] : memref<16x4x16xf32, #tpu.memory_space<vmem>>, vector<16x1x16xf32>
    %334 = vector.shape_cast %333 : vector<16x1x16xf32> to vector<16x16xf32>
    %335 = vector.shape_cast %332 : vector<16x16xf32> to vector<16x1x16xf32>
    tpu.vector_store %arg11[%c0_381, %c3_382, %c0_383], %335 {strides = array<i32>} : memref<16x4x16xf32, #tpu.memory_space<vmem>>, vector<16x1x16xf32>,
    %c0_384 = arith.constant 0 : index
    %c0_385 = arith.constant 0 : index
    %c0_386 = arith.constant 0 : index
    %336 = vector.load %arg11[%c0_384, %c0_385, %c0_386] : memref<16x4x16xf32, #tpu.memory_space<vmem>>, vector<1x4x16xf32>
    %337 = vector.shape_cast %336 : vector<1x4x16xf32> to vector<4x16xf32>
    %c1_387 = arith.constant 1 : index
    %c0_388 = arith.constant 0 : index
    %c0_389 = arith.constant 0 : index
    %338 = vector.load %arg11[%c1_387, %c0_388, %c0_389] : memref<16x4x16xf32, #tpu.memory_space<vmem>>, vector<1x4x16xf32>
    %339 = vector.shape_cast %338 : vector<1x4x16xf32> to vector<4x16xf32>
    %340 = arith.maximumf %337, %339 : vector<4x16xf32>
    %c0_390 = arith.constant 0 : index
    %c0_391 = arith.constant 0 : index
    %c0_392 = arith.constant 0 : index
    %341 = vector.load %arg3[%c0_390, %c0_391, %c0_392] : memref<8x4x16xf32, #tpu.memory_space<vmem>>, vector<1x4x16xf32>
    %342 = vector.shape_cast %341 : vector<1x4x16xf32> to vector<4x16xf32>
    %343 = vector.shape_cast %340 : vector<4x16xf32> to vector<1x4x16xf32>
    tpu.vector_store %arg3[%c0_390, %c0_391, %c0_392], %343 {strides = array<i32>} : memref<8x4x16xf32, #tpu.memory_space<vmem>>, vector<1x4x16xf32>,
    %c2_393 = arith.constant 2 : index
    %c0_394 = arith.constant 0 : index
    %c0_395 = arith.constant 0 : index
    %344 = vector.load %arg11[%c2_393, %c0_394, %c0_395] : memref<16x4x16xf32, #tpu.memory_space<vmem>>, vector<1x4x16xf32>
    %345 = vector.shape_cast %344 : vector<1x4x16xf32> to vector<4x16xf32>
    %c3_396 = arith.constant 3 : index
    %c0_397 = arith.constant 0 : index
    %c0_398 = arith.constant 0 : index
    %346 = vector.load %arg11[%c3_396, %c0_397, %c0_398] : memref<16x4x16xf32, #tpu.memory_space<vmem>>, vector<1x4x16xf32>
    %347 = vector.shape_cast %346 : vector<1x4x16xf32> to vector<4x16xf32>
    %348 = arith.maximumf %345, %347 : vector<4x16xf32>
    %c1_399 = arith.constant 1 : index
    %c0_400 = arith.constant 0 : index
    %c0_401 = arith.constant 0 : index
    %349 = vector.load %arg3[%c1_399, %c0_400, %c0_401] : memref<8x4x16xf32, #tpu.memory_space<vmem>>, vector<1x4x16xf32>
    %350 = vector.shape_cast %349 : vector<1x4x16xf32> to vector<4x16xf32>
    %351 = vector.shape_cast %348 : vector<4x16xf32> to vector<1x4x16xf32>
    tpu.vector_store %arg3[%c1_399, %c0_400, %c0_401], %351 {strides = array<i32>} : memref<8x4x16xf32, #tpu.memory_space<vmem>>, vector<1x4x16xf32>,
    %c4_402 = arith.constant 4 : index
    %c0_403 = arith.constant 0 : index
    %c0_404 = arith.constant 0 : index
    %352 = vector.load %arg11[%c4_402, %c0_403, %c0_404] : memref<16x4x16xf32, #tpu.memory_space<vmem>>, vector<1x4x16xf32>
    %353 = vector.shape_cast %352 : vector<1x4x16xf32> to vector<4x16xf32>
    %c5_405 = arith.constant 5 : index
    %c0_406 = arith.constant 0 : index
    %c0_407 = arith.constant 0 : index
    %354 = vector.load %arg11[%c5_405, %c0_406, %c0_407] : memref<16x4x16xf32, #tpu.memory_space<vmem>>, vector<1x4x16xf32>
    %355 = vector.shape_cast %354 : vector<1x4x16xf32> to vector<4x16xf32>
    %356 = arith.maximumf %353, %355 : vector<4x16xf32>
    %c2_408 = arith.constant 2 : index
    %c0_409 = arith.constant 0 : index
    %c0_410 = arith.constant 0 : index
    %357 = vector.load %arg3[%c2_408, %c0_409, %c0_410] : memref<8x4x16xf32, #tpu.memory_space<vmem>>, vector<1x4x16xf32>
    %358 = vector.shape_cast %357 : vector<1x4x16xf32> to vector<4x16xf32>
    %359 = vector.shape_cast %356 : vector<4x16xf32> to vector<1x4x16xf32>
    tpu.vector_store %arg3[%c2_408, %c0_409, %c0_410], %359 {strides = array<i32>} : memref<8x4x16xf32, #tpu.memory_space<vmem>>, vector<1x4x16xf32>,
    %c6_411 = arith.constant 6 : index
    %c0_412 = arith.constant 0 : index
    %c0_413 = arith.constant 0 : index
    %360 = vector.load %arg11[%c6_411, %c0_412, %c0_413] : memref<16x4x16xf32, #tpu.memory_space<vmem>>, vector<1x4x16xf32>
    %361 = vector.shape_cast %360 : vector<1x4x16xf32> to vector<4x16xf32>
    %c7_414 = arith.constant 7 : index
    %c0_415 = arith.constant 0 : index
    %c0_416 = arith.constant 0 : index
    %362 = vector.load %arg11[%c7_414, %c0_415, %c0_416] : memref<16x4x16xf32, #tpu.memory_space<vmem>>, vector<1x4x16xf32>
    %363 = vector.shape_cast %362 : vector<1x4x16xf32> to vector<4x16xf32>
    %364 = arith.maximumf %361, %363 : vector<4x16xf32>
    %c3_417 = arith.constant 3 : index
    %c0_418 = arith.constant 0 : index
    %c0_419 = arith.constant 0 : index
    %365 = vector.load %arg3[%c3_417, %c0_418, %c0_419] : memref<8x4x16xf32, #tpu.memory_space<vmem>>, vector<1x4x16xf32>
    %366 = vector.shape_cast %365 : vector<1x4x16xf32> to vector<4x16xf32>
    %367 = vector.shape_cast %364 : vector<4x16xf32> to vector<1x4x16xf32>
    tpu.vector_store %arg3[%c3_417, %c0_418, %c0_419], %367 {strides = array<i32>} : memref<8x4x16xf32, #tpu.memory_space<vmem>>, vector<1x4x16xf32>,
    %c8_420 = arith.constant 8 : index
    %c0_421 = arith.constant 0 : index
    %c0_422 = arith.constant 0 : index
    %368 = vector.load %arg11[%c8_420, %c0_421, %c0_422] : memref<16x4x16xf32, #tpu.memory_space<vmem>>, vector<1x4x16xf32>
    %369 = vector.shape_cast %368 : vector<1x4x16xf32> to vector<4x16xf32>
    %c9_423 = arith.constant 9 : index
    %c0_424 = arith.constant 0 : index
    %c0_425 = arith.constant 0 : index
    %370 = vector.load %arg11[%c9_423, %c0_424, %c0_425] : memref<16x4x16xf32, #tpu.memory_space<vmem>>, vector<1x4x16xf32>
    %371 = vector.shape_cast %370 : vector<1x4x16xf32> to vector<4x16xf32>
    %372 = arith.maximumf %369, %371 : vector<4x16xf32>
    %c4_426 = arith.constant 4 : index
    %c0_427 = arith.constant 0 : index
    %c0_428 = arith.constant 0 : index
    %373 = vector.load %arg3[%c4_426, %c0_427, %c0_428] : memref<8x4x16xf32, #tpu.memory_space<vmem>>, vector<1x4x16xf32>
    %374 = vector.shape_cast %373 : vector<1x4x16xf32> to vector<4x16xf32>
    %375 = vector.shape_cast %372 : vector<4x16xf32> to vector<1x4x16xf32>
    tpu.vector_store %arg3[%c4_426, %c0_427, %c0_428], %375 {strides = array<i32>} : memref<8x4x16xf32, #tpu.memory_space<vmem>>, vector<1x4x16xf32>,
    %c10_429 = arith.constant 10 : index
    %c0_430 = arith.constant 0 : index
    %c0_431 = arith.constant 0 : index
    %376 = vector.load %arg11[%c10_429, %c0_430, %c0_431] : memref<16x4x16xf32, #tpu.memory_space<vmem>>, vector<1x4x16xf32>
    %377 = vector.shape_cast %376 : vector<1x4x16xf32> to vector<4x16xf32>
    %c11_432 = arith.constant 11 : index
    %c0_433 = arith.constant 0 : index
    %c0_434 = arith.constant 0 : index
    %378 = vector.load %arg11[%c11_432, %c0_433, %c0_434] : memref<16x4x16xf32, #tpu.memory_space<vmem>>, vector<1x4x16xf32>
    %379 = vector.shape_cast %378 : vector<1x4x16xf32> to vector<4x16xf32>
    %380 = arith.maximumf %377, %379 : vector<4x16xf32>
    %c5_435 = arith.constant 5 : index
    %c0_436 = arith.constant 0 : index
    %c0_437 = arith.constant 0 : index
    %381 = vector.load %arg3[%c5_435, %c0_436, %c0_437] : memref<8x4x16xf32, #tpu.memory_space<vmem>>, vector<1x4x16xf32>
    %382 = vector.shape_cast %381 : vector<1x4x16xf32> to vector<4x16xf32>
    %383 = vector.shape_cast %380 : vector<4x16xf32> to vector<1x4x16xf32>
    tpu.vector_store %arg3[%c5_435, %c0_436, %c0_437], %383 {strides = array<i32>} : memref<8x4x16xf32, #tpu.memory_space<vmem>>, vector<1x4x16xf32>,
    %c12_438 = arith.constant 12 : index
    %c0_439 = arith.constant 0 : index
    %c0_440 = arith.constant 0 : index
    %384 = vector.load %arg11[%c12_438, %c0_439, %c0_440] : memref<16x4x16xf32, #tpu.memory_space<vmem>>, vector<1x4x16xf32>
    %385 = vector.shape_cast %384 : vector<1x4x16xf32> to vector<4x16xf32>
    %c13_441 = arith.constant 13 : index
    %c0_442 = arith.constant 0 : index
    %c0_443 = arith.constant 0 : index
    %386 = vector.load %arg11[%c13_441, %c0_442, %c0_443] : memref<16x4x16xf32, #tpu.memory_space<vmem>>, vector<1x4x16xf32>
    %387 = vector.shape_cast %386 : vector<1x4x16xf32> to vector<4x16xf32>
    %388 = arith.maximumf %385, %387 : vector<4x16xf32>
    %c6_444 = arith.constant 6 : index
    %c0_445 = arith.constant 0 : index
    %c0_446 = arith.constant 0 : index
    %389 = vector.load %arg3[%c6_444, %c0_445, %c0_446] : memref<8x4x16xf32, #tpu.memory_space<vmem>>, vector<1x4x16xf32>
    %390 = vector.shape_cast %389 : vector<1x4x16xf32> to vector<4x16xf32>
    %391 = vector.shape_cast %388 : vector<4x16xf32> to vector<1x4x16xf32>
    tpu.vector_store %arg3[%c6_444, %c0_445, %c0_446], %391 {strides = array<i32>} : memref<8x4x16xf32, #tpu.memory_space<vmem>>, vector<1x4x16xf32>,
    %c14_447 = arith.constant 14 : index
    %c0_448 = arith.constant 0 : index
    %c0_449 = arith.constant 0 : index
    %392 = vector.load %arg11[%c14_447, %c0_448, %c0_449] : memref<16x4x16xf32, #tpu.memory_space<vmem>>, vector<1x4x16xf32>
    %393 = vector.shape_cast %392 : vector<1x4x16xf32> to vector<4x16xf32>
    %c15_450 = arith.constant 15 : index
    %c0_451 = arith.constant 0 : index
    %c0_452 = arith.constant 0 : index
    %394 = vector.load %arg11[%c15_450, %c0_451, %c0_452] : memref<16x4x16xf32, #tpu.memory_space<vmem>>, vector<1x4x16xf32>
    %395 = vector.shape_cast %394 : vector<1x4x16xf32> to vector<4x16xf32>
    %396 = arith.maximumf %393, %395 : vector<4x16xf32>
    %c7_453 = arith.constant 7 : index
    %c0_454 = arith.constant 0 : index
    %c0_455 = arith.constant 0 : index
    %397 = vector.load %arg3[%c7_453, %c0_454, %c0_455] : memref<8x4x16xf32, #tpu.memory_space<vmem>>, vector<1x4x16xf32>
    %398 = vector.shape_cast %397 : vector<1x4x16xf32> to vector<4x16xf32>
    %399 = vector.shape_cast %396 : vector<4x16xf32> to vector<1x4x16xf32>
    tpu.vector_store %arg3[%c7_453, %c0_454, %c0_455], %399 {strides = array<i32>} : memref<8x4x16xf32, #tpu.memory_space<vmem>>, vector<1x4x16xf32>,
    return
  }
}

</mosaic_0001>

<llo_original>
// kernel: convnet_forward.1
$region0: #{convnet_forward.1}
  #allocation0 [shape = 'u32[]', space=smem, size = 0x4, offset = 0x4, fixed_abs, tag = 'smem constant byte address 0x4 - core index']
  #allocation1 [shape = 'u32[72,128]{1,0:T(1,128)}', space=vmem, size = 0x9000, scoped, tag = 'internal scratch']
  #allocation2 [shape = 'f32[2,18,18,3]{3,2,1,0:T(8,128)}', space=vmem, size = 0x6c000, scoped, tag = 'scratch operand']
  #allocation3 [shape = 'f32[512,27]{1,0:T(8,128)}', space=vmem, size = 0x40000, scoped, tag = 'scratch operand']
  #allocation4 [shape = 'f32[32,16,8]{2,1,0:T(8,128)}', space=vmem, size = 0x40000, scoped, tag = 'scratch operand']
  #allocation5 [shape = 'f32[32,8,8]{2,1,0:T(8,128)}', space=vmem, size = 0x20000, scoped, tag = 'scratch operand']
  #allocation6 [shape = 'f32[2,10,10,8]{3,2,1,0:T(8,128)}', space=vmem, size = 0x28000, scoped, tag = 'scratch operand']
  #allocation7 [shape = 'f32[128,72]{1,0:T(8,128)}', space=vmem, size = 0x10000, scoped, tag = 'scratch operand']
  #allocation8 [shape = 'f32[16,8,16]{2,1,0:T(8,128)}', space=vmem, size = 0x10000, scoped, tag = 'scratch operand']
  #allocation9 [shape = 'f32[16,4,16]{2,1,0:T(4,128)}', space=vmem, size = 0x8000, scoped, tag = 'scratch operand']
  %s0 = inlined_call_operand.vmem [shape: f32[2,16,16,3], index: 0, kind: input, shape index: {}]
  %s1 = inlined_call_operand.vmem [shape: bf16[27,8], index: 1, kind: input, shape index: {}]
  %s2 = inlined_call_operand.vmem [shape: bf16[72,16], index: 2, kind: input, shape index: {}]
  %s3 = inlined_call_operand.vmem [shape: f32[8,4,16], index: 3, kind: output, shape index: {}]
  %s4 = sld [smem:[#allocation0]]
  $region22: #{convnet_forward.1} parent=0
    _
  %s6 = ssub.s32 1, %s4
  %s7 = scalar_select 0, %s6, %s4
  // Predicated region
  $region2: #{convnet_forward.1} parent=0 // pred_check
    _
  $region3: #{convnet_forward.1} parent=0 // pred_check_branch
    %9 = sbr.rel (0) target = $region5
  $region4: #{convnet_forward.1} parent=0 // pred_region
    _
  $region5: #{convnet_forward.1} parent=0 // pred_fallthru
    _
  // Predicated region
  $region6: #{convnet_forward.1} parent=0 // pred_check
    _
  $region7: #{convnet_forward.1} parent=0 // pred_check_branch
    %11 = sbr.rel (0) target = $region9
  $region8: #{convnet_forward.1} parent=0 // pred_region
    _
  $region9: #{convnet_forward.1} parent=0 // pred_fallthru
    _
  // Predicated region
  $region10: #{convnet_forward.1} parent=0 // pred_check
    _
  $region11: #{convnet_forward.1} parent=0 // pred_check_branch
    %13 = sbr.rel (0) target = $region13
  $region12: #{convnet_forward.1} parent=0 // pred_region
    _
  $region13: #{convnet_forward.1} parent=0 // pred_fallthru
    _
  %vm15 = vcmask 23552
  %16 = vst.msk [vmem:[#allocation2] sm:$0xff] %vm15, 0.0
  %17 = vst.msk [vmem:[#allocation2 + $0x8] sm:$0xff] %vm15, 0.0
  %vm18 = vcmask 17408
  %19 = vst.msk [vmem:[#allocation2 + $0x10] sm:$0x3] %vm18, 0.0
  %20 = vst.msk [vmem:[#allocation2 + $0x18] sm:$0xff] %vm15, 0.0
  %21 = vst.msk [vmem:[#allocation2 + $0x20] sm:$0xff] %vm15, 0.0
  %22 = vst.msk [vmem:[#allocation2 + $0x28] sm:$0x3] %vm18, 0.0
  %23 = vst.msk [vmem:[#allocation2 + $0x30] sm:$0xff] %vm15, 0.0
  %24 = vst.msk [vmem:[#allocation2 + $0x38] sm:$0xff] %vm15, 0.0
  %25 = vst.msk [vmem:[#allocation2 + $0x40] sm:$0x3] %vm18, 0.0
  %26 = vst.msk [vmem:[#allocation2 + $0x48] sm:$0xff] %vm15, 0.0
  %27 = vst.msk [vmem:[#allocation2 + $0x50] sm:$0xff] %vm15, 0.0
  %28 = vst.msk [vmem:[#allocation2 + $0x58] sm:$0x3] %vm18, 0.0
  %29 = vst.msk [vmem:[#allocation2 + $0x60] sm:$0xff] %vm15, 0.0
  %30 = vst.msk [vmem:[#allocation2 + $0x68] sm:$0xff] %vm15, 0.0
  %31 = vst.msk [vmem:[#allocation2 + $0x70] sm:$0x3] %vm18, 0.0
  %32 = vst.msk [vmem:[#allocation2 + $0x78] sm:$0xff] %vm15, 0.0
  %33 = vst.msk [vmem:[#allocation2 + $0x80] sm:$0xff] %vm15, 0.0
  %34 = vst.msk [vmem:[#allocation2 + $0x88] sm:$0x3] %vm18, 0.0
  %35 = vst.msk [vmem:[#allocation2 + $0x90] sm:$0xff] %vm15, 0.0
  %36 = vst.msk [vmem:[#allocation2 + $0x98] sm:$0xff] %vm15, 0.0
  %37 = vst.msk [vmem:[#allocation2 + $0xa0] sm:$0x3] %vm18, 0.0
  %38 = vst.msk [vmem:[#allocation2 + $0xa8] sm:$0xff] %vm15, 0.0
  %39 = vst.msk [vmem:[#allocation2 + $0xb0] sm:$0xff] %vm15, 0.0
  %40 = vst.msk [vmem:[#allocation2 + $0xb8] sm:$0x3] %vm18, 0.0
  %41 = vst.msk [vmem:[#allocation2 + $0xc0] sm:$0xff] %vm15, 0.0
  %42 = vst.msk [vmem:[#allocation2 + $0xc8] sm:$0xff] %vm15, 0.0
  %43 = vst.msk [vmem:[#allocation2 + $0xd0] sm:$0x3] %vm18, 0.0
  %44 = vst.msk [vmem:[#allocation2 + $0xd8] sm:$0xff] %vm15, 0.0
  %45 = vst.msk [vmem:[#allocation2 + $0xe0] sm:$0xff] %vm15, 0.0
  %46 = vst.msk [vmem:[#allocation2 + $0xe8] sm:$0x3] %vm18, 0.0
  %47 = vst.msk [vmem:[#allocation2 + $0xf0] sm:$0xff] %vm15, 0.0
  %48 = vst.msk [vmem:[#allocation2 + $0xf8] sm:$0xff] %vm15, 0.0
  %49 = vst.msk [vmem:[#allocation2 + $0x100] sm:$0x3] %vm18, 0.0
  %50 = vst.msk [vmem:[#allocation2 + $0x108] sm:$0xff] %vm15, 0.0
  %51 = vst.msk [vmem:[#allocation2 + $0x110] sm:$0xff] %vm15, 0.0
  %52 = vst.msk [vmem:[#allocation2 + $0x118] sm:$0x3] %vm18, 0.0
  %53 = vst.msk [vmem:[#allocation2 + $0x120] sm:$0xff] %vm15, 0.0
  %54 = vst.msk [vmem:[#allocation2 + $0x128] sm:$0xff] %vm15, 0.0
  %55 = vst.msk [vmem:[#allocation2 + $0x130] sm:$0x3] %vm18, 0.0
  %56 = vst.msk [vmem:[#allocation2 + $0x138] sm:$0xff] %vm15, 0.0
  %57 = vst.msk [vmem:[#allocation2 + $0x140] sm:$0xff] %vm15, 0.0
  %58 = vst.msk [vmem:[#allocation2 + $0x148] sm:$0x3] %vm18, 0.0
  %59 = vst.msk [vmem:[#allocation2 + $0x150] sm:$0xff] %vm15, 0.0
  %60 = vst.msk [vmem:[#allocation2 + $0x158] sm:$0xff] %vm15, 0.0
  %61 = vst.msk [vmem:[#allocation2 + $0x160] sm:$0x3] %vm18, 0.0
  %62 = vst.msk [vmem:[#allocation2 + $0x168] sm:$0xff] %vm15, 0.0
  %63 = vst.msk [vmem:[#allocation2 + $0x170] sm:$0xff] %vm15, 0.0
  %64 = vst.msk [vmem:[#allocation2 + $0x178] sm:$0x3] %vm18, 0.0
  %65 = vst.msk [vmem:[#allocation2 + $0x180] sm:$0xff] %vm15, 0.0
  %66 = vst.msk [vmem:[#allocation2 + $0x188] sm:$0xff] %vm15, 0.0
  %67 = vst.msk [vmem:[#allocation2 + $0x190] sm:$0x3] %vm18, 0.0
  %68 = vst.msk [vmem:[#allocation2 + $0x198] sm:$0xff] %vm15, 0.0
  %69 = vst.msk [vmem:[#allocation2 + $0x1a0] sm:$0xff] %vm15, 0.0
  %70 = vst.msk [vmem:[#allocation2 + $0x1a8] sm:$0x3] %vm18, 0.0
  %71 = vst.msk [vmem:[#allocation2 + $0x1b0] sm:$0xff] %vm15, 0.0
  %72 = vst.msk [vmem:[#allocation2 + $0x1b8] sm:$0xff] %vm15, 0.0
  %73 = vst.msk [vmem:[#allocation2 + $0x1c0] sm:$0x3] %vm18, 0.0
  %74 = vst.msk [vmem:[#allocation2 + $0x1c8] sm:$0xff] %vm15, 0.0
  %75 = vst.msk [vmem:[#allocation2 + $0x1d0] sm:$0xff] %vm15, 0.0
  %76 = vst.msk [vmem:[#allocation2 + $0x1d8] sm:$0x3] %vm18, 0.0
  %77 = vst.msk [vmem:[#allocation2 + $0x1e0] sm:$0xff] %vm15, 0.0
  %78 = vst.msk [vmem:[#allocation2 + $0x1e8] sm:$0xff] %vm15, 0.0
  %79 = vst.msk [vmem:[#allocation2 + $0x1f0] sm:$0x3] %vm18, 0.0
  %80 = vst.msk [vmem:[#allocation2 + $0x1f8] sm:$0xff] %vm15, 0.0
  %81 = vst.msk [vmem:[#allocation2 + $0x200] sm:$0xff] %vm15, 0.0
  %82 = vst.msk [vmem:[#allocation2 + $0x208] sm:$0x3] %vm18, 0.0
  %83 = vst.msk [vmem:[#allocation2 + $0x210] sm:$0xff] %vm15, 0.0
  %84 = vst.msk [vmem:[#allocation2 + $0x218] sm:$0xff] %vm15, 0.0
  %85 = vst.msk [vmem:[#allocation2 + $0x220] sm:$0x3] %vm18, 0.0
  %86 = vst.msk [vmem:[#allocation2 + $0x228] sm:$0xff] %vm15, 0.0
  %87 = vst.msk [vmem:[#allocation2 + $0x230] sm:$0xff] %vm15, 0.0
  %88 = vst.msk [vmem:[#allocation2 + $0x238] sm:$0x3] %vm18, 0.0
  %89 = vst.msk [vmem:[#allocation2 + $0x240] sm:$0xff] %vm15, 0.0
  %90 = vst.msk [vmem:[#allocation2 + $0x248] sm:$0xff] %vm15, 0.0
  %91 = vst.msk [vmem:[#allocation2 + $0x250] sm:$0x3] %vm18, 0.0
  %92 = vst.msk [vmem:[#allocation2 + $0x258] sm:$0xff] %vm15, 0.0
  %93 = vst.msk [vmem:[#allocation2 + $0x260] sm:$0xff] %vm15, 0.0
  %94 = vst.msk [vmem:[#allocation2 + $0x268] sm:$0x3] %vm18, 0.0
  %95 = vst.msk [vmem:[#allocation2 + $0x270] sm:$0xff] %vm15, 0.0
  %96 = vst.msk [vmem:[#allocation2 + $0x278] sm:$0xff] %vm15, 0.0
  %97 = vst.msk [vmem:[#allocation2 + $0x280] sm:$0x3] %vm18, 0.0
  %98 = vst.msk [vmem:[#allocation2 + $0x288] sm:$0xff] %vm15, 0.0
  %99 = vst.msk [vmem:[#allocation2 + $0x290] sm:$0xff] %vm15, 0.0
  %100 = vst.msk [vmem:[#allocation2 + $0x298] sm:$0x3] %vm18, 0.0
  %101 = vst.msk [vmem:[#allocation2 + $0x2a0] sm:$0xff] %vm15, 0.0
  %102 = vst.msk [vmem:[#allocation2 + $0x2a8] sm:$0xff] %vm15, 0.0
  %103 = vst.msk [vmem:[#allocation2 + $0x2b0] sm:$0x3] %vm18, 0.0
  %104 = vst.msk [vmem:[#allocation2 + $0x2b8] sm:$0xff] %vm15, 0.0
  %105 = vst.msk [vmem:[#allocation2 + $0x2c0] sm:$0xff] %vm15, 0.0
  %106 = vst.msk [vmem:[#allocation2 + $0x2c8] sm:$0x3] %vm18, 0.0
  %107 = vst.msk [vmem:[#allocation2 + $0x2d0] sm:$0xff] %vm15, 0.0
  %108 = vst.msk [vmem:[#allocation2 + $0x2d8] sm:$0xff] %vm15, 0.0
  %109 = vst.msk [vmem:[#allocation2 + $0x2e0] sm:$0x3] %vm18, 0.0
  %110 = vst.msk [vmem:[#allocation2 + $0x2e8] sm:$0xff] %vm15, 0.0
  %111 = vst.msk [vmem:[#allocation2 + $0x2f0] sm:$0xff] %vm15, 0.0
  %112 = vst.msk [vmem:[#allocation2 + $0x2f8] sm:$0x3] %vm18, 0.0
  %113 = vst.msk [vmem:[#allocation2 + $0x300] sm:$0xff] %vm15, 0.0
  %114 = vst.msk [vmem:[#allocation2 + $0x308] sm:$0xff] %vm15, 0.0
  %115 = vst.msk [vmem:[#allocation2 + $0x310] sm:$0x3] %vm18, 0.0
  %116 = vst.msk [vmem:[#allocation2 + $0x318] sm:$0xff] %vm15, 0.0
  %117 = vst.msk [vmem:[#allocation2 + $0x320] sm:$0xff] %vm15, 0.0
  %118 = vst.msk [vmem:[#allocation2 + $0x328] sm:$0x3] %vm18, 0.0
  %119 = vst.msk [vmem:[#allocation2 + $0x330] sm:$0xff] %vm15, 0.0
  %120 = vst.msk [vmem:[#allocation2 + $0x338] sm:$0xff] %vm15, 0.0
  %121 = vst.msk [vmem:[#allocation2 + $0x340] sm:$0x3] %vm18, 0.0
  %122 = vst.msk [vmem:[#allocation2 + $0x348] sm:$0xff] %vm15, 0.0
  %123 = vst.msk [vmem:[#allocation2 + $0x350] sm:$0xff] %vm15, 0.0
  %124 = vst.msk [vmem:[#allocation2 + $0x358] sm:$0x3] %vm18, 0.0
  %vm125 = vcmask 64512
  %126 = vst.msk [vmem:[#allocation6] sm:$0xff] %vm125, 0.0
  %vm127 = vcmask 58368
  %128 = vst.msk [vmem:[#allocation6 + $0x8] sm:$0x3] %vm127, 0.0
  %129 = vst.msk [vmem:[#allocation6 + $0x10] sm:$0xff] %vm125, 0.0
  %130 = vst.msk [vmem:[#allocation6 + $0x18] sm:$0x3] %vm127, 0.0
  %131 = vst.msk [vmem:[#allocation6 + $0x20] sm:$0xff] %vm125, 0.0
  %132 = vst.msk [vmem:[#allocation6 + $0x28] sm:$0x3] %vm127, 0.0
  %133 = vst.msk [vmem:[#allocation6 + $0x30] sm:$0xff] %vm125, 0.0
  %134 = vst.msk [vmem:[#allocation6 + $0x38] sm:$0x3] %vm127, 0.0
  %135 = vst.msk [vmem:[#allocation6 + $0x40] sm:$0xff] %vm125, 0.0
  %136 = vst.msk [vmem:[#allocation6 + $0x48] sm:$0x3] %vm127, 0.0
  %137 = vst.msk [vmem:[#allocation6 + $0x50] sm:$0xff] %vm125, 0.0
  %138 = vst.msk [vmem:[#allocation6 + $0x58] sm:$0x3] %vm127, 0.0
  %139 = vst.msk [vmem:[#allocation6 + $0x60] sm:$0xff] %vm125, 0.0
  %140 = vst.msk [vmem:[#allocation6 + $0x68] sm:$0x3] %vm127, 0.0
  %141 = vst.msk [vmem:[#allocation6 + $0x70] sm:$0xff] %vm125, 0.0
  %142 = vst.msk [vmem:[#allocation6 + $0x78] sm:$0x3] %vm127, 0.0
  %143 = vst.msk [vmem:[#allocation6 + $0x80] sm:$0xff] %vm125, 0.0
  %144 = vst.msk [vmem:[#allocation6 + $0x88] sm:$0x3] %vm127, 0.0
  %145 = vst.msk [vmem:[#allocation6 + $0x90] sm:$0xff] %vm125, 0.0
  %146 = vst.msk [vmem:[#allocation6 + $0x98] sm:$0x3] %vm127, 0.0
  %147 = vst.msk [vmem:[#allocation6 + $0xa0] sm:$0xff] %vm125, 0.0
  %148 = vst.msk [vmem:[#allocation6 + $0xa8] sm:$0x3] %vm127, 0.0
  %149 = vst.msk [vmem:[#allocation6 + $0xb0] sm:$0xff] %vm125, 0.0
  %150 = vst.msk [vmem:[#allocation6 + $0xb8] sm:$0x3] %vm127, 0.0
  %151 = vst.msk [vmem:[#allocation6 + $0xc0] sm:$0xff] %vm125, 0.0
  %152 = vst.msk [vmem:[#allocation6 + $0xc8] sm:$0x3] %vm127, 0.0
  %153 = vst.msk [vmem:[#allocation6 + $0xd0] sm:$0xff] %vm125, 0.0
  %154 = vst.msk [vmem:[#allocation6 + $0xd8] sm:$0x3] %vm127, 0.0
  %155 = vst.msk [vmem:[#allocation6 + $0xe0] sm:$0xff] %vm125, 0.0
  %156 = vst.msk [vmem:[#allocation6 + $0xe8] sm:$0x3] %vm127, 0.0
  %157 = vst.msk [vmem:[#allocation6 + $0xf0] sm:$0xff] %vm125, 0.0
  %158 = vst.msk [vmem:[#allocation6 + $0xf8] sm:$0x3] %vm127, 0.0
  %159 = vst.msk [vmem:[#allocation6 + $0x100] sm:$0xff] %vm125, 0.0
  %160 = vst.msk [vmem:[#allocation6 + $0x108] sm:$0x3] %vm127, 0.0
  %161 = vst.msk [vmem:[#allocation6 + $0x110] sm:$0xff] %vm125, 0.0
  %162 = vst.msk [vmem:[#allocation6 + $0x118] sm:$0x3] %vm127, 0.0
  %163 = vst.msk [vmem:[#allocation6 + $0x120] sm:$0xff] %vm125, 0.0
  %164 = vst.msk [vmem:[#allocation6 + $0x128] sm:$0x3] %vm127, 0.0
  %165 = vst.msk [vmem:[#allocation6 + $0x130] sm:$0xff] %vm125, 0.0
  %166 = vst.msk [vmem:[#allocation6 + $0x138] sm:$0x3] %vm127, 0.0
  %v167 = vld [vmem:[%s0] sm:$0xff]
  %v168 = vld [vmem:[%s0 + $0x8] sm:$0xff]
  %v169 = vld [vmem:[%s0 + $0x10] sm:$0xff]
  %v170 = vld [vmem:[%s0 + $0x18] sm:$0xff]
  %v171 = vld [vmem:[%s0 + $0x20] sm:$0xff]
  %v172 = vld [vmem:[%s0 + $0x28] sm:$0xff]
  %v173 = vld [vmem:[%s0 + $0x30] sm:$0xff]
  %v174 = vld [vmem:[%s0 + $0x38] sm:$0xff]
  %v175 = vld [vmem:[%s0 + $0x40] sm:$0xff]
  %v176 = vld [vmem:[%s0 + $0x48] sm:$0xff]
  %v177 = vld [vmem:[%s0 + $0x50] sm:$0xff]
  %v178 = vld [vmem:[%s0 + $0x58] sm:$0xff]
  %v179 = vld [vmem:[%s0 + $0x60] sm:$0xff]
  %v180 = vld [vmem:[%s0 + $0x68] sm:$0xff]
  %v181 = vld [vmem:[%s0 + $0x70] sm:$0xff]
  %v182 = vld [vmem:[%s0 + $0x78] sm:$0xff]
  %v183 = vld [vmem:[%s0 + $0x80] sm:$0xff]
  %v184 = vld [vmem:[%s0 + $0x88] sm:$0xff]
  %v185 = vld [vmem:[%s0 + $0x90] sm:$0xff]
  %v186 = vld [vmem:[%s0 + $0x98] sm:$0xff]
  %v187 = vld [vmem:[%s0 + $0xa0] sm:$0xff]
  %v188 = vld [vmem:[%s0 + $0xa8] sm:$0xff]
  %v189 = vld [vmem:[%s0 + $0xb0] sm:$0xff]
  %v190 = vld [vmem:[%s0 + $0xb8] sm:$0xff]
  %v191 = vld [vmem:[%s0 + $0xc0] sm:$0xff]
  %v192 = vld [vmem:[%s0 + $0xc8] sm:$0xff]
  %v193 = vld [vmem:[%s0 + $0xd0] sm:$0xff]
  %v194 = vld [vmem:[%s0 + $0xd8] sm:$0xff]
  %v195 = vld [vmem:[%s0 + $0xe0] sm:$0xff]
  %v196 = vld [vmem:[%s0 + $0xe8] sm:$0xff]
  %v197 = vld [vmem:[%s0 + $0xf0] sm:$0xff]
  %v198 = vld [vmem:[%s0 + $0xf8] sm:$0xff]
  %v199 = vld [vmem:[%s0 + $0x100] sm:$0xff]
  %v200 = vld [vmem:[%s0 + $0x108] sm:$0xff]
  %v201 = vld [vmem:[%s0 + $0x110] sm:$0xff]
  %v202 = vld [vmem:[%s0 + $0x118] sm:$0xff]
  %v203 = vld [vmem:[%s0 + $0x120] sm:$0xff]
  %v204 = vld [vmem:[%s0 + $0x128] sm:$0xff]
  %v205 = vld [vmem:[%s0 + $0x130] sm:$0xff]
  %v206 = vld [vmem:[%s0 + $0x138] sm:$0xff]
  %v207 = vld [vmem:[%s0 + $0x140] sm:$0xff]
  %v208 = vld [vmem:[%s0 + $0x148] sm:$0xff]
  %v209 = vld [vmem:[%s0 + $0x150] sm:$0xff]
  %v210 = vld [vmem:[%s0 + $0x158] sm:$0xff]
  %v211 = vld [vmem:[%s0 + $0x160] sm:$0xff]
  %v212 = vld [vmem:[%s0 + $0x168] sm:$0xff]
  %v213 = vld [vmem:[%s0 + $0x170] sm:$0xff]
  %v214 = vld [vmem:[%s0 + $0x178] sm:$0xff]
  %v215 = vld [vmem:[%s0 + $0x180] sm:$0xff]
  %v216 = vld [vmem:[%s0 + $0x188] sm:$0xff]
  %v217 = vld [vmem:[%s0 + $0x190] sm:$0xff]
  %v218 = vld [vmem:[%s0 + $0x198] sm:$0xff]
  %v219 = vld [vmem:[%s0 + $0x1a0] sm:$0xff]
  %v220 = vld [vmem:[%s0 + $0x1a8] sm:$0xff]
  %v221 = vld [vmem:[%s0 + $0x1b0] sm:$0xff]
  %v222 = vld [vmem:[%s0 + $0x1b8] sm:$0xff]
  %v223 = vld [vmem:[%s0 + $0x1c0] sm:$0xff]
  %v224 = vld [vmem:[%s0 + $0x1c8] sm:$0xff]
  %v225 = vld [vmem:[%s0 + $0x1d0] sm:$0xff]
  %v226 = vld [vmem:[%s0 + $0x1d8] sm:$0xff]
  %v227 = vld [vmem:[%s0 + $0x1e0] sm:$0xff]
  %v228 = vld [vmem:[%s0 + $0x1e8] sm:$0xff]
  %v229 = vld [vmem:[%s0 + $0x1f0] sm:$0xff]
  %v230 = vld [vmem:[%s0 + $0x1f8] sm:$0xff]
  %s231 = scalar_lea.vmem [#allocation2], 24
  %232 = vst.msk [vmem:[%s231 + $0x1] sm:$0xff] %vm15, %v167
  %233 = vst.msk [vmem:[%s231 + $0x9] sm:$0xff] %vm15, %v168
  %234 = vst.msk [vmem:[%s231 + $0x19] sm:$0xff] %vm15, %v169
  %235 = vst.msk [vmem:[%s231 + $0x21] sm:$0xff] %vm15, %v170
  %236 = vst.msk [vmem:[%s231 + $0x31] sm:$0xff] %vm15, %v171
  %237 = vst.msk [vmem:[%s231 + $0x39] sm:$0xff] %vm15, %v172
  %238 = vst.msk [vmem:[%s231 + $0x49] sm:$0xff] %vm15, %v173
  %239 = vst.msk [vmem:[%s231 + $0x51] sm:$0xff] %vm15, %v174
  %240 = vst.msk [vmem:[%s231 + $0x61] sm:$0xff] %vm15, %v175
  %241 = vst.msk [vmem:[%s231 + $0x69] sm:$0xff] %vm15, %v176
  %242 = vst.msk [vmem:[%s231 + $0x79] sm:$0xff] %vm15, %v177
  %243 = vst.msk [vmem:[%s231 + $0x81] sm:$0xff] %vm15, %v178
  %244 = vst.msk [vmem:[%s231 + $0x91] sm:$0xff] %vm15, %v179
  %245 = vst.msk [vmem:[%s231 + $0x99] sm:$0xff] %vm15, %v180
  %246 = vst.msk [vmem:[%s231 + $0xa9] sm:$0xff] %vm15, %v181
  %247 = vst.msk [vmem:[%s231 + $0xb1] sm:$0xff] %vm15, %v182
  %248 = vst.msk [vmem:[%s231 + $0xc1] sm:$0xff] %vm15, %v183
  %249 = vst.msk [vmem:[%s231 + $0xc9] sm:$0xff] %vm15, %v184
  %250 = vst.msk [vmem:[%s231 + $0xd9] sm:$0xff] %vm15, %v185
  %251 = vst.msk [vmem:[%s231 + $0xe1] sm:$0xff] %vm15, %v186
  %252 = vst.msk [vmem:[%s231 + $0xf1] sm:$0xff] %vm15, %v187
  %253 = vst.msk [vmem:[%s231 + $0xf9] sm:$0xff] %vm15, %v188
  %254 = vst.msk [vmem:[%s231 + $0x109] sm:$0xff] %vm15, %v189
  %255 = vst.msk [vmem:[%s231 + $0x111] sm:$0xff] %vm15, %v190
  %256 = vst.msk [vmem:[%s231 + $0x121] sm:$0xff] %vm15, %v191
  %257 = vst.msk [vmem:[%s231 + $0x129] sm:$0xff] %vm15, %v192
  %258 = vst.msk [vmem:[%s231 + $0x139] sm:$0xff] %vm15, %v193
  %259 = vst.msk [vmem:[%s231 + $0x141] sm:$0xff] %vm15, %v194
  %260 = vst.msk [vmem:[%s231 + $0x151] sm:$0xff] %vm15, %v195
  %261 = vst.msk [vmem:[%s231 + $0x159] sm:$0xff] %vm15, %v196
  %262 = vst.msk [vmem:[%s231 + $0x169] sm:$0xff] %vm15, %v197
  %263 = vst.msk [vmem:[%s231 + $0x171] sm:$0xff] %vm15, %v198
  %264 = vst.msk [vmem:[%s231 + $0x1b1] sm:$0xff] %vm15, %v199
  %265 = vst.msk [vmem:[%s231 + $0x1b9] sm:$0xff] %vm15, %v200
  %266 = vst.msk [vmem:[%s231 + $0x1c9] sm:$0xff] %vm15, %v201
  %267 = vst.msk [vmem:[%s231 + $0x1d1] sm:$0xff] %vm15, %v202
  %268 = vst.msk [vmem:[%s231 + $0x1e1] sm:$0xff] %vm15, %v203
  %269 = vst.msk [vmem:[%s231 + $0x1e9] sm:$0xff] %vm15, %v204
  %270 = vst.msk [vmem:[%s231 + $0x1f9] sm:$0xff] %vm15, %v205
  %271 = vst.msk [vmem:[%s231 + $0x201] sm:$0xff] %vm15, %v206
  %272 = vst.msk [vmem:[%s231 + $0x211] sm:$0xff] %vm15, %v207
  %273 = vst.msk [vmem:[%s231 + $0x219] sm:$0xff] %vm15, %v208
  %274 = vst.msk [vmem:[%s231 + $0x229] sm:$0xff] %vm15, %v209
  %275 = vst.msk [vmem:[%s231 + $0x231] sm:$0xff] %vm15, %v210
  %276 = vst.msk [vmem:[%s231 + $0x241] sm:$0xff] %vm15, %v211
  %277 = vst.msk [vmem:[%s231 + $0x249] sm:$0xff] %vm15, %v212
  %278 = vst.msk [vmem:[%s231 + $0x259] sm:$0xff] %vm15, %v213
  %279 = vst.msk [vmem:[%s231 + $0x261] sm:$0xff] %vm15, %v214
  %280 = vst.msk [vmem:[%s231 + $0x271] sm:$0xff] %vm15, %v215
  %281 = vst.msk [vmem:[%s231 + $0x279] sm:$0xff] %vm15, %v216
  %282 = vst.msk [vmem:[%s231 + $0x289] sm:$0xff] %vm15, %v217
  %283 = vst.msk [vmem:[%s231 + $0x291] sm:$0xff] %vm15, %v218
  %284 = vst.msk [vmem:[%s231 + $0x2a1] sm:$0xff] %vm15, %v219
  %285 = vst.msk [vmem:[%s231 + $0x2a9] sm:$0xff] %vm15, %v220
  %286 = vst.msk [vmem:[%s231 + $0x2b9] sm:$0xff] %vm15, %v221
  %287 = vst.msk [vmem:[%s231 + $0x2c1] sm:$0xff] %vm15, %v222
  %288 = vst.msk [vmem:[%s231 + $0x2d1] sm:$0xff] %vm15, %v223
  %289 = vst.msk [vmem:[%s231 + $0x2d9] sm:$0xff] %vm15, %v224
  %290 = vst.msk [vmem:[%s231 + $0x2e9] sm:$0xff] %vm15, %v225
  %291 = vst.msk [vmem:[%s231 + $0x2f1] sm:$0xff] %vm15, %v226
  %292 = vst.msk [vmem:[%s231 + $0x301] sm:$0xff] %vm15, %v227
  %293 = vst.msk [vmem:[%s231 + $0x309] sm:$0xff] %vm15, %v228
  %294 = vst.msk [vmem:[%s231 + $0x319] sm:$0xff] %vm15, %v229
  %295 = vst.msk [vmem:[%s231 + $0x321] sm:$0xff] %vm15, %v230
  %v296 = vld [vmem:[#allocation2] sm:$0xff]
  %v297 = vld [vmem:[#allocation2 + $0x8] sm:$0xff]
  %v298 = vld [vmem:[#allocation2 + $0x18] sm:$0xff]
  %v299 = vld [vmem:[#allocation2 + $0x20] sm:$0xff]
  %v300 = vld [vmem:[#allocation2 + $0x30] sm:$0xff]
  %v301 = vld [vmem:[#allocation2 + $0x38] sm:$0xff]
  %v302 = vld [vmem:[#allocation2 + $0x48] sm:$0xff]
  %v303 = vld [vmem:[#allocation2 + $0x50] sm:$0xff]
  %v304 = vld [vmem:[#allocation2 + $0x60] sm:$0xff]
  %v305 = vld [vmem:[#allocation2 + $0x68] sm:$0xff]
  %v306 = vld [vmem:[#allocation2 + $0x78] sm:$0xff]
  %v307 = vld [vmem:[#allocation2 + $0x80] sm:$0xff]
  %v308 = vld [vmem:[#allocation2 + $0x90] sm:$0xff]
  %v309 = vld [vmem:[#allocation2 + $0x98] sm:$0xff]
  %v310 = vld [vmem:[#allocation2 + $0xa8] sm:$0xff]
  %v311 = vld [vmem:[#allocation2 + $0xb0] sm:$0xff]
  %v312 = vld [vmem:[#allocation2 + $0xc0] sm:$0xff]
  %v313 = vld [vmem:[#allocation2 + $0xc8] sm:$0xff]
  %v314 = vld [vmem:[#allocation2 + $0xd8] sm:$0xff]
  %v315 = vld [vmem:[#allocation2 + $0xe0] sm:$0xff]
  %v316 = vld [vmem:[#allocation2 + $0xf0] sm:$0xff]
  %v317 = vld [vmem:[#allocation2 + $0xf8] sm:$0xff]
  %v318 = vld [vmem:[#allocation2 + $0x108] sm:$0xff]
  %v319 = vld [vmem:[#allocation2 + $0x110] sm:$0xff]
  %v320 = vld [vmem:[#allocation2 + $0x120] sm:$0xff]
  %v321 = vld [vmem:[#allocation2 + $0x128] sm:$0xff]
  %v322 = vld [vmem:[#allocation2 + $0x138] sm:$0xff]
  %v323 = vld [vmem:[#allocation2 + $0x140] sm:$0xff]
  %v324 = vld [vmem:[#allocation2 + $0x150] sm:$0xff]
  %v325 = vld [vmem:[#allocation2 + $0x158] sm:$0xff]
  %v326 = vld [vmem:[#allocation2 + $0x168] sm:$0xff]
  %v327 = vld [vmem:[#allocation2 + $0x170] sm:$0xff]
  %v328 = vld [vmem:[#allocation2 + $0x1b0] sm:$0xff]
  %v329 = vld [vmem:[#allocation2 + $0x1b8] sm:$0xff]
  %v330 = vld [vmem:[#allocation2 + $0x1c8] sm:$0xff]
  %v331 = vld [vmem:[#allocation2 + $0x1d0] sm:$0xff]
  %v332 = vld [vmem:[#allocation2 + $0x1e0] sm:$0xff]
  %v333 = vld [vmem:[#allocation2 + $0x1e8] sm:$0xff]
  %v334 = vld [vmem:[#allocation2 + $0x1f8] sm:$0xff]
  %v335 = vld [vmem:[#allocation2 + $0x200] sm:$0xff]
  %v336 = vld [vmem:[#allocation2 + $0x210] sm:$0xff]
  %v337 = vld [vmem:[#allocation2 + $0x218] sm:$0xff]
  %v338 = vld [vmem:[#allocation2 + $0x228] sm:$0xff]
  %v339 = vld [vmem:[#allocation2 + $0x230] sm:$0xff]
  %v340 = vld [vmem:[#allocation2 + $0x240] sm:$0xff]
  %v341 = vld [vmem:[#allocation2 + $0x248] sm:$0xff]
  %v342 = vld [vmem:[#allocation2 + $0x258] sm:$0xff]
  %v343 = vld [vmem:[#allocation2 + $0x260] sm:$0xff]
  %v344 = vld [vmem:[#allocation2 + $0x270] sm:$0xff]
  %v345 = vld [vmem:[#allocation2 + $0x278] sm:$0xff]
  %v346 = vld [vmem:[#allocation2 + $0x288] sm:$0xff]
  %v347 = vld [vmem:[#allocation2 + $0x290] sm:$0xff]
  %v348 = vld [vmem:[#allocation2 + $0x2a0] sm:$0xff]
  %v349 = vld [vmem:[#allocation2 + $0x2a8] sm:$0xff]
  %v350 = vld [vmem:[#allocation2 + $0x2b8] sm:$0xff]
  %v351 = vld [vmem:[#allocation2 + $0x2c0] sm:$0xff]
  %v352 = vld [vmem:[#allocation2 + $0x2d0] sm:$0xff]
  %v353 = vld [vmem:[#allocation2 + $0x2d8] sm:$0xff]
  %v354 = vld [vmem:[#allocation2 + $0x2e8] sm:$0xff]
  %v355 = vld [vmem:[#allocation2 + $0x2f0] sm:$0xff]
  %v356 = vld [vmem:[#allocation2 + $0x300] sm:$0xff]
  %v357 = vld [vmem:[#allocation2 + $0x308] sm:$0xff]
  %v358 = vld [vmem:[#allocation2 + $0x318] sm:$0xff]
  %v359 = vld [vmem:[#allocation2 + $0x320] sm:$0xff]
  %360 = vst.msk [vmem:[#allocation3] sm:$0xff] %vm15, %v296
  %361 = vst.msk [vmem:[#allocation3 + $0x8] sm:$0xff] %vm15, %v297
  %362 = vst.msk [vmem:[#allocation3 + $0x10] sm:$0xff] %vm15, %v298
  %363 = vst.msk [vmem:[#allocation3 + $0x18] sm:$0xff] %vm15, %v299
  %364 = vst.msk [vmem:[#allocation3 + $0x20] sm:$0xff] %vm15, %v300
  %365 = vst.msk [vmem:[#allocation3 + $0x28] sm:$0xff] %vm15, %v301
  %366 = vst.msk [vmem:[#allocation3 + $0x30] sm:$0xff] %vm15, %v302
  %367 = vst.msk [vmem:[#allocation3 + $0x38] sm:$0xff] %vm15, %v303
  %368 = vst.msk [vmem:[#allocation3 + $0x40] sm:$0xff] %vm15, %v304
  %369 = vst.msk [vmem:[#allocation3 + $0x48] sm:$0xff] %vm15, %v305
  %370 = vst.msk [vmem:[#allocation3 + $0x50] sm:$0xff] %vm15, %v306
  %371 = vst.msk [vmem:[#allocation3 + $0x58] sm:$0xff] %vm15, %v307
  %372 = vst.msk [vmem:[#allocation3 + $0x60] sm:$0xff] %vm15, %v308
  %373 = vst.msk [vmem:[#allocation3 + $0x68] sm:$0xff] %vm15, %v309
  %374 = vst.msk [vmem:[#allocation3 + $0x70] sm:$0xff] %vm15, %v310
  %375 = vst.msk [vmem:[#allocation3 + $0x78] sm:$0xff] %vm15, %v311
  %376 = vst.msk [vmem:[#allocation3 + $0x80] sm:$0xff] %vm15, %v312
  %377 = vst.msk [vmem:[#allocation3 + $0x88] sm:$0xff] %vm15, %v313
  %378 = vst.msk [vmem:[#allocation3 + $0x90] sm:$0xff] %vm15, %v314
  %379 = vst.msk [vmem:[#allocation3 + $0x98] sm:$0xff] %vm15, %v315
  %380 = vst.msk [vmem:[#allocation3 + $0xa0] sm:$0xff] %vm15, %v316
  %381 = vst.msk [vmem:[#allocation3 + $0xa8] sm:$0xff] %vm15, %v317
  %382 = vst.msk [vmem:[#allocation3 + $0xb0] sm:$0xff] %vm15, %v318
  %383 = vst.msk [vmem:[#allocation3 + $0xb8] sm:$0xff] %vm15, %v319
  %384 = vst.msk [vmem:[#allocation3 + $0xc0] sm:$0xff] %vm15, %v320
  %385 = vst.msk [vmem:[#allocation3 + $0xc8] sm:$0xff] %vm15, %v321
  %386 = vst.msk [vmem:[#allocation3 + $0xd0] sm:$0xff] %vm15, %v322
  %387 = vst.msk [vmem:[#allocation3 + $0xd8] sm:$0xff] %vm15, %v323
  %388 = vst.msk [vmem:[#allocation3 + $0xe0] sm:$0xff] %vm15, %v324
  %389 = vst.msk [vmem:[#allocation3 + $0xe8] sm:$0xff] %vm15, %v325
  %390 = vst.msk [vmem:[#allocation3 + $0xf0] sm:$0xff] %vm15, %v326
  %391 = vst.msk [vmem:[#allocation3 + $0xf8] sm:$0xff] %vm15, %v327
  %392 = vst.msk [vmem:[#allocation3 + $0x100] sm:$0xff] %vm15, %v328
  %393 = vst.msk [vmem:[#allocation3 + $0x108] sm:$0xff] %vm15, %v329
  %394 = vst.msk [vmem:[#allocation3 + $0x110] sm:$0xff] %vm15, %v330
  %395 = vst.msk [vmem:[#allocation3 + $0x118] sm:$0xff] %vm15, %v331
  %396 = vst.msk [vmem:[#allocation3 + $0x120] sm:$0xff] %vm15, %v332
  %397 = vst.msk [vmem:[#allocation3 + $0x128] sm:$0xff] %vm15, %v333
  %398 = vst.msk [vmem:[#allocation3 + $0x130] sm:$0xff] %vm15, %v334
  %399 = vst.msk [vmem:[#allocation3 + $0x138] sm:$0xff] %vm15, %v335
  %400 = vst.msk [vmem:[#allocation3 + $0x140] sm:$0xff] %vm15, %v336
  %401 = vst.msk [vmem:[#allocation3 + $0x148] sm:$0xff] %vm15, %v337
  %402 = vst.msk [vmem:[#allocation3 + $0x150] sm:$0xff] %vm15, %v338
  %403 = vst.msk [vmem:[#allocation3 + $0x158] sm:$0xff] %vm15, %v339
  %404 = vst.msk [vmem:[#allocation3 + $0x160] sm:$0xff] %vm15, %v340
  %405 = vst.msk [vmem:[#allocation3 + $0x168] sm:$0xff] %vm15, %v341
  %406 = vst.msk [vmem:[#allocation3 + $0x170] sm:$0xff] %vm15, %v342
  %407 = vst.msk [vmem:[#allocation3 + $0x178] sm:$0xff] %vm15, %v343
  %408 = vst.msk [vmem:[#allocation3 + $0x180] sm:$0xff] %vm15, %v344
  %409 = vst.msk [vmem:[#allocation3 + $0x188] sm:$0xff] %vm15, %v345
  %410 = vst.msk [vmem:[#allocation3 + $0x190] sm:$0xff] %vm15, %v346
  %411 = vst.msk [vmem:[#allocation3 + $0x198] sm:$0xff] %vm15, %v347
  %412 = vst.msk [vmem:[#allocation3 + $0x1a0] sm:$0xff] %vm15, %v348
  %413 = vst.msk [vmem:[#allocation3 + $0x1a8] sm:$0xff] %vm15, %v349
  %414 = vst.msk [vmem:[#allocation3 + $0x1b0] sm:$0xff] %vm15, %v350
  %415 = vst.msk [vmem:[#allocation3 + $0x1b8] sm:$0xff] %vm15, %v351
  %416 = vst.msk [vmem:[#allocation3 + $0x1c0] sm:$0xff] %vm15, %v352
  %417 = vst.msk [vmem:[#allocation3 + $0x1c8] sm:$0xff] %vm15, %v353
  %418 = vst.msk [vmem:[#allocation3 + $0x1d0] sm:$0xff] %vm15, %v354
  %419 = vst.msk [vmem:[#allocation3 + $0x1d8] sm:$0xff] %vm15, %v355
  %420 = vst.msk [vmem:[#allocation3 + $0x1e0] sm:$0xff] %vm15, %v356
  %421 = vst.msk [vmem:[#allocation3 + $0x1e8] sm:$0xff] %vm15, %v357
  %422 = vst.msk [vmem:[#allocation3 + $0x1f0] sm:$0xff] %vm15, %v358
  %423 = vst.msk [vmem:[#allocation3 + $0x1f8] sm:$0xff] %vm15, %v359
  %v424 = vld [vmem:[#allocation2 + $0x1] sm:$0xff]
  %v425 = vld [vmem:[#allocation2 + $0x9] sm:$0xff]
  %v426 = vld [vmem:[#allocation2 + $0x19] sm:$0xff]
  %v427 = vld [vmem:[#allocation2 + $0x21] sm:$0xff]
  %v428 = vld [vmem:[#allocation2 + $0x31] sm:$0xff]
  %v429 = vld [vmem:[#allocation2 + $0x39] sm:$0xff]
  %v430 = vld [vmem:[#allocation2 + $0x49] sm:$0xff]
  %v431 = vld [vmem:[#allocation2 + $0x51] sm:$0xff]
  %v432 = vld [vmem:[#allocation2 + $0x61] sm:$0xff]
  %v433 = vld [vmem:[#allocation2 + $0x69] sm:$0xff]
  %v434 = vld [vmem:[#allocation2 + $0x79] sm:$0xff]
  %v435 = vld [vmem:[#allocation2 + $0x81] sm:$0xff]
  %v436 = vld [vmem:[#allocation2 + $0x91] sm:$0xff]
  %v437 = vld [vmem:[#allocation2 + $0x99] sm:$0xff]
  %v438 = vld [vmem:[#allocation2 + $0xa9] sm:$0xff]
  %v439 = vld [vmem:[#allocation2 + $0xb1] sm:$0xff]
  %v440 = vld [vmem:[#allocation2 + $0xc1] sm:$0xff]
  %v441 = vld [vmem:[#allocation2 + $0xc9] sm:$0xff]
  %v442 = vld [vmem:[#allocation2 + $0xd9] sm:$0xff]
  %v443 = vld [vmem:[#allocation2 + $0xe1] sm:$0xff]
  %v444 = vld [vmem:[#allocation2 + $0xf1] sm:$0xff]
  %v445 = vld [vmem:[#allocation2 + $0xf9] sm:$0xff]
  %v446 = vld [vmem:[#allocation2 + $0x109] sm:$0xff]
  %v447 = vld [vmem:[#allocation2 + $0x111] sm:$0xff]
  %v448 = vld [vmem:[#allocation2 + $0x121] sm:$0xff]
  %v449 = vld [vmem:[#allocation2 + $0x129] sm:$0xff]
  %v450 = vld [vmem:[#allocation2 + $0x139] sm:$0xff]
  %v451 = vld [vmem:[#allocation2 + $0x141] sm:$0xff]
  %v452 = vld [vmem:[#allocation2 + $0x151] sm:$0xff]
  %v453 = vld [vmem:[#allocation2 + $0x159] sm:$0xff]
  %v454 = vld [vmem:[#allocation2 + $0x169] sm:$0xff]
  %v455 = vld [vmem:[#allocation2 + $0x171] sm:$0xff]
  %v456 = vld [vmem:[#allocation2 + $0x1b1] sm:$0xff]
  %v457 = vld [vmem:[#allocation2 + $0x1b9] sm:$0xff]
  %v458 = vld [vmem:[#allocation2 + $0x1c9] sm:$0xff]
  %v459 = vld [vmem:[#allocation2 + $0x1d1] sm:$0xff]
  %v460 = vld [vmem:[#allocation2 + $0x1e1] sm:$0xff]
  %v461 = vld [vmem:[#allocation2 + $0x1e9] sm:$0xff]
  %v462 = vld [vmem:[#allocation2 + $0x1f9] sm:$0xff]
  %v463 = vld [vmem:[#allocation2 + $0x201] sm:$0xff]
  %v464 = vld [vmem:[#allocation2 + $0x211] sm:$0xff]
  %v465 = vld [vmem:[#allocation2 + $0x219] sm:$0xff]
  %v466 = vld [vmem:[#allocation2 + $0x229] sm:$0xff]
  %v467 = vld [vmem:[#allocation2 + $0x231] sm:$0xff]
  %v468 = vld [vmem:[#allocation2 + $0x241] sm:$0xff]
  %v469 = vld [vmem:[#allocation2 + $0x249] sm:$0xff]
  %v470 = vld [vmem:[#allocation2 + $0x259] sm:$0xff]
  %v471 = vld [vmem:[#allocation2 + $0x261] sm:$0xff]
  %v472 = vld [vmem:[#allocation2 + $0x271] sm:$0xff]
  %v473 = vld [vmem:[#allocation2 + $0x279] sm:$0xff]
  %v474 = vld [vmem:[#allocation2 + $0x289] sm:$0xff]
  %v475 = vld [vmem:[#allocation2 + $0x291] sm:$0xff]
  %v476 = vld [vmem:[#allocation2 + $0x2a1] sm:$0xff]
  %v477 = vld [vmem:[#allocation2 + $0x2a9] sm:$0xff]
  %v478 = vld [vmem:[#allocation2 + $0x2b9] sm:$0xff]
  %v479 = vld [vmem:[#allocation2 + $0x2c1] sm:$0xff]
  %v480 = vld [vmem:[#allocation2 + $0x2d1] sm:$0xff]
  %v481 = vld [vmem:[#allocation2 + $0x2d9] sm:$0xff]
  %v482 = vld [vmem:[#allocation2 + $0x2e9] sm:$0xff]
  %v483 = vld [vmem:[#allocation2 + $0x2f1] sm:$0xff]
  %v484 = vld [vmem:[#allocation2 + $0x301] sm:$0xff]
  %v485 = vld [vmem:[#allocation2 + $0x309] sm:$0xff]
  %v486 = vld [vmem:[#allocation2 + $0x319] sm:$0xff]
  %v487 = vld [vmem:[#allocation2 + $0x321] sm:$0xff]
  %552 = vrot.lane.b32.xlu0 %v424, 3
  %v553 = vpop.permute.xlu0 %552
  %554 = vrot.lane.b32.xlu0 %v425, 3
  %v555 = vpop.permute.xlu0 %554
  %556 = vrot.lane.b32.xlu0 %v426, 3
  %v557 = vpop.permute.xlu0 %556
  %558 = vrot.lane.b32.xlu0 %v427, 3
  %v559 = vpop.permute.xlu0 %558
  %560 = vrot.lane.b32.xlu0 %v428, 3
  %v561 = vpop.permute.xlu0 %560
  %562 = vrot.lane.b32.xlu0 %v429, 3
  %v563 = vpop.permute.xlu0 %562
  %564 = vrot.lane.b32.xlu0 %v430, 3
  %v565 = vpop.permute.xlu0 %564
  %566 = vrot.lane.b32.xlu0 %v431, 3
  %v567 = vpop.permute.xlu0 %566
  %568 = vrot.lane.b32.xlu0 %v432, 3
  %v569 = vpop.permute.xlu0 %568
  %570 = vrot.lane.b32.xlu0 %v433, 3
  %v571 = vpop.permute.xlu0 %570
  %572 = vrot.lane.b32.xlu0 %v434, 3
  %v573 = vpop.permute.xlu0 %572
  %574 = vrot.lane.b32.xlu0 %v435, 3
  %v575 = vpop.permute.xlu0 %574
  %576 = vrot.lane.b32.xlu0 %v436, 3
  %v577 = vpop.permute.xlu0 %576
  %578 = vrot.lane.b32.xlu0 %v437, 3
  %v579 = vpop.permute.xlu0 %578
  %580 = vrot.lane.b32.xlu0 %v438, 3
  %v581 = vpop.permute.xlu0 %580
  %582 = vrot.lane.b32.xlu0 %v439, 3
  %v583 = vpop.permute.xlu0 %582
  %584 = vrot.lane.b32.xlu0 %v440, 3
  %v585 = vpop.permute.xlu0 %584
  %586 = vrot.lane.b32.xlu0 %v441, 3
  %v587 = vpop.permute.xlu0 %586
  %588 = vrot.lane.b32.xlu0 %v442, 3
  %v589 = vpop.permute.xlu0 %588
  %590 = vrot.lane.b32.xlu0 %v443, 3
  %v591 = vpop.permute.xlu0 %590
  %592 = vrot.lane.b32.xlu0 %v444, 3
  %v593 = vpop.permute.xlu0 %592
  %594 = vrot.lane.b32.xlu0 %v445, 3
  %v595 = vpop.permute.xlu0 %594
  %596 = vrot.lane.b32.xlu0 %v446, 3
  %v597 = vpop.permute.xlu0 %596
  %598 = vrot.lane.b32.xlu0 %v447, 3
  %v599 = vpop.permute.xlu0 %598
  %600 = vrot.lane.b32.xlu0 %v448, 3
  %v601 = vpop.permute.xlu0 %600
  %602 = vrot.lane.b32.xlu0 %v449, 3
  %v603 = vpop.permute.xlu0 %602
  %604 = vrot.lane.b32.xlu0 %v450, 3
  %v605 = vpop.permute.xlu0 %604
  %606 = vrot.lane.b32.xlu0 %v451, 3
  %v607 = vpop.permute.xlu0 %606
  %608 = vrot.lane.b32.xlu0 %v452, 3
  %v609 = vpop.permute.xlu0 %608
  %610 = vrot.lane.b32.xlu0 %v453, 3
  %v611 = vpop.permute.xlu0 %610
  %612 = vrot.lane.b32.xlu0 %v454, 3
  %v613 = vpop.permute.xlu0 %612
  %614 = vrot.lane.b32.xlu0 %v455, 3
  %v615 = vpop.permute.xlu0 %614
  %616 = vrot.lane.b32.xlu0 %v456, 3
  %v617 = vpop.permute.xlu0 %616
  %618 = vrot.lane.b32.xlu0 %v457, 3
  %v619 = vpop.permute.xlu0 %618
  %620 = vrot.lane.b32.xlu0 %v458, 3
  %v621 = vpop.permute.xlu0 %620
  %622 = vrot.lane.b32.xlu0 %v459, 3
  %v623 = vpop.permute.xlu0 %622
  %624 = vrot.lane.b32.xlu0 %v460, 3
  %v625 = vpop.permute.xlu0 %624
  %626 = vrot.lane.b32.xlu0 %v461, 3
  %v627 = vpop.permute.xlu0 %626
  %628 = vrot.lane.b32.xlu0 %v462, 3
  %v629 = vpop.permute.xlu0 %628
  %630 = vrot.lane.b32.xlu0 %v463, 3
  %v631 = vpop.permute.xlu0 %630
  %632 = vrot.lane.b32.xlu0 %v464, 3
  %v633 = vpop.permute.xlu0 %632
  %634 = vrot.lane.b32.xlu0 %v465, 3
  %v635 = vpop.permute.xlu0 %634
  %636 = vrot.lane.b32.xlu0 %v466, 3
  %v637 = vpop.permute.xlu0 %636
  %638 = vrot.lane.b32.xlu0 %v467, 3
  %v639 = vpop.permute.xlu0 %638
  %640 = vrot.lane.b32.xlu0 %v468, 3
  %v641 = vpop.permute.xlu0 %640
  %642 = vrot.lane.b32.xlu0 %v469, 3
  %v643 = vpop.permute.xlu0 %642
  %644 = vrot.lane.b32.xlu0 %v470, 3
  %v645 = vpop.permute.xlu0 %644
  %646 = vrot.lane.b32.xlu0 %v471, 3
  %v647 = vpop.permute.xlu0 %646
  %648 = vrot.lane.b32.xlu0 %v472, 3
  %v649 = vpop.permute.xlu0 %648
  %650 = vrot.lane.b32.xlu0 %v473, 3
  %v651 = vpop.permute.xlu0 %650
  %652 = vrot.lane.b32.xlu0 %v474, 3
  %v653 = vpop.permute.xlu0 %652
  %654 = vrot.lane.b32.xlu0 %v475, 3
  %v655 = vpop.permute.xlu0 %654
  %656 = vrot.lane.b32.xlu0 %v476, 3
  %v657 = vpop.permute.xlu0 %656
  %658 = vrot.lane.b32.xlu0 %v477, 3
  %v659 = vpop.permute.xlu0 %658
  %660 = vrot.lane.b32.xlu0 %v478, 3
  %v661 = vpop.permute.xlu0 %660
  %662 = vrot.lane.b32.xlu0 %v479, 3
  %v663 = vpop.permute.xlu0 %662
  %664 = vrot.lane.b32.xlu0 %v480, 3
  %v665 = vpop.permute.xlu0 %664
  %666 = vrot.lane.b32.xlu0 %v481, 3
  %v667 = vpop.permute.xlu0 %666
  %668 = vrot.lane.b32.xlu0 %v482, 3
  %v669 = vpop.permute.xlu0 %668
  %670 = vrot.lane.b32.xlu0 %v483, 3
  %v671 = vpop.permute.xlu0 %670
  %672 = vrot.lane.b32.xlu0 %v484, 3
  %v673 = vpop.permute.xlu0 %672
  %674 = vrot.lane.b32.xlu0 %v485, 3
  %v675 = vpop.permute.xlu0 %674
  %676 = vrot.lane.b32.xlu0 %v486, 3
  %v677 = vpop.permute.xlu0 %676
  %678 = vrot.lane.b32.xlu0 %v487, 3
  %v679 = vpop.permute.xlu0 %678
  %vm744 = vcmask 48152
  %745 = vst.msk [vmem:[#allocation3] sm:$0xff] %vm744, %v553
  %746 = vst.msk [vmem:[#allocation3 + $0x8] sm:$0xff] %vm744, %v555
  %747 = vst.msk [vmem:[#allocation3 + $0x10] sm:$0xff] %vm744, %v557
  %748 = vst.msk [vmem:[#allocation3 + $0x18] sm:$0xff] %vm744, %v559
  %749 = vst.msk [vmem:[#allocation3 + $0x20] sm:$0xff] %vm744, %v561
  %750 = vst.msk [vmem:[#allocation3 + $0x28] sm:$0xff] %vm744, %v563
  %751 = vst.msk [vmem:[#allocation3 + $0x30] sm:$0xff] %vm744, %v565
  %752 = vst.msk [vmem:[#allocation3 + $0x38] sm:$0xff] %vm744, %v567
  %753 = vst.msk [vmem:[#allocation3 + $0x40] sm:$0xff] %vm744, %v569
  %754 = vst.msk [vmem:[#allocation3 + $0x48] sm:$0xff] %vm744, %v571
  %755 = vst.msk [vmem:[#allocation3 + $0x50] sm:$0xff] %vm744, %v573
  %756 = vst.msk [vmem:[#allocation3 + $0x58] sm:$0xff] %vm744, %v575
  %757 = vst.msk [vmem:[#allocation3 + $0x60] sm:$0xff] %vm744, %v577
  %758 = vst.msk [vmem:[#allocation3 + $0x68] sm:$0xff] %vm744, %v579
  %759 = vst.msk [vmem:[#allocation3 + $0x70] sm:$0xff] %vm744, %v581
  %760 = vst.msk [vmem:[#allocation3 + $0x78] sm:$0xff] %vm744, %v583
  %761 = vst.msk [vmem:[#allocation3 + $0x80] sm:$0xff] %vm744, %v585
  %762 = vst.msk [vmem:[#allocation3 + $0x88] sm:$0xff] %vm744, %v587
  %763 = vst.msk [vmem:[#allocation3 + $0x90] sm:$0xff] %vm744, %v589
  %764 = vst.msk [vmem:[#allocation3 + $0x98] sm:$0xff] %vm744, %v591
  %765 = vst.msk [vmem:[#allocation3 + $0xa0] sm:$0xff] %vm744, %v593
  %766 = vst.msk [vmem:[#allocation3 + $0xa8] sm:$0xff] %vm744, %v595
  %767 = vst.msk [vmem:[#allocation3 + $0xb0] sm:$0xff] %vm744, %v597
  %768 = vst.msk [vmem:[#allocation3 + $0xb8] sm:$0xff] %vm744, %v599
  %769 = vst.msk [vmem:[#allocation3 + $0xc0] sm:$0xff] %vm744, %v601
  %770 = vst.msk [vmem:[#allocation3 + $0xc8] sm:$0xff] %vm744, %v603
  %771 = vst.msk [vmem:[#allocation3 + $0xd0] sm:$0xff] %vm744, %v605
  %772 = vst.msk [vmem:[#allocation3 + $0xd8] sm:$0xff] %vm744, %v607
  %773 = vst.msk [vmem:[#allocation3 + $0xe0] sm:$0xff] %vm744, %v609
  %774 = vst.msk [vmem:[#allocation3 + $0xe8] sm:$0xff] %vm744, %v611
  %775 = vst.msk [vmem:[#allocation3 + $0xf0] sm:$0xff] %vm744, %v613
  %776 = vst.msk [vmem:[#allocation3 + $0xf8] sm:$0xff] %vm744, %v615
  %777 = vst.msk [vmem:[#allocation3 + $0x100] sm:$0xff] %vm744, %v617
  %778 = vst.msk [vmem:[#allocation3 + $0x108] sm:$0xff] %vm744, %v619
  %779 = vst.msk [vmem:[#allocation3 + $0x110] sm:$0xff] %vm744, %v621
  %780 = vst.msk [vmem:[#allocation3 + $0x118] sm:$0xff] %vm744, %v623
  %781 = vst.msk [vmem:[#allocation3 + $0x120] sm:$0xff] %vm744, %v625
  %782 = vst.msk [vmem:[#allocation3 + $0x128] sm:$0xff] %vm744, %v627
  %783 = vst.msk [vmem:[#allocation3 + $0x130] sm:$0xff] %vm744, %v629
  %784 = vst.msk [vmem:[#allocation3 + $0x138] sm:$0xff] %vm744, %v631
  %785 = vst.msk [vmem:[#allocation3 + $0x140] sm:$0xff] %vm744, %v633
  %786 = vst.msk [vmem:[#allocation3 + $0x148] sm:$0xff] %vm744, %v635
  %787 = vst.msk [vmem:[#allocation3 + $0x150] sm:$0xff] %vm744, %v637
  %788 = vst.msk [vmem:[#allocation3 + $0x158] sm:$0xff] %vm744, %v639
  %789 = vst.msk [vmem:[#allocation3 + $0x160] sm:$0xff] %vm744, %v641
  %790 = vst.msk [vmem:[#allocation3 + $0x168] sm:$0xff] %vm744, %v643
  %791 = vst.msk [vmem:[#allocation3 + $0x170] sm:$0xff] %vm744, %v645
  %792 = vst.msk [vmem:[#allocation3 + $0x178] sm:$0xff] %vm744, %v647
  %793 = vst.msk [vmem:[#allocation3 + $0x180] sm:$0xff] %vm744, %v649
  %794 = vst.msk [vmem:[#allocation3 + $0x188] sm:$0xff] %vm744, %v651
  %795 = vst.msk [vmem:[#allocation3 + $0x190] sm:$0xff] %vm744, %v653
  %796 = vst.msk [vmem:[#allocation3 + $0x198] sm:$0xff] %vm744, %v655
  %797 = vst.msk [vmem:[#allocation3 + $0x1a0] sm:$0xff] %vm744, %v657
  %798 = vst.msk [vmem:[#allocation3 + $0x1a8] sm:$0xff] %vm744, %v659
  %799 = vst.msk [vmem:[#allocation3 + $0x1b0] sm:$0xff] %vm744, %v661
  %800 = vst.msk [vmem:[#allocation3 + $0x1b8] sm:$0xff] %vm744, %v663
  %801 = vst.msk [vmem:[#allocation3 + $0x1c0] sm:$0xff] %vm744, %v665
  %802 = vst.msk [vmem:[#allocation3 + $0x1c8] sm:$0xff] %vm744, %v667
  %803 = vst.msk [vmem:[#allocation3 + $0x1d0] sm:$0xff] %vm744, %v669
  %804 = vst.msk [vmem:[#allocation3 + $0x1d8] sm:$0xff] %vm744, %v671
  %805 = vst.msk [vmem:[#allocation3 + $0x1e0] sm:$0xff] %vm744, %v673
  %806 = vst.msk [vmem:[#allocation3 + $0x1e8] sm:$0xff] %vm744, %v675
  %807 = vst.msk [vmem:[#allocation3 + $0x1f0] sm:$0xff] %vm744, %v677
  %808 = vst.msk [vmem:[#allocation3 + $0x1f8] sm:$0xff] %vm744, %v679
  %v809 = vld [vmem:[#allocation2 + $0x2] sm:$0xff]
  %v810 = vld [vmem:[#allocation2 + $0xa] sm:$0xff]
  %v811 = vld [vmem:[#allocation2 + $0x1a] sm:$0xff]
  %v812 = vld [vmem:[#allocation2 + $0x22] sm:$0xff]
  %v813 = vld [vmem:[#allocation2 + $0x32] sm:$0xff]
  %v814 = vld [vmem:[#allocation2 + $0x3a] sm:$0xff]
  %v815 = vld [vmem:[#allocation2 + $0x4a] sm:$0xff]
  %v816 = vld [vmem:[#allocation2 + $0x52] sm:$0xff]
  %v817 = vld [vmem:[#allocation2 + $0x62] sm:$0xff]
  %v818 = vld [vmem:[#allocation2 + $0x6a] sm:$0xff]
  %v819 = vld [vmem:[#allocation2 + $0x7a] sm:$0xff]
  %v820 = vld [vmem:[#allocation2 + $0x82] sm:$0xff]
  %v821 = vld [vmem:[#allocation2 + $0x92] sm:$0xff]
  %v822 = vld [vmem:[#allocation2 + $0x9a] sm:$0xff]
  %v823 = vld [vmem:[#allocation2 + $0xaa] sm:$0xff]
  %v824 = vld [vmem:[#allocation2 + $0xb2] sm:$0xff]
  %v825 = vld [vmem:[#allocation2 + $0xc2] sm:$0xff]
  %v826 = vld [vmem:[#allocation2 + $0xca] sm:$0xff]
  %v827 = vld [vmem:[#allocation2 + $0xda] sm:$0xff]
  %v828 = vld [vmem:[#allocation2 + $0xe2] sm:$0xff]
  %v829 = vld [vmem:[#allocation2 + $0xf2] sm:$0xff]
  %v830 = vld [vmem:[#allocation2 + $0xfa] sm:$0xff]
  %v831 = vld [vmem:[#allocation2 + $0x10a] sm:$0xff]
  %v832 = vld [vmem:[#allocation2 + $0x112] sm:$0xff]
  %v833 = vld [vmem:[#allocation2 + $0x122] sm:$0xff]
  %v834 = vld [vmem:[#allocation2 + $0x12a] sm:$0xff]
  %v835 = vld [vmem:[#allocation2 + $0x13a] sm:$0xff]
  %v836 = vld [vmem:[#allocation2 + $0x142] sm:$0xff]
  %v837 = vld [vmem:[#allocation2 + $0x152] sm:$0xff]
  %v838 = vld [vmem:[#allocation2 + $0x15a] sm:$0xff]
  %v839 = vld [vmem:[#allocation2 + $0x16a] sm:$0xff]
  %v840 = vld [vmem:[#allocation2 + $0x172] sm:$0xff]
  %v841 = vld [vmem:[#allocation2 + $0x1b2] sm:$0xff]
  %v842 = vld [vmem:[#allocation2 + $0x1ba] sm:$0xff]
  %v843 = vld [vmem:[#allocation2 + $0x1ca] sm:$0xff]
  %v844 = vld [vmem:[#allocation2 + $0x1d2] sm:$0xff]
  %v845 = vld [vmem:[#allocation2 + $0x1e2] sm:$0xff]
  %v846 = vld [vmem:[#allocation2 + $0x1ea] sm:$0xff]
  %v847 = vld [vmem:[#allocation2 + $0x1fa] sm:$0xff]
  %v848 = vld [vmem:[#allocation2 + $0x202] sm:$0xff]
  %v849 = vld [vmem:[#allocation2 + $0x212] sm:$0xff]
  %v850 = vld [vmem:[#allocation2 + $0x21a] sm:$0xff]
  %v851 = vld [vmem:[#allocation2 + $0x22a] sm:$0xff]
  %v852 = vld [vmem:[#allocation2 + $0x232] sm:$0xff]
  %v853 = vld [vmem:[#allocation2 + $0x242] sm:$0xff]
  %v854 = vld [vmem:[#allocation2 + $0x24a] sm:$0xff]
  %v855 = vld [vmem:[#allocation2 + $0x25a] sm:$0xff]
  %v856 = vld [vmem:[#allocation2 + $0x262] sm:$0xff]
  %v857 = vld [vmem:[#allocation2 + $0x272] sm:$0xff]
  %v858 = vld [vmem:[#allocation2 + $0x27a] sm:$0xff]
  %v859 = vld [vmem:[#allocation2 + $0x28a] sm:$0xff]
  %v860 = vld [vmem:[#allocation2 + $0x292] sm:$0xff]
  %v861 = vld [vmem:[#allocation2 + $0x2a2] sm:$0xff]
  %v862 = vld [vmem:[#allocation2 + $0x2aa] sm:$0xff]
  %v863 = vld [vmem:[#allocation2 + $0x2ba] sm:$0xff]
  %v864 = vld [vmem:[#allocation2 + $0x2c2] sm:$0xff]
  %v865 = vld [vmem:[#allocation2 + $0x2d2] sm:$0xff]
  %v866 = vld [vmem:[#allocation2 + $0x2da] sm:$0xff]
  %v867 = vld [vmem:[#allocation2 + $0x2ea] sm:$0xff]
  %v868 = vld [vmem:[#allocation2 + $0x2f2] sm:$0xff]
  %v869 = vld [vmem:[#allocation2 + $0x302] sm:$0xff]
  %v870 = vld [vmem:[#allocation2 + $0x30a] sm:$0xff]
  %v871 = vld [vmem:[#allocation2 + $0x31a] sm:$0xff]
  %v872 = vld [vmem:[#allocation2 + $0x322] sm:$0xff]
  %937 = vrot.lane.b32.xlu0 %v809, 6
  %v938 = vpop.permute.xlu0 %937
  %939 = vrot.lane.b32.xlu0 %v810, 6
  %v940 = vpop.permute.xlu0 %939
  %941 = vrot.lane.b32.xlu0 %v811, 6
  %v942 = vpop.permute.xlu0 %941
  %943 = vrot.lane.b32.xlu0 %v812, 6
  %v944 = vpop.permute.xlu0 %943
  %945 = vrot.lane.b32.xlu0 %v813, 6
  %v946 = vpop.permute.xlu0 %945
  %947 = vrot.lane.b32.xlu0 %v814, 6
  %v948 = vpop.permute.xlu0 %947
  %949 = vrot.lane.b32.xlu0 %v815, 6
  %v950 = vpop.permute.xlu0 %949
  %951 = vrot.lane.b32.xlu0 %v816, 6
  %v952 = vpop.permute.xlu0 %951
  %953 = vrot.lane.b32.xlu0 %v817, 6
  %v954 = vpop.permute.xlu0 %953
  %955 = vrot.lane.b32.xlu0 %v818, 6
  %v956 = vpop.permute.xlu0 %955
  %957 = vrot.lane.b32.xlu0 %v819, 6
  %v958 = vpop.permute.xlu0 %957
  %959 = vrot.lane.b32.xlu0 %v820, 6
  %v960 = vpop.permute.xlu0 %959
  %961 = vrot.lane.b32.xlu0 %v821, 6
  %v962 = vpop.permute.xlu0 %961
  %963 = vrot.lane.b32.xlu0 %v822, 6
  %v964 = vpop.permute.xlu0 %963
  %965 = vrot.lane.b32.xlu0 %v823, 6
  %v966 = vpop.permute.xlu0 %965
  %967 = vrot.lane.b32.xlu0 %v824, 6
  %v968 = vpop.permute.xlu0 %967
  %969 = vrot.lane.b32.xlu0 %v825, 6
  %v970 = vpop.permute.xlu0 %969
  %971 = vrot.lane.b32.xlu0 %v826, 6
  %v972 = vpop.permute.xlu0 %971
  %973 = vrot.lane.b32.xlu0 %v827, 6
  %v974 = vpop.permute.xlu0 %973
  %975 = vrot.lane.b32.xlu0 %v828, 6
  %v976 = vpop.permute.xlu0 %975
  %977 = vrot.lane.b32.xlu0 %v829, 6
  %v978 = vpop.permute.xlu0 %977
  %979 = vrot.lane.b32.xlu0 %v830, 6
  %v980 = vpop.permute.xlu0 %979
  %981 = vrot.lane.b32.xlu0 %v831, 6
  %v982 = vpop.permute.xlu0 %981
  %983 = vrot.lane.b32.xlu0 %v832, 6
  %v984 = vpop.permute.xlu0 %983
  %985 = vrot.lane.b32.xlu0 %v833, 6
  %v986 = vpop.permute.xlu0 %985
  %987 = vrot.lane.b32.xlu0 %v834, 6
  %v988 = vpop.permute.xlu0 %987
  %989 = vrot.lane.b32.xlu0 %v835, 6
  %v990 = vpop.permute.xlu0 %989
  %991 = vrot.lane.b32.xlu0 %v836, 6
  %v992 = vpop.permute.xlu0 %991
  %993 = vrot.lane.b32.xlu0 %v837, 6
  %v994 = vpop.permute.xlu0 %993
  %995 = vrot.lane.b32.xlu0 %v838, 6
  %v996 = vpop.permute.xlu0 %995
  %997 = vrot.lane.b32.xlu0 %v839, 6
  %v998 = vpop.permute.xlu0 %997
  %999 = vrot.lane.b32.xlu0 %v840, 6
  %v1000 = vpop.permute.xlu0 %999
  %1001 = vrot.lane.b32.xlu0 %v841, 6
  %v1002 = vpop.permute.xlu0 %1001
  %1003 = vrot.lane.b32.xlu0 %v842, 6
  %v1004 = vpop.permute.xlu0 %1003
  %1005 = vrot.lane.b32.xlu0 %v843, 6
  %v1006 = vpop.permute.xlu0 %1005
  %1007 = vrot.lane.b32.xlu0 %v844, 6
  %v1008 = vpop.permute.xlu0 %1007
  %1009 = vrot.lane.b32.xlu0 %v845, 6
  %v1010 = vpop.permute.xlu0 %1009
  %1011 = vrot.lane.b32.xlu0 %v846, 6
  %v1012 = vpop.permute.xlu0 %1011
  %1013 = vrot.lane.b32.xlu0 %v847, 6
  %v1014 = vpop.permute.xlu0 %1013
  %1015 = vrot.lane.b32.xlu0 %v848, 6
  %v1016 = vpop.permute.xlu0 %1015
  %1017 = vrot.lane.b32.xlu0 %v849, 6
  %v1018 = vpop.permute.xlu0 %1017
  %1019 = vrot.lane.b32.xlu0 %v850, 6
  %v1020 = vpop.permute.xlu0 %1019
  %1021 = vrot.lane.b32.xlu0 %v851, 6
  %v1022 = vpop.permute.xlu0 %1021
  %1023 = vrot.lane.b32.xlu0 %v852, 6
  %v1024 = vpop.permute.xlu0 %1023
  %1025 = vrot.lane.b32.xlu0 %v853, 6
  %v1026 = vpop.permute.xlu0 %1025
  %1027 = vrot.lane.b32.xlu0 %v854, 6
  %v1028 = vpop.permute.xlu0 %1027
  %1029 = vrot.lane.b32.xlu0 %v855, 6
  %v1030 = vpop.permute.xlu0 %1029
  %1031 = vrot.lane.b32.xlu0 %v856, 6
  %v1032 = vpop.permute.xlu0 %1031
  %1033 = vrot.lane.b32.xlu0 %v857, 6
  %v1034 = vpop.permute.xlu0 %1033
  %1035 = vrot.lane.b32.xlu0 %v858, 6
  %v1036 = vpop.permute.xlu0 %1035
  %1037 = vrot.lane.b32.xlu0 %v859, 6
  %v1038 = vpop.permute.xlu0 %1037
  %1039 = vrot.lane.b32.xlu0 %v860, 6
  %v1040 = vpop.permute.xlu0 %1039
  %1041 = vrot.lane.b32.xlu0 %v861, 6
  %v1042 = vpop.permute.xlu0 %1041
  %1043 = vrot.lane.b32.xlu0 %v862, 6
  %v1044 = vpop.permute.xlu0 %1043
  %1045 = vrot.lane.b32.xlu0 %v863, 6
  %v1046 = vpop.permute.xlu0 %1045
  %1047 = vrot.lane.b32.xlu0 %v864, 6
  %v1048 = vpop.permute.xlu0 %1047
  %1049 = vrot.lane.b32.xlu0 %v865, 6
  %v1050 = vpop.permute.xlu0 %1049
  %1051 = vrot.lane.b32.xlu0 %v866, 6
  %v1052 = vpop.permute.xlu0 %1051
  %1053 = vrot.lane.b32.xlu0 %v867, 6
  %v1054 = vpop.permute.xlu0 %1053
  %1055 = vrot.lane.b32.xlu0 %v868, 6
  %v1056 = vpop.permute.xlu0 %1055
  %1057 = vrot.lane.b32.xlu0 %v869, 6
  %v1058 = vpop.permute.xlu0 %1057
  %1059 = vrot.lane.b32.xlu0 %v870, 6
  %v1060 = vpop.permute.xlu0 %1059
  %1061 = vrot.lane.b32.xlu0 %v871, 6
  %v1062 = vpop.permute.xlu0 %1061
  %1063 = vrot.lane.b32.xlu0 %v872, 6
  %v1064 = vpop.permute.xlu0 %1063
  %vm1129 = vcmask 72752
  %1130 = vst.msk [vmem:[#allocation3] sm:$0xff] %vm1129, %v938
  %1131 = vst.msk [vmem:[#allocation3 + $0x8] sm:$0xff] %vm1129, %v940
  %1132 = vst.msk [vmem:[#allocation3 + $0x10] sm:$0xff] %vm1129, %v942
  %1133 = vst.msk [vmem:[#allocation3 + $0x18] sm:$0xff] %vm1129, %v944
  %1134 = vst.msk [vmem:[#allocation3 + $0x20] sm:$0xff] %vm1129, %v946
  %1135 = vst.msk [vmem:[#allocation3 + $0x28] sm:$0xff] %vm1129, %v948
  %1136 = vst.msk [vmem:[#allocation3 + $0x30] sm:$0xff] %vm1129, %v950
  %1137 = vst.msk [vmem:[#allocation3 + $0x38] sm:$0xff] %vm1129, %v952
  %1138 = vst.msk [vmem:[#allocation3 + $0x40] sm:$0xff] %vm1129, %v954
  %1139 = vst.msk [vmem:[#allocation3 + $0x48] sm:$0xff] %vm1129, %v956
  %1140 = vst.msk [vmem:[#allocation3 + $0x50] sm:$0xff] %vm1129, %v958
  %1141 = vst.msk [vmem:[#allocation3 + $0x58] sm:$0xff] %vm1129, %v960
  %1142 = vst.msk [vmem:[#allocation3 + $0x60] sm:$0xff] %vm1129, %v962
  %1143 = vst.msk [vmem:[#allocation3 + $0x68] sm:$0xff] %vm1129, %v964
  %1144 = vst.msk [vmem:[#allocation3 + $0x70] sm:$0xff] %vm1129, %v966
  %1145 = vst.msk [vmem:[#allocation3 + $0x78] sm:$0xff] %vm1129, %v968
  %1146 = vst.msk [vmem:[#allocation3 + $0x80] sm:$0xff] %vm1129, %v970
  %1147 = vst.msk [vmem:[#allocation3 + $0x88] sm:$0xff] %vm1129, %v972
  %1148 = vst.msk [vmem:[#allocation3 + $0x90] sm:$0xff] %vm1129, %v974
  %1149 = vst.msk [vmem:[#allocation3 + $0x98] sm:$0xff] %vm1129, %v976
  %1150 = vst.msk [vmem:[#allocation3 + $0xa0] sm:$0xff] %vm1129, %v978
  %1151 = vst.msk [vmem:[#allocation3 + $0xa8] sm:$0xff] %vm1129, %v980
  %1152 = vst.msk [vmem:[#allocation3 + $0xb0] sm:$0xff] %vm1129, %v982
  %1153 = vst.msk [vmem:[#allocation3 + $0xb8] sm:$0xff] %vm1129, %v984
  %1154 = vst.msk [vmem:[#allocation3 + $0xc0] sm:$0xff] %vm1129, %v986
  %1155 = vst.msk [vmem:[#allocation3 + $0xc8] sm:$0xff] %vm1129, %v988
  %1156 = vst.msk [vmem:[#allocation3 + $0xd0] sm:$0xff] %vm1129, %v990
  %1157 = vst.msk [vmem:[#allocation3 + $0xd8] sm:$0xff] %vm1129, %v992
  %1158 = vst.msk [vmem:[#allocation3 + $0xe0] sm:$0xff] %vm1129, %v994
  %1159 = vst.msk [vmem:[#allocation3 + $0xe8] sm:$0xff] %vm1129, %v996
  %1160 = vst.msk [vmem:[#allocation3 + $0xf0] sm:$0xff] %vm1129, %v998
  %1161 = vst.msk [vmem:[#allocation3 + $0xf8] sm:$0xff] %vm1129, %v1000
  %1162 = vst.msk [vmem:[#allocation3 + $0x100] sm:$0xff] %vm1129, %v1002
  %1163 = vst.msk [vmem:[#allocation3 + $0x108] sm:$0xff] %vm1129, %v1004
  %1164 = vst.msk [vmem:[#allocation3 + $0x110] sm:$0xff] %vm1129, %v1006
  %1165 = vst.msk [vmem:[#allocation3 + $0x118] sm:$0xff] %vm1129, %v1008
  %1166 = vst.msk [vmem:[#allocation3 + $0x120] sm:$0xff] %vm1129, %v1010
  %1167 = vst.msk [vmem:[#allocation3 + $0x128] sm:$0xff] %vm1129, %v1012
  %1168 = vst.msk [vmem:[#allocation3 + $0x130] sm:$0xff] %vm1129, %v1014
  %1169 = vst.msk [vmem:[#allocation3 + $0x138] sm:$0xff] %vm1129, %v1016
  %1170 = vst.msk [vmem:[#allocation3 + $0x140] sm:$0xff] %vm1129, %v1018
  %1171 = vst.msk [vmem:[#allocation3 + $0x148] sm:$0xff] %vm1129, %v1020
  %1172 = vst.msk [vmem:[#allocation3 + $0x150] sm:$0xff] %vm1129, %v1022
  %1173 = vst.msk [vmem:[#allocation3 + $0x158] sm:$0xff] %vm1129, %v1024
  %1174 = vst.msk [vmem:[#allocation3 + $0x160] sm:$0xff] %vm1129, %v1026
  %1175 = vst.msk [vmem:[#allocation3 + $0x168] sm:$0xff] %vm1129, %v1028
  %1176 = vst.msk [vmem:[#allocation3 + $0x170] sm:$0xff] %vm1129, %v1030
  %1177 = vst.msk [vmem:[#allocation3 + $0x178] sm:$0xff] %vm1129, %v1032
  %1178 = vst.msk [vmem:[#allocation3 + $0x180] sm:$0xff] %vm1129, %v1034
  %1179 = vst.msk [vmem:[#allocation3 + $0x188] sm:$0xff] %vm1129, %v1036
  %1180 = vst.msk [vmem:[#allocation3 + $0x190] sm:$0xff] %vm1129, %v1038
  %1181 = vst.msk [vmem:[#allocation3 + $0x198] sm:$0xff] %vm1129, %v1040
  %1182 = vst.msk [vmem:[#allocation3 + $0x1a0] sm:$0xff] %vm1129, %v1042
  %1183 = vst.msk [vmem:[#allocation3 + $0x1a8] sm:$0xff] %vm1129, %v1044
  %1184 = vst.msk [vmem:[#allocation3 + $0x1b0] sm:$0xff] %vm1129, %v1046
  %1185 = vst.msk [vmem:[#allocation3 + $0x1b8] sm:$0xff] %vm1129, %v1048
  %1186 = vst.msk [vmem:[#allocation3 + $0x1c0] sm:$0xff] %vm1129, %v1050
  %1187 = vst.msk [vmem:[#allocation3 + $0x1c8] sm:$0xff] %vm1129, %v1052
  %1188 = vst.msk [vmem:[#allocation3 + $0x1d0] sm:$0xff] %vm1129, %v1054
  %1189 = vst.msk [vmem:[#allocation3 + $0x1d8] sm:$0xff] %vm1129, %v1056
  %1190 = vst.msk [vmem:[#allocation3 + $0x1e0] sm:$0xff] %vm1129, %v1058
  %1191 = vst.msk [vmem:[#allocation3 + $0x1e8] sm:$0xff] %vm1129, %v1060
  %1192 = vst.msk [vmem:[#allocation3 + $0x1f0] sm:$0xff] %vm1129, %v1062
  %1193 = vst.msk [vmem:[#allocation3 + $0x1f8] sm:$0xff] %vm1129, %v1064
  %v1194 = vld [vmem:[%s231] sm:$0xff]
  %v1195 = vld [vmem:[%s231 + $0x8] sm:$0xff]
  %v1196 = vld [vmem:[%s231 + $0x18] sm:$0xff]
  %v1197 = vld [vmem:[%s231 + $0x20] sm:$0xff]
  %v1198 = vld [vmem:[%s231 + $0x30] sm:$0xff]
  %v1199 = vld [vmem:[%s231 + $0x38] sm:$0xff]
  %v1200 = vld [vmem:[%s231 + $0x48] sm:$0xff]
  %v1201 = vld [vmem:[%s231 + $0x50] sm:$0xff]
  %v1202 = vld [vmem:[%s231 + $0x60] sm:$0xff]
  %v1203 = vld [vmem:[%s231 + $0x68] sm:$0xff]
  %v1204 = vld [vmem:[%s231 + $0x78] sm:$0xff]
  %v1205 = vld [vmem:[%s231 + $0x80] sm:$0xff]
  %v1206 = vld [vmem:[%s231 + $0x90] sm:$0xff]
  %v1207 = vld [vmem:[%s231 + $0x98] sm:$0xff]
  %v1208 = vld [vmem:[%s231 + $0xa8] sm:$0xff]
  %v1209 = vld [vmem:[%s231 + $0xb0] sm:$0xff]
  %v1210 = vld [vmem:[%s231 + $0xc0] sm:$0xff]
  %v1211 = vld [vmem:[%s231 + $0xc8] sm:$0xff]
  %v1212 = vld [vmem:[%s231 + $0xd8] sm:$0xff]
  %v1213 = vld [vmem:[%s231 + $0xe0] sm:$0xff]
  %v1214 = vld [vmem:[%s231 + $0xf0] sm:$0xff]
  %v1215 = vld [vmem:[%s231 + $0xf8] sm:$0xff]
  %v1216 = vld [vmem:[%s231 + $0x108] sm:$0xff]
  %v1217 = vld [vmem:[%s231 + $0x110] sm:$0xff]
  %v1218 = vld [vmem:[%s231 + $0x120] sm:$0xff]
  %v1219 = vld [vmem:[%s231 + $0x128] sm:$0xff]
  %v1220 = vld [vmem:[%s231 + $0x138] sm:$0xff]
  %v1221 = vld [vmem:[%s231 + $0x140] sm:$0xff]
  %v1222 = vld [vmem:[%s231 + $0x150] sm:$0xff]
  %v1223 = vld [vmem:[%s231 + $0x158] sm:$0xff]
  %v1224 = vld [vmem:[%s231 + $0x168] sm:$0xff]
  %v1225 = vld [vmem:[%s231 + $0x170] sm:$0xff]
  %v1226 = vld [vmem:[%s231 + $0x1b0] sm:$0xff]
  %v1227 = vld [vmem:[%s231 + $0x1b8] sm:$0xff]
  %v1228 = vld [vmem:[%s231 + $0x1c8] sm:$0xff]
  %v1229 = vld [vmem:[%s231 + $0x1d0] sm:$0xff]
  %v1230 = vld [vmem:[%s231 + $0x1e0] sm:$0xff]
  %v1231 = vld [vmem:[%s231 + $0x1e8] sm:$0xff]
  %v1232 = vld [vmem:[%s231 + $0x1f8] sm:$0xff]
  %v1233 = vld [vmem:[%s231 + $0x200] sm:$0xff]
  %v1234 = vld [vmem:[%s231 + $0x210] sm:$0xff]
  %v1235 = vld [vmem:[%s231 + $0x218] sm:$0xff]
  %v1236 = vld [vmem:[%s231 + $0x228] sm:$0xff]
  %v1237 = vld [vmem:[%s231 + $0x230] sm:$0xff]
  %v1238 = vld [vmem:[%s231 + $0x240] sm:$0xff]
  %v1239 = vld [vmem:[%s231 + $0x248] sm:$0xff]
  %v1240 = vld [vmem:[%s231 + $0x258] sm:$0xff]
  %v1241 = vld [vmem:[%s231 + $0x260] sm:$0xff]
  %v1242 = vld [vmem:[%s231 + $0x270] sm:$0xff]
  %v1243 = vld [vmem:[%s231 + $0x278] sm:$0xff]
  %v1244 = vld [vmem:[%s231 + $0x288] sm:$0xff]
  %v1245 = vld [vmem:[%s231 + $0x290] sm:$0xff]
  %v1246 = vld [vmem:[%s231 + $0x2a0] sm:$0xff]
  %v1247 = vld [vmem:[%s231 + $0x2a8] sm:$0xff]
  %v1248 = vld [vmem:[%s231 + $0x2b8] sm:$0xff]
  %v1249 = vld [vmem:[%s231 + $0x2c0] sm:$0xff]
  %v1250 = vld [vmem:[%s231 + $0x2d0] sm:$0xff]
  %v1251 = vld [vmem:[%s231 + $0x2d8] sm:$0xff]
  %v1252 = vld [vmem:[%s231 + $0x2e8] sm:$0xff]
  %v1253 = vld [vmem:[%s231 + $0x2f0] sm:$0xff]
  %v1254 = vld [vmem:[%s231 + $0x300] sm:$0xff]
  %v1255 = vld [vmem:[%s231 + $0x308] sm:$0xff]
  %v1256 = vld [vmem:[%s231 + $0x318] sm:$0xff]
  %v1257 = vld [vmem:[%s231 + $0x320] sm:$0xff]
  %1322 = vrot.lane.b32.xlu0 %v1194, 9
  %v1323 = vpop.permute.xlu0 %1322
  %1324 = vrot.lane.b32.xlu0 %v1195, 9
  %v1325 = vpop.permute.xlu0 %1324
  %1326 = vrot.lane.b32.xlu0 %v1196, 9
  %v1327 = vpop.permute.xlu0 %1326
  %1328 = vrot.lane.b32.xlu0 %v1197, 9
  %v1329 = vpop.permute.xlu0 %1328
  %1330 = vrot.lane.b32.xlu0 %v1198, 9
  %v1331 = vpop.permute.xlu0 %1330
  %1332 = vrot.lane.b32.xlu0 %v1199, 9
  %v1333 = vpop.permute.xlu0 %1332
  %1334 = vrot.lane.b32.xlu0 %v1200, 9
  %v1335 = vpop.permute.xlu0 %1334
  %1336 = vrot.lane.b32.xlu0 %v1201, 9
  %v1337 = vpop.permute.xlu0 %1336
  %1338 = vrot.lane.b32.xlu0 %v1202, 9
  %v1339 = vpop.permute.xlu0 %1338
  %1340 = vrot.lane.b32.xlu0 %v1203, 9
  %v1341 = vpop.permute.xlu0 %1340
  %1342 = vrot.lane.b32.xlu0 %v1204, 9
  %v1343 = vpop.permute.xlu0 %1342
  %1344 = vrot.lane.b32.xlu0 %v1205, 9
  %v1345 = vpop.permute.xlu0 %1344
  %1346 = vrot.lane.b32.xlu0 %v1206, 9
  %v1347 = vpop.permute.xlu0 %1346
  %1348 = vrot.lane.b32.xlu0 %v1207, 9
  %v1349 = vpop.permute.xlu0 %1348
  %1350 = vrot.lane.b32.xlu0 %v1208, 9
  %v1351 = vpop.permute.xlu0 %1350
  %1352 = vrot.lane.b32.xlu0 %v1209, 9
  %v1353 = vpop.permute.xlu0 %1352
  %1354 = vrot.lane.b32.xlu0 %v1210, 9
  %v1355 = vpop.permute.xlu0 %1354
  %1356 = vrot.lane.b32.xlu0 %v1211, 9
  %v1357 = vpop.permute.xlu0 %1356
  %1358 = vrot.lane.b32.xlu0 %v1212, 9
  %v1359 = vpop.permute.xlu0 %1358
  %1360 = vrot.lane.b32.xlu0 %v1213, 9
  %v1361 = vpop.permute.xlu0 %1360
  %1362 = vrot.lane.b32.xlu0 %v1214, 9
  %v1363 = vpop.permute.xlu0 %1362
  %1364 = vrot.lane.b32.xlu0 %v1215, 9
  %v1365 = vpop.permute.xlu0 %1364
  %1366 = vrot.lane.b32.xlu0 %v1216, 9
  %v1367 = vpop.permute.xlu0 %1366
  %1368 = vrot.lane.b32.xlu0 %v1217, 9
  %v1369 = vpop.permute.xlu0 %1368
  %1370 = vrot.lane.b32.xlu0 %v1218, 9
  %v1371 = vpop.permute.xlu0 %1370
  %1372 = vrot.lane.b32.xlu0 %v1219, 9
  %v1373 = vpop.permute.xlu0 %1372
  %1374 = vrot.lane.b32.xlu0 %v1220, 9
  %v1375 = vpop.permute.xlu0 %1374
  %1376 = vrot.lane.b32.xlu0 %v1221, 9
  %v1377 = vpop.permute.xlu0 %1376
  %1378 = vrot.lane.b32.xlu0 %v1222, 9
  %v1379 = vpop.permute.xlu0 %1378
  %1380 = vrot.lane.b32.xlu0 %v1223, 9
  %v1381 = vpop.permute.xlu0 %1380
  %1382 = vrot.lane.b32.xlu0 %v1224, 9
  %v1383 = vpop.permute.xlu0 %1382
  %1384 = vrot.lane.b32.xlu0 %v1225, 9
  %v1385 = vpop.permute.xlu0 %1384
  %1386 = vrot.lane.b32.xlu0 %v1226, 9
  %v1387 = vpop.permute.xlu0 %1386
  %1388 = vrot.lane.b32.xlu0 %v1227, 9
  %v1389 = vpop.permute.xlu0 %1388
  %1390 = vrot.lane.b32.xlu0 %v1228, 9
  %v1391 = vpop.permute.xlu0 %1390
  %1392 = vrot.lane.b32.xlu0 %v1229, 9
  %v1393 = vpop.permute.xlu0 %1392
  %1394 = vrot.lane.b32.xlu0 %v1230, 9
  %v1395 = vpop.permute.xlu0 %1394
  %1396 = vrot.lane.b32.xlu0 %v1231, 9
  %v1397 = vpop.permute.xlu0 %1396
  %1398 = vrot.lane.b32.xlu0 %v1232, 9
  %v1399 = vpop.permute.xlu0 %1398
  %1400 = vrot.lane.b32.xlu0 %v1233, 9
  %v1401 = vpop.permute.xlu0 %1400
  %1402 = vrot.lane.b32.xlu0 %v1234, 9
  %v1403 = vpop.permute.xlu0 %1402
  %1404 = vrot.lane.b32.xlu0 %v1235, 9
  %v1405 = vpop.permute.xlu0 %1404
  %1406 = vrot.lane.b32.xlu0 %v1236, 9
  %v1407 = vpop.permute.xlu0 %1406
  %1408 = vrot.lane.b32.xlu0 %v1237, 9
  %v1409 = vpop.permute.xlu0 %1408
  %1410 = vrot.lane.b32.xlu0 %v1238, 9
  %v1411 = vpop.permute.xlu0 %1410
  %1412 = vrot.lane.b32.xlu0 %v1239, 9
  %v1413 = vpop.permute.xlu0 %1412
  %1414 = vrot.lane.b32.xlu0 %v1240, 9
  %v1415 = vpop.permute.xlu0 %1414
  %1416 = vrot.lane.b32.xlu0 %v1241, 9
  %v1417 = vpop.permute.xlu0 %1416
  %1418 = vrot.lane.b32.xlu0 %v1242, 9
  %v1419 = vpop.permute.xlu0 %1418
  %1420 = vrot.lane.b32.xlu0 %v1243, 9
  %v1421 = vpop.permute.xlu0 %1420
  %1422 = vrot.lane.b32.xlu0 %v1244, 9
  %v1423 = vpop.permute.xlu0 %1422
  %1424 = vrot.lane.b32.xlu0 %v1245, 9
  %v1425 = vpop.permute.xlu0 %1424
  %1426 = vrot.lane.b32.xlu0 %v1246, 9
  %v1427 = vpop.permute.xlu0 %1426
  %1428 = vrot.lane.b32.xlu0 %v1247, 9
  %v1429 = vpop.permute.xlu0 %1428
  %1430 = vrot.lane.b32.xlu0 %v1248, 9
  %v1431 = vpop.permute.xlu0 %1430
  %1432 = vrot.lane.b32.xlu0 %v1249, 9
  %v1433 = vpop.permute.xlu0 %1432
  %1434 = vrot.lane.b32.xlu0 %v1250, 9
  %v1435 = vpop.permute.xlu0 %1434
  %1436 = vrot.lane.b32.xlu0 %v1251, 9
  %v1437 = vpop.permute.xlu0 %1436
  %1438 = vrot.lane.b32.xlu0 %v1252, 9
  %v1439 = vpop.permute.xlu0 %1438
  %1440 = vrot.lane.b32.xlu0 %v1253, 9
  %v1441 = vpop.permute.xlu0 %1440
  %1442 = vrot.lane.b32.xlu0 %v1254, 9
  %v1443 = vpop.permute.xlu0 %1442
  %1444 = vrot.lane.b32.xlu0 %v1255, 9
  %v1445 = vpop.permute.xlu0 %1444
  %1446 = vrot.lane.b32.xlu0 %v1256, 9
  %v1447 = vpop.permute.xlu0 %1446
  %1448 = vrot.lane.b32.xlu0 %v1257, 9
  %v1449 = vpop.permute.xlu0 %1448
  %vm1514 = vcmask 97352
  %1515 = vst.msk [vmem:[#allocation3] sm:$0xff] %vm1514, %v1323
  %1516 = vst.msk [vmem:[#allocation3 + $0x8] sm:$0xff] %vm1514, %v1325
  %1517 = vst.msk [vmem:[#allocation3 + $0x10] sm:$0xff] %vm1514, %v1327
  %1518 = vst.msk [vmem:[#allocation3 + $0x18] sm:$0xff] %vm1514, %v1329
  %1519 = vst.msk [vmem:[#allocation3 + $0x20] sm:$0xff] %vm1514, %v1331
  %1520 = vst.msk [vmem:[#allocation3 + $0x28] sm:$0xff] %vm1514, %v1333
  %1521 = vst.msk [vmem:[#allocation3 + $0x30] sm:$0xff] %vm1514, %v1335
  %1522 = vst.msk [vmem:[#allocation3 + $0x38] sm:$0xff] %vm1514, %v1337
  %1523 = vst.msk [vmem:[#allocation3 + $0x40] sm:$0xff] %vm1514, %v1339
  %1524 = vst.msk [vmem:[#allocation3 + $0x48] sm:$0xff] %vm1514, %v1341
  %1525 = vst.msk [vmem:[#allocation3 + $0x50] sm:$0xff] %vm1514, %v1343
  %1526 = vst.msk [vmem:[#allocation3 + $0x58] sm:$0xff] %vm1514, %v1345
  %1527 = vst.msk [vmem:[#allocation3 + $0x60] sm:$0xff] %vm1514, %v1347
  %1528 = vst.msk [vmem:[#allocation3 + $0x68] sm:$0xff] %vm1514, %v1349
  %1529 = vst.msk [vmem:[#allocation3 + $0x70] sm:$0xff] %vm1514, %v1351
  %1530 = vst.msk [vmem:[#allocation3 + $0x78] sm:$0xff] %vm1514, %v1353
  %1531 = vst.msk [vmem:[#allocation3 + $0x80] sm:$0xff] %vm1514, %v1355
  %1532 = vst.msk [vmem:[#allocation3 + $0x88] sm:$0xff] %vm1514, %v1357
  %1533 = vst.msk [vmem:[#allocation3 + $0x90] sm:$0xff] %vm1514, %v1359
  %1534 = vst.msk [vmem:[#allocation3 + $0x98] sm:$0xff] %vm1514, %v1361
  %1535 = vst.msk [vmem:[#allocation3 + $0xa0] sm:$0xff] %vm1514, %v1363
  %1536 = vst.msk [vmem:[#allocation3 + $0xa8] sm:$0xff] %vm1514, %v1365
  %1537 = vst.msk [vmem:[#allocation3 + $0xb0] sm:$0xff] %vm1514, %v1367
  %1538 = vst.msk [vmem:[#allocation3 + $0xb8] sm:$0xff] %vm1514, %v1369
  %1539 = vst.msk [vmem:[#allocation3 + $0xc0] sm:$0xff] %vm1514, %v1371
  %1540 = vst.msk [vmem:[#allocation3 + $0xc8] sm:$0xff] %vm1514, %v1373
  %1541 = vst.msk [vmem:[#allocation3 + $0xd0] sm:$0xff] %vm1514, %v1375
  %1542 = vst.msk [vmem:[#allocation3 + $0xd8] sm:$0xff] %vm1514, %v1377
  %1543 = vst.msk [vmem:[#allocation3 + $0xe0] sm:$0xff] %vm1514, %v1379
  %1544 = vst.msk [vmem:[#allocation3 + $0xe8] sm:$0xff] %vm1514, %v1381
  %1545 = vst.msk [vmem:[#allocation3 + $0xf0] sm:$0xff] %vm1514, %v1383
  %1546 = vst.msk [vmem:[#allocation3 + $0xf8] sm:$0xff] %vm1514, %v1385
  %1547 = vst.msk [vmem:[#allocation3 + $0x100] sm:$0xff] %vm1514, %v1387
  %1548 = vst.msk [vmem:[#allocation3 + $0x108] sm:$0xff] %vm1514, %v1389
  %1549 = vst.msk [vmem:[#allocation3 + $0x110] sm:$0xff] %vm1514, %v1391
  %1550 = vst.msk [vmem:[#allocation3 + $0x118] sm:$0xff] %vm1514, %v1393
  %1551 = vst.msk [vmem:[#allocation3 + $0x120] sm:$0xff] %vm1514, %v1395
  %1552 = vst.msk [vmem:[#allocation3 + $0x128] sm:$0xff] %vm1514, %v1397
  %1553 = vst.msk [vmem:[#allocation3 + $0x130] sm:$0xff] %vm1514, %v1399
  %1554 = vst.msk [vmem:[#allocation3 + $0x138] sm:$0xff] %vm1514, %v1401
  %1555 = vst.msk [vmem:[#allocation3 + $0x140] sm:$0xff] %vm1514, %v1403
  %1556 = vst.msk [vmem:[#allocation3 + $0x148] sm:$0xff] %vm1514, %v1405
  %1557 = vst.msk [vmem:[#allocation3 + $0x150] sm:$0xff] %vm1514, %v1407
  %1558 = vst.msk [vmem:[#allocation3 + $0x158] sm:$0xff] %vm1514, %v1409
  %1559 = vst.msk [vmem:[#allocation3 + $0x160] sm:$0xff] %vm1514, %v1411
  %1560 = vst.msk [vmem:[#allocation3 + $0x168] sm:$0xff] %vm1514, %v1413
  %1561 = vst.msk [vmem:[#allocation3 + $0x170] sm:$0xff] %vm1514, %v1415
  %1562 = vst.msk [vmem:[#allocation3 + $0x178] sm:$0xff] %vm1514, %v1417
  %1563 = vst.msk [vmem:[#allocation3 + $0x180] sm:$0xff] %vm1514, %v1419
  %1564 = vst.msk [vmem:[#allocation3 + $0x188] sm:$0xff] %vm1514, %v1421
  %1565 = vst.msk [vmem:[#allocation3 + $0x190] sm:$0xff] %vm1514, %v1423
  %1566 = vst.msk [vmem:[#allocation3 + $0x198] sm:$0xff] %vm1514, %v1425
  %1567 = vst.msk [vmem:[#allocation3 + $0x1a0] sm:$0xff] %vm1514, %v1427
  %1568 = vst.msk [vmem:[#allocation3 + $0x1a8] sm:$0xff] %vm1514, %v1429
  %1569 = vst.msk [vmem:[#allocation3 + $0x1b0] sm:$0xff] %vm1514, %v1431
  %1570 = vst.msk [vmem:[#allocation3 + $0x1b8] sm:$0xff] %vm1514, %v1433
  %1571 = vst.msk [vmem:[#allocation3 + $0x1c0] sm:$0xff] %vm1514, %v1435
  %1572 = vst.msk [vmem:[#allocation3 + $0x1c8] sm:$0xff] %vm1514, %v1437
  %1573 = vst.msk [vmem:[#allocation3 + $0x1d0] sm:$0xff] %vm1514, %v1439
  %1574 = vst.msk [vmem:[#allocation3 + $0x1d8] sm:$0xff] %vm1514, %v1441
  %1575 = vst.msk [vmem:[#allocation3 + $0x1e0] sm:$0xff] %vm1514, %v1443
  %1576 = vst.msk [vmem:[#allocation3 + $0x1e8] sm:$0xff] %vm1514, %v1445
  %1577 = vst.msk [vmem:[#allocation3 + $0x1f0] sm:$0xff] %vm1514, %v1447
  %1578 = vst.msk [vmem:[#allocation3 + $0x1f8] sm:$0xff] %vm1514, %v1449
  %v1579 = vld [vmem:[%s231 + $0x1] sm:$0xff]
  %v1580 = vld [vmem:[%s231 + $0x9] sm:$0xff]
  %v1581 = vld [vmem:[%s231 + $0x19] sm:$0xff]
  %v1582 = vld [vmem:[%s231 + $0x21] sm:$0xff]
  %v1583 = vld [vmem:[%s231 + $0x31] sm:$0xff]
  %v1584 = vld [vmem:[%s231 + $0x39] sm:$0xff]
  %v1585 = vld [vmem:[%s231 + $0x49] sm:$0xff]
  %v1586 = vld [vmem:[%s231 + $0x51] sm:$0xff]
  %v1587 = vld [vmem:[%s231 + $0x61] sm:$0xff]
  %v1588 = vld [vmem:[%s231 + $0x69] sm:$0xff]
  %v1589 = vld [vmem:[%s231 + $0x79] sm:$0xff]
  %v1590 = vld [vmem:[%s231 + $0x81] sm:$0xff]
  %v1591 = vld [vmem:[%s231 + $0x91] sm:$0xff]
  %v1592 = vld [vmem:[%s231 + $0x99] sm:$0xff]
  %v1593 = vld [vmem:[%s231 + $0xa9] sm:$0xff]
  %v1594 = vld [vmem:[%s231 + $0xb1] sm:$0xff]
  %v1595 = vld [vmem:[%s231 + $0xc1] sm:$0xff]
  %v1596 = vld [vmem:[%s231 + $0xc9] sm:$0xff]
  %v1597 = vld [vmem:[%s231 + $0xd9] sm:$0xff]
  %v1598 = vld [vmem:[%s231 + $0xe1] sm:$0xff]
  %v1599 = vld [vmem:[%s231 + $0xf1] sm:$0xff]
  %v1600 = vld [vmem:[%s231 + $0xf9] sm:$0xff]
  %v1601 = vld [vmem:[%s231 + $0x109] sm:$0xff]
  %v1602 = vld [vmem:[%s231 + $0x111] sm:$0xff]
  %v1603 = vld [vmem:[%s231 + $0x121] sm:$0xff]
  %v1604 = vld [vmem:[%s231 + $0x129] sm:$0xff]
  %v1605 = vld [vmem:[%s231 + $0x139] sm:$0xff]
  %v1606 = vld [vmem:[%s231 + $0x141] sm:$0xff]
  %v1607 = vld [vmem:[%s231 + $0x151] sm:$0xff]
  %v1608 = vld [vmem:[%s231 + $0x159] sm:$0xff]
  %v1609 = vld [vmem:[%s231 + $0x169] sm:$0xff]
  %v1610 = vld [vmem:[%s231 + $0x171] sm:$0xff]
  %v1611 = vld [vmem:[%s231 + $0x1b1] sm:$0xff]
  %v1612 = vld [vmem:[%s231 + $0x1b9] sm:$0xff]
  %v1613 = vld [vmem:[%s231 + $0x1c9] sm:$0xff]
  %v1614 = vld [vmem:[%s231 + $0x1d1] sm:$0xff]
  %v1615 = vld [vmem:[%s231 + $0x1e1] sm:$0xff]
  %v1616 = vld [vmem:[%s231 + $0x1e9] sm:$0xff]
  %v1617 = vld [vmem:[%s231 + $0x1f9] sm:$0xff]
  %v1618 = vld [vmem:[%s231 + $0x201] sm:$0xff]
  %v1619 = vld [vmem:[%s231 + $0x211] sm:$0xff]
  %v1620 = vld [vmem:[%s231 + $0x219] sm:$0xff]
  %v1621 = vld [vmem:[%s231 + $0x229] sm:$0xff]
  %v1622 = vld [vmem:[%s231 + $0x231] sm:$0xff]
  %v1623 = vld [vmem:[%s231 + $0x241] sm:$0xff]
  %v1624 = vld [vmem:[%s231 + $0x249] sm:$0xff]
  %v1625 = vld [vmem:[%s231 + $0x259] sm:$0xff]
  %v1626 = vld [vmem:[%s231 + $0x261] sm:$0xff]
  %v1627 = vld [vmem:[%s231 + $0x271] sm:$0xff]
  %v1628 = vld [vmem:[%s231 + $0x279] sm:$0xff]
  %v1629 = vld [vmem:[%s231 + $0x289] sm:$0xff]
  %v1630 = vld [vmem:[%s231 + $0x291] sm:$0xff]
  %v1631 = vld [vmem:[%s231 + $0x2a1] sm:$0xff]
  %v1632 = vld [vmem:[%s231 + $0x2a9] sm:$0xff]
  %v1633 = vld [vmem:[%s231 + $0x2b9] sm:$0xff]
  %v1634 = vld [vmem:[%s231 + $0x2c1] sm:$0xff]
  %v1635 = vld [vmem:[%s231 + $0x2d1] sm:$0xff]
  %v1636 = vld [vmem:[%s231 + $0x2d9] sm:$0xff]
  %v1637 = vld [vmem:[%s231 + $0x2e9] sm:$0xff]
  %v1638 = vld [vmem:[%s231 + $0x2f1] sm:$0xff]
  %v1639 = vld [vmem:[%s231 + $0x301] sm:$0xff]
  %v1640 = vld [vmem:[%s231 + $0x309] sm:$0xff]
  %v1641 = vld [vmem:[%s231 + $0x319] sm:$0xff]
  %v1642 = vld [vmem:[%s231 + $0x321] sm:$0xff]
  %1707 = vrot.lane.b32.xlu0 %v1579, 12
  %v1708 = vpop.permute.xlu0 %1707
  %1709 = vrot.lane.b32.xlu0 %v1580, 12
  %v1710 = vpop.permute.xlu0 %1709
  %1711 = vrot.lane.b32.xlu0 %v1581, 12
  %v1712 = vpop.permute.xlu0 %1711
  %1713 = vrot.lane.b32.xlu0 %v1582, 12
  %v1714 = vpop.permute.xlu0 %1713
  %1715 = vrot.lane.b32.xlu0 %v1583, 12
  %v1716 = vpop.permute.xlu0 %1715
  %1717 = vrot.lane.b32.xlu0 %v1584, 12
  %v1718 = vpop.permute.xlu0 %1717
  %1719 = vrot.lane.b32.xlu0 %v1585, 12
  %v1720 = vpop.permute.xlu0 %1719
  %1721 = vrot.lane.b32.xlu0 %v1586, 12
  %v1722 = vpop.permute.xlu0 %1721
  %1723 = vrot.lane.b32.xlu0 %v1587, 12
  %v1724 = vpop.permute.xlu0 %1723
  %1725 = vrot.lane.b32.xlu0 %v1588, 12
  %v1726 = vpop.permute.xlu0 %1725
  %1727 = vrot.lane.b32.xlu0 %v1589, 12
  %v1728 = vpop.permute.xlu0 %1727
  %1729 = vrot.lane.b32.xlu0 %v1590, 12
  %v1730 = vpop.permute.xlu0 %1729
  %1731 = vrot.lane.b32.xlu0 %v1591, 12
  %v1732 = vpop.permute.xlu0 %1731
  %1733 = vrot.lane.b32.xlu0 %v1592, 12
  %v1734 = vpop.permute.xlu0 %1733
  %1735 = vrot.lane.b32.xlu0 %v1593, 12
  %v1736 = vpop.permute.xlu0 %1735
  %1737 = vrot.lane.b32.xlu0 %v1594, 12
  %v1738 = vpop.permute.xlu0 %1737
  %1739 = vrot.lane.b32.xlu0 %v1595, 12
  %v1740 = vpop.permute.xlu0 %1739
  %1741 = vrot.lane.b32.xlu0 %v1596, 12
  %v1742 = vpop.permute.xlu0 %1741
  %1743 = vrot.lane.b32.xlu0 %v1597, 12
  %v1744 = vpop.permute.xlu0 %1743
  %1745 = vrot.lane.b32.xlu0 %v1598, 12
  %v1746 = vpop.permute.xlu0 %1745
  %1747 = vrot.lane.b32.xlu0 %v1599, 12
  %v1748 = vpop.permute.xlu0 %1747
  %1749 = vrot.lane.b32.xlu0 %v1600, 12
  %v1750 = vpop.permute.xlu0 %1749
  %1751 = vrot.lane.b32.xlu0 %v1601, 12
  %v1752 = vpop.permute.xlu0 %1751
  %1753 = vrot.lane.b32.xlu0 %v1602, 12
  %v1754 = vpop.permute.xlu0 %1753
  %1755 = vrot.lane.b32.xlu0 %v1603, 12
  %v1756 = vpop.permute.xlu0 %1755
  %1757 = vrot.lane.b32.xlu0 %v1604, 12
  %v1758 = vpop.permute.xlu0 %1757
  %1759 = vrot.lane.b32.xlu0 %v1605, 12
  %v1760 = vpop.permute.xlu0 %1759
  %1761 = vrot.lane.b32.xlu0 %v1606, 12
  %v1762 = vpop.permute.xlu0 %1761
  %1763 = vrot.lane.b32.xlu0 %v1607, 12
  %v1764 = vpop.permute.xlu0 %1763
  %1765 = vrot.lane.b32.xlu0 %v1608, 12
  %v1766 = vpop.permute.xlu0 %1765
  %1767 = vrot.lane.b32.xlu0 %v1609, 12
  %v1768 = vpop.permute.xlu0 %1767
  %1769 = vrot.lane.b32.xlu0 %v1610, 12
  %v1770 = vpop.permute.xlu0 %1769
  %1771 = vrot.lane.b32.xlu0 %v1611, 12
  %v1772 = vpop.permute.xlu0 %1771
  %1773 = vrot.lane.b32.xlu0 %v1612, 12
  %v1774 = vpop.permute.xlu0 %1773
  %1775 = vrot.lane.b32.xlu0 %v1613, 12
  %v1776 = vpop.permute.xlu0 %1775
  %1777 = vrot.lane.b32.xlu0 %v1614, 12
  %v1778 = vpop.permute.xlu0 %1777
  %1779 = vrot.lane.b32.xlu0 %v1615, 12
  %v1780 = vpop.permute.xlu0 %1779
  %1781 = vrot.lane.b32.xlu0 %v1616, 12
  %v1782 = vpop.permute.xlu0 %1781
  %1783 = vrot.lane.b32.xlu0 %v1617, 12
  %v1784 = vpop.permute.xlu0 %1783
  %1785 = vrot.lane.b32.xlu0 %v1618, 12
  %v1786 = vpop.permute.xlu0 %1785
  %1787 = vrot.lane.b32.xlu0 %v1619, 12
  %v1788 = vpop.permute.xlu0 %1787
  %1789 = vrot.lane.b32.xlu0 %v1620, 12
  %v1790 = vpop.permute.xlu0 %1789
  %1791 = vrot.lane.b32.xlu0 %v1621, 12
  %v1792 = vpop.permute.xlu0 %1791
  %1793 = vrot.lane.b32.xlu0 %v1622, 12
  %v1794 = vpop.permute.xlu0 %1793
  %1795 = vrot.lane.b32.xlu0 %v1623, 12
  %v1796 = vpop.permute.xlu0 %1795
  %1797 = vrot.lane.b32.xlu0 %v1624, 12
  %v1798 = vpop.permute.xlu0 %1797
  %1799 = vrot.lane.b32.xlu0 %v1625, 12
  %v1800 = vpop.permute.xlu0 %1799
  %1801 = vrot.lane.b32.xlu0 %v1626, 12
  %v1802 = vpop.permute.xlu0 %1801
  %1803 = vrot.lane.b32.xlu0 %v1627, 12
  %v1804 = vpop.permute.xlu0 %1803
  %1805 = vrot.lane.b32.xlu0 %v1628, 12
  %v1806 = vpop.permute.xlu0 %1805
  %1807 = vrot.lane.b32.xlu0 %v1629, 12
  %v1808 = vpop.permute.xlu0 %1807
  %1809 = vrot.lane.b32.xlu0 %v1630, 12
  %v1810 = vpop.permute.xlu0 %1809
  %1811 = vrot.lane.b32.xlu0 %v1631, 12
  %v1812 = vpop.permute.xlu0 %1811
  %1813 = vrot.lane.b32.xlu0 %v1632, 12
  %v1814 = vpop.permute.xlu0 %1813
  %1815 = vrot.lane.b32.xlu0 %v1633, 12
  %v1816 = vpop.permute.xlu0 %1815
  %1817 = vrot.lane.b32.xlu0 %v1634, 12
  %v1818 = vpop.permute.xlu0 %1817
  %1819 = vrot.lane.b32.xlu0 %v1635, 12
  %v1820 = vpop.permute.xlu0 %1819
  %1821 = vrot.lane.b32.xlu0 %v1636, 12
  %v1822 = vpop.permute.xlu0 %1821
  %1823 = vrot.lane.b32.xlu0 %v1637, 12
  %v1824 = vpop.permute.xlu0 %1823
  %1825 = vrot.lane.b32.xlu0 %v1638, 12
  %v1826 = vpop.permute.xlu0 %1825
  %1827 = vrot.lane.b32.xlu0 %v1639, 12
  %v1828 = vpop.permute.xlu0 %1827
  %1829 = vrot.lane.b32.xlu0 %v1640, 12
  %v1830 = vpop.permute.xlu0 %1829
  %1831 = vrot.lane.b32.xlu0 %v1641, 12
  %v1832 = vpop.permute.xlu0 %1831
  %1833 = vrot.lane.b32.xlu0 %v1642, 12
  %v1834 = vpop.permute.xlu0 %1833
  %vm1899 = vcmask 121952
  %1900 = vst.msk [vmem:[#allocation3] sm:$0xff] %vm1899, %v1708
  %1901 = vst.msk [vmem:[#allocation3 + $0x8] sm:$0xff] %vm1899, %v1710
  %1902 = vst.msk [vmem:[#allocation3 + $0x10] sm:$0xff] %vm1899, %v1712
  %1903 = vst.msk [vmem:[#allocation3 + $0x18] sm:$0xff] %vm1899, %v1714
  %1904 = vst.msk [vmem:[#allocation3 + $0x20] sm:$0xff] %vm1899, %v1716
  %1905 = vst.msk [vmem:[#allocation3 + $0x28] sm:$0xff] %vm1899, %v1718
  %1906 = vst.msk [vmem:[#allocation3 + $0x30] sm:$0xff] %vm1899, %v1720
  %1907 = vst.msk [vmem:[#allocation3 + $0x38] sm:$0xff] %vm1899, %v1722
  %1908 = vst.msk [vmem:[#allocation3 + $0x40] sm:$0xff] %vm1899, %v1724
  %1909 = vst.msk [vmem:[#allocation3 + $0x48] sm:$0xff] %vm1899, %v1726
  %1910 = vst.msk [vmem:[#allocation3 + $0x50] sm:$0xff] %vm1899, %v1728
  %1911 = vst.msk [vmem:[#allocation3 + $0x58] sm:$0xff] %vm1899, %v1730
  %1912 = vst.msk [vmem:[#allocation3 + $0x60] sm:$0xff] %vm1899, %v1732
  %1913 = vst.msk [vmem:[#allocation3 + $0x68] sm:$0xff] %vm1899, %v1734
  %1914 = vst.msk [vmem:[#allocation3 + $0x70] sm:$0xff] %vm1899, %v1736
  %1915 = vst.msk [vmem:[#allocation3 + $0x78] sm:$0xff] %vm1899, %v1738
  %1916 = vst.msk [vmem:[#allocation3 + $0x80] sm:$0xff] %vm1899, %v1740
  %1917 = vst.msk [vmem:[#allocation3 + $0x88] sm:$0xff] %vm1899, %v1742
  %1918 = vst.msk [vmem:[#allocation3 + $0x90] sm:$0xff] %vm1899, %v1744
  %1919 = vst.msk [vmem:[#allocation3 + $0x98] sm:$0xff] %vm1899, %v1746
  %1920 = vst.msk [vmem:[#allocation3 + $0xa0] sm:$0xff] %vm1899, %v1748
  %1921 = vst.msk [vmem:[#allocation3 + $0xa8] sm:$0xff] %vm1899, %v1750
  %1922 = vst.msk [vmem:[#allocation3 + $0xb0] sm:$0xff] %vm1899, %v1752
  %1923 = vst.msk [vmem:[#allocation3 + $0xb8] sm:$0xff] %vm1899, %v1754
  %1924 = vst.msk [vmem:[#allocation3 + $0xc0] sm:$0xff] %vm1899, %v1756
  %1925 = vst.msk [vmem:[#allocation3 + $0xc8] sm:$0xff] %vm1899, %v1758
  %1926 = vst.msk [vmem:[#allocation3 + $0xd0] sm:$0xff] %vm1899, %v1760
  %1927 = vst.msk [vmem:[#allocation3 + $0xd8] sm:$0xff] %vm1899, %v1762
  %1928 = vst.msk [vmem:[#allocation3 + $0xe0] sm:$0xff] %vm1899, %v1764
  %1929 = vst.msk [vmem:[#allocation3 + $0xe8] sm:$0xff] %vm1899, %v1766
  %1930 = vst.msk [vmem:[#allocation3 + $0xf0] sm:$0xff] %vm1899, %v1768
  %1931 = vst.msk [vmem:[#allocation3 + $0xf8] sm:$0xff] %vm1899, %v1770
  %1932 = vst.msk [vmem:[#allocation3 + $0x100] sm:$0xff] %vm1899, %v1772
  %1933 = vst.msk [vmem:[#allocation3 + $0x108] sm:$0xff] %vm1899, %v1774
  %1934 = vst.msk [vmem:[#allocation3 + $0x110] sm:$0xff] %vm1899, %v1776
  %1935 = vst.msk [vmem:[#allocation3 + $0x118] sm:$0xff] %vm1899, %v1778
  %1936 = vst.msk [vmem:[#allocation3 + $0x120] sm:$0xff] %vm1899, %v1780
  %1937 = vst.msk [vmem:[#allocation3 + $0x128] sm:$0xff] %vm1899, %v1782
  %1938 = vst.msk [vmem:[#allocation3 + $0x130] sm:$0xff] %vm1899, %v1784
  %1939 = vst.msk [vmem:[#allocation3 + $0x138] sm:$0xff] %vm1899, %v1786
  %1940 = vst.msk [vmem:[#allocation3 + $0x140] sm:$0xff] %vm1899, %v1788
  %1941 = vst.msk [vmem:[#allocation3 + $0x148] sm:$0xff] %vm1899, %v1790
  %1942 = vst.msk [vmem:[#allocation3 + $0x150] sm:$0xff] %vm1899, %v1792
  %1943 = vst.msk [vmem:[#allocation3 + $0x158] sm:$0xff] %vm1899, %v1794
  %1944 = vst.msk [vmem:[#allocation3 + $0x160] sm:$0xff] %vm1899, %v1796
  %1945 = vst.msk [vmem:[#allocation3 + $0x168] sm:$0xff] %vm1899, %v1798
  %1946 = vst.msk [vmem:[#allocation3 + $0x170] sm:$0xff] %vm1899, %v1800
  %1947 = vst.msk [vmem:[#allocation3 + $0x178] sm:$0xff] %vm1899, %v1802
  %1948 = vst.msk [vmem:[#allocation3 + $0x180] sm:$0xff] %vm1899, %v1804
  %1949 = vst.msk [vmem:[#allocation3 + $0x188] sm:$0xff] %vm1899, %v1806
  %1950 = vst.msk [vmem:[#allocation3 + $0x190] sm:$0xff] %vm1899, %v1808
  %1951 = vst.msk [vmem:[#allocation3 + $0x198] sm:$0xff] %vm1899, %v1810
  %1952 = vst.msk [vmem:[#allocation3 + $0x1a0] sm:$0xff] %vm1899, %v1812
  %1953 = vst.msk [vmem:[#allocation3 + $0x1a8] sm:$0xff] %vm1899, %v1814
  %1954 = vst.msk [vmem:[#allocation3 + $0x1b0] sm:$0xff] %vm1899, %v1816
  %1955 = vst.msk [vmem:[#allocation3 + $0x1b8] sm:$0xff] %vm1899, %v1818
  %1956 = vst.msk [vmem:[#allocation3 + $0x1c0] sm:$0xff] %vm1899, %v1820
  %1957 = vst.msk [vmem:[#allocation3 + $0x1c8] sm:$0xff] %vm1899, %v1822
  %1958 = vst.msk [vmem:[#allocation3 + $0x1d0] sm:$0xff] %vm1899, %v1824
  %1959 = vst.msk [vmem:[#allocation3 + $0x1d8] sm:$0xff] %vm1899, %v1826
  %1960 = vst.msk [vmem:[#allocation3 + $0x1e0] sm:$0xff] %vm1899, %v1828
  %1961 = vst.msk [vmem:[#allocation3 + $0x1e8] sm:$0xff] %vm1899, %v1830
  %1962 = vst.msk [vmem:[#allocation3 + $0x1f0] sm:$0xff] %vm1899, %v1832
  %1963 = vst.msk [vmem:[#allocation3 + $0x1f8] sm:$0xff] %vm1899, %v1834
  %v1964 = vld [vmem:[%s231 + $0x2] sm:$0xff]
  %v1965 = vld [vmem:[%s231 + $0xa] sm:$0xff]
  %v1966 = vld [vmem:[%s231 + $0x1a] sm:$0xff]
  %v1967 = vld [vmem:[%s231 + $0x22] sm:$0xff]
  %v1968 = vld [vmem:[%s231 + $0x32] sm:$0xff]
  %v1969 = vld [vmem:[%s231 + $0x3a] sm:$0xff]
  %v1970 = vld [vmem:[%s231 + $0x4a] sm:$0xff]
  %v1971 = vld [vmem:[%s231 + $0x52] sm:$0xff]
  %v1972 = vld [vmem:[%s231 + $0x62] sm:$0xff]
  %v1973 = vld [vmem:[%s231 + $0x6a] sm:$0xff]
  %v1974 = vld [vmem:[%s231 + $0x7a] sm:$0xff]
  %v1975 = vld [vmem:[%s231 + $0x82] sm:$0xff]
  %v1976 = vld [vmem:[%s231 + $0x92] sm:$0xff]
  %v1977 = vld [vmem:[%s231 + $0x9a] sm:$0xff]
  %v1978 = vld [vmem:[%s231 + $0xaa] sm:$0xff]
  %v1979 = vld [vmem:[%s231 + $0xb2] sm:$0xff]
  %v1980 = vld [vmem:[%s231 + $0xc2] sm:$0xff]
  %v1981 = vld [vmem:[%s231 + $0xca] sm:$0xff]
  %v1982 = vld [vmem:[%s231 + $0xda] sm:$0xff]
  %v1983 = vld [vmem:[%s231 + $0xe2] sm:$0xff]
  %v1984 = vld [vmem:[%s231 + $0xf2] sm:$0xff]
  %v1985 = vld [vmem:[%s231 + $0xfa] sm:$0xff]
  %v1986 = vld [vmem:[%s231 + $0x10a] sm:$0xff]
  %v1987 = vld [vmem:[%s231 + $0x112] sm:$0xff]
  %v1988 = vld [vmem:[%s231 + $0x122] sm:$0xff]
  %v1989 = vld [vmem:[%s231 + $0x12a] sm:$0xff]
  %v1990 = vld [vmem:[%s231 + $0x13a] sm:$0xff]
  %v1991 = vld [vmem:[%s231 + $0x142] sm:$0xff]
  %v1992 = vld [vmem:[%s231 + $0x152] sm:$0xff]
  %v1993 = vld [vmem:[%s231 + $0x15a] sm:$0xff]
  %v1994 = vld [vmem:[%s231 + $0x16a] sm:$0xff]
  %v1995 = vld [vmem:[%s231 + $0x172] sm:$0xff]
  %v1996 = vld [vmem:[%s231 + $0x1b2] sm:$0xff]
  %v1997 = vld [vmem:[%s231 + $0x1ba] sm:$0xff]
  %v1998 = vld [vmem:[%s231 + $0x1ca] sm:$0xff]
  %v1999 = vld [vmem:[%s231 + $0x1d2] sm:$0xff]
  %v2000 = vld [vmem:[%s231 + $0x1e2] sm:$0xff]
  %v2001 = vld [vmem:[%s231 + $0x1ea] sm:$0xff]
  %v2002 = vld [vmem:[%s231 + $0x1fa] sm:$0xff]
  %v2003 = vld [vmem:[%s231 + $0x202] sm:$0xff]
  %v2004 = vld [vmem:[%s231 + $0x212] sm:$0xff]
  %v2005 = vld [vmem:[%s231 + $0x21a] sm:$0xff]
  %v2006 = vld [vmem:[%s231 + $0x22a] sm:$0xff]
  %v2007 = vld [vmem:[%s231 + $0x232] sm:$0xff]
  %v2008 = vld [vmem:[%s231 + $0x242] sm:$0xff]
  %v2009 = vld [vmem:[%s231 + $0x24a] sm:$0xff]
  %v2010 = vld [vmem:[%s231 + $0x25a] sm:$0xff]
  %v2011 = vld [vmem:[%s231 + $0x262] sm:$0xff]
  %v2012 = vld [vmem:[%s231 + $0x272] sm:$0xff]
  %v2013 = vld [vmem:[%s231 + $0x27a] sm:$0xff]
  %v2014 = vld [vmem:[%s231 + $0x28a] sm:$0xff]
  %v2015 = vld [vmem:[%s231 + $0x292] sm:$0xff]
  %v2016 = vld [vmem:[%s231 + $0x2a2] sm:$0xff]
  %v2017 = vld [vmem:[%s231 + $0x2aa] sm:$0xff]
  %v2018 = vld [vmem:[%s231 + $0x2ba] sm:$0xff]
  %v2019 = vld [vmem:[%s231 + $0x2c2] sm:$0xff]
  %v2020 = vld [vmem:[%s231 + $0x2d2] sm:$0xff]
  %v2021 = vld [vmem:[%s231 + $0x2da] sm:$0xff]
  %v2022 = vld [vmem:[%s231 + $0x2ea] sm:$0xff]
  %v2023 = vld [vmem:[%s231 + $0x2f2] sm:$0xff]
  %v2024 = vld [vmem:[%s231 + $0x302] sm:$0xff]
  %v2025 = vld [vmem:[%s231 + $0x30a] sm:$0xff]
  %v2026 = vld [vmem:[%s231 + $0x31a] sm:$0xff]
  %v2027 = vld [vmem:[%s231 + $0x322] sm:$0xff]
  %2092 = vrot.lane.b32.xlu0 %v1964, 15
  %v2093 = vpop.permute.xlu0 %2092
  %2094 = vrot.lane.b32.xlu0 %v1965, 15
  %v2095 = vpop.permute.xlu0 %2094
  %2096 = vrot.lane.b32.xlu0 %v1966, 15
  %v2097 = vpop.permute.xlu0 %2096
  %2098 = vrot.lane.b32.xlu0 %v1967, 15
  %v2099 = vpop.permute.xlu0 %2098
  %2100 = vrot.lane.b32.xlu0 %v1968, 15
  %v2101 = vpop.permute.xlu0 %2100
  %2102 = vrot.lane.b32.xlu0 %v1969, 15
  %v2103 = vpop.permute.xlu0 %2102
  %2104 = vrot.lane.b32.xlu0 %v1970, 15
  %v2105 = vpop.permute.xlu0 %2104
  %2106 = vrot.lane.b32.xlu0 %v1971, 15
  %v2107 = vpop.permute.xlu0 %2106
  %2108 = vrot.lane.b32.xlu0 %v1972, 15
  %v2109 = vpop.permute.xlu0 %2108
  %2110 = vrot.lane.b32.xlu0 %v1973, 15
  %v2111 = vpop.permute.xlu0 %2110
  %2112 = vrot.lane.b32.xlu0 %v1974, 15
  %v2113 = vpop.permute.xlu0 %2112
  %2114 = vrot.lane.b32.xlu0 %v1975, 15
  %v2115 = vpop.permute.xlu0 %2114
  %2116 = vrot.lane.b32.xlu0 %v1976, 15
  %v2117 = vpop.permute.xlu0 %2116
  %2118 = vrot.lane.b32.xlu0 %v1977, 15
  %v2119 = vpop.permute.xlu0 %2118
  %2120 = vrot.lane.b32.xlu0 %v1978, 15
  %v2121 = vpop.permute.xlu0 %2120
  %2122 = vrot.lane.b32.xlu0 %v1979, 15
  %v2123 = vpop.permute.xlu0 %2122
  %2124 = vrot.lane.b32.xlu0 %v1980, 15
  %v2125 = vpop.permute.xlu0 %2124
  %2126 = vrot.lane.b32.xlu0 %v1981, 15
  %v2127 = vpop.permute.xlu0 %2126
  %2128 = vrot.lane.b32.xlu0 %v1982, 15
  %v2129 = vpop.permute.xlu0 %2128
  %2130 = vrot.lane.b32.xlu0 %v1983, 15
  %v2131 = vpop.permute.xlu0 %2130
  %2132 = vrot.lane.b32.xlu0 %v1984, 15
  %v2133 = vpop.permute.xlu0 %2132
  %2134 = vrot.lane.b32.xlu0 %v1985, 15
  %v2135 = vpop.permute.xlu0 %2134
  %2136 = vrot.lane.b32.xlu0 %v1986, 15
  %v2137 = vpop.permute.xlu0 %2136
  %2138 = vrot.lane.b32.xlu0 %v1987, 15
  %v2139 = vpop.permute.xlu0 %2138
  %2140 = vrot.lane.b32.xlu0 %v1988, 15
  %v2141 = vpop.permute.xlu0 %2140
  %2142 = vrot.lane.b32.xlu0 %v1989, 15
  %v2143 = vpop.permute.xlu0 %2142
  %2144 = vrot.lane.b32.xlu0 %v1990, 15
  %v2145 = vpop.permute.xlu0 %2144
  %2146 = vrot.lane.b32.xlu0 %v1991, 15
  %v2147 = vpop.permute.xlu0 %2146
  %2148 = vrot.lane.b32.xlu0 %v1992, 15
  %v2149 = vpop.permute.xlu0 %2148
  %2150 = vrot.lane.b32.xlu0 %v1993, 15
  %v2151 = vpop.permute.xlu0 %2150
  %2152 = vrot.lane.b32.xlu0 %v1994, 15
  %v2153 = vpop.permute.xlu0 %2152
  %2154 = vrot.lane.b32.xlu0 %v1995, 15
  %v2155 = vpop.permute.xlu0 %2154
  %2156 = vrot.lane.b32.xlu0 %v1996, 15
  %v2157 = vpop.permute.xlu0 %2156
  %2158 = vrot.lane.b32.xlu0 %v1997, 15
  %v2159 = vpop.permute.xlu0 %2158
  %2160 = vrot.lane.b32.xlu0 %v1998, 15
  %v2161 = vpop.permute.xlu0 %2160
  %2162 = vrot.lane.b32.xlu0 %v1999, 15
  %v2163 = vpop.permute.xlu0 %2162
  %2164 = vrot.lane.b32.xlu0 %v2000, 15
  %v2165 = vpop.permute.xlu0 %2164
  %2166 = vrot.lane.b32.xlu0 %v2001, 15
  %v2167 = vpop.permute.xlu0 %2166
  %2168 = vrot.lane.b32.xlu0 %v2002, 15
  %v2169 = vpop.permute.xlu0 %2168
  %2170 = vrot.lane.b32.xlu0 %v2003, 15
  %v2171 = vpop.permute.xlu0 %2170
  %2172 = vrot.lane.b32.xlu0 %v2004, 15
  %v2173 = vpop.permute.xlu0 %2172
  %2174 = vrot.lane.b32.xlu0 %v2005, 15
  %v2175 = vpop.permute.xlu0 %2174
  %2176 = vrot.lane.b32.xlu0 %v2006, 15
  %v2177 = vpop.permute.xlu0 %2176
  %2178 = vrot.lane.b32.xlu0 %v2007, 15
  %v2179 = vpop.permute.xlu0 %2178
  %2180 = vrot.lane.b32.xlu0 %v2008, 15
  %v2181 = vpop.permute.xlu0 %2180
  %2182 = vrot.lane.b32.xlu0 %v2009, 15
  %v2183 = vpop.permute.xlu0 %2182
  %2184 = vrot.lane.b32.xlu0 %v2010, 15
  %v2185 = vpop.permute.xlu0 %2184
  %2186 = vrot.lane.b32.xlu0 %v2011, 15
  %v2187 = vpop.permute.xlu0 %2186
  %2188 = vrot.lane.b32.xlu0 %v2012, 15
  %v2189 = vpop.permute.xlu0 %2188
  %2190 = vrot.lane.b32.xlu0 %v2013, 15
  %v2191 = vpop.permute.xlu0 %2190
  %2192 = vrot.lane.b32.xlu0 %v2014, 15
  %v2193 = vpop.permute.xlu0 %2192
  %2194 = vrot.lane.b32.xlu0 %v2015, 15
  %v2195 = vpop.permute.xlu0 %2194
  %2196 = vrot.lane.b32.xlu0 %v2016, 15
  %v2197 = vpop.permute.xlu0 %2196
  %2198 = vrot.lane.b32.xlu0 %v2017, 15
  %v2199 = vpop.permute.xlu0 %2198
  %2200 = vrot.lane.b32.xlu0 %v2018, 15
  %v2201 = vpop.permute.xlu0 %2200
  %2202 = vrot.lane.b32.xlu0 %v2019, 15
  %v2203 = vpop.permute.xlu0 %2202
  %2204 = vrot.lane.b32.xlu0 %v2020, 15
  %v2205 = vpop.permute.xlu0 %2204
  %2206 = vrot.lane.b32.xlu0 %v2021, 15
  %v2207 = vpop.permute.xlu0 %2206
  %2208 = vrot.lane.b32.xlu0 %v2022, 15
  %v2209 = vpop.permute.xlu0 %2208
  %2210 = vrot.lane.b32.xlu0 %v2023, 15
  %v2211 = vpop.permute.xlu0 %2210
  %2212 = vrot.lane.b32.xlu0 %v2024, 15
  %v2213 = vpop.permute.xlu0 %2212
  %2214 = vrot.lane.b32.xlu0 %v2025, 15
  %v2215 = vpop.permute.xlu0 %2214
  %2216 = vrot.lane.b32.xlu0 %v2026, 15
  %v2217 = vpop.permute.xlu0 %2216
  %2218 = vrot.lane.b32.xlu0 %v2027, 15
  %v2219 = vpop.permute.xlu0 %2218
  %vm2284 = vcmask 146552
  %2285 = vst.msk [vmem:[#allocation3] sm:$0xff] %vm2284, %v2093
  %2286 = vst.msk [vmem:[#allocation3 + $0x8] sm:$0xff] %vm2284, %v2095
  %2287 = vst.msk [vmem:[#allocation3 + $0x10] sm:$0xff] %vm2284, %v2097
  %2288 = vst.msk [vmem:[#allocation3 + $0x18] sm:$0xff] %vm2284, %v2099
  %2289 = vst.msk [vmem:[#allocation3 + $0x20] sm:$0xff] %vm2284, %v2101
  %2290 = vst.msk [vmem:[#allocation3 + $0x28] sm:$0xff] %vm2284, %v2103
  %2291 = vst.msk [vmem:[#allocation3 + $0x30] sm:$0xff] %vm2284, %v2105
  %2292 = vst.msk [vmem:[#allocation3 + $0x38] sm:$0xff] %vm2284, %v2107
  %2293 = vst.msk [vmem:[#allocation3 + $0x40] sm:$0xff] %vm2284, %v2109
  %2294 = vst.msk [vmem:[#allocation3 + $0x48] sm:$0xff] %vm2284, %v2111
  %2295 = vst.msk [vmem:[#allocation3 + $0x50] sm:$0xff] %vm2284, %v2113
  %2296 = vst.msk [vmem:[#allocation3 + $0x58] sm:$0xff] %vm2284, %v2115
  %2297 = vst.msk [vmem:[#allocation3 + $0x60] sm:$0xff] %vm2284, %v2117
  %2298 = vst.msk [vmem:[#allocation3 + $0x68] sm:$0xff] %vm2284, %v2119
  %2299 = vst.msk [vmem:[#allocation3 + $0x70] sm:$0xff] %vm2284, %v2121
  %2300 = vst.msk [vmem:[#allocation3 + $0x78] sm:$0xff] %vm2284, %v2123
  %2301 = vst.msk [vmem:[#allocation3 + $0x80] sm:$0xff] %vm2284, %v2125
  %2302 = vst.msk [vmem:[#allocation3 + $0x88] sm:$0xff] %vm2284, %v2127
  %2303 = vst.msk [vmem:[#allocation3 + $0x90] sm:$0xff] %vm2284, %v2129
  %2304 = vst.msk [vmem:[#allocation3 + $0x98] sm:$0xff] %vm2284, %v2131
  %2305 = vst.msk [vmem:[#allocation3 + $0xa0] sm:$0xff] %vm2284, %v2133
  %2306 = vst.msk [vmem:[#allocation3 + $0xa8] sm:$0xff] %vm2284, %v2135
  %2307 = vst.msk [vmem:[#allocation3 + $0xb0] sm:$0xff] %vm2284, %v2137
  %2308 = vst.msk [vmem:[#allocation3 + $0xb8] sm:$0xff] %vm2284, %v2139
  %2309 = vst.msk [vmem:[#allocation3 + $0xc0] sm:$0xff] %vm2284, %v2141
  %2310 = vst.msk [vmem:[#allocation3 + $0xc8] sm:$0xff] %vm2284, %v2143
  %2311 = vst.msk [vmem:[#allocation3 + $0xd0] sm:$0xff] %vm2284, %v2145
  %2312 = vst.msk [vmem:[#allocation3 + $0xd8] sm:$0xff] %vm2284, %v2147
  %2313 = vst.msk [vmem:[#allocation3 + $0xe0] sm:$0xff] %vm2284, %v2149
  %2314 = vst.msk [vmem:[#allocation3 + $0xe8] sm:$0xff] %vm2284, %v2151
  %2315 = vst.msk [vmem:[#allocation3 + $0xf0] sm:$0xff] %vm2284, %v2153
  %2316 = vst.msk [vmem:[#allocation3 + $0xf8] sm:$0xff] %vm2284, %v2155
  %2317 = vst.msk [vmem:[#allocation3 + $0x100] sm:$0xff] %vm2284, %v2157
  %2318 = vst.msk [vmem:[#allocation3 + $0x108] sm:$0xff] %vm2284, %v2159
  %2319 = vst.msk [vmem:[#allocation3 + $0x110] sm:$0xff] %vm2284, %v2161
  %2320 = vst.msk [vmem:[#allocation3 + $0x118] sm:$0xff] %vm2284, %v2163
  %2321 = vst.msk [vmem:[#allocation3 + $0x120] sm:$0xff] %vm2284, %v2165
  %2322 = vst.msk [vmem:[#allocation3 + $0x128] sm:$0xff] %vm2284, %v2167
  %2323 = vst.msk [vmem:[#allocation3 + $0x130] sm:$0xff] %vm2284, %v2169
  %2324 = vst.msk [vmem:[#allocation3 + $0x138] sm:$0xff] %vm2284, %v2171
  %2325 = vst.msk [vmem:[#allocation3 + $0x140] sm:$0xff] %vm2284, %v2173
  %2326 = vst.msk [vmem:[#allocation3 + $0x148] sm:$0xff] %vm2284, %v2175
  %2327 = vst.msk [vmem:[#allocation3 + $0x150] sm:$0xff] %vm2284, %v2177
  %2328 = vst.msk [vmem:[#allocation3 + $0x158] sm:$0xff] %vm2284, %v2179
  %2329 = vst.msk [vmem:[#allocation3 + $0x160] sm:$0xff] %vm2284, %v2181
  %2330 = vst.msk [vmem:[#allocation3 + $0x168] sm:$0xff] %vm2284, %v2183
  %2331 = vst.msk [vmem:[#allocation3 + $0x170] sm:$0xff] %vm2284, %v2185
  %2332 = vst.msk [vmem:[#allocation3 + $0x178] sm:$0xff] %vm2284, %v2187
  %2333 = vst.msk [vmem:[#allocation3 + $0x180] sm:$0xff] %vm2284, %v2189
  %2334 = vst.msk [vmem:[#allocation3 + $0x188] sm:$0xff] %vm2284, %v2191
  %2335 = vst.msk [vmem:[#allocation3 + $0x190] sm:$0xff] %vm2284, %v2193
  %2336 = vst.msk [vmem:[#allocation3 + $0x198] sm:$0xff] %vm2284, %v2195
  %2337 = vst.msk [vmem:[#allocation3 + $0x1a0] sm:$0xff] %vm2284, %v2197
  %2338 = vst.msk [vmem:[#allocation3 + $0x1a8] sm:$0xff] %vm2284, %v2199
  %2339 = vst.msk [vmem:[#allocation3 + $0x1b0] sm:$0xff] %vm2284, %v2201
  %2340 = vst.msk [vmem:[#allocation3 + $0x1b8] sm:$0xff] %vm2284, %v2203
  %2341 = vst.msk [vmem:[#allocation3 + $0x1c0] sm:$0xff] %vm2284, %v2205
  %2342 = vst.msk [vmem:[#allocation3 + $0x1c8] sm:$0xff] %vm2284, %v2207
  %2343 = vst.msk [vmem:[#allocation3 + $0x1d0] sm:$0xff] %vm2284, %v2209
  %2344 = vst.msk [vmem:[#allocation3 + $0x1d8] sm:$0xff] %vm2284, %v2211
  %2345 = vst.msk [vmem:[#allocation3 + $0x1e0] sm:$0xff] %vm2284, %v2213
  %2346 = vst.msk [vmem:[#allocation3 + $0x1e8] sm:$0xff] %vm2284, %v2215
  %2347 = vst.msk [vmem:[#allocation3 + $0x1f0] sm:$0xff] %vm2284, %v2217
  %2348 = vst.msk [vmem:[#allocation3 + $0x1f8] sm:$0xff] %vm2284, %v2219
  %s2349 = scalar_lea.vmem [#allocation2], 48
  %v2350 = vld [vmem:[%s2349] sm:$0xff]
  %v2351 = vld [vmem:[%s2349 + $0x8] sm:$0xff]
  %v2352 = vld [vmem:[%s2349 + $0x18] sm:$0xff]
  %v2353 = vld [vmem:[%s2349 + $0x20] sm:$0xff]
  %v2354 = vld [vmem:[%s2349 + $0x30] sm:$0xff]
  %v2355 = vld [vmem:[%s2349 + $0x38] sm:$0xff]
  %v2356 = vld [vmem:[%s2349 + $0x48] sm:$0xff]
  %v2357 = vld [vmem:[%s2349 + $0x50] sm:$0xff]
  %v2358 = vld [vmem:[%s2349 + $0x60] sm:$0xff]
  %v2359 = vld [vmem:[%s2349 + $0x68] sm:$0xff]
  %v2360 = vld [vmem:[%s2349 + $0x78] sm:$0xff]
  %v2361 = vld [vmem:[%s2349 + $0x80] sm:$0xff]
  %v2362 = vld [vmem:[%s2349 + $0x90] sm:$0xff]
  %v2363 = vld [vmem:[%s2349 + $0x98] sm:$0xff]
  %v2364 = vld [vmem:[%s2349 + $0xa8] sm:$0xff]
  %v2365 = vld [vmem:[%s2349 + $0xb0] sm:$0xff]
  %v2366 = vld [vmem:[%s2349 + $0xc0] sm:$0xff]
  %v2367 = vld [vmem:[%s2349 + $0xc8] sm:$0xff]
  %v2368 = vld [vmem:[%s2349 + $0xd8] sm:$0xff]
  %v2369 = vld [vmem:[%s2349 + $0xe0] sm:$0xff]
  %v2370 = vld [vmem:[%s2349 + $0xf0] sm:$0xff]
  %v2371 = vld [vmem:[%s2349 + $0xf8] sm:$0xff]
  %v2372 = vld [vmem:[%s2349 + $0x108] sm:$0xff]
  %v2373 = vld [vmem:[%s2349 + $0x110] sm:$0xff]
  %v2374 = vld [vmem:[%s2349 + $0x120] sm:$0xff]
  %v2375 = vld [vmem:[%s2349 + $0x128] sm:$0xff]
  %v2376 = vld [vmem:[%s2349 + $0x138] sm:$0xff]
  %v2377 = vld [vmem:[%s2349 + $0x140] sm:$0xff]
  %v2378 = vld [vmem:[%s2349 + $0x150] sm:$0xff]
  %v2379 = vld [vmem:[%s2349 + $0x158] sm:$0xff]
  %v2380 = vld [vmem:[%s2349 + $0x168] sm:$0xff]
  %v2381 = vld [vmem:[%s2349 + $0x170] sm:$0xff]
  %v2382 = vld [vmem:[%s2349 + $0x1b0] sm:$0xff]
  %v2383 = vld [vmem:[%s2349 + $0x1b8] sm:$0xff]
  %v2384 = vld [vmem:[%s2349 + $0x1c8] sm:$0xff]
  %v2385 = vld [vmem:[%s2349 + $0x1d0] sm:$0xff]
  %v2386 = vld [vmem:[%s2349 + $0x1e0] sm:$0xff]
  %v2387 = vld [vmem:[%s2349 + $0x1e8] sm:$0xff]
  %v2388 = vld [vmem:[%s2349 + $0x1f8] sm:$0xff]
  %v2389 = vld [vmem:[%s2349 + $0x200] sm:$0xff]
  %v2390 = vld [vmem:[%s2349 + $0x210] sm:$0xff]
  %v2391 = vld [vmem:[%s2349 + $0x218] sm:$0xff]
  %v2392 = vld [vmem:[%s2349 + $0x228] sm:$0xff]
  %v2393 = vld [vmem:[%s2349 + $0x230] sm:$0xff]
  %v2394 = vld [vmem:[%s2349 + $0x240] sm:$0xff]
  %v2395 = vld [vmem:[%s2349 + $0x248] sm:$0xff]
  %v2396 = vld [vmem:[%s2349 + $0x258] sm:$0xff]
  %v2397 = vld [vmem:[%s2349 + $0x260] sm:$0xff]
  %v2398 = vld [vmem:[%s2349 + $0x270] sm:$0xff]
  %v2399 = vld [vmem:[%s2349 + $0x278] sm:$0xff]
  %v2400 = vld [vmem:[%s2349 + $0x288] sm:$0xff]
  %v2401 = vld [vmem:[%s2349 + $0x290] sm:$0xff]
  %v2402 = vld [vmem:[%s2349 + $0x2a0] sm:$0xff]
  %v2403 = vld [vmem:[%s2349 + $0x2a8] sm:$0xff]
  %v2404 = vld [vmem:[%s2349 + $0x2b8] sm:$0xff]
  %v2405 = vld [vmem:[%s2349 + $0x2c0] sm:$0xff]
  %v2406 = vld [vmem:[%s2349 + $0x2d0] sm:$0xff]
  %v2407 = vld [vmem:[%s2349 + $0x2d8] sm:$0xff]
  %v2408 = vld [vmem:[%s2349 + $0x2e8] sm:$0xff]
  %v2409 = vld [vmem:[%s2349 + $0x2f0] sm:$0xff]
  %v2410 = vld [vmem:[%s2349 + $0x300] sm:$0xff]
  %v2411 = vld [vmem:[%s2349 + $0x308] sm:$0xff]
  %v2412 = vld [vmem:[%s2349 + $0x318] sm:$0xff]
  %v2413 = vld [vmem:[%s2349 + $0x320] sm:$0xff]
  %2478 = vrot.lane.b32.xlu0 %v2350, 18
  %v2479 = vpop.permute.xlu0 %2478
  %2480 = vrot.lane.b32.xlu0 %v2351, 18
  %v2481 = vpop.permute.xlu0 %2480
  %2482 = vrot.lane.b32.xlu0 %v2352, 18
  %v2483 = vpop.permute.xlu0 %2482
  %2484 = vrot.lane.b32.xlu0 %v2353, 18
  %v2485 = vpop.permute.xlu0 %2484
  %2486 = vrot.lane.b32.xlu0 %v2354, 18
  %v2487 = vpop.permute.xlu0 %2486
  %2488 = vrot.lane.b32.xlu0 %v2355, 18
  %v2489 = vpop.permute.xlu0 %2488
  %2490 = vrot.lane.b32.xlu0 %v2356, 18
  %v2491 = vpop.permute.xlu0 %2490
  %2492 = vrot.lane.b32.xlu0 %v2357, 18
  %v2493 = vpop.permute.xlu0 %2492
  %2494 = vrot.lane.b32.xlu0 %v2358, 18
  %v2495 = vpop.permute.xlu0 %2494
  %2496 = vrot.lane.b32.xlu0 %v2359, 18
  %v2497 = vpop.permute.xlu0 %2496
  %2498 = vrot.lane.b32.xlu0 %v2360, 18
  %v2499 = vpop.permute.xlu0 %2498
  %2500 = vrot.lane.b32.xlu0 %v2361, 18
  %v2501 = vpop.permute.xlu0 %2500
  %2502 = vrot.lane.b32.xlu0 %v2362, 18
  %v2503 = vpop.permute.xlu0 %2502
  %2504 = vrot.lane.b32.xlu0 %v2363, 18
  %v2505 = vpop.permute.xlu0 %2504
  %2506 = vrot.lane.b32.xlu0 %v2364, 18
  %v2507 = vpop.permute.xlu0 %2506
  %2508 = vrot.lane.b32.xlu0 %v2365, 18
  %v2509 = vpop.permute.xlu0 %2508
  %2510 = vrot.lane.b32.xlu0 %v2366, 18
  %v2511 = vpop.permute.xlu0 %2510
  %2512 = vrot.lane.b32.xlu0 %v2367, 18
  %v2513 = vpop.permute.xlu0 %2512
  %2514 = vrot.lane.b32.xlu0 %v2368, 18
  %v2515 = vpop.permute.xlu0 %2514
  %2516 = vrot.lane.b32.xlu0 %v2369, 18
  %v2517 = vpop.permute.xlu0 %2516
  %2518 = vrot.lane.b32.xlu0 %v2370, 18
  %v2519 = vpop.permute.xlu0 %2518
  %2520 = vrot.lane.b32.xlu0 %v2371, 18
  %v2521 = vpop.permute.xlu0 %2520
  %2522 = vrot.lane.b32.xlu0 %v2372, 18
  %v2523 = vpop.permute.xlu0 %2522
  %2524 = vrot.lane.b32.xlu0 %v2373, 18
  %v2525 = vpop.permute.xlu0 %2524
  %2526 = vrot.lane.b32.xlu0 %v2374, 18
  %v2527 = vpop.permute.xlu0 %2526
  %2528 = vrot.lane.b32.xlu0 %v2375, 18
  %v2529 = vpop.permute.xlu0 %2528
  %2530 = vrot.lane.b32.xlu0 %v2376, 18
  %v2531 = vpop.permute.xlu0 %2530
  %2532 = vrot.lane.b32.xlu0 %v2377, 18
  %v2533 = vpop.permute.xlu0 %2532
  %2534 = vrot.lane.b32.xlu0 %v2378, 18
  %v2535 = vpop.permute.xlu0 %2534
  %2536 = vrot.lane.b32.xlu0 %v2379, 18
  %v2537 = vpop.permute.xlu0 %2536
  %2538 = vrot.lane.b32.xlu0 %v2380, 18
  %v2539 = vpop.permute.xlu0 %2538
  %2540 = vrot.lane.b32.xlu0 %v2381, 18
  %v2541 = vpop.permute.xlu0 %2540
  %2542 = vrot.lane.b32.xlu0 %v2382, 18
  %v2543 = vpop.permute.xlu0 %2542
  %2544 = vrot.lane.b32.xlu0 %v2383, 18
  %v2545 = vpop.permute.xlu0 %2544
  %2546 = vrot.lane.b32.xlu0 %v2384, 18
  %v2547 = vpop.permute.xlu0 %2546
  %2548 = vrot.lane.b32.xlu0 %v2385, 18
  %v2549 = vpop.permute.xlu0 %2548
  %2550 = vrot.lane.b32.xlu0 %v2386, 18
  %v2551 = vpop.permute.xlu0 %2550
  %2552 = vrot.lane.b32.xlu0 %v2387, 18
  %v2553 = vpop.permute.xlu0 %2552
  %2554 = vrot.lane.b32.xlu0 %v2388, 18
  %v2555 = vpop.permute.xlu0 %2554
  %2556 = vrot.lane.b32.xlu0 %v2389, 18
  %v2557 = vpop.permute.xlu0 %2556
  %2558 = vrot.lane.b32.xlu0 %v2390, 18
  %v2559 = vpop.permute.xlu0 %2558
  %2560 = vrot.lane.b32.xlu0 %v2391, 18
  %v2561 = vpop.permute.xlu0 %2560
  %2562 = vrot.lane.b32.xlu0 %v2392, 18
  %v2563 = vpop.permute.xlu0 %2562
  %2564 = vrot.lane.b32.xlu0 %v2393, 18
  %v2565 = vpop.permute.xlu0 %2564
  %2566 = vrot.lane.b32.xlu0 %v2394, 18
  %v2567 = vpop.permute.xlu0 %2566
  %2568 = vrot.lane.b32.xlu0 %v2395, 18
  %v2569 = vpop.permute.xlu0 %2568
  %2570 = vrot.lane.b32.xlu0 %v2396, 18
  %v2571 = vpop.permute.xlu0 %2570
  %2572 = vrot.lane.b32.xlu0 %v2397, 18
  %v2573 = vpop.permute.xlu0 %2572
  %2574 = vrot.lane.b32.xlu0 %v2398, 18
  %v2575 = vpop.permute.xlu0 %2574
  %2576 = vrot.lane.b32.xlu0 %v2399, 18
  %v2577 = vpop.permute.xlu0 %2576
  %2578 = vrot.lane.b32.xlu0 %v2400, 18
  %v2579 = vpop.permute.xlu0 %2578
  %2580 = vrot.lane.b32.xlu0 %v2401, 18
  %v2581 = vpop.permute.xlu0 %2580
  %2582 = vrot.lane.b32.xlu0 %v2402, 18
  %v2583 = vpop.permute.xlu0 %2582
  %2584 = vrot.lane.b32.xlu0 %v2403, 18
  %v2585 = vpop.permute.xlu0 %2584
  %2586 = vrot.lane.b32.xlu0 %v2404, 18
  %v2587 = vpop.permute.xlu0 %2586
  %2588 = vrot.lane.b32.xlu0 %v2405, 18
  %v2589 = vpop.permute.xlu0 %2588
  %2590 = vrot.lane.b32.xlu0 %v2406, 18
  %v2591 = vpop.permute.xlu0 %2590
  %2592 = vrot.lane.b32.xlu0 %v2407, 18
  %v2593 = vpop.permute.xlu0 %2592
  %2594 = vrot.lane.b32.xlu0 %v2408, 18
  %v2595 = vpop.permute.xlu0 %2594
  %2596 = vrot.lane.b32.xlu0 %v2409, 18
  %v2597 = vpop.permute.xlu0 %2596
  %2598 = vrot.lane.b32.xlu0 %v2410, 18
  %v2599 = vpop.permute.xlu0 %2598
  %2600 = vrot.lane.b32.xlu0 %v2411, 18
  %v2601 = vpop.permute.xlu0 %2600
  %2602 = vrot.lane.b32.xlu0 %v2412, 18
  %v2603 = vpop.permute.xlu0 %2602
  %2604 = vrot.lane.b32.xlu0 %v2413, 18
  %v2605 = vpop.permute.xlu0 %2604
  %vm2670 = vcmask 171152
  %2671 = vst.msk [vmem:[#allocation3] sm:$0xff] %vm2670, %v2479
  %2672 = vst.msk [vmem:[#allocation3 + $0x8] sm:$0xff] %vm2670, %v2481
  %2673 = vst.msk [vmem:[#allocation3 + $0x10] sm:$0xff] %vm2670, %v2483
  %2674 = vst.msk [vmem:[#allocation3 + $0x18] sm:$0xff] %vm2670, %v2485
  %2675 = vst.msk [vmem:[#allocation3 + $0x20] sm:$0xff] %vm2670, %v2487
  %2676 = vst.msk [vmem:[#allocation3 + $0x28] sm:$0xff] %vm2670, %v2489
  %2677 = vst.msk [vmem:[#allocation3 + $0x30] sm:$0xff] %vm2670, %v2491
  %2678 = vst.msk [vmem:[#allocation3 + $0x38] sm:$0xff] %vm2670, %v2493
  %2679 = vst.msk [vmem:[#allocation3 + $0x40] sm:$0xff] %vm2670, %v2495
  %2680 = vst.msk [vmem:[#allocation3 + $0x48] sm:$0xff] %vm2670, %v2497
  %2681 = vst.msk [vmem:[#allocation3 + $0x50] sm:$0xff] %vm2670, %v2499
  %2682 = vst.msk [vmem:[#allocation3 + $0x58] sm:$0xff] %vm2670, %v2501
  %2683 = vst.msk [vmem:[#allocation3 + $0x60] sm:$0xff] %vm2670, %v2503
  %2684 = vst.msk [vmem:[#allocation3 + $0x68] sm:$0xff] %vm2670, %v2505
  %2685 = vst.msk [vmem:[#allocation3 + $0x70] sm:$0xff] %vm2670, %v2507
  %2686 = vst.msk [vmem:[#allocation3 + $0x78] sm:$0xff] %vm2670, %v2509
  %2687 = vst.msk [vmem:[#allocation3 + $0x80] sm:$0xff] %vm2670, %v2511
  %2688 = vst.msk [vmem:[#allocation3 + $0x88] sm:$0xff] %vm2670, %v2513
  %2689 = vst.msk [vmem:[#allocation3 + $0x90] sm:$0xff] %vm2670, %v2515
  %2690 = vst.msk [vmem:[#allocation3 + $0x98] sm:$0xff] %vm2670, %v2517
  %2691 = vst.msk [vmem:[#allocation3 + $0xa0] sm:$0xff] %vm2670, %v2519
  %2692 = vst.msk [vmem:[#allocation3 + $0xa8] sm:$0xff] %vm2670, %v2521
  %2693 = vst.msk [vmem:[#allocation3 + $0xb0] sm:$0xff] %vm2670, %v2523
  %2694 = vst.msk [vmem:[#allocation3 + $0xb8] sm:$0xff] %vm2670, %v2525
  %2695 = vst.msk [vmem:[#allocation3 + $0xc0] sm:$0xff] %vm2670, %v2527
  %2696 = vst.msk [vmem:[#allocation3 + $0xc8] sm:$0xff] %vm2670, %v2529
  %2697 = vst.msk [vmem:[#allocation3 + $0xd0] sm:$0xff] %vm2670, %v2531
  %2698 = vst.msk [vmem:[#allocation3 + $0xd8] sm:$0xff] %vm2670, %v2533
  %2699 = vst.msk [vmem:[#allocation3 + $0xe0] sm:$0xff] %vm2670, %v2535
  %2700 = vst.msk [vmem:[#allocation3 + $0xe8] sm:$0xff] %vm2670, %v2537
  %2701 = vst.msk [vmem:[#allocation3 + $0xf0] sm:$0xff] %vm2670, %v2539
  %2702 = vst.msk [vmem:[#allocation3 + $0xf8] sm:$0xff] %vm2670, %v2541
  %2703 = vst.msk [vmem:[#allocation3 + $0x100] sm:$0xff] %vm2670, %v2543
  %2704 = vst.msk [vmem:[#allocation3 + $0x108] sm:$0xff] %vm2670, %v2545
  %2705 = vst.msk [vmem:[#allocation3 + $0x110] sm:$0xff] %vm2670, %v2547
  %2706 = vst.msk [vmem:[#allocation3 + $0x118] sm:$0xff] %vm2670, %v2549
  %2707 = vst.msk [vmem:[#allocation3 + $0x120] sm:$0xff] %vm2670, %v2551
  %2708 = vst.msk [vmem:[#allocation3 + $0x128] sm:$0xff] %vm2670, %v2553
  %2709 = vst.msk [vmem:[#allocation3 + $0x130] sm:$0xff] %vm2670, %v2555
  %2710 = vst.msk [vmem:[#allocation3 + $0x138] sm:$0xff] %vm2670, %v2557
  %2711 = vst.msk [vmem:[#allocation3 + $0x140] sm:$0xff] %vm2670, %v2559
  %2712 = vst.msk [vmem:[#allocation3 + $0x148] sm:$0xff] %vm2670, %v2561
  %2713 = vst.msk [vmem:[#allocation3 + $0x150] sm:$0xff] %vm2670, %v2563
  %2714 = vst.msk [vmem:[#allocation3 + $0x158] sm:$0xff] %vm2670, %v2565
  %2715 = vst.msk [vmem:[#allocation3 + $0x160] sm:$0xff] %vm2670, %v2567
  %2716 = vst.msk [vmem:[#allocation3 + $0x168] sm:$0xff] %vm2670, %v2569
  %2717 = vst.msk [vmem:[#allocation3 + $0x170] sm:$0xff] %vm2670, %v2571
  %2718 = vst.msk [vmem:[#allocation3 + $0x178] sm:$0xff] %vm2670, %v2573
  %2719 = vst.msk [vmem:[#allocation3 + $0x180] sm:$0xff] %vm2670, %v2575
  %2720 = vst.msk [vmem:[#allocation3 + $0x188] sm:$0xff] %vm2670, %v2577
  %2721 = vst.msk [vmem:[#allocation3 + $0x190] sm:$0xff] %vm2670, %v2579
  %2722 = vst.msk [vmem:[#allocation3 + $0x198] sm:$0xff] %vm2670, %v2581
  %2723 = vst.msk [vmem:[#allocation3 + $0x1a0] sm:$0xff] %vm2670, %v2583
  %2724 = vst.msk [vmem:[#allocation3 + $0x1a8] sm:$0xff] %vm2670, %v2585
  %2725 = vst.msk [vmem:[#allocation3 + $0x1b0] sm:$0xff] %vm2670, %v2587
  %2726 = vst.msk [vmem:[#allocation3 + $0x1b8] sm:$0xff] %vm2670, %v2589
  %2727 = vst.msk [vmem:[#allocation3 + $0x1c0] sm:$0xff] %vm2670, %v2591
  %2728 = vst.msk [vmem:[#allocation3 + $0x1c8] sm:$0xff] %vm2670, %v2593
  %2729 = vst.msk [vmem:[#allocation3 + $0x1d0] sm:$0xff] %vm2670, %v2595
  %2730 = vst.msk [vmem:[#allocation3 + $0x1d8] sm:$0xff] %vm2670, %v2597
  %2731 = vst.msk [vmem:[#allocation3 + $0x1e0] sm:$0xff] %vm2670, %v2599
  %2732 = vst.msk [vmem:[#allocation3 + $0x1e8] sm:$0xff] %vm2670, %v2601
  %2733 = vst.msk [vmem:[#allocation3 + $0x1f0] sm:$0xff] %vm2670, %v2603
  %2734 = vst.msk [vmem:[#allocation3 + $0x1f8] sm:$0xff] %vm2670, %v2605
  %v2735 = vld [vmem:[%s2349 + $0x1] sm:$0xff]
  %v2736 = vld [vmem:[%s2349 + $0x9] sm:$0xff]
  %v2737 = vld [vmem:[%s2349 + $0x19] sm:$0xff]
  %v2738 = vld [vmem:[%s2349 + $0x21] sm:$0xff]
  %v2739 = vld [vmem:[%s2349 + $0x31] sm:$0xff]
  %v2740 = vld [vmem:[%s2349 + $0x39] sm:$0xff]
  %v2741 = vld [vmem:[%s2349 + $0x49] sm:$0xff]
  %v2742 = vld [vmem:[%s2349 + $0x51] sm:$0xff]
  %v2743 = vld [vmem:[%s2349 + $0x61] sm:$0xff]
  %v2744 = vld [vmem:[%s2349 + $0x69] sm:$0xff]
  %v2745 = vld [vmem:[%s2349 + $0x79] sm:$0xff]
  %v2746 = vld [vmem:[%s2349 + $0x81] sm:$0xff]
  %v2747 = vld [vmem:[%s2349 + $0x91] sm:$0xff]
  %v2748 = vld [vmem:[%s2349 + $0x99] sm:$0xff]
  %v2749 = vld [vmem:[%s2349 + $0xa9] sm:$0xff]
  %v2750 = vld [vmem:[%s2349 + $0xb1] sm:$0xff]
  %v2751 = vld [vmem:[%s2349 + $0xc1] sm:$0xff]
  %v2752 = vld [vmem:[%s2349 + $0xc9] sm:$0xff]
  %v2753 = vld [vmem:[%s2349 + $0xd9] sm:$0xff]
  %v2754 = vld [vmem:[%s2349 + $0xe1] sm:$0xff]
  %v2755 = vld [vmem:[%s2349 + $0xf1] sm:$0xff]
  %v2756 = vld [vmem:[%s2349 + $0xf9] sm:$0xff]
  %v2757 = vld [vmem:[%s2349 + $0x109] sm:$0xff]
  %v2758 = vld [vmem:[%s2349 + $0x111] sm:$0xff]
  %v2759 = vld [vmem:[%s2349 + $0x121] sm:$0xff]
  %v2760 = vld [vmem:[%s2349 + $0x129] sm:$0xff]
  %v2761 = vld [vmem:[%s2349 + $0x139] sm:$0xff]
  %v2762 = vld [vmem:[%s2349 + $0x141] sm:$0xff]
  %v2763 = vld [vmem:[%s2349 + $0x151] sm:$0xff]
  %v2764 = vld [vmem:[%s2349 + $0x159] sm:$0xff]
  %v2765 = vld [vmem:[%s2349 + $0x169] sm:$0xff]
  %v2766 = vld [vmem:[%s2349 + $0x171] sm:$0xff]
  %v2767 = vld [vmem:[%s2349 + $0x1b1] sm:$0xff]
  %v2768 = vld [vmem:[%s2349 + $0x1b9] sm:$0xff]
  %v2769 = vld [vmem:[%s2349 + $0x1c9] sm:$0xff]
  %v2770 = vld [vmem:[%s2349 + $0x1d1] sm:$0xff]
  %v2771 = vld [vmem:[%s2349 + $0x1e1] sm:$0xff]
  %v2772 = vld [vmem:[%s2349 + $0x1e9] sm:$0xff]
  %v2773 = vld [vmem:[%s2349 + $0x1f9] sm:$0xff]
  %v2774 = vld [vmem:[%s2349 + $0x201] sm:$0xff]
  %v2775 = vld [vmem:[%s2349 + $0x211] sm:$0xff]
  %v2776 = vld [vmem:[%s2349 + $0x219] sm:$0xff]
  %v2777 = vld [vmem:[%s2349 + $0x229] sm:$0xff]
  %v2778 = vld [vmem:[%s2349 + $0x231] sm:$0xff]
  %v2779 = vld [vmem:[%s2349 + $0x241] sm:$0xff]
  %v2780 = vld [vmem:[%s2349 + $0x249] sm:$0xff]
  %v2781 = vld [vmem:[%s2349 + $0x259] sm:$0xff]
  %v2782 = vld [vmem:[%s2349 + $0x261] sm:$0xff]
  %v2783 = vld [vmem:[%s2349 + $0x271] sm:$0xff]
  %v2784 = vld [vmem:[%s2349 + $0x279] sm:$0xff]
  %v2785 = vld [vmem:[%s2349 + $0x289] sm:$0xff]
  %v2786 = vld [vmem:[%s2349 + $0x291] sm:$0xff]
  %v2787 = vld [vmem:[%s2349 + $0x2a1] sm:$0xff]
  %v2788 = vld [vmem:[%s2349 + $0x2a9] sm:$0xff]
  %v2789 = vld [vmem:[%s2349 + $0x2b9] sm:$0xff]
  %v2790 = vld [vmem:[%s2349 + $0x2c1] sm:$0xff]
  %v2791 = vld [vmem:[%s2349 + $0x2d1] sm:$0xff]
  %v2792 = vld [vmem:[%s2349 + $0x2d9] sm:$0xff]
  %v2793 = vld [vmem:[%s2349 + $0x2e9] sm:$0xff]
  %v2794 = vld [vmem:[%s2349 + $0x2f1] sm:$0xff]
  %v2795 = vld [vmem:[%s2349 + $0x301] sm:$0xff]
  %v2796 = vld [vmem:[%s2349 + $0x309] sm:$0xff]
  %v2797 = vld [vmem:[%s2349 + $0x319] sm:$0xff]
  %v2798 = vld [vmem:[%s2349 + $0x321] sm:$0xff]
  %2863 = vrot.lane.b32.xlu0 %v2735, 21
  %v2864 = vpop.permute.xlu0 %2863
  %2865 = vrot.lane.b32.xlu0 %v2736, 21
  %v2866 = vpop.permute.xlu0 %2865
  %2867 = vrot.lane.b32.xlu0 %v2737, 21
  %v2868 = vpop.permute.xlu0 %2867
  %2869 = vrot.lane.b32.xlu0 %v2738, 21
  %v2870 = vpop.permute.xlu0 %2869
  %2871 = vrot.lane.b32.xlu0 %v2739, 21
  %v2872 = vpop.permute.xlu0 %2871
  %2873 = vrot.lane.b32.xlu0 %v2740, 21
  %v2874 = vpop.permute.xlu0 %2873
  %2875 = vrot.lane.b32.xlu0 %v2741, 21
  %v2876 = vpop.permute.xlu0 %2875
  %2877 = vrot.lane.b32.xlu0 %v2742, 21
  %v2878 = vpop.permute.xlu0 %2877
  %2879 = vrot.lane.b32.xlu0 %v2743, 21
  %v2880 = vpop.permute.xlu0 %2879
  %2881 = vrot.lane.b32.xlu0 %v2744, 21
  %v2882 = vpop.permute.xlu0 %2881
  %2883 = vrot.lane.b32.xlu0 %v2745, 21
  %v2884 = vpop.permute.xlu0 %2883
  %2885 = vrot.lane.b32.xlu0 %v2746, 21
  %v2886 = vpop.permute.xlu0 %2885
  %2887 = vrot.lane.b32.xlu0 %v2747, 21
  %v2888 = vpop.permute.xlu0 %2887
  %2889 = vrot.lane.b32.xlu0 %v2748, 21
  %v2890 = vpop.permute.xlu0 %2889
  %2891 = vrot.lane.b32.xlu0 %v2749, 21
  %v2892 = vpop.permute.xlu0 %2891
  %2893 = vrot.lane.b32.xlu0 %v2750, 21
  %v2894 = vpop.permute.xlu0 %2893
  %2895 = vrot.lane.b32.xlu0 %v2751, 21
  %v2896 = vpop.permute.xlu0 %2895
  %2897 = vrot.lane.b32.xlu0 %v2752, 21
  %v2898 = vpop.permute.xlu0 %2897
  %2899 = vrot.lane.b32.xlu0 %v2753, 21
  %v2900 = vpop.permute.xlu0 %2899
  %2901 = vrot.lane.b32.xlu0 %v2754, 21
  %v2902 = vpop.permute.xlu0 %2901
  %2903 = vrot.lane.b32.xlu0 %v2755, 21
  %v2904 = vpop.permute.xlu0 %2903
  %2905 = vrot.lane.b32.xlu0 %v2756, 21
  %v2906 = vpop.permute.xlu0 %2905
  %2907 = vrot.lane.b32.xlu0 %v2757, 21
  %v2908 = vpop.permute.xlu0 %2907
  %2909 = vrot.lane.b32.xlu0 %v2758, 21
  %v2910 = vpop.permute.xlu0 %2909
  %2911 = vrot.lane.b32.xlu0 %v2759, 21
  %v2912 = vpop.permute.xlu0 %2911
  %2913 = vrot.lane.b32.xlu0 %v2760, 21
  %v2914 = vpop.permute.xlu0 %2913
  %2915 = vrot.lane.b32.xlu0 %v2761, 21
  %v2916 = vpop.permute.xlu0 %2915
  %2917 = vrot.lane.b32.xlu0 %v2762, 21
  %v2918 = vpop.permute.xlu0 %2917
  %2919 = vrot.lane.b32.xlu0 %v2763, 21
  %v2920 = vpop.permute.xlu0 %2919
  %2921 = vrot.lane.b32.xlu0 %v2764, 21
  %v2922 = vpop.permute.xlu0 %2921
  %2923 = vrot.lane.b32.xlu0 %v2765, 21
  %v2924 = vpop.permute.xlu0 %2923
  %2925 = vrot.lane.b32.xlu0 %v2766, 21
  %v2926 = vpop.permute.xlu0 %2925
  %2927 = vrot.lane.b32.xlu0 %v2767, 21
  %v2928 = vpop.permute.xlu0 %2927
  %2929 = vrot.lane.b32.xlu0 %v2768, 21
  %v2930 = vpop.permute.xlu0 %2929
  %2931 = vrot.lane.b32.xlu0 %v2769, 21
  %v2932 = vpop.permute.xlu0 %2931
  %2933 = vrot.lane.b32.xlu0 %v2770, 21
  %v2934 = vpop.permute.xlu0 %2933
  %2935 = vrot.lane.b32.xlu0 %v2771, 21
  %v2936 = vpop.permute.xlu0 %2935
  %2937 = vrot.lane.b32.xlu0 %v2772, 21
  %v2938 = vpop.permute.xlu0 %2937
  %2939 = vrot.lane.b32.xlu0 %v2773, 21
  %v2940 = vpop.permute.xlu0 %2939
  %2941 = vrot.lane.b32.xlu0 %v2774, 21
  %v2942 = vpop.permute.xlu0 %2941
  %2943 = vrot.lane.b32.xlu0 %v2775, 21
  %v2944 = vpop.permute.xlu0 %2943
  %2945 = vrot.lane.b32.xlu0 %v2776, 21
  %v2946 = vpop.permute.xlu0 %2945
  %2947 = vrot.lane.b32.xlu0 %v2777, 21
  %v2948 = vpop.permute.xlu0 %2947
  %2949 = vrot.lane.b32.xlu0 %v2778, 21
  %v2950 = vpop.permute.xlu0 %2949
  %2951 = vrot.lane.b32.xlu0 %v2779, 21
  %v2952 = vpop.permute.xlu0 %2951
  %2953 = vrot.lane.b32.xlu0 %v2780, 21
  %v2954 = vpop.permute.xlu0 %2953
  %2955 = vrot.lane.b32.xlu0 %v2781, 21
  %v2956 = vpop.permute.xlu0 %2955
  %2957 = vrot.lane.b32.xlu0 %v2782, 21
  %v2958 = vpop.permute.xlu0 %2957
  %2959 = vrot.lane.b32.xlu0 %v2783, 21
  %v2960 = vpop.permute.xlu0 %2959
  %2961 = vrot.lane.b32.xlu0 %v2784, 21
  %v2962 = vpop.permute.xlu0 %2961
  %2963 = vrot.lane.b32.xlu0 %v2785, 21
  %v2964 = vpop.permute.xlu0 %2963
  %2965 = vrot.lane.b32.xlu0 %v2786, 21
  %v2966 = vpop.permute.xlu0 %2965
  %2967 = vrot.lane.b32.xlu0 %v2787, 21
  %v2968 = vpop.permute.xlu0 %2967
  %2969 = vrot.lane.b32.xlu0 %v2788, 21
  %v2970 = vpop.permute.xlu0 %2969
  %2971 = vrot.lane.b32.xlu0 %v2789, 21
  %v2972 = vpop.permute.xlu0 %2971
  %2973 = vrot.lane.b32.xlu0 %v2790, 21
  %v2974 = vpop.permute.xlu0 %2973
  %2975 = vrot.lane.b32.xlu0 %v2791, 21
  %v2976 = vpop.permute.xlu0 %2975
  %2977 = vrot.lane.b32.xlu0 %v2792, 21
  %v2978 = vpop.permute.xlu0 %2977
  %2979 = vrot.lane.b32.xlu0 %v2793, 21
  %v2980 = vpop.permute.xlu0 %2979
  %2981 = vrot.lane.b32.xlu0 %v2794, 21
  %v2982 = vpop.permute.xlu0 %2981
  %2983 = vrot.lane.b32.xlu0 %v2795, 21
  %v2984 = vpop.permute.xlu0 %2983
  %2985 = vrot.lane.b32.xlu0 %v2796, 21
  %v2986 = vpop.permute.xlu0 %2985
  %2987 = vrot.lane.b32.xlu0 %v2797, 21
  %v2988 = vpop.permute.xlu0 %2987
  %2989 = vrot.lane.b32.xlu0 %v2798, 21
  %v2990 = vpop.permute.xlu0 %2989
  %vm3055 = vcmask 195752
  %3056 = vst.msk [vmem:[#allocation3] sm:$0xff] %vm3055, %v2864
  %3057 = vst.msk [vmem:[#allocation3 + $0x8] sm:$0xff] %vm3055, %v2866
  %3058 = vst.msk [vmem:[#allocation3 + $0x10] sm:$0xff] %vm3055, %v2868
  %3059 = vst.msk [vmem:[#allocation3 + $0x18] sm:$0xff] %vm3055, %v2870
  %3060 = vst.msk [vmem:[#allocation3 + $0x20] sm:$0xff] %vm3055, %v2872
  %3061 = vst.msk [vmem:[#allocation3 + $0x28] sm:$0xff] %vm3055, %v2874
  %3062 = vst.msk [vmem:[#allocation3 + $0x30] sm:$0xff] %vm3055, %v2876
  %3063 = vst.msk [vmem:[#allocation3 + $0x38] sm:$0xff] %vm3055, %v2878
  %3064 = vst.msk [vmem:[#allocation3 + $0x40] sm:$0xff] %vm3055, %v2880
  %3065 = vst.msk [vmem:[#allocation3 + $0x48] sm:$0xff] %vm3055, %v2882
  %3066 = vst.msk [vmem:[#allocation3 + $0x50] sm:$0xff] %vm3055, %v2884
  %3067 = vst.msk [vmem:[#allocation3 + $0x58] sm:$0xff] %vm3055, %v2886
  %3068 = vst.msk [vmem:[#allocation3 + $0x60] sm:$0xff] %vm3055, %v2888
  %3069 = vst.msk [vmem:[#allocation3 + $0x68] sm:$0xff] %vm3055, %v2890
  %3070 = vst.msk [vmem:[#allocation3 + $0x70] sm:$0xff] %vm3055, %v2892
  %3071 = vst.msk [vmem:[#allocation3 + $0x78] sm:$0xff] %vm3055, %v2894
  %3072 = vst.msk [vmem:[#allocation3 + $0x80] sm:$0xff] %vm3055, %v2896
  %3073 = vst.msk [vmem:[#allocation3 + $0x88] sm:$0xff] %vm3055, %v2898
  %3074 = vst.msk [vmem:[#allocation3 + $0x90] sm:$0xff] %vm3055, %v2900
  %3075 = vst.msk [vmem:[#allocation3 + $0x98] sm:$0xff] %vm3055, %v2902
  %3076 = vst.msk [vmem:[#allocation3 + $0xa0] sm:$0xff] %vm3055, %v2904
  %3077 = vst.msk [vmem:[#allocation3 + $0xa8] sm:$0xff] %vm3055, %v2906
  %3078 = vst.msk [vmem:[#allocation3 + $0xb0] sm:$0xff] %vm3055, %v2908
  %3079 = vst.msk [vmem:[#allocation3 + $0xb8] sm:$0xff] %vm3055, %v2910
  %3080 = vst.msk [vmem:[#allocation3 + $0xc0] sm:$0xff] %vm3055, %v2912
  %3081 = vst.msk [vmem:[#allocation3 + $0xc8] sm:$0xff] %vm3055, %v2914
  %3082 = vst.msk [vmem:[#allocation3 + $0xd0] sm:$0xff] %vm3055, %v2916
  %3083 = vst.msk [vmem:[#allocation3 + $0xd8] sm:$0xff] %vm3055, %v2918
  %3084 = vst.msk [vmem:[#allocation3 + $0xe0] sm:$0xff] %vm3055, %v2920
  %3085 = vst.msk [vmem:[#allocation3 + $0xe8] sm:$0xff] %vm3055, %v2922
  %3086 = vst.msk [vmem:[#allocation3 + $0xf0] sm:$0xff] %vm3055, %v2924
  %3087 = vst.msk [vmem:[#allocation3 + $0xf8] sm:$0xff] %vm3055, %v2926
  %3088 = vst.msk [vmem:[#allocation3 + $0x100] sm:$0xff] %vm3055, %v2928
  %3089 = vst.msk [vmem:[#allocation3 + $0x108] sm:$0xff] %vm3055, %v2930
  %3090 = vst.msk [vmem:[#allocation3 + $0x110] sm:$0xff] %vm3055, %v2932
  %3091 = vst.msk [vmem:[#allocation3 + $0x118] sm:$0xff] %vm3055, %v2934
  %3092 = vst.msk [vmem:[#allocation3 + $0x120] sm:$0xff] %vm3055, %v2936
  %3093 = vst.msk [vmem:[#allocation3 + $0x128] sm:$0xff] %vm3055, %v2938
  %3094 = vst.msk [vmem:[#allocation3 + $0x130] sm:$0xff] %vm3055, %v2940
  %3095 = vst.msk [vmem:[#allocation3 + $0x138] sm:$0xff] %vm3055, %v2942
  %3096 = vst.msk [vmem:[#allocation3 + $0x140] sm:$0xff] %vm3055, %v2944
  %3097 = vst.msk [vmem:[#allocation3 + $0x148] sm:$0xff] %vm3055, %v2946
  %3098 = vst.msk [vmem:[#allocation3 + $0x150] sm:$0xff] %vm3055, %v2948
  %3099 = vst.msk [vmem:[#allocation3 + $0x158] sm:$0xff] %vm3055, %v2950
  %3100 = vst.msk [vmem:[#allocation3 + $0x160] sm:$0xff] %vm3055, %v2952
  %3101 = vst.msk [vmem:[#allocation3 + $0x168] sm:$0xff] %vm3055, %v2954
  %3102 = vst.msk [vmem:[#allocation3 + $0x170] sm:$0xff] %vm3055, %v2956
  %3103 = vst.msk [vmem:[#allocation3 + $0x178] sm:$0xff] %vm3055, %v2958
  %3104 = vst.msk [vmem:[#allocation3 + $0x180] sm:$0xff] %vm3055, %v2960
  %3105 = vst.msk [vmem:[#allocation3 + $0x188] sm:$0xff] %vm3055, %v2962
  %3106 = vst.msk [vmem:[#allocation3 + $0x190] sm:$0xff] %vm3055, %v2964
  %3107 = vst.msk [vmem:[#allocation3 + $0x198] sm:$0xff] %vm3055, %v2966
  %3108 = vst.msk [vmem:[#allocation3 + $0x1a0] sm:$0xff] %vm3055, %v2968
  %3109 = vst.msk [vmem:[#allocation3 + $0x1a8] sm:$0xff] %vm3055, %v2970
  %3110 = vst.msk [vmem:[#allocation3 + $0x1b0] sm:$0xff] %vm3055, %v2972
  %3111 = vst.msk [vmem:[#allocation3 + $0x1b8] sm:$0xff] %vm3055, %v2974
  %3112 = vst.msk [vmem:[#allocation3 + $0x1c0] sm:$0xff] %vm3055, %v2976
  %3113 = vst.msk [vmem:[#allocation3 + $0x1c8] sm:$0xff] %vm3055, %v2978
  %3114 = vst.msk [vmem:[#allocation3 + $0x1d0] sm:$0xff] %vm3055, %v2980
  %3115 = vst.msk [vmem:[#allocation3 + $0x1d8] sm:$0xff] %vm3055, %v2982
  %3116 = vst.msk [vmem:[#allocation3 + $0x1e0] sm:$0xff] %vm3055, %v2984
  %3117 = vst.msk [vmem:[#allocation3 + $0x1e8] sm:$0xff] %vm3055, %v2986
  %3118 = vst.msk [vmem:[#allocation3 + $0x1f0] sm:$0xff] %vm3055, %v2988
  %3119 = vst.msk [vmem:[#allocation3 + $0x1f8] sm:$0xff] %vm3055, %v2990
  %v3120 = vld [vmem:[%s2349 + $0x2] sm:$0xff]
  %v3121 = vld [vmem:[%s2349 + $0xa] sm:$0xff]
  %v3122 = vld [vmem:[%s2349 + $0x1a] sm:$0xff]
  %v3123 = vld [vmem:[%s2349 + $0x22] sm:$0xff]
  %v3124 = vld [vmem:[%s2349 + $0x32] sm:$0xff]
  %v3125 = vld [vmem:[%s2349 + $0x3a] sm:$0xff]
  %v3126 = vld [vmem:[%s2349 + $0x4a] sm:$0xff]
  %v3127 = vld [vmem:[%s2349 + $0x52] sm:$0xff]
  %v3128 = vld [vmem:[%s2349 + $0x62] sm:$0xff]
  %v3129 = vld [vmem:[%s2349 + $0x6a] sm:$0xff]
  %v3130 = vld [vmem:[%s2349 + $0x7a] sm:$0xff]
  %v3131 = vld [vmem:[%s2349 + $0x82] sm:$0xff]
  %v3132 = vld [vmem:[%s2349 + $0x92] sm:$0xff]
  %v3133 = vld [vmem:[%s2349 + $0x9a] sm:$0xff]
  %v3134 = vld [vmem:[%s2349 + $0xaa] sm:$0xff]
  %v3135 = vld [vmem:[%s2349 + $0xb2] sm:$0xff]
  %v3136 = vld [vmem:[%s2349 + $0xc2] sm:$0xff]
  %v3137 = vld [vmem:[%s2349 + $0xca] sm:$0xff]
  %v3138 = vld [vmem:[%s2349 + $0xda] sm:$0xff]
  %v3139 = vld [vmem:[%s2349 + $0xe2] sm:$0xff]
  %v3140 = vld [vmem:[%s2349 + $0xf2] sm:$0xff]
  %v3141 = vld [vmem:[%s2349 + $0xfa] sm:$0xff]
  %v3142 = vld [vmem:[%s2349 + $0x10a] sm:$0xff]
  %v3143 = vld [vmem:[%s2349 + $0x112] sm:$0xff]
  %v3144 = vld [vmem:[%s2349 + $0x122] sm:$0xff]
  %v3145 = vld [vmem:[%s2349 + $0x12a] sm:$0xff]
  %v3146 = vld [vmem:[%s2349 + $0x13a] sm:$0xff]
  %v3147 = vld [vmem:[%s2349 + $0x142] sm:$0xff]
  %v3148 = vld [vmem:[%s2349 + $0x152] sm:$0xff]
  %v3149 = vld [vmem:[%s2349 + $0x15a] sm:$0xff]
  %v3150 = vld [vmem:[%s2349 + $0x16a] sm:$0xff]
  %v3151 = vld [vmem:[%s2349 + $0x172] sm:$0xff]
  %v3152 = vld [vmem:[%s2349 + $0x1b2] sm:$0xff]
  %v3153 = vld [vmem:[%s2349 + $0x1ba] sm:$0xff]
  %v3154 = vld [vmem:[%s2349 + $0x1ca] sm:$0xff]
  %v3155 = vld [vmem:[%s2349 + $0x1d2] sm:$0xff]
  %v3156 = vld [vmem:[%s2349 + $0x1e2] sm:$0xff]
  %v3157 = vld [vmem:[%s2349 + $0x1ea] sm:$0xff]
  %v3158 = vld [vmem:[%s2349 + $0x1fa] sm:$0xff]
  %v3159 = vld [vmem:[%s2349 + $0x202] sm:$0xff]
  %v3160 = vld [vmem:[%s2349 + $0x212] sm:$0xff]
  %v3161 = vld [vmem:[%s2349 + $0x21a] sm:$0xff]
  %v3162 = vld [vmem:[%s2349 + $0x22a] sm:$0xff]
  %v3163 = vld [vmem:[%s2349 + $0x232] sm:$0xff]
  %v3164 = vld [vmem:[%s2349 + $0x242] sm:$0xff]
  %v3165 = vld [vmem:[%s2349 + $0x24a] sm:$0xff]
  %v3166 = vld [vmem:[%s2349 + $0x25a] sm:$0xff]
  %v3167 = vld [vmem:[%s2349 + $0x262] sm:$0xff]
  %v3168 = vld [vmem:[%s2349 + $0x272] sm:$0xff]
  %v3169 = vld [vmem:[%s2349 + $0x27a] sm:$0xff]
  %v3170 = vld [vmem:[%s2349 + $0x28a] sm:$0xff]
  %v3171 = vld [vmem:[%s2349 + $0x292] sm:$0xff]
  %v3172 = vld [vmem:[%s2349 + $0x2a2] sm:$0xff]
  %v3173 = vld [vmem:[%s2349 + $0x2aa] sm:$0xff]
  %v3174 = vld [vmem:[%s2349 + $0x2ba] sm:$0xff]
  %v3175 = vld [vmem:[%s2349 + $0x2c2] sm:$0xff]
  %v3176 = vld [vmem:[%s2349 + $0x2d2] sm:$0xff]
  %v3177 = vld [vmem:[%s2349 + $0x2da] sm:$0xff]
  %v3178 = vld [vmem:[%s2349 + $0x2ea] sm:$0xff]
  %v3179 = vld [vmem:[%s2349 + $0x2f2] sm:$0xff]
  %v3180 = vld [vmem:[%s2349 + $0x302] sm:$0xff]
  %v3181 = vld [vmem:[%s2349 + $0x30a] sm:$0xff]
  %v3182 = vld [vmem:[%s2349 + $0x31a] sm:$0xff]
  %v3183 = vld [vmem:[%s2349 + $0x322] sm:$0xff]
  %3248 = vrot.lane.b32.xlu0 %v3120, 24
  %v3249 = vpop.permute.xlu0 %3248
  %3250 = vrot.lane.b32.xlu0 %v3121, 24
  %v3251 = vpop.permute.xlu0 %3250
  %3252 = vrot.lane.b32.xlu0 %v3122, 24
  %v3253 = vpop.permute.xlu0 %3252
  %3254 = vrot.lane.b32.xlu0 %v3123, 24
  %v3255 = vpop.permute.xlu0 %3254
  %3256 = vrot.lane.b32.xlu0 %v3124, 24
  %v3257 = vpop.permute.xlu0 %3256
  %3258 = vrot.lane.b32.xlu0 %v3125, 24
  %v3259 = vpop.permute.xlu0 %3258
  %3260 = vrot.lane.b32.xlu0 %v3126, 24
  %v3261 = vpop.permute.xlu0 %3260
  %3262 = vrot.lane.b32.xlu0 %v3127, 24
  %v3263 = vpop.permute.xlu0 %3262
  %3264 = vrot.lane.b32.xlu0 %v3128, 24
  %v3265 = vpop.permute.xlu0 %3264
  %3266 = vrot.lane.b32.xlu0 %v3129, 24
  %v3267 = vpop.permute.xlu0 %3266
  %3268 = vrot.lane.b32.xlu0 %v3130, 24
  %v3269 = vpop.permute.xlu0 %3268
  %3270 = vrot.lane.b32.xlu0 %v3131, 24
  %v3271 = vpop.permute.xlu0 %3270
  %3272 = vrot.lane.b32.xlu0 %v3132, 24
  %v3273 = vpop.permute.xlu0 %3272
  %3274 = vrot.lane.b32.xlu0 %v3133, 24
  %v3275 = vpop.permute.xlu0 %3274
  %3276 = vrot.lane.b32.xlu0 %v3134, 24
  %v3277 = vpop.permute.xlu0 %3276
  %3278 = vrot.lane.b32.xlu0 %v3135, 24
  %v3279 = vpop.permute.xlu0 %3278
  %3280 = vrot.lane.b32.xlu0 %v3136, 24
  %v3281 = vpop.permute.xlu0 %3280
  %3282 = vrot.lane.b32.xlu0 %v3137, 24
  %v3283 = vpop.permute.xlu0 %3282
  %3284 = vrot.lane.b32.xlu0 %v3138, 24
  %v3285 = vpop.permute.xlu0 %3284
  %3286 = vrot.lane.b32.xlu0 %v3139, 24
  %v3287 = vpop.permute.xlu0 %3286
  %3288 = vrot.lane.b32.xlu0 %v3140, 24
  %v3289 = vpop.permute.xlu0 %3288
  %3290 = vrot.lane.b32.xlu0 %v3141, 24
  %v3291 = vpop.permute.xlu0 %3290
  %3292 = vrot.lane.b32.xlu0 %v3142, 24
  %v3293 = vpop.permute.xlu0 %3292
  %3294 = vrot.lane.b32.xlu0 %v3143, 24
  %v3295 = vpop.permute.xlu0 %3294
  %3296 = vrot.lane.b32.xlu0 %v3144, 24
  %v3297 = vpop.permute.xlu0 %3296
  %3298 = vrot.lane.b32.xlu0 %v3145, 24
  %v3299 = vpop.permute.xlu0 %3298
  %3300 = vrot.lane.b32.xlu0 %v3146, 24
  %v3301 = vpop.permute.xlu0 %3300
  %3302 = vrot.lane.b32.xlu0 %v3147, 24
  %v3303 = vpop.permute.xlu0 %3302
  %3304 = vrot.lane.b32.xlu0 %v3148, 24
  %v3305 = vpop.permute.xlu0 %3304
  %3306 = vrot.lane.b32.xlu0 %v3149, 24
  %v3307 = vpop.permute.xlu0 %3306
  %3308 = vrot.lane.b32.xlu0 %v3150, 24
  %v3309 = vpop.permute.xlu0 %3308
  %3310 = vrot.lane.b32.xlu0 %v3151, 24
  %v3311 = vpop.permute.xlu0 %3310
  %3312 = vrot.lane.b32.xlu0 %v3152, 24
  %v3313 = vpop.permute.xlu0 %3312
  %3314 = vrot.lane.b32.xlu0 %v3153, 24
  %v3315 = vpop.permute.xlu0 %3314
  %3316 = vrot.lane.b32.xlu0 %v3154, 24
  %v3317 = vpop.permute.xlu0 %3316
  %3318 = vrot.lane.b32.xlu0 %v3155, 24
  %v3319 = vpop.permute.xlu0 %3318
  %3320 = vrot.lane.b32.xlu0 %v3156, 24
  %v3321 = vpop.permute.xlu0 %3320
  %3322 = vrot.lane.b32.xlu0 %v3157, 24
  %v3323 = vpop.permute.xlu0 %3322
  %3324 = vrot.lane.b32.xlu0 %v3158, 24
  %v3325 = vpop.permute.xlu0 %3324
  %3326 = vrot.lane.b32.xlu0 %v3159, 24
  %v3327 = vpop.permute.xlu0 %3326
  %3328 = vrot.lane.b32.xlu0 %v3160, 24
  %v3329 = vpop.permute.xlu0 %3328
  %3330 = vrot.lane.b32.xlu0 %v3161, 24
  %v3331 = vpop.permute.xlu0 %3330
  %3332 = vrot.lane.b32.xlu0 %v3162, 24
  %v3333 = vpop.permute.xlu0 %3332
  %3334 = vrot.lane.b32.xlu0 %v3163, 24
  %v3335 = vpop.permute.xlu0 %3334
  %3336 = vrot.lane.b32.xlu0 %v3164, 24
  %v3337 = vpop.permute.xlu0 %3336
  %3338 = vrot.lane.b32.xlu0 %v3165, 24
  %v3339 = vpop.permute.xlu0 %3338
  %3340 = vrot.lane.b32.xlu0 %v3166, 24
  %v3341 = vpop.permute.xlu0 %3340
  %3342 = vrot.lane.b32.xlu0 %v3167, 24
  %v3343 = vpop.permute.xlu0 %3342
  %3344 = vrot.lane.b32.xlu0 %v3168, 24
  %v3345 = vpop.permute.xlu0 %3344
  %3346 = vrot.lane.b32.xlu0 %v3169, 24
  %v3347 = vpop.permute.xlu0 %3346
  %3348 = vrot.lane.b32.xlu0 %v3170, 24
  %v3349 = vpop.permute.xlu0 %3348
  %3350 = vrot.lane.b32.xlu0 %v3171, 24
  %v3351 = vpop.permute.xlu0 %3350
  %3352 = vrot.lane.b32.xlu0 %v3172, 24
  %v3353 = vpop.permute.xlu0 %3352
  %3354 = vrot.lane.b32.xlu0 %v3173, 24
  %v3355 = vpop.permute.xlu0 %3354
  %3356 = vrot.lane.b32.xlu0 %v3174, 24
  %v3357 = vpop.permute.xlu0 %3356
  %3358 = vrot.lane.b32.xlu0 %v3175, 24
  %v3359 = vpop.permute.xlu0 %3358
  %3360 = vrot.lane.b32.xlu0 %v3176, 24
  %v3361 = vpop.permute.xlu0 %3360
  %3362 = vrot.lane.b32.xlu0 %v3177, 24
  %v3363 = vpop.permute.xlu0 %3362
  %3364 = vrot.lane.b32.xlu0 %v3178, 24
  %v3365 = vpop.permute.xlu0 %3364
  %3366 = vrot.lane.b32.xlu0 %v3179, 24
  %v3367 = vpop.permute.xlu0 %3366
  %3368 = vrot.lane.b32.xlu0 %v3180, 24
  %v3369 = vpop.permute.xlu0 %3368
  %3370 = vrot.lane.b32.xlu0 %v3181, 24
  %v3371 = vpop.permute.xlu0 %3370
  %3372 = vrot.lane.b32.xlu0 %v3182, 24
  %v3373 = vpop.permute.xlu0 %3372
  %3374 = vrot.lane.b32.xlu0 %v3183, 24
  %v3375 = vpop.permute.xlu0 %3374
  %vm3440 = vcmask 220352
  %3441 = vst.msk [vmem:[#allocation3] sm:$0xff] %vm3440, %v3249
  %3442 = vst.msk [vmem:[#allocation3 + $0x8] sm:$0xff] %vm3440, %v3251
  %3443 = vst.msk [vmem:[#allocation3 + $0x10] sm:$0xff] %vm3440, %v3253
  %3444 = vst.msk [vmem:[#allocation3 + $0x18] sm:$0xff] %vm3440, %v3255
  %3445 = vst.msk [vmem:[#allocation3 + $0x20] sm:$0xff] %vm3440, %v3257
  %3446 = vst.msk [vmem:[#allocation3 + $0x28] sm:$0xff] %vm3440, %v3259
  %3447 = vst.msk [vmem:[#allocation3 + $0x30] sm:$0xff] %vm3440, %v3261
  %3448 = vst.msk [vmem:[#allocation3 + $0x38] sm:$0xff] %vm3440, %v3263
  %3449 = vst.msk [vmem:[#allocation3 + $0x40] sm:$0xff] %vm3440, %v3265
  %3450 = vst.msk [vmem:[#allocation3 + $0x48] sm:$0xff] %vm3440, %v3267
  %3451 = vst.msk [vmem:[#allocation3 + $0x50] sm:$0xff] %vm3440, %v3269
  %3452 = vst.msk [vmem:[#allocation3 + $0x58] sm:$0xff] %vm3440, %v3271
  %3453 = vst.msk [vmem:[#allocation3 + $0x60] sm:$0xff] %vm3440, %v3273
  %3454 = vst.msk [vmem:[#allocation3 + $0x68] sm:$0xff] %vm3440, %v3275
  %3455 = vst.msk [vmem:[#allocation3 + $0x70] sm:$0xff] %vm3440, %v3277
  %3456 = vst.msk [vmem:[#allocation3 + $0x78] sm:$0xff] %vm3440, %v3279
  %3457 = vst.msk [vmem:[#allocation3 + $0x80] sm:$0xff] %vm3440, %v3281
  %3458 = vst.msk [vmem:[#allocation3 + $0x88] sm:$0xff] %vm3440, %v3283
  %3459 = vst.msk [vmem:[#allocation3 + $0x90] sm:$0xff] %vm3440, %v3285
  %3460 = vst.msk [vmem:[#allocation3 + $0x98] sm:$0xff] %vm3440, %v3287
  %3461 = vst.msk [vmem:[#allocation3 + $0xa0] sm:$0xff] %vm3440, %v3289
  %3462 = vst.msk [vmem:[#allocation3 + $0xa8] sm:$0xff] %vm3440, %v3291
  %3463 = vst.msk [vmem:[#allocation3 + $0xb0] sm:$0xff] %vm3440, %v3293
  %3464 = vst.msk [vmem:[#allocation3 + $0xb8] sm:$0xff] %vm3440, %v3295
  %3465 = vst.msk [vmem:[#allocation3 + $0xc0] sm:$0xff] %vm3440, %v3297
  %3466 = vst.msk [vmem:[#allocation3 + $0xc8] sm:$0xff] %vm3440, %v3299
  %3467 = vst.msk [vmem:[#allocation3 + $0xd0] sm:$0xff] %vm3440, %v3301
  %3468 = vst.msk [vmem:[#allocation3 + $0xd8] sm:$0xff] %vm3440, %v3303
  %3469 = vst.msk [vmem:[#allocation3 + $0xe0] sm:$0xff] %vm3440, %v3305
  %3470 = vst.msk [vmem:[#allocation3 + $0xe8] sm:$0xff] %vm3440, %v3307
  %3471 = vst.msk [vmem:[#allocation3 + $0xf0] sm:$0xff] %vm3440, %v3309
  %3472 = vst.msk [vmem:[#allocation3 + $0xf8] sm:$0xff] %vm3440, %v3311
  %3473 = vst.msk [vmem:[#allocation3 + $0x100] sm:$0xff] %vm3440, %v3313
  %3474 = vst.msk [vmem:[#allocation3 + $0x108] sm:$0xff] %vm3440, %v3315
  %3475 = vst.msk [vmem:[#allocation3 + $0x110] sm:$0xff] %vm3440, %v3317
  %3476 = vst.msk [vmem:[#allocation3 + $0x118] sm:$0xff] %vm3440, %v3319
  %3477 = vst.msk [vmem:[#allocation3 + $0x120] sm:$0xff] %vm3440, %v3321
  %3478 = vst.msk [vmem:[#allocation3 + $0x128] sm:$0xff] %vm3440, %v3323
  %3479 = vst.msk [vmem:[#allocation3 + $0x130] sm:$0xff] %vm3440, %v3325
  %3480 = vst.msk [vmem:[#allocation3 + $0x138] sm:$0xff] %vm3440, %v3327
  %3481 = vst.msk [vmem:[#allocation3 + $0x140] sm:$0xff] %vm3440, %v3329
  %3482 = vst.msk [vmem:[#allocation3 + $0x148] sm:$0xff] %vm3440, %v3331
  %3483 = vst.msk [vmem:[#allocation3 + $0x150] sm:$0xff] %vm3440, %v3333
  %3484 = vst.msk [vmem:[#allocation3 + $0x158] sm:$0xff] %vm3440, %v3335
  %3485 = vst.msk [vmem:[#allocation3 + $0x160] sm:$0xff] %vm3440, %v3337
  %3486 = vst.msk [vmem:[#allocation3 + $0x168] sm:$0xff] %vm3440, %v3339
  %3487 = vst.msk [vmem:[#allocation3 + $0x170] sm:$0xff] %vm3440, %v3341
  %3488 = vst.msk [vmem:[#allocation3 + $0x178] sm:$0xff] %vm3440, %v3343
  %3489 = vst.msk [vmem:[#allocation3 + $0x180] sm:$0xff] %vm3440, %v3345
  %3490 = vst.msk [vmem:[#allocation3 + $0x188] sm:$0xff] %vm3440, %v3347
  %3491 = vst.msk [vmem:[#allocation3 + $0x190] sm:$0xff] %vm3440, %v3349
  %3492 = vst.msk [vmem:[#allocation3 + $0x198] sm:$0xff] %vm3440, %v3351
  %3493 = vst.msk [vmem:[#allocation3 + $0x1a0] sm:$0xff] %vm3440, %v3353
  %3494 = vst.msk [vmem:[#allocation3 + $0x1a8] sm:$0xff] %vm3440, %v3355
  %3495 = vst.msk [vmem:[#allocation3 + $0x1b0] sm:$0xff] %vm3440, %v3357
  %3496 = vst.msk [vmem:[#allocation3 + $0x1b8] sm:$0xff] %vm3440, %v3359
  %3497 = vst.msk [vmem:[#allocation3 + $0x1c0] sm:$0xff] %vm3440, %v3361
  %3498 = vst.msk [vmem:[#allocation3 + $0x1c8] sm:$0xff] %vm3440, %v3363
  %3499 = vst.msk [vmem:[#allocation3 + $0x1d0] sm:$0xff] %vm3440, %v3365
  %3500 = vst.msk [vmem:[#allocation3 + $0x1d8] sm:$0xff] %vm3440, %v3367
  %3501 = vst.msk [vmem:[#allocation3 + $0x1e0] sm:$0xff] %vm3440, %v3369
  %3502 = vst.msk [vmem:[#allocation3 + $0x1e8] sm:$0xff] %vm3440, %v3371
  %3503 = vst.msk [vmem:[#allocation3 + $0x1f0] sm:$0xff] %vm3440, %v3373
  %3504 = vst.msk [vmem:[#allocation3 + $0x1f8] sm:$0xff] %vm3440, %v3375
  %v3505 = vld [vmem:[#allocation3] sm:$0xff]
  %v3506 = vld [vmem:[#allocation3 + $0x8] sm:$0xff]
  %v3507 = vld [vmem:[#allocation3 + $0x10] sm:$0xff]
  %v3508 = vld [vmem:[#allocation3 + $0x18] sm:$0xff]
  %v3509 = vld [vmem:[#allocation3 + $0x20] sm:$0xff]
  %v3510 = vld [vmem:[#allocation3 + $0x28] sm:$0xff]
  %v3511 = vld [vmem:[#allocation3 + $0x30] sm:$0xff]
  %v3512 = vld [vmem:[#allocation3 + $0x38] sm:$0xff]
  %v3513 = vld [vmem:[#allocation3 + $0x40] sm:$0xff]
  %v3514 = vld [vmem:[#allocation3 + $0x48] sm:$0xff]
  %v3515 = vld [vmem:[#allocation3 + $0x50] sm:$0xff]
  %v3516 = vld [vmem:[#allocation3 + $0x58] sm:$0xff]
  %v3517 = vld [vmem:[#allocation3 + $0x60] sm:$0xff]
  %v3518 = vld [vmem:[#allocation3 + $0x68] sm:$0xff]
  %v3519 = vld [vmem:[#allocation3 + $0x70] sm:$0xff]
  %v3520 = vld [vmem:[#allocation3 + $0x78] sm:$0xff]
  %v3521 = vld [vmem:[#allocation3 + $0x80] sm:$0xff]
  %v3522 = vld [vmem:[#allocation3 + $0x88] sm:$0xff]
  %v3523 = vld [vmem:[#allocation3 + $0x90] sm:$0xff]
  %v3524 = vld [vmem:[#allocation3 + $0x98] sm:$0xff]
  %v3525 = vld [vmem:[#allocation3 + $0xa0] sm:$0xff]
  %v3526 = vld [vmem:[#allocation3 + $0xa8] sm:$0xff]
  %v3527 = vld [vmem:[#allocation3 + $0xb0] sm:$0xff]
  %v3528 = vld [vmem:[#allocation3 + $0xb8] sm:$0xff]
  %v3529 = vld [vmem:[#allocation3 + $0xc0] sm:$0xff]
  %v3530 = vld [vmem:[#allocation3 + $0xc8] sm:$0xff]
  %v3531 = vld [vmem:[#allocation3 + $0xd0] sm:$0xff]
  %v3532 = vld [vmem:[#allocation3 + $0xd8] sm:$0xff]
  %v3533 = vld [vmem:[#allocation3 + $0xe0] sm:$0xff]
  %v3534 = vld [vmem:[#allocation3 + $0xe8] sm:$0xff]
  %v3535 = vld [vmem:[#allocation3 + $0xf0] sm:$0xff]
  %v3536 = vld [vmem:[#allocation3 + $0xf8] sm:$0xff]
  %v3537 = vld [vmem:[#allocation3 + $0x100] sm:$0xff]
  %v3538 = vld [vmem:[#allocation3 + $0x108] sm:$0xff]
  %v3539 = vld [vmem:[#allocation3 + $0x110] sm:$0xff]
  %v3540 = vld [vmem:[#allocation3 + $0x118] sm:$0xff]
  %v3541 = vld [vmem:[#allocation3 + $0x120] sm:$0xff]
  %v3542 = vld [vmem:[#allocation3 + $0x128] sm:$0xff]
  %v3543 = vld [vmem:[#allocation3 + $0x130] sm:$0xff]
  %v3544 = vld [vmem:[#allocation3 + $0x138] sm:$0xff]
  %v3545 = vld [vmem:[#allocation3 + $0x140] sm:$0xff]
  %v3546 = vld [vmem:[#allocation3 + $0x148] sm:$0xff]
  %v3547 = vld [vmem:[#allocation3 + $0x150] sm:$0xff]
  %v3548 = vld [vmem:[#allocation3 + $0x158] sm:$0xff]
  %v3549 = vld [vmem:[#allocation3 + $0x160] sm:$0xff]
  %v3550 = vld [vmem:[#allocation3 + $0x168] sm:$0xff]
  %v3551 = vld [vmem:[#allocation3 + $0x170] sm:$0xff]
  %v3552 = vld [vmem:[#allocation3 + $0x178] sm:$0xff]
  %v3553 = vld [vmem:[#allocation3 + $0x180] sm:$0xff]
  %v3554 = vld [vmem:[#allocation3 + $0x188] sm:$0xff]
  %v3555 = vld [vmem:[#allocation3 + $0x190] sm:$0xff]
  %v3556 = vld [vmem:[#allocation3 + $0x198] sm:$0xff]
  %v3557 = vld [vmem:[#allocation3 + $0x1a0] sm:$0xff]
  %v3558 = vld [vmem:[#allocation3 + $0x1a8] sm:$0xff]
  %v3559 = vld [vmem:[#allocation3 + $0x1b0] sm:$0xff]
  %v3560 = vld [vmem:[#allocation3 + $0x1b8] sm:$0xff]
  %v3561 = vld [vmem:[#allocation3 + $0x1c0] sm:$0xff]
  %v3562 = vld [vmem:[#allocation3 + $0x1c8] sm:$0xff]
  %v3563 = vld [vmem:[#allocation3 + $0x1d0] sm:$0xff]
  %v3564 = vld [vmem:[#allocation3 + $0x1d8] sm:$0xff]
  %v3565 = vld [vmem:[#allocation3 + $0x1e0] sm:$0xff]
  %v3566 = vld [vmem:[#allocation3 + $0x1e8] sm:$0xff]
  %v3567 = vld [vmem:[#allocation3 + $0x1f0] sm:$0xff]
  %v3568 = vld [vmem:[#allocation3 + $0x1f8] sm:$0xff]
  %v3569 = vpack.c.bf16 %v3506, %v3505
  %v3570 = vpack.c.bf16 %v3508, %v3507
  %v3571 = vpack.c.bf16 %v3510, %v3509
  %v3572 = vpack.c.bf16 %v3512, %v3511
  %v3573 = vpack.c.bf16 %v3514, %v3513
  %v3574 = vpack.c.bf16 %v3516, %v3515
  %v3575 = vpack.c.bf16 %v3518, %v3517
  %v3576 = vpack.c.bf16 %v3520, %v3519
  %v3577 = vpack.c.bf16 %v3522, %v3521
  %v3578 = vpack.c.bf16 %v3524, %v3523
  %v3579 = vpack.c.bf16 %v3526, %v3525
  %v3580 = vpack.c.bf16 %v3528, %v3527
  %v3581 = vpack.c.bf16 %v3530, %v3529
  %v3582 = vpack.c.bf16 %v3532, %v3531
  %v3583 = vpack.c.bf16 %v3534, %v3533
  %v3584 = vpack.c.bf16 %v3536, %v3535
  %v3585 = vpack.c.bf16 %v3538, %v3537
  %v3586 = vpack.c.bf16 %v3540, %v3539
  %v3587 = vpack.c.bf16 %v3542, %v3541
  %v3588 = vpack.c.bf16 %v3544, %v3543
  %v3589 = vpack.c.bf16 %v3546, %v3545
  %v3590 = vpack.c.bf16 %v3548, %v3547
  %v3591 = vpack.c.bf16 %v3550, %v3549
  %v3592 = vpack.c.bf16 %v3552, %v3551
  %v3593 = vpack.c.bf16 %v3554, %v3553
  %v3594 = vpack.c.bf16 %v3556, %v3555
  %v3595 = vpack.c.bf16 %v3558, %v3557
  %v3596 = vpack.c.bf16 %v3560, %v3559
  %v3597 = vpack.c.bf16 %v3562, %v3561
  %v3598 = vpack.c.bf16 %v3564, %v3563
  %v3599 = vpack.c.bf16 %v3566, %v3565
  %v3600 = vpack.c.bf16 %v3568, %v3567
  %v3601 = vld [vmem:[%s1] sm:$0xf]
  %v3602 = vld [vmem:[%s1 + $0x4] sm:$0xf]
  %v3603 = vld [vmem:[%s1 + $0x8] sm:$0xf]
  %v3604 = vld [vmem:[%s1 + $0xc] sm:$0x3]
  %v3609 = vunpack.c.l.b16 %v3601
  %v3610 = vunpack.c.l.b16 %v3602
  %v3611 = vunpack.c.l.b16 %v3603
  %v3612 = vunpack.c.l.b16 %v3604
  %v3613 = vpack.c.b16 %v3610, %v3609
  %v3614 = vpack.c.b16 %v3612, %v3611
  %vm3616 = vcmask 220160
  %v3618 = vsel %vm3616, %v3569, 0
  %v3621 = vsel %vm3616, %v3570, 0
  %v3624 = vsel %vm3616, %v3571, 0
  %v3627 = vsel %vm3616, %v3572, 0
  %v3630 = vsel %vm3616, %v3573, 0
  %v3633 = vsel %vm3616, %v3574, 0
  %v3636 = vsel %vm3616, %v3575, 0
  %v3639 = vsel %vm3616, %v3576, 0
  %v3642 = vsel %vm3616, %v3577, 0
  %v3645 = vsel %vm3616, %v3578, 0
  %v3648 = vsel %vm3616, %v3579, 0
  %v3651 = vsel %vm3616, %v3580, 0
  %v3654 = vsel %vm3616, %v3581, 0
  %v3657 = vsel %vm3616, %v3582, 0
  %v3660 = vsel %vm3616, %v3583, 0
  %v3663 = vsel %vm3616, %v3584, 0
  %v3666 = vsel %vm3616, %v3585, 0
  %v3669 = vsel %vm3616, %v3586, 0
  %v3672 = vsel %vm3616, %v3587, 0
  %v3675 = vsel %vm3616, %v3588, 0
  %v3678 = vsel %vm3616, %v3589, 0
  %v3681 = vsel %vm3616, %v3590, 0
  %v3684 = vsel %vm3616, %v3591, 0
  %v3687 = vsel %vm3616, %v3592, 0
  %v3690 = vsel %vm3616, %v3593, 0
  %v3693 = vsel %vm3616, %v3594, 0
  %v3696 = vsel %vm3616, %v3595, 0
  %v3699 = vsel %vm3616, %v3596, 0
  %v3702 = vsel %vm3616, %v3597, 0
  %v3705 = vsel %vm3616, %v3598, 0
  %v3708 = vsel %vm3616, %v3599, 0
  %v3711 = vsel %vm3616, %v3600, 0
  %vm3713 = vcmask 1044480
  %vm3714 = vcmask 1045504
  %v3715 = vsel %vm3713, 4294967295, 65535
  %v3716 = vsel %vm3714, %v3715, 0
  %v3718 = vand.u32 %v3614, %v3716
  %3720 = vmatpush.bf16.msra.mxu0 0
  %3721 = vmatpush.bf16.msra.mxu0 0
  %3722 = vmatpush.bf16.msra.mxu0 0
  %3723 = vmatpush.bf16.msra.mxu0 0
  %3724 = vmatpush.bf16.msra.mxu0 0
  %3725 = vmatpush.bf16.msra.mxu0 0
  %3726 = vmatpush.bf16.msra.mxu0 %v3718
  %3727 = vmatpush.bf16.msra.mxu0 %v3613
  %3728 = vmatmul.bf16.gmra.mxu0 %v3618
  %v3729 = vpop.f32.mrf.mxu0
  %v3730 = vadd.f32 0.0, %v3729
  %v3731 = vpop.f32.mrf.mxu0
  %v3732 = vadd.f32 0.0, %v3731
  %3733 = vmatmul.bf16.gmra.mxu0 %v3621
  %v3734 = vpop.f32.mrf.mxu0
  %v3735 = vadd.f32 0.0, %v3734
  %v3736 = vpop.f32.mrf.mxu0
  %v3737 = vadd.f32 0.0, %v3736
  %3738 = vmatmul.bf16.gmra.mxu0 %v3624
  %v3739 = vpop.f32.mrf.mxu0
  %v3740 = vadd.f32 0.0, %v3739
  %v3741 = vpop.f32.mrf.mxu0
  %v3742 = vadd.f32 0.0, %v3741
  %3743 = vmatmul.bf16.gmra.mxu0 %v3627
  %v3744 = vpop.f32.mrf.mxu0
  %v3745 = vadd.f32 0.0, %v3744
  %v3746 = vpop.f32.mrf.mxu0
  %v3747 = vadd.f32 0.0, %v3746
  %3748 = vmatmul.bf16.gmra.mxu0 %v3630
  %v3749 = vpop.f32.mrf.mxu0
  %v3750 = vadd.f32 0.0, %v3749
  %v3751 = vpop.f32.mrf.mxu0
  %v3752 = vadd.f32 0.0, %v3751
  %3753 = vmatmul.bf16.gmra.mxu0 %v3633
  %v3754 = vpop.f32.mrf.mxu0
  %v3755 = vadd.f32 0.0, %v3754
  %v3756 = vpop.f32.mrf.mxu0
  %v3757 = vadd.f32 0.0, %v3756
  %3758 = vmatmul.bf16.gmra.mxu0 %v3636
  %v3759 = vpop.f32.mrf.mxu0
  %v3760 = vadd.f32 0.0, %v3759
  %v3761 = vpop.f32.mrf.mxu0
  %v3762 = vadd.f32 0.0, %v3761
  %3763 = vmatmul.bf16.gmra.mxu0 %v3639
  %v3764 = vpop.f32.mrf.mxu0
  %v3765 = vadd.f32 0.0, %v3764
  %v3766 = vpop.f32.mrf.mxu0
  %v3767 = vadd.f32 0.0, %v3766
  %3768 = vmatmul.bf16.gmra.mxu0 %v3642
  %v3769 = vpop.f32.mrf.mxu0
  %v3770 = vadd.f32 0.0, %v3769
  %v3771 = vpop.f32.mrf.mxu0
  %v3772 = vadd.f32 0.0, %v3771
  %3773 = vmatmul.bf16.gmra.mxu0 %v3645
  %v3774 = vpop.f32.mrf.mxu0
  %v3775 = vadd.f32 0.0, %v3774
  %v3776 = vpop.f32.mrf.mxu0
  %v3777 = vadd.f32 0.0, %v3776
  %3778 = vmatmul.bf16.gmra.mxu0 %v3648
  %v3779 = vpop.f32.mrf.mxu0
  %v3780 = vadd.f32 0.0, %v3779
  %v3781 = vpop.f32.mrf.mxu0
  %v3782 = vadd.f32 0.0, %v3781
  %3783 = vmatmul.bf16.gmra.mxu0 %v3651
  %v3784 = vpop.f32.mrf.mxu0
  %v3785 = vadd.f32 0.0, %v3784
  %v3786 = vpop.f32.mrf.mxu0
  %v3787 = vadd.f32 0.0, %v3786
  %3788 = vmatmul.bf16.gmra.mxu0 %v3654
  %v3789 = vpop.f32.mrf.mxu0
  %v3790 = vadd.f32 0.0, %v3789
  %v3791 = vpop.f32.mrf.mxu0
  %v3792 = vadd.f32 0.0, %v3791
  %3793 = vmatmul.bf16.gmra.mxu0 %v3657
  %v3794 = vpop.f32.mrf.mxu0
  %v3795 = vadd.f32 0.0, %v3794
  %v3796 = vpop.f32.mrf.mxu0
  %v3797 = vadd.f32 0.0, %v3796
  %3798 = vmatmul.bf16.gmra.mxu0 %v3660
  %v3799 = vpop.f32.mrf.mxu0
  %v3800 = vadd.f32 0.0, %v3799
  %v3801 = vpop.f32.mrf.mxu0
  %v3802 = vadd.f32 0.0, %v3801
  %3803 = vmatmul.bf16.gmra.mxu0 %v3663
  %v3804 = vpop.f32.mrf.mxu0
  %v3805 = vadd.f32 0.0, %v3804
  %v3806 = vpop.f32.mrf.mxu0
  %v3807 = vadd.f32 0.0, %v3806
  %3808 = vmatmul.bf16.gmra.mxu0 %v3666
  %v3809 = vpop.f32.mrf.mxu0
  %v3810 = vadd.f32 0.0, %v3809
  %v3811 = vpop.f32.mrf.mxu0
  %v3812 = vadd.f32 0.0, %v3811
  %3813 = vmatmul.bf16.gmra.mxu0 %v3669
  %v3814 = vpop.f32.mrf.mxu0
  %v3815 = vadd.f32 0.0, %v3814
  %v3816 = vpop.f32.mrf.mxu0
  %v3817 = vadd.f32 0.0, %v3816
  %3818 = vmatmul.bf16.gmra.mxu0 %v3672
  %v3819 = vpop.f32.mrf.mxu0
  %v3820 = vadd.f32 0.0, %v3819
  %v3821 = vpop.f32.mrf.mxu0
  %v3822 = vadd.f32 0.0, %v3821
  %3823 = vmatmul.bf16.gmra.mxu0 %v3675
  %v3824 = vpop.f32.mrf.mxu0
  %v3825 = vadd.f32 0.0, %v3824
  %v3826 = vpop.f32.mrf.mxu0
  %v3827 = vadd.f32 0.0, %v3826
  %3828 = vmatmul.bf16.gmra.mxu0 %v3678
  %v3829 = vpop.f32.mrf.mxu0
  %v3830 = vadd.f32 0.0, %v3829
  %v3831 = vpop.f32.mrf.mxu0
  %v3832 = vadd.f32 0.0, %v3831
  %3833 = vmatmul.bf16.gmra.mxu0 %v3681
  %v3834 = vpop.f32.mrf.mxu0
  %v3835 = vadd.f32 0.0, %v3834
  %v3836 = vpop.f32.mrf.mxu0
  %v3837 = vadd.f32 0.0, %v3836
  %3838 = vmatmul.bf16.gmra.mxu0 %v3684
  %v3839 = vpop.f32.mrf.mxu0
  %v3840 = vadd.f32 0.0, %v3839
  %v3841 = vpop.f32.mrf.mxu0
  %v3842 = vadd.f32 0.0, %v3841
  %3843 = vmatmul.bf16.gmra.mxu0 %v3687
  %v3844 = vpop.f32.mrf.mxu0
  %v3845 = vadd.f32 0.0, %v3844
  %v3846 = vpop.f32.mrf.mxu0
  %v3847 = vadd.f32 0.0, %v3846
  %3848 = vmatmul.bf16.gmra.mxu0 %v3690
  %v3849 = vpop.f32.mrf.mxu0
  %v3850 = vadd.f32 0.0, %v3849
  %v3851 = vpop.f32.mrf.mxu0
  %v3852 = vadd.f32 0.0, %v3851
  %3853 = vmatmul.bf16.gmra.mxu0 %v3693
  %v3854 = vpop.f32.mrf.mxu0
  %v3855 = vadd.f32 0.0, %v3854
  %v3856 = vpop.f32.mrf.mxu0
  %v3857 = vadd.f32 0.0, %v3856
  %3858 = vmatmul.bf16.gmra.mxu0 %v3696
  %v3859 = vpop.f32.mrf.mxu0
  %v3860 = vadd.f32 0.0, %v3859
  %v3861 = vpop.f32.mrf.mxu0
  %v3862 = vadd.f32 0.0, %v3861
  %3863 = vmatmul.bf16.gmra.mxu0 %v3699
  %v3864 = vpop.f32.mrf.mxu0
  %v3865 = vadd.f32 0.0, %v3864
  %v3866 = vpop.f32.mrf.mxu0
  %v3867 = vadd.f32 0.0, %v3866
  %3868 = vmatmul.bf16.gmra.mxu0 %v3702
  %v3869 = vpop.f32.mrf.mxu0
  %v3870 = vadd.f32 0.0, %v3869
  %v3871 = vpop.f32.mrf.mxu0
  %v3872 = vadd.f32 0.0, %v3871
  %3873 = vmatmul.bf16.gmra.mxu0 %v3705
  %v3874 = vpop.f32.mrf.mxu0
  %v3875 = vadd.f32 0.0, %v3874
  %v3876 = vpop.f32.mrf.mxu0
  %v3877 = vadd.f32 0.0, %v3876
  %3878 = vmatmul.bf16.gmra.mxu0 %v3708
  %v3879 = vpop.f32.mrf.mxu0
  %v3880 = vadd.f32 0.0, %v3879
  %v3881 = vpop.f32.mrf.mxu0
  %v3882 = vadd.f32 0.0, %v3881
  %3883 = vmatmul.bf16.gmra.mxu0 %v3711
  %v3884 = vpop.f32.mrf.mxu0
  %v3885 = vadd.f32 0.0, %v3884
  %v3886 = vpop.f32.mrf.mxu0
  %v3887 = vadd.f32 0.0, %v3886
  %3888 = vdwg.mxu0
  %v3889 = vsel %vm125, %v3730, 0.0
  %v3890 = vsel %vm125, %v3732, 0.0
  %v3891 = vadd.f32 %v3889, %v3890
  %v3892 = vsel %vm125, %v3735, 0.0
  %v3893 = vadd.f32 %v3891, %v3892
  %v3894 = vsel %vm125, %v3737, 0.0
  %v3895 = vadd.f32 %v3893, %v3894
  %v3896 = vsel %vm125, %v3740, 0.0
  %v3897 = vadd.f32 %v3895, %v3896
  %v3898 = vsel %vm125, %v3742, 0.0
  %v3899 = vadd.f32 %v3897, %v3898
  %v3900 = vsel %vm125, %v3745, 0.0
  %v3901 = vadd.f32 %v3899, %v3900
  %v3902 = vsel %vm125, %v3747, 0.0
  %v3903 = vadd.f32 %v3901, %v3902
  %v3904 = vsel %vm125, %v3750, 0.0
  %v3905 = vadd.f32 %v3903, %v3904
  %v3906 = vsel %vm125, %v3752, 0.0
  %v3907 = vadd.f32 %v3905, %v3906
  %v3908 = vsel %vm125, %v3755, 0.0
  %v3909 = vadd.f32 %v3907, %v3908
  %v3910 = vsel %vm125, %v3757, 0.0
  %v3911 = vadd.f32 %v3909, %v3910
  %v3912 = vsel %vm125, %v3760, 0.0
  %v3913 = vadd.f32 %v3911, %v3912
  %v3914 = vsel %vm125, %v3762, 0.0
  %v3915 = vadd.f32 %v3913, %v3914
  %v3916 = vsel %vm125, %v3765, 0.0
  %v3917 = vadd.f32 %v3915, %v3916
  %v3918 = vsel %vm125, %v3767, 0.0
  %v3919 = vadd.f32 %v3917, %v3918
  %v3920 = vsel %vm125, %v3770, 0.0
  %v3921 = vadd.f32 %v3919, %v3920
  %v3922 = vsel %vm125, %v3772, 0.0
  %v3923 = vadd.f32 %v3921, %v3922
  %v3924 = vsel %vm125, %v3775, 0.0
  %v3925 = vadd.f32 %v3923, %v3924
  %v3926 = vsel %vm125, %v3777, 0.0
  %v3927 = vadd.f32 %v3925, %v3926
  %v3928 = vsel %vm125, %v3780, 0.0
  %v3929 = vadd.f32 %v3927, %v3928
  %v3930 = vsel %vm125, %v3782, 0.0
  %v3931 = vadd.f32 %v3929, %v3930
  %v3932 = vsel %vm125, %v3785, 0.0
  %v3933 = vadd.f32 %v3931, %v3932
  %v3934 = vsel %vm125, %v3787, 0.0
  %v3935 = vadd.f32 %v3933, %v3934
  %v3936 = vsel %vm125, %v3790, 0.0
  %v3937 = vadd.f32 %v3935, %v3936
  %v3938 = vsel %vm125, %v3792, 0.0
  %v3939 = vadd.f32 %v3937, %v3938
  %v3940 = vsel %vm125, %v3795, 0.0
  %v3941 = vadd.f32 %v3939, %v3940
  %v3942 = vsel %vm125, %v3797, 0.0
  %v3943 = vadd.f32 %v3941, %v3942
  %v3944 = vsel %vm125, %v3800, 0.0
  %v3945 = vadd.f32 %v3943, %v3944
  %v3946 = vsel %vm125, %v3802, 0.0
  %v3947 = vadd.f32 %v3945, %v3946
  %v3948 = vsel %vm125, %v3805, 0.0
  %v3949 = vadd.f32 %v3947, %v3948
  %v3950 = vsel %vm125, %v3807, 0.0
  %v3951 = vadd.f32 %v3949, %v3950
  %v3952 = vsel %vm125, %v3810, 0.0
  %v3953 = vadd.f32 %v3951, %v3952
  %v3954 = vsel %vm125, %v3812, 0.0
  %v3955 = vadd.f32 %v3953, %v3954
  %v3956 = vsel %vm125, %v3815, 0.0
  %v3957 = vadd.f32 %v3955, %v3956
  %v3958 = vsel %vm125, %v3817, 0.0
  %v3959 = vadd.f32 %v3957, %v3958
  %v3960 = vsel %vm125, %v3820, 0.0
  %v3961 = vadd.f32 %v3959, %v3960
  %v3962 = vsel %vm125, %v3822, 0.0
  %v3963 = vadd.f32 %v3961, %v3962
  %v3964 = vsel %vm125, %v3825, 0.0
  %v3965 = vadd.f32 %v3963, %v3964
  %v3966 = vsel %vm125, %v3827, 0.0
  %v3967 = vadd.f32 %v3965, %v3966
  %v3968 = vsel %vm125, %v3830, 0.0
  %v3969 = vadd.f32 %v3967, %v3968
  %v3970 = vsel %vm125, %v3832, 0.0
  %v3971 = vadd.f32 %v3969, %v3970
  %v3972 = vsel %vm125, %v3835, 0.0
  %v3973 = vadd.f32 %v3971, %v3972
  %v3974 = vsel %vm125, %v3837, 0.0
  %v3975 = vadd.f32 %v3973, %v3974
  %v3976 = vsel %vm125, %v3840, 0.0
  %v3977 = vadd.f32 %v3975, %v3976
  %v3978 = vsel %vm125, %v3842, 0.0
  %v3979 = vadd.f32 %v3977, %v3978
  %v3980 = vsel %vm125, %v3845, 0.0
  %v3981 = vadd.f32 %v3979, %v3980
  %v3982 = vsel %vm125, %v3847, 0.0
  %v3983 = vadd.f32 %v3981, %v3982
  %v3984 = vsel %vm125, %v3850, 0.0
  %v3985 = vadd.f32 %v3983, %v3984
  %v3986 = vsel %vm125, %v3852, 0.0
  %v3987 = vadd.f32 %v3985, %v3986
  %v3988 = vsel %vm125, %v3855, 0.0
  %v3989 = vadd.f32 %v3987, %v3988
  %v3990 = vsel %vm125, %v3857, 0.0
  %v3991 = vadd.f32 %v3989, %v3990
  %v3992 = vsel %vm125, %v3860, 0.0
  %v3993 = vadd.f32 %v3991, %v3992
  %v3994 = vsel %vm125, %v3862, 0.0
  %v3995 = vadd.f32 %v3993, %v3994
  %v3996 = vsel %vm125, %v3865, 0.0
  %v3997 = vadd.f32 %v3995, %v3996
  %v3998 = vsel %vm125, %v3867, 0.0
  %v3999 = vadd.f32 %v3997, %v3998
  %v4000 = vsel %vm125, %v3870, 0.0
  %v4001 = vadd.f32 %v3999, %v4000
  %v4002 = vsel %vm125, %v3872, 0.0
  %v4003 = vadd.f32 %v4001, %v4002
  %v4004 = vsel %vm125, %v3875, 0.0
  %v4005 = vadd.f32 %v4003, %v4004
  %v4006 = vsel %vm125, %v3877, 0.0
  %v4007 = vadd.f32 %v4005, %v4006
  %v4008 = vsel %vm125, %v3880, 0.0
  %v4009 = vadd.f32 %v4007, %v4008
  %v4010 = vsel %vm125, %v3882, 0.0
  %v4011 = vadd.f32 %v4009, %v4010
  %v4012 = vsel %vm125, %v3885, 0.0
  %v4013 = vadd.f32 %v4011, %v4012
  %v4014 = vsel %vm125, %v3887, 0.0
  %v4015 = vadd.f32 %v4013, %v4014
  %v4016 = vrot.slane %v4015, 4
  %v4017 = vadd.f32 %v4015, %v4016
  %v4018 = vrot.slane %v4017, 2
  %v4019 = vadd.f32 %v4017, %v4018
  %v4020 = vrot.slane %v4019, 1
  %v4021 = vadd.f32 %v4019, %v4020
  %v4022 = vrcp.pop 512.0
  %v4023 = vmul.f32 512.0, %v4022
  %v4024 = vsub.f32 1.0, %v4023
  %v4025 = vmul.f32 %v4022, %v4024
  %v4026 = vadd.f32 %v4022, %v4025
  %vm4027 = vweird.f32 %v4022
  %v4028 = vsel %vm4027, %v4022, %v4026
  %v4029 = vmul.f32 %v4021, %v4028
  %v4030 = vmul.f32 %v3730, %v3730
  %v4031 = vmul.f32 %v3732, %v3732
  %v4032 = vmul.f32 %v3735, %v3735
  %v4033 = vmul.f32 %v3737, %v3737
  %v4034 = vmul.f32 %v3740, %v3740
  %v4035 = vmul.f32 %v3742, %v3742
  %v4036 = vmul.f32 %v3745, %v3745
  %v4037 = vmul.f32 %v3747, %v3747
  %v4038 = vmul.f32 %v3750, %v3750
  %v4039 = vmul.f32 %v3752, %v3752
  %v4040 = vmul.f32 %v3755, %v3755
  %v4041 = vmul.f32 %v3757, %v3757
  %v4042 = vmul.f32 %v3760, %v3760
  %v4043 = vmul.f32 %v3762, %v3762
  %v4044 = vmul.f32 %v3765, %v3765
  %v4045 = vmul.f32 %v3767, %v3767
  %v4046 = vmul.f32 %v3770, %v3770
  %v4047 = vmul.f32 %v3772, %v3772
  %v4048 = vmul.f32 %v3775, %v3775
  %v4049 = vmul.f32 %v3777, %v3777
  %v4050 = vmul.f32 %v3780, %v3780
  %v4051 = vmul.f32 %v3782, %v3782
  %v4052 = vmul.f32 %v3785, %v3785
  %v4053 = vmul.f32 %v3787, %v3787
  %v4054 = vmul.f32 %v3790, %v3790
  %v4055 = vmul.f32 %v3792, %v3792
  %v4056 = vmul.f32 %v3795, %v3795
  %v4057 = vmul.f32 %v3797, %v3797
  %v4058 = vmul.f32 %v3800, %v3800
  %v4059 = vmul.f32 %v3802, %v3802
  %v4060 = vmul.f32 %v3805, %v3805
  %v4061 = vmul.f32 %v3807, %v3807
  %v4062 = vmul.f32 %v3810, %v3810
  %v4063 = vmul.f32 %v3812, %v3812
  %v4064 = vmul.f32 %v3815, %v3815
  %v4065 = vmul.f32 %v3817, %v3817
  %v4066 = vmul.f32 %v3820, %v3820
  %v4067 = vmul.f32 %v3822, %v3822
  %v4068 = vmul.f32 %v3825, %v3825
  %v4069 = vmul.f32 %v3827, %v3827
  %v4070 = vmul.f32 %v3830, %v3830
  %v4071 = vmul.f32 %v3832, %v3832
  %v4072 = vmul.f32 %v3835, %v3835
  %v4073 = vmul.f32 %v3837, %v3837
  %v4074 = vmul.f32 %v3840, %v3840
  %v4075 = vmul.f32 %v3842, %v3842
  %v4076 = vmul.f32 %v3845, %v3845
  %v4077 = vmul.f32 %v3847, %v3847
  %v4078 = vmul.f32 %v3850, %v3850
  %v4079 = vmul.f32 %v3852, %v3852
  %v4080 = vmul.f32 %v3855, %v3855
  %v4081 = vmul.f32 %v3857, %v3857
  %v4082 = vmul.f32 %v3860, %v3860
  %v4083 = vmul.f32 %v3862, %v3862
  %v4084 = vmul.f32 %v3865, %v3865
  %v4085 = vmul.f32 %v3867, %v3867
  %v4086 = vmul.f32 %v3870, %v3870
  %v4087 = vmul.f32 %v3872, %v3872
  %v4088 = vmul.f32 %v3875, %v3875
  %v4089 = vmul.f32 %v3877, %v3877
  %v4090 = vmul.f32 %v3880, %v3880
  %v4091 = vmul.f32 %v3882, %v3882
  %v4092 = vmul.f32 %v3885, %v3885
  %v4093 = vmul.f32 %v3887, %v3887
  %v4094 = vsel %vm125, %v4030, 0.0
  %v4095 = vsel %vm125, %v4031, 0.0
  %v4096 = vadd.f32 %v4094, %v4095
  %v4097 = vsel %vm125, %v4032, 0.0
  %v4098 = vadd.f32 %v4096, %v4097
  %v4099 = vsel %vm125, %v4033, 0.0
  %v4100 = vadd.f32 %v4098, %v4099
  %v4101 = vsel %vm125, %v4034, 0.0
  %v4102 = vadd.f32 %v4100, %v4101
  %v4103 = vsel %vm125, %v4035, 0.0
  %v4104 = vadd.f32 %v4102, %v4103
  %v4105 = vsel %vm125, %v4036, 0.0
  %v4106 = vadd.f32 %v4104, %v4105
  %v4107 = vsel %vm125, %v4037, 0.0
  %v4108 = vadd.f32 %v4106, %v4107
  %v4109 = vsel %vm125, %v4038, 0.0
  %v4110 = vadd.f32 %v4108, %v4109
  %v4111 = vsel %vm125, %v4039, 0.0
  %v4112 = vadd.f32 %v4110, %v4111
  %v4113 = vsel %vm125, %v4040, 0.0
  %v4114 = vadd.f32 %v4112, %v4113
  %v4115 = vsel %vm125, %v4041, 0.0
  %v4116 = vadd.f32 %v4114, %v4115
  %v4117 = vsel %vm125, %v4042, 0.0
  %v4118 = vadd.f32 %v4116, %v4117
  %v4119 = vsel %vm125, %v4043, 0.0
  %v4120 = vadd.f32 %v4118, %v4119
  %v4121 = vsel %vm125, %v4044, 0.0
  %v4122 = vadd.f32 %v4120, %v4121
  %v4123 = vsel %vm125, %v4045, 0.0
  %v4124 = vadd.f32 %v4122, %v4123
  %v4125 = vsel %vm125, %v4046, 0.0
  %v4126 = vadd.f32 %v4124, %v4125
  %v4127 = vsel %vm125, %v4047, 0.0
  %v4128 = vadd.f32 %v4126, %v4127
  %v4129 = vsel %vm125, %v4048, 0.0
  %v4130 = vadd.f32 %v4128, %v4129
  %v4131 = vsel %vm125, %v4049, 0.0
  %v4132 = vadd.f32 %v4130, %v4131
  %v4133 = vsel %vm125, %v4050, 0.0
  %v4134 = vadd.f32 %v4132, %v4133
  %v4135 = vsel %vm125, %v4051, 0.0
  %v4136 = vadd.f32 %v4134, %v4135
  %v4137 = vsel %vm125, %v4052, 0.0
  %v4138 = vadd.f32 %v4136, %v4137
  %v4139 = vsel %vm125, %v4053, 0.0
  %v4140 = vadd.f32 %v4138, %v4139
  %v4141 = vsel %vm125, %v4054, 0.0
  %v4142 = vadd.f32 %v4140, %v4141
  %v4143 = vsel %vm125, %v4055, 0.0
  %v4144 = vadd.f32 %v4142, %v4143
  %v4145 = vsel %vm125, %v4056, 0.0
  %v4146 = vadd.f32 %v4144, %v4145
  %v4147 = vsel %vm125, %v4057, 0.0
  %v4148 = vadd.f32 %v4146, %v4147
  %v4149 = vsel %vm125, %v4058, 0.0
  %v4150 = vadd.f32 %v4148, %v4149
  %v4151 = vsel %vm125, %v4059, 0.0
  %v4152 = vadd.f32 %v4150, %v4151
  %v4153 = vsel %vm125, %v4060, 0.0
  %v4154 = vadd.f32 %v4152, %v4153
  %v4155 = vsel %vm125, %v4061, 0.0
  %v4156 = vadd.f32 %v4154, %v4155
  %v4157 = vsel %vm125, %v4062, 0.0
  %v4158 = vadd.f32 %v4156, %v4157
  %v4159 = vsel %vm125, %v4063, 0.0
  %v4160 = vadd.f32 %v4158, %v4159
  %v4161 = vsel %vm125, %v4064, 0.0
  %v4162 = vadd.f32 %v4160, %v4161
  %v4163 = vsel %vm125, %v4065, 0.0
  %v4164 = vadd.f32 %v4162, %v4163
  %v4165 = vsel %vm125, %v4066, 0.0
  %v4166 = vadd.f32 %v4164, %v4165
  %v4167 = vsel %vm125, %v4067, 0.0
  %v4168 = vadd.f32 %v4166, %v4167
  %v4169 = vsel %vm125, %v4068, 0.0
  %v4170 = vadd.f32 %v4168, %v4169
  %v4171 = vsel %vm125, %v4069, 0.0
  %v4172 = vadd.f32 %v4170, %v4171
  %v4173 = vsel %vm125, %v4070, 0.0
  %v4174 = vadd.f32 %v4172, %v4173
  %v4175 = vsel %vm125, %v4071, 0.0
  %v4176 = vadd.f32 %v4174, %v4175
  %v4177 = vsel %vm125, %v4072, 0.0
  %v4178 = vadd.f32 %v4176, %v4177
  %v4179 = vsel %vm125, %v4073, 0.0
  %v4180 = vadd.f32 %v4178, %v4179
  %v4181 = vsel %vm125, %v4074, 0.0
  %v4182 = vadd.f32 %v4180, %v4181
  %v4183 = vsel %vm125, %v4075, 0.0
  %v4184 = vadd.f32 %v4182, %v4183
  %v4185 = vsel %vm125, %v4076, 0.0
  %v4186 = vadd.f32 %v4184, %v4185
  %v4187 = vsel %vm125, %v4077, 0.0
  %v4188 = vadd.f32 %v4186, %v4187
  %v4189 = vsel %vm125, %v4078, 0.0
  %v4190 = vadd.f32 %v4188, %v4189
  %v4191 = vsel %vm125, %v4079, 0.0
  %v4192 = vadd.f32 %v4190, %v4191
  %v4193 = vsel %vm125, %v4080, 0.0
  %v4194 = vadd.f32 %v4192, %v4193
  %v4195 = vsel %vm125, %v4081, 0.0
  %v4196 = vadd.f32 %v4194, %v4195
  %v4197 = vsel %vm125, %v4082, 0.0
  %v4198 = vadd.f32 %v4196, %v4197
  %v4199 = vsel %vm125, %v4083, 0.0
  %v4200 = vadd.f32 %v4198, %v4199
  %v4201 = vsel %vm125, %v4084, 0.0
  %v4202 = vadd.f32 %v4200, %v4201
  %v4203 = vsel %vm125, %v4085, 0.0
  %v4204 = vadd.f32 %v4202, %v4203
  %v4205 = vsel %vm125, %v4086, 0.0
  %v4206 = vadd.f32 %v4204, %v4205
  %v4207 = vsel %vm125, %v4087, 0.0
  %v4208 = vadd.f32 %v4206, %v4207
  %v4209 = vsel %vm125, %v4088, 0.0
  %v4210 = vadd.f32 %v4208, %v4209
  %v4211 = vsel %vm125, %v4089, 0.0
  %v4212 = vadd.f32 %v4210, %v4211
  %v4213 = vsel %vm125, %v4090, 0.0
  %v4214 = vadd.f32 %v4212, %v4213
  %v4215 = vsel %vm125, %v4091, 0.0
  %v4216 = vadd.f32 %v4214, %v4215
  %v4217 = vsel %vm125, %v4092, 0.0
  %v4218 = vadd.f32 %v4216, %v4217
  %v4219 = vsel %vm125, %v4093, 0.0
  %v4220 = vadd.f32 %v4218, %v4219
  %v4221 = vrot.slane %v4220, 4
  %v4222 = vadd.f32 %v4220, %v4221
  %v4223 = vrot.slane %v4222, 2
  %v4224 = vadd.f32 %v4222, %v4223
  %v4225 = vrot.slane %v4224, 1
  %v4226 = vadd.f32 %v4224, %v4225
  %v4227 = vmul.f32 %v4226, %v4028
  %v4228 = vmul.f32 %v4029, %v4029
  %v4229 = vsub.f32 %v4227, %v4228
  %v4230 = vsub.f32 %v3730, %v4029
  %v4231 = vsub.f32 %v3732, %v4029
  %v4232 = vsub.f32 %v3735, %v4029
  %v4233 = vsub.f32 %v3737, %v4029
  %v4234 = vsub.f32 %v3740, %v4029
  %v4235 = vsub.f32 %v3742, %v4029
  %v4236 = vsub.f32 %v3745, %v4029
  %v4237 = vsub.f32 %v3747, %v4029
  %v4238 = vsub.f32 %v3750, %v4029
  %v4239 = vsub.f32 %v3752, %v4029
  %v4240 = vsub.f32 %v3755, %v4029
  %v4241 = vsub.f32 %v3757, %v4029
  %v4242 = vsub.f32 %v3760, %v4029
  %v4243 = vsub.f32 %v3762, %v4029
  %v4244 = vsub.f32 %v3765, %v4029
  %v4245 = vsub.f32 %v3767, %v4029
  %v4246 = vsub.f32 %v3770, %v4029
  %v4247 = vsub.f32 %v3772, %v4029
  %v4248 = vsub.f32 %v3775, %v4029
  %v4249 = vsub.f32 %v3777, %v4029
  %v4250 = vsub.f32 %v3780, %v4029
  %v4251 = vsub.f32 %v3782, %v4029
  %v4252 = vsub.f32 %v3785, %v4029
  %v4253 = vsub.f32 %v3787, %v4029
  %v4254 = vsub.f32 %v3790, %v4029
  %v4255 = vsub.f32 %v3792, %v4029
  %v4256 = vsub.f32 %v3795, %v4029
  %v4257 = vsub.f32 %v3797, %v4029
  %v4258 = vsub.f32 %v3800, %v4029
  %v4259 = vsub.f32 %v3802, %v4029
  %v4260 = vsub.f32 %v3805, %v4029
  %v4261 = vsub.f32 %v3807, %v4029
  %v4262 = vsub.f32 %v3810, %v4029
  %v4263 = vsub.f32 %v3812, %v4029
  %v4264 = vsub.f32 %v3815, %v4029
  %v4265 = vsub.f32 %v3817, %v4029
  %v4266 = vsub.f32 %v3820, %v4029
  %v4267 = vsub.f32 %v3822, %v4029
  %v4268 = vsub.f32 %v3825, %v4029
  %v4269 = vsub.f32 %v3827, %v4029
  %v4270 = vsub.f32 %v3830, %v4029
  %v4271 = vsub.f32 %v3832, %v4029
  %v4272 = vsub.f32 %v3835, %v4029
  %v4273 = vsub.f32 %v3837, %v4029
  %v4274 = vsub.f32 %v3840, %v4029
  %v4275 = vsub.f32 %v3842, %v4029
  %v4276 = vsub.f32 %v3845, %v4029
  %v4277 = vsub.f32 %v3847, %v4029
  %v4278 = vsub.f32 %v3850, %v4029
  %v4279 = vsub.f32 %v3852, %v4029
  %v4280 = vsub.f32 %v3855, %v4029
  %v4281 = vsub.f32 %v3857, %v4029
  %v4282 = vsub.f32 %v3860, %v4029
  %v4283 = vsub.f32 %v3862, %v4029
  %v4284 = vsub.f32 %v3865, %v4029
  %v4285 = vsub.f32 %v3867, %v4029
  %v4286 = vsub.f32 %v3870, %v4029
  %v4287 = vsub.f32 %v3872, %v4029
  %v4288 = vsub.f32 %v3875, %v4029
  %v4289 = vsub.f32 %v3877, %v4029
  %v4290 = vsub.f32 %v3880, %v4029
  %v4291 = vsub.f32 %v3882, %v4029
  %v4292 = vsub.f32 %v3885, %v4029
  %v4293 = vsub.f32 %v3887, %v4029
  %v4294 = vadd.f32 %v4229, 1e-05
  %v4295 = vrsqrt.pop %v4294
  %v4296 = vmul.f32 %v4295, %v4294
  %v4297 = vmul.f32 %v4296, %v4295
  %v4298 = vmul.f32 0.5, %v4297
  %v4299 = vsub.f32 1.5, %v4298
  %v4300 = vmul.f32 %v4295, %v4299
  %vm4301 = vweird.f32 %v4294
  %vm4302 = vweird.f32 %v4295
  %vm4303 = vmor %vm4301, %vm4302
  %v4304 = vsel %vm4303, %v4295, %v4300
  %v4305 = vmul.f32 %v4230, %v4304
  %v4306 = vmul.f32 %v4231, %v4304
  %v4307 = vmul.f32 %v4232, %v4304
  %v4308 = vmul.f32 %v4233, %v4304
  %v4309 = vmul.f32 %v4234, %v4304
  %v4310 = vmul.f32 %v4235, %v4304
  %v4311 = vmul.f32 %v4236, %v4304
  %v4312 = vmul.f32 %v4237, %v4304
  %v4313 = vmul.f32 %v4238, %v4304
  %v4314 = vmul.f32 %v4239, %v4304
  %v4315 = vmul.f32 %v4240, %v4304
  %v4316 = vmul.f32 %v4241, %v4304
  %v4317 = vmul.f32 %v4242, %v4304
  %v4318 = vmul.f32 %v4243, %v4304
  %v4319 = vmul.f32 %v4244, %v4304
  %v4320 = vmul.f32 %v4245, %v4304
  %v4321 = vmul.f32 %v4246, %v4304
  %v4322 = vmul.f32 %v4247, %v4304
  %v4323 = vmul.f32 %v4248, %v4304
  %v4324 = vmul.f32 %v4249, %v4304
  %v4325 = vmul.f32 %v4250, %v4304
  %v4326 = vmul.f32 %v4251, %v4304
  %v4327 = vmul.f32 %v4252, %v4304
  %v4328 = vmul.f32 %v4253, %v4304
  %v4329 = vmul.f32 %v4254, %v4304
  %v4330 = vmul.f32 %v4255, %v4304
  %v4331 = vmul.f32 %v4256, %v4304
  %v4332 = vmul.f32 %v4257, %v4304
  %v4333 = vmul.f32 %v4258, %v4304
  %v4334 = vmul.f32 %v4259, %v4304
  %v4335 = vmul.f32 %v4260, %v4304
  %v4336 = vmul.f32 %v4261, %v4304
  %v4337 = vmul.f32 %v4262, %v4304
  %v4338 = vmul.f32 %v4263, %v4304
  %v4339 = vmul.f32 %v4264, %v4304
  %v4340 = vmul.f32 %v4265, %v4304
  %v4341 = vmul.f32 %v4266, %v4304
  %v4342 = vmul.f32 %v4267, %v4304
  %v4343 = vmul.f32 %v4268, %v4304
  %v4344 = vmul.f32 %v4269, %v4304
  %v4345 = vmul.f32 %v4270, %v4304
  %v4346 = vmul.f32 %v4271, %v4304
  %v4347 = vmul.f32 %v4272, %v4304
  %v4348 = vmul.f32 %v4273, %v4304
  %v4349 = vmul.f32 %v4274, %v4304
  %v4350 = vmul.f32 %v4275, %v4304
  %v4351 = vmul.f32 %v4276, %v4304
  %v4352 = vmul.f32 %v4277, %v4304
  %v4353 = vmul.f32 %v4278, %v4304
  %v4354 = vmul.f32 %v4279, %v4304
  %v4355 = vmul.f32 %v4280, %v4304
  %v4356 = vmul.f32 %v4281, %v4304
  %v4357 = vmul.f32 %v4282, %v4304
  %v4358 = vmul.f32 %v4283, %v4304
  %v4359 = vmul.f32 %v4284, %v4304
  %v4360 = vmul.f32 %v4285, %v4304
  %v4361 = vmul.f32 %v4286, %v4304
  %v4362 = vmul.f32 %v4287, %v4304
  %v4363 = vmul.f32 %v4288, %v4304
  %v4364 = vmul.f32 %v4289, %v4304
  %v4365 = vmul.f32 %v4290, %v4304
  %v4366 = vmul.f32 %v4291, %v4304
  %v4367 = vmul.f32 %v4292, %v4304
  %v4368 = vmul.f32 %v4293, %v4304
  %v4369 = vmax.f32 %v4305, 0.0
  %v4370 = vmax.f32 %v4306, 0.0
  %v4371 = vmax.f32 %v4307, 0.0
  %v4372 = vmax.f32 %v4308, 0.0
  %v4373 = vmax.f32 %v4309, 0.0
  %v4374 = vmax.f32 %v4310, 0.0
  %v4375 = vmax.f32 %v4311, 0.0
  %v4376 = vmax.f32 %v4312, 0.0
  %v4377 = vmax.f32 %v4313, 0.0
  %v4378 = vmax.f32 %v4314, 0.0
  %v4379 = vmax.f32 %v4315, 0.0
  %v4380 = vmax.f32 %v4316, 0.0
  %v4381 = vmax.f32 %v4317, 0.0
  %v4382 = vmax.f32 %v4318, 0.0
  %v4383 = vmax.f32 %v4319, 0.0
  %v4384 = vmax.f32 %v4320, 0.0
  %v4385 = vmax.f32 %v4321, 0.0
  %v4386 = vmax.f32 %v4322, 0.0
  %v4387 = vmax.f32 %v4323, 0.0
  %v4388 = vmax.f32 %v4324, 0.0
  %v4389 = vmax.f32 %v4325, 0.0
  %v4390 = vmax.f32 %v4326, 0.0
  %v4391 = vmax.f32 %v4327, 0.0
  %v4392 = vmax.f32 %v4328, 0.0
  %v4393 = vmax.f32 %v4329, 0.0
  %v4394 = vmax.f32 %v4330, 0.0
  %v4395 = vmax.f32 %v4331, 0.0
  %v4396 = vmax.f32 %v4332, 0.0
  %v4397 = vmax.f32 %v4333, 0.0
  %v4398 = vmax.f32 %v4334, 0.0
  %v4399 = vmax.f32 %v4335, 0.0
  %v4400 = vmax.f32 %v4336, 0.0
  %v4401 = vmax.f32 %v4337, 0.0
  %v4402 = vmax.f32 %v4338, 0.0
  %v4403 = vmax.f32 %v4339, 0.0
  %v4404 = vmax.f32 %v4340, 0.0
  %v4405 = vmax.f32 %v4341, 0.0
  %v4406 = vmax.f32 %v4342, 0.0
  %v4407 = vmax.f32 %v4343, 0.0
  %v4408 = vmax.f32 %v4344, 0.0
  %v4409 = vmax.f32 %v4345, 0.0
  %v4410 = vmax.f32 %v4346, 0.0
  %v4411 = vmax.f32 %v4347, 0.0
  %v4412 = vmax.f32 %v4348, 0.0
  %v4413 = vmax.f32 %v4349, 0.0
  %v4414 = vmax.f32 %v4350, 0.0
  %v4415 = vmax.f32 %v4351, 0.0
  %v4416 = vmax.f32 %v4352, 0.0
  %v4417 = vmax.f32 %v4353, 0.0
  %v4418 = vmax.f32 %v4354, 0.0
  %v4419 = vmax.f32 %v4355, 0.0
  %v4420 = vmax.f32 %v4356, 0.0
  %v4421 = vmax.f32 %v4357, 0.0
  %v4422 = vmax.f32 %v4358, 0.0
  %v4423 = vmax.f32 %v4359, 0.0
  %v4424 = vmax.f32 %v4360, 0.0
  %v4425 = vmax.f32 %v4361, 0.0
  %v4426 = vmax.f32 %v4362, 0.0
  %v4427 = vmax.f32 %v4363, 0.0
  %v4428 = vmax.f32 %v4364, 0.0
  %v4429 = vmax.f32 %v4365, 0.0
  %v4430 = vmax.f32 %v4366, 0.0
  %v4431 = vmax.f32 %v4367, 0.0
  %v4432 = vmax.f32 %v4368, 0.0
  %4433 = vst.msk [vmem:[#allocation4] sm:$0xff] %vm125, %v4369
  %4434 = vst.msk [vmem:[#allocation4 + $0x8] sm:$0xff] %vm125, %v4370
  %4435 = vst.msk [vmem:[#allocation4 + $0x10] sm:$0xff] %vm125, %v4371
  %4436 = vst.msk [vmem:[#allocation4 + $0x18] sm:$0xff] %vm125, %v4372
  %4437 = vst.msk [vmem:[#allocation4 + $0x20] sm:$0xff] %vm125, %v4373
  %4438 = vst.msk [vmem:[#allocation4 + $0x28] sm:$0xff] %vm125, %v4374
  %4439 = vst.msk [vmem:[#allocation4 + $0x30] sm:$0xff] %vm125, %v4375
  %4440 = vst.msk [vmem:[#allocation4 + $0x38] sm:$0xff] %vm125, %v4376
  %4441 = vst.msk [vmem:[#allocation4 + $0x40] sm:$0xff] %vm125, %v4377
  %4442 = vst.msk [vmem:[#allocation4 + $0x48] sm:$0xff] %vm125, %v4378
  %4443 = vst.msk [vmem:[#allocation4 + $0x50] sm:$0xff] %vm125, %v4379
  %4444 = vst.msk [vmem:[#allocation4 + $0x58] sm:$0xff] %vm125, %v4380
  %4445 = vst.msk [vmem:[#allocation4 + $0x60] sm:$0xff] %vm125, %v4381
  %4446 = vst.msk [vmem:[#allocation4 + $0x68] sm:$0xff] %vm125, %v4382
  %4447 = vst.msk [vmem:[#allocation4 + $0x70] sm:$0xff] %vm125, %v4383
  %4448 = vst.msk [vmem:[#allocation4 + $0x78] sm:$0xff] %vm125, %v4384
  %4449 = vst.msk [vmem:[#allocation4 + $0x80] sm:$0xff] %vm125, %v4385
  %4450 = vst.msk [vmem:[#allocation4 + $0x88] sm:$0xff] %vm125, %v4386
  %4451 = vst.msk [vmem:[#allocation4 + $0x90] sm:$0xff] %vm125, %v4387
  %4452 = vst.msk [vmem:[#allocation4 + $0x98] sm:$0xff] %vm125, %v4388
  %4453 = vst.msk [vmem:[#allocation4 + $0xa0] sm:$0xff] %vm125, %v4389
  %4454 = vst.msk [vmem:[#allocation4 + $0xa8] sm:$0xff] %vm125, %v4390
  %4455 = vst.msk [vmem:[#allocation4 + $0xb0] sm:$0xff] %vm125, %v4391
  %4456 = vst.msk [vmem:[#allocation4 + $0xb8] sm:$0xff] %vm125, %v4392
  %4457 = vst.msk [vmem:[#allocation4 + $0xc0] sm:$0xff] %vm125, %v4393
  %4458 = vst.msk [vmem:[#allocation4 + $0xc8] sm:$0xff] %vm125, %v4394
  %4459 = vst.msk [vmem:[#allocation4 + $0xd0] sm:$0xff] %vm125, %v4395
  %4460 = vst.msk [vmem:[#allocation4 + $0xd8] sm:$0xff] %vm125, %v4396
  %4461 = vst.msk [vmem:[#allocation4 + $0xe0] sm:$0xff] %vm125, %v4397
  %4462 = vst.msk [vmem:[#allocation4 + $0xe8] sm:$0xff] %vm125, %v4398
  %4463 = vst.msk [vmem:[#allocation4 + $0xf0] sm:$0xff] %vm125, %v4399
  %4464 = vst.msk [vmem:[#allocation4 + $0xf8] sm:$0xff] %vm125, %v4400
  %4465 = vst.msk [vmem:[#allocation4 + $0x100] sm:$0xff] %vm125, %v4401
  %4466 = vst.msk [vmem:[#allocation4 + $0x108] sm:$0xff] %vm125, %v4402
  %4467 = vst.msk [vmem:[#allocation4 + $0x110] sm:$0xff] %vm125, %v4403
  %4468 = vst.msk [vmem:[#allocation4 + $0x118] sm:$0xff] %vm125, %v4404
  %4469 = vst.msk [vmem:[#allocation4 + $0x120] sm:$0xff] %vm125, %v4405
  %4470 = vst.msk [vmem:[#allocation4 + $0x128] sm:$0xff] %vm125, %v4406
  %4471 = vst.msk [vmem:[#allocation4 + $0x130] sm:$0xff] %vm125, %v4407
  %4472 = vst.msk [vmem:[#allocation4 + $0x138] sm:$0xff] %vm125, %v4408
  %4473 = vst.msk [vmem:[#allocation4 + $0x140] sm:$0xff] %vm125, %v4409
  %4474 = vst.msk [vmem:[#allocation4 + $0x148] sm:$0xff] %vm125, %v4410
  %4475 = vst.msk [vmem:[#allocation4 + $0x150] sm:$0xff] %vm125, %v4411
  %4476 = vst.msk [vmem:[#allocation4 + $0x158] sm:$0xff] %vm125, %v4412
  %4477 = vst.msk [vmem:[#allocation4 + $0x160] sm:$0xff] %vm125, %v4413
  %4478 = vst.msk [vmem:[#allocation4 + $0x168] sm:$0xff] %vm125, %v4414
  %4479 = vst.msk [vmem:[#allocation4 + $0x170] sm:$0xff] %vm125, %v4415
  %4480 = vst.msk [vmem:[#allocation4 + $0x178] sm:$0xff] %vm125, %v4416
  %4481 = vst.msk [vmem:[#allocation4 + $0x180] sm:$0xff] %vm125, %v4417
  %4482 = vst.msk [vmem:[#allocation4 + $0x188] sm:$0xff] %vm125, %v4418
  %4483 = vst.msk [vmem:[#allocation4 + $0x190] sm:$0xff] %vm125, %v4419
  %4484 = vst.msk [vmem:[#allocation4 + $0x198] sm:$0xff] %vm125, %v4420
  %4485 = vst.msk [vmem:[#allocation4 + $0x1a0] sm:$0xff] %vm125, %v4421
  %4486 = vst.msk [vmem:[#allocation4 + $0x1a8] sm:$0xff] %vm125, %v4422
  %4487 = vst.msk [vmem:[#allocation4 + $0x1b0] sm:$0xff] %vm125, %v4423
  %4488 = vst.msk [vmem:[#allocation4 + $0x1b8] sm:$0xff] %vm125, %v4424
  %4489 = vst.msk [vmem:[#allocation4 + $0x1c0] sm:$0xff] %vm125, %v4425
  %4490 = vst.msk [vmem:[#allocation4 + $0x1c8] sm:$0xff] %vm125, %v4426
  %4491 = vst.msk [vmem:[#allocation4 + $0x1d0] sm:$0xff] %vm125, %v4427
  %4492 = vst.msk [vmem:[#allocation4 + $0x1d8] sm:$0xff] %vm125, %v4428
  %4493 = vst.msk [vmem:[#allocation4 + $0x1e0] sm:$0xff] %vm125, %v4429
  %4494 = vst.msk [vmem:[#allocation4 + $0x1e8] sm:$0xff] %vm125, %v4430
  %4495 = vst.msk [vmem:[#allocation4 + $0x1f0] sm:$0xff] %vm125, %v4431
  %4496 = vst.msk [vmem:[#allocation4 + $0x1f8] sm:$0xff] %vm125, %v4432
  %v4497 = vld [vmem:[#allocation4] sm:$0x1]
  %v4498 = vld [vmem:[#allocation4 + $0x10] sm:$0x1]
  %v4499 = vld [vmem:[#allocation4 + $0x20] sm:$0x1]
  %v4500 = vld [vmem:[#allocation4 + $0x30] sm:$0x1]
  %v4501 = vld [vmem:[#allocation4 + $0x40] sm:$0x1]
  %v4502 = vld [vmem:[#allocation4 + $0x50] sm:$0x1]
  %v4503 = vld [vmem:[#allocation4 + $0x60] sm:$0x1]
  %v4504 = vld [vmem:[#allocation4 + $0x70] sm:$0x1]
  %v4505 = vld [vmem:[#allocation4 + $0x80] sm:$0x1]
  %v4506 = vld [vmem:[#allocation4 + $0x90] sm:$0x1]
  %v4507 = vld [vmem:[#allocation4 + $0xa0] sm:$0x1]
  %v4508 = vld [vmem:[#allocation4 + $0xb0] sm:$0x1]
  %v4509 = vld [vmem:[#allocation4 + $0xc0] sm:$0x1]
  %v4510 = vld [vmem:[#allocation4 + $0xd0] sm:$0x1]
  %v4511 = vld [vmem:[#allocation4 + $0xe0] sm:$0x1]
  %v4512 = vld [vmem:[#allocation4 + $0xf0] sm:$0x1]
  %v4513 = vld [vmem:[#allocation4 + $0x100] sm:$0x1]
  %v4514 = vld [vmem:[#allocation4 + $0x110] sm:$0x1]
  %v4515 = vld [vmem:[#allocation4 + $0x120] sm:$0x1]
  %v4516 = vld [vmem:[#allocation4 + $0x130] sm:$0x1]
  %v4517 = vld [vmem:[#allocation4 + $0x140] sm:$0x1]
  %v4518 = vld [vmem:[#allocation4 + $0x150] sm:$0x1]
  %v4519 = vld [vmem:[#allocation4 + $0x160] sm:$0x1]
  %v4520 = vld [vmem:[#allocation4 + $0x170] sm:$0x1]
  %v4521 = vld [vmem:[#allocation4 + $0x180] sm:$0x1]
  %v4522 = vld [vmem:[#allocation4 + $0x190] sm:$0x1]
  %v4523 = vld [vmem:[#allocation4 + $0x1a0] sm:$0x1]
  %v4524 = vld [vmem:[#allocation4 + $0x1b0] sm:$0x1]
  %v4525 = vld [vmem:[#allocation4 + $0x1c0] sm:$0x1]
  %v4526 = vld [vmem:[#allocation4 + $0x1d0] sm:$0x1]
  %v4527 = vld [vmem:[#allocation4 + $0x1e0] sm:$0x1]
  %v4528 = vld [vmem:[#allocation4 + $0x1f0] sm:$0x1]
  %v4529 = vld [vmem:[#allocation4 + $0x1] sm:$0x1]
  %v4530 = vld [vmem:[#allocation4 + $0x11] sm:$0x1]
  %v4531 = vld [vmem:[#allocation4 + $0x21] sm:$0x1]
  %v4532 = vld [vmem:[#allocation4 + $0x31] sm:$0x1]
  %v4533 = vld [vmem:[#allocation4 + $0x41] sm:$0x1]
  %v4534 = vld [vmem:[#allocation4 + $0x51] sm:$0x1]
  %v4535 = vld [vmem:[#allocation4 + $0x61] sm:$0x1]
  %v4536 = vld [vmem:[#allocation4 + $0x71] sm:$0x1]
  %v4537 = vld [vmem:[#allocation4 + $0x81] sm:$0x1]
  %v4538 = vld [vmem:[#allocation4 + $0x91] sm:$0x1]
  %v4539 = vld [vmem:[#allocation4 + $0xa1] sm:$0x1]
  %v4540 = vld [vmem:[#allocation4 + $0xb1] sm:$0x1]
  %v4541 = vld [vmem:[#allocation4 + $0xc1] sm:$0x1]
  %v4542 = vld [vmem:[#allocation4 + $0xd1] sm:$0x1]
  %v4543 = vld [vmem:[#allocation4 + $0xe1] sm:$0x1]
  %v4544 = vld [vmem:[#allocation4 + $0xf1] sm:$0x1]
  %v4545 = vld [vmem:[#allocation4 + $0x101] sm:$0x1]
  %v4546 = vld [vmem:[#allocation4 + $0x111] sm:$0x1]
  %v4547 = vld [vmem:[#allocation4 + $0x121] sm:$0x1]
  %v4548 = vld [vmem:[#allocation4 + $0x131] sm:$0x1]
  %v4549 = vld [vmem:[#allocation4 + $0x141] sm:$0x1]
  %v4550 = vld [vmem:[#allocation4 + $0x151] sm:$0x1]
  %v4551 = vld [vmem:[#allocation4 + $0x161] sm:$0x1]
  %v4552 = vld [vmem:[#allocation4 + $0x171] sm:$0x1]
  %v4553 = vld [vmem:[#allocation4 + $0x181] sm:$0x1]
  %v4554 = vld [vmem:[#allocation4 + $0x191] sm:$0x1]
  %v4555 = vld [vmem:[#allocation4 + $0x1a1] sm:$0x1]
  %v4556 = vld [vmem:[#allocation4 + $0x1b1] sm:$0x1]
  %v4557 = vld [vmem:[#allocation4 + $0x1c1] sm:$0x1]
  %v4558 = vld [vmem:[#allocation4 + $0x1d1] sm:$0x1]
  %v4559 = vld [vmem:[#allocation4 + $0x1e1] sm:$0x1]
  %v4560 = vld [vmem:[#allocation4 + $0x1f1] sm:$0x1]
  %v4561 = vmax.f32 %v4497, %v4529
  %v4562 = vmax.f32 %v4498, %v4530
  %v4563 = vmax.f32 %v4499, %v4531
  %v4564 = vmax.f32 %v4500, %v4532
  %v4565 = vmax.f32 %v4501, %v4533
  %v4566 = vmax.f32 %v4502, %v4534
  %v4567 = vmax.f32 %v4503, %v4535
  %v4568 = vmax.f32 %v4504, %v4536
  %v4569 = vmax.f32 %v4505, %v4537
  %v4570 = vmax.f32 %v4506, %v4538
  %v4571 = vmax.f32 %v4507, %v4539
  %v4572 = vmax.f32 %v4508, %v4540
  %v4573 = vmax.f32 %v4509, %v4541
  %v4574 = vmax.f32 %v4510, %v4542
  %v4575 = vmax.f32 %v4511, %v4543
  %v4576 = vmax.f32 %v4512, %v4544
  %v4577 = vmax.f32 %v4513, %v4545
  %v4578 = vmax.f32 %v4514, %v4546
  %v4579 = vmax.f32 %v4515, %v4547
  %v4580 = vmax.f32 %v4516, %v4548
  %v4581 = vmax.f32 %v4517, %v4549
  %v4582 = vmax.f32 %v4518, %v4550
  %v4583 = vmax.f32 %v4519, %v4551
  %v4584 = vmax.f32 %v4520, %v4552
  %v4585 = vmax.f32 %v4521, %v4553
  %v4586 = vmax.f32 %v4522, %v4554
  %v4587 = vmax.f32 %v4523, %v4555
  %v4588 = vmax.f32 %v4524, %v4556
  %v4589 = vmax.f32 %v4525, %v4557
  %v4590 = vmax.f32 %v4526, %v4558
  %v4591 = vmax.f32 %v4527, %v4559
  %v4592 = vmax.f32 %v4528, %v4560
  %vm4593 = vcmask 57344
  %4594 = vst.msk [vmem:[#allocation5] sm:$0x1] %vm4593, %v4561
  %4595 = vst.msk [vmem:[#allocation5 + $0x8] sm:$0x1] %vm4593, %v4562
  %4596 = vst.msk [vmem:[#allocation5 + $0x10] sm:$0x1] %vm4593, %v4563
  %4597 = vst.msk [vmem:[#allocation5 + $0x18] sm:$0x1] %vm4593, %v4564
  %4598 = vst.msk [vmem:[#allocation5 + $0x20] sm:$0x1] %vm4593, %v4565
  %4599 = vst.msk [vmem:[#allocation5 + $0x28] sm:$0x1] %vm4593, %v4566
  %4600 = vst.msk [vmem:[#allocation5 + $0x30] sm:$0x1] %vm4593, %v4567
  %4601 = vst.msk [vmem:[#allocation5 + $0x38] sm:$0x1] %vm4593, %v4568
  %4602 = vst.msk [vmem:[#allocation5 + $0x40] sm:$0x1] %vm4593, %v4569
  %4603 = vst.msk [vmem:[#allocation5 + $0x48] sm:$0x1] %vm4593, %v4570
  %4604 = vst.msk [vmem:[#allocation5 + $0x50] sm:$0x1] %vm4593, %v4571
  %4605 = vst.msk [vmem:[#allocation5 + $0x58] sm:$0x1] %vm4593, %v4572
  %4606 = vst.msk [vmem:[#allocation5 + $0x60] sm:$0x1] %vm4593, %v4573
  %4607 = vst.msk [vmem:[#allocation5 + $0x68] sm:$0x1] %vm4593, %v4574
  %4608 = vst.msk [vmem:[#allocation5 + $0x70] sm:$0x1] %vm4593, %v4575
  %4609 = vst.msk [vmem:[#allocation5 + $0x78] sm:$0x1] %vm4593, %v4576
  %4610 = vst.msk [vmem:[#allocation5 + $0x80] sm:$0x1] %vm4593, %v4577
  %4611 = vst.msk [vmem:[#allocation5 + $0x88] sm:$0x1] %vm4593, %v4578
  %4612 = vst.msk [vmem:[#allocation5 + $0x90] sm:$0x1] %vm4593, %v4579
  %4613 = vst.msk [vmem:[#allocation5 + $0x98] sm:$0x1] %vm4593, %v4580
  %4614 = vst.msk [vmem:[#allocation5 + $0xa0] sm:$0x1] %vm4593, %v4581
  %4615 = vst.msk [vmem:[#allocation5 + $0xa8] sm:$0x1] %vm4593, %v4582
  %4616 = vst.msk [vmem:[#allocation5 + $0xb0] sm:$0x1] %vm4593, %v4583
  %4617 = vst.msk [vmem:[#allocation5 + $0xb8] sm:$0x1] %vm4593, %v4584
  %4618 = vst.msk [vmem:[#allocation5 + $0xc0] sm:$0x1] %vm4593, %v4585
  %4619 = vst.msk [vmem:[#allocation5 + $0xc8] sm:$0x1] %vm4593, %v4586
  %4620 = vst.msk [vmem:[#allocation5 + $0xd0] sm:$0x1] %vm4593, %v4587
  %4621 = vst.msk [vmem:[#allocation5 + $0xd8] sm:$0x1] %vm4593, %v4588
  %4622 = vst.msk [vmem:[#allocation5 + $0xe0] sm:$0x1] %vm4593, %v4589
  %4623 = vst.msk [vmem:[#allocation5 + $0xe8] sm:$0x1] %vm4593, %v4590
  %4624 = vst.msk [vmem:[#allocation5 + $0xf0] sm:$0x1] %vm4593, %v4591
  %4625 = vst.msk [vmem:[#allocation5 + $0xf8] sm:$0x1] %vm4593, %v4592
  %v4626 = vld [vmem:[#allocation4 + $0x2] sm:$0x1]
  %v4627 = vld [vmem:[#allocation4 + $0x12] sm:$0x1]
  %v4628 = vld [vmem:[#allocation4 + $0x22] sm:$0x1]
  %v4629 = vld [vmem:[#allocation4 + $0x32] sm:$0x1]
  %v4630 = vld [vmem:[#allocation4 + $0x42] sm:$0x1]
  %v4631 = vld [vmem:[#allocation4 + $0x52] sm:$0x1]
  %v4632 = vld [vmem:[#allocation4 + $0x62] sm:$0x1]
  %v4633 = vld [vmem:[#allocation4 + $0x72] sm:$0x1]
  %v4634 = vld [vmem:[#allocation4 + $0x82] sm:$0x1]
  %v4635 = vld [vmem:[#allocation4 + $0x92] sm:$0x1]
  %v4636 = vld [vmem:[#allocation4 + $0xa2] sm:$0x1]
  %v4637 = vld [vmem:[#allocation4 + $0xb2] sm:$0x1]
  %v4638 = vld [vmem:[#allocation4 + $0xc2] sm:$0x1]
  %v4639 = vld [vmem:[#allocation4 + $0xd2] sm:$0x1]
  %v4640 = vld [vmem:[#allocation4 + $0xe2] sm:$0x1]
  %v4641 = vld [vmem:[#allocation4 + $0xf2] sm:$0x1]
  %v4642 = vld [vmem:[#allocation4 + $0x102] sm:$0x1]
  %v4643 = vld [vmem:[#allocation4 + $0x112] sm:$0x1]
  %v4644 = vld [vmem:[#allocation4 + $0x122] sm:$0x1]
  %v4645 = vld [vmem:[#allocation4 + $0x132] sm:$0x1]
  %v4646 = vld [vmem:[#allocation4 + $0x142] sm:$0x1]
  %v4647 = vld [vmem:[#allocation4 + $0x152] sm:$0x1]
  %v4648 = vld [vmem:[#allocation4 + $0x162] sm:$0x1]
  %v4649 = vld [vmem:[#allocation4 + $0x172] sm:$0x1]
  %v4650 = vld [vmem:[#allocation4 + $0x182] sm:$0x1]
  %v4651 = vld [vmem:[#allocation4 + $0x192] sm:$0x1]
  %v4652 = vld [vmem:[#allocation4 + $0x1a2] sm:$0x1]
  %v4653 = vld [vmem:[#allocation4 + $0x1b2] sm:$0x1]
  %v4654 = vld [vmem:[#allocation4 + $0x1c2] sm:$0x1]
  %v4655 = vld [vmem:[#allocation4 + $0x1d2] sm:$0x1]
  %v4656 = vld [vmem:[#allocation4 + $0x1e2] sm:$0x1]
  %v4657 = vld [vmem:[#allocation4 + $0x1f2] sm:$0x1]
  %v4658 = vld [vmem:[#allocation4 + $0x3] sm:$0x1]
  %v4659 = vld [vmem:[#allocation4 + $0x13] sm:$0x1]
  %v4660 = vld [vmem:[#allocation4 + $0x23] sm:$0x1]
  %v4661 = vld [vmem:[#allocation4 + $0x33] sm:$0x1]
  %v4662 = vld [vmem:[#allocation4 + $0x43] sm:$0x1]
  %v4663 = vld [vmem:[#allocation4 + $0x53] sm:$0x1]
  %v4664 = vld [vmem:[#allocation4 + $0x63] sm:$0x1]
  %v4665 = vld [vmem:[#allocation4 + $0x73] sm:$0x1]
  %v4666 = vld [vmem:[#allocation4 + $0x83] sm:$0x1]
  %v4667 = vld [vmem:[#allocation4 + $0x93] sm:$0x1]
  %v4668 = vld [vmem:[#allocation4 + $0xa3] sm:$0x1]
  %v4669 = vld [vmem:[#allocation4 + $0xb3] sm:$0x1]
  %v4670 = vld [vmem:[#allocation4 + $0xc3] sm:$0x1]
  %v4671 = vld [vmem:[#allocation4 + $0xd3] sm:$0x1]
  %v4672 = vld [vmem:[#allocation4 + $0xe3] sm:$0x1]
  %v4673 = vld [vmem:[#allocation4 + $0xf3] sm:$0x1]
  %v4674 = vld [vmem:[#allocation4 + $0x103] sm:$0x1]
  %v4675 = vld [vmem:[#allocation4 + $0x113] sm:$0x1]
  %v4676 = vld [vmem:[#allocation4 + $0x123] sm:$0x1]
  %v4677 = vld [vmem:[#allocation4 + $0x133] sm:$0x1]
  %v4678 = vld [vmem:[#allocation4 + $0x143] sm:$0x1]
  %v4679 = vld [vmem:[#allocation4 + $0x153] sm:$0x1]
  %v4680 = vld [vmem:[#allocation4 + $0x163] sm:$0x1]
  %v4681 = vld [vmem:[#allocation4 + $0x173] sm:$0x1]
  %v4682 = vld [vmem:[#allocation4 + $0x183] sm:$0x1]
  %v4683 = vld [vmem:[#allocation4 + $0x193] sm:$0x1]
  %v4684 = vld [vmem:[#allocation4 + $0x1a3] sm:$0x1]
  %v4685 = vld [vmem:[#allocation4 + $0x1b3] sm:$0x1]
  %v4686 = vld [vmem:[#allocation4 + $0x1c3] sm:$0x1]
  %v4687 = vld [vmem:[#allocation4 + $0x1d3] sm:$0x1]
  %v4688 = vld [vmem:[#allocation4 + $0x1e3] sm:$0x1]
  %v4689 = vld [vmem:[#allocation4 + $0x1f3] sm:$0x1]
  %v4690 = vmax.f32 %v4626, %v4658
  %v4691 = vmax.f32 %v4627, %v4659
  %v4692 = vmax.f32 %v4628, %v4660
  %v4693 = vmax.f32 %v4629, %v4661
  %v4694 = vmax.f32 %v4630, %v4662
  %v4695 = vmax.f32 %v4631, %v4663
  %v4696 = vmax.f32 %v4632, %v4664
  %v4697 = vmax.f32 %v4633, %v4665
  %v4698 = vmax.f32 %v4634, %v4666
  %v4699 = vmax.f32 %v4635, %v4667
  %v4700 = vmax.f32 %v4636, %v4668
  %v4701 = vmax.f32 %v4637, %v4669
  %v4702 = vmax.f32 %v4638, %v4670
  %v4703 = vmax.f32 %v4639, %v4671
  %v4704 = vmax.f32 %v4640, %v4672
  %v4705 = vmax.f32 %v4641, %v4673
  %v4706 = vmax.f32 %v4642, %v4674
  %v4707 = vmax.f32 %v4643, %v4675
  %v4708 = vmax.f32 %v4644, %v4676
  %v4709 = vmax.f32 %v4645, %v4677
  %v4710 = vmax.f32 %v4646, %v4678
  %v4711 = vmax.f32 %v4647, %v4679
  %v4712 = vmax.f32 %v4648, %v4680
  %v4713 = vmax.f32 %v4649, %v4681
  %v4714 = vmax.f32 %v4650, %v4682
  %v4715 = vmax.f32 %v4651, %v4683
  %v4716 = vmax.f32 %v4652, %v4684
  %v4717 = vmax.f32 %v4653, %v4685
  %v4718 = vmax.f32 %v4654, %v4686
  %v4719 = vmax.f32 %v4655, %v4687
  %v4720 = vmax.f32 %v4656, %v4688
  %v4721 = vmax.f32 %v4657, %v4689
  %4722 = vst.msk [vmem:[#allocation5 + $0x1] sm:$0x1] %vm4593, %v4690
  %4723 = vst.msk [vmem:[#allocation5 + $0x9] sm:$0x1] %vm4593, %v4691
  %4724 = vst.msk [vmem:[#allocation5 + $0x11] sm:$0x1] %vm4593, %v4692
  %4725 = vst.msk [vmem:[#allocation5 + $0x19] sm:$0x1] %vm4593, %v4693
  %4726 = vst.msk [vmem:[#allocation5 + $0x21] sm:$0x1] %vm4593, %v4694
  %4727 = vst.msk [vmem:[#allocation5 + $0x29] sm:$0x1] %vm4593, %v4695
  %4728 = vst.msk [vmem:[#allocation5 + $0x31] sm:$0x1] %vm4593, %v4696
  %4729 = vst.msk [vmem:[#allocation5 + $0x39] sm:$0x1] %vm4593, %v4697
  %4730 = vst.msk [vmem:[#allocation5 + $0x41] sm:$0x1] %vm4593, %v4698
  %4731 = vst.msk [vmem:[#allocation5 + $0x49] sm:$0x1] %vm4593, %v4699
  %4732 = vst.msk [vmem:[#allocation5 + $0x51] sm:$0x1] %vm4593, %v4700
  %4733 = vst.msk [vmem:[#allocation5 + $0x59] sm:$0x1] %vm4593, %v4701
  %4734 = vst.msk [vmem:[#allocation5 + $0x61] sm:$0x1] %vm4593, %v4702
  %4735 = vst.msk [vmem:[#allocation5 + $0x69] sm:$0x1] %vm4593, %v4703
  %4736 = vst.msk [vmem:[#allocation5 + $0x71] sm:$0x1] %vm4593, %v4704
  %4737 = vst.msk [vmem:[#allocation5 + $0x79] sm:$0x1] %vm4593, %v4705
  %4738 = vst.msk [vmem:[#allocation5 + $0x81] sm:$0x1] %vm4593, %v4706
  %4739 = vst.msk [vmem:[#allocation5 + $0x89] sm:$0x1] %vm4593, %v4707
  %4740 = vst.msk [vmem:[#allocation5 + $0x91] sm:$0x1] %vm4593, %v4708
  %4741 = vst.msk [vmem:[#allocation5 + $0x99] sm:$0x1] %vm4593, %v4709
  %4742 = vst.msk [vmem:[#allocation5 + $0xa1] sm:$0x1] %vm4593, %v4710
  %4743 = vst.msk [vmem:[#allocation5 + $0xa9] sm:$0x1] %vm4593, %v4711
  %4744 = vst.msk [vmem:[#allocation5 + $0xb1] sm:$0x1] %vm4593, %v4712
  %4745 = vst.msk [vmem:[#allocation5 + $0xb9] sm:$0x1] %vm4593, %v4713
  %4746 = vst.msk [vmem:[#allocation5 + $0xc1] sm:$0x1] %vm4593, %v4714
  %4747 = vst.msk [vmem:[#allocation5 + $0xc9] sm:$0x1] %vm4593, %v4715
  %4748 = vst.msk [vmem:[#allocation5 + $0xd1] sm:$0x1] %vm4593, %v4716
  %4749 = vst.msk [vmem:[#allocation5 + $0xd9] sm:$0x1] %vm4593, %v4717
  %4750 = vst.msk [vmem:[#allocation5 + $0xe1] sm:$0x1] %vm4593, %v4718
  %4751 = vst.msk [vmem:[#allocation5 + $0xe9] sm:$0x1] %vm4593, %v4719
  %4752 = vst.msk [vmem:[#allocation5 + $0xf1] sm:$0x1] %vm4593, %v4720
  %4753 = vst.msk [vmem:[#allocation5 + $0xf9] sm:$0x1] %vm4593, %v4721
  %v4754 = vld [vmem:[#allocation4 + $0x4] sm:$0x1]
  %v4755 = vld [vmem:[#allocation4 + $0x14] sm:$0x1]
  %v4756 = vld [vmem:[#allocation4 + $0x24] sm:$0x1]
  %v4757 = vld [vmem:[#allocation4 + $0x34] sm:$0x1]
  %v4758 = vld [vmem:[#allocation4 + $0x44] sm:$0x1]
  %v4759 = vld [vmem:[#allocation4 + $0x54] sm:$0x1]
  %v4760 = vld [vmem:[#allocation4 + $0x64] sm:$0x1]
  %v4761 = vld [vmem:[#allocation4 + $0x74] sm:$0x1]
  %v4762 = vld [vmem:[#allocation4 + $0x84] sm:$0x1]
  %v4763 = vld [vmem:[#allocation4 + $0x94] sm:$0x1]
  %v4764 = vld [vmem:[#allocation4 + $0xa4] sm:$0x1]
  %v4765 = vld [vmem:[#allocation4 + $0xb4] sm:$0x1]
  %v4766 = vld [vmem:[#allocation4 + $0xc4] sm:$0x1]
  %v4767 = vld [vmem:[#allocation4 + $0xd4] sm:$0x1]
  %v4768 = vld [vmem:[#allocation4 + $0xe4] sm:$0x1]
  %v4769 = vld [vmem:[#allocation4 + $0xf4] sm:$0x1]
  %v4770 = vld [vmem:[#allocation4 + $0x104] sm:$0x1]
  %v4771 = vld [vmem:[#allocation4 + $0x114] sm:$0x1]
  %v4772 = vld [vmem:[#allocation4 + $0x124] sm:$0x1]
  %v4773 = vld [vmem:[#allocation4 + $0x134] sm:$0x1]
  %v4774 = vld [vmem:[#allocation4 + $0x144] sm:$0x1]
  %v4775 = vld [vmem:[#allocation4 + $0x154] sm:$0x1]
  %v4776 = vld [vmem:[#allocation4 + $0x164] sm:$0x1]
  %v4777 = vld [vmem:[#allocation4 + $0x174] sm:$0x1]
  %v4778 = vld [vmem:[#allocation4 + $0x184] sm:$0x1]
  %v4779 = vld [vmem:[#allocation4 + $0x194] sm:$0x1]
  %v4780 = vld [vmem:[#allocation4 + $0x1a4] sm:$0x1]
  %v4781 = vld [vmem:[#allocation4 + $0x1b4] sm:$0x1]
  %v4782 = vld [vmem:[#allocation4 + $0x1c4] sm:$0x1]
  %v4783 = vld [vmem:[#allocation4 + $0x1d4] sm:$0x1]
  %v4784 = vld [vmem:[#allocation4 + $0x1e4] sm:$0x1]
  %v4785 = vld [vmem:[#allocation4 + $0x1f4] sm:$0x1]
  %v4786 = vld [vmem:[#allocation4 + $0x5] sm:$0x1]
  %v4787 = vld [vmem:[#allocation4 + $0x15] sm:$0x1]
  %v4788 = vld [vmem:[#allocation4 + $0x25] sm:$0x1]
  %v4789 = vld [vmem:[#allocation4 + $0x35] sm:$0x1]
  %v4790 = vld [vmem:[#allocation4 + $0x45] sm:$0x1]
  %v4791 = vld [vmem:[#allocation4 + $0x55] sm:$0x1]
  %v4792 = vld [vmem:[#allocation4 + $0x65] sm:$0x1]
  %v4793 = vld [vmem:[#allocation4 + $0x75] sm:$0x1]
  %v4794 = vld [vmem:[#allocation4 + $0x85] sm:$0x1]
  %v4795 = vld [vmem:[#allocation4 + $0x95] sm:$0x1]
  %v4796 = vld [vmem:[#allocation4 + $0xa5] sm:$0x1]
  %v4797 = vld [vmem:[#allocation4 + $0xb5] sm:$0x1]
  %v4798 = vld [vmem:[#allocation4 + $0xc5] sm:$0x1]
  %v4799 = vld [vmem:[#allocation4 + $0xd5] sm:$0x1]
  %v4800 = vld [vmem:[#allocation4 + $0xe5] sm:$0x1]
  %v4801 = vld [vmem:[#allocation4 + $0xf5] sm:$0x1]
  %v4802 = vld [vmem:[#allocation4 + $0x105] sm:$0x1]
  %v4803 = vld [vmem:[#allocation4 + $0x115] sm:$0x1]
  %v4804 = vld [vmem:[#allocation4 + $0x125] sm:$0x1]
  %v4805 = vld [vmem:[#allocation4 + $0x135] sm:$0x1]
  %v4806 = vld [vmem:[#allocation4 + $0x145] sm:$0x1]
  %v4807 = vld [vmem:[#allocation4 + $0x155] sm:$0x1]
  %v4808 = vld [vmem:[#allocation4 + $0x165] sm:$0x1]
  %v4809 = vld [vmem:[#allocation4 + $0x175] sm:$0x1]
  %v4810 = vld [vmem:[#allocation4 + $0x185] sm:$0x1]
  %v4811 = vld [vmem:[#allocation4 + $0x195] sm:$0x1]
  %v4812 = vld [vmem:[#allocation4 + $0x1a5] sm:$0x1]
  %v4813 = vld [vmem:[#allocation4 + $0x1b5] sm:$0x1]
  %v4814 = vld [vmem:[#allocation4 + $0x1c5] sm:$0x1]
  %v4815 = vld [vmem:[#allocation4 + $0x1d5] sm:$0x1]
  %v4816 = vld [vmem:[#allocation4 + $0x1e5] sm:$0x1]
  %v4817 = vld [vmem:[#allocation4 + $0x1f5] sm:$0x1]
  %v4818 = vmax.f32 %v4754, %v4786
  %v4819 = vmax.f32 %v4755, %v4787
  %v4820 = vmax.f32 %v4756, %v4788
  %v4821 = vmax.f32 %v4757, %v4789
  %v4822 = vmax.f32 %v4758, %v4790
  %v4823 = vmax.f32 %v4759, %v4791
  %v4824 = vmax.f32 %v4760, %v4792
  %v4825 = vmax.f32 %v4761, %v4793
  %v4826 = vmax.f32 %v4762, %v4794
  %v4827 = vmax.f32 %v4763, %v4795
  %v4828 = vmax.f32 %v4764, %v4796
  %v4829 = vmax.f32 %v4765, %v4797
  %v4830 = vmax.f32 %v4766, %v4798
  %v4831 = vmax.f32 %v4767, %v4799
  %v4832 = vmax.f32 %v4768, %v4800
  %v4833 = vmax.f32 %v4769, %v4801
  %v4834 = vmax.f32 %v4770, %v4802
  %v4835 = vmax.f32 %v4771, %v4803
  %v4836 = vmax.f32 %v4772, %v4804
  %v4837 = vmax.f32 %v4773, %v4805
  %v4838 = vmax.f32 %v4774, %v4806
  %v4839 = vmax.f32 %v4775, %v4807
  %v4840 = vmax.f32 %v4776, %v4808
  %v4841 = vmax.f32 %v4777, %v4809
  %v4842 = vmax.f32 %v4778, %v4810
  %v4843 = vmax.f32 %v4779, %v4811
  %v4844 = vmax.f32 %v4780, %v4812
  %v4845 = vmax.f32 %v4781, %v4813
  %v4846 = vmax.f32 %v4782, %v4814
  %v4847 = vmax.f32 %v4783, %v4815
  %v4848 = vmax.f32 %v4784, %v4816
  %v4849 = vmax.f32 %v4785, %v4817
  %4850 = vst.msk [vmem:[#allocation5 + $0x2] sm:$0x1] %vm4593, %v4818
  %4851 = vst.msk [vmem:[#allocation5 + $0xa] sm:$0x1] %vm4593, %v4819
  %4852 = vst.msk [vmem:[#allocation5 + $0x12] sm:$0x1] %vm4593, %v4820
  %4853 = vst.msk [vmem:[#allocation5 + $0x1a] sm:$0x1] %vm4593, %v4821
  %4854 = vst.msk [vmem:[#allocation5 + $0x22] sm:$0x1] %vm4593, %v4822
  %4855 = vst.msk [vmem:[#allocation5 + $0x2a] sm:$0x1] %vm4593, %v4823
  %4856 = vst.msk [vmem:[#allocation5 + $0x32] sm:$0x1] %vm4593, %v4824
  %4857 = vst.msk [vmem:[#allocation5 + $0x3a] sm:$0x1] %vm4593, %v4825
  %4858 = vst.msk [vmem:[#allocation5 + $0x42] sm:$0x1] %vm4593, %v4826
  %4859 = vst.msk [vmem:[#allocation5 + $0x4a] sm:$0x1] %vm4593, %v4827
  %4860 = vst.msk [vmem:[#allocation5 + $0x52] sm:$0x1] %vm4593, %v4828
  %4861 = vst.msk [vmem:[#allocation5 + $0x5a] sm:$0x1] %vm4593, %v4829
  %4862 = vst.msk [vmem:[#allocation5 + $0x62] sm:$0x1] %vm4593, %v4830
  %4863 = vst.msk [vmem:[#allocation5 + $0x6a] sm:$0x1] %vm4593, %v4831
  %4864 = vst.msk [vmem:[#allocation5 + $0x72] sm:$0x1] %vm4593, %v4832
  %4865 = vst.msk [vmem:[#allocation5 + $0x7a] sm:$0x1] %vm4593, %v4833
  %4866 = vst.msk [vmem:[#allocation5 + $0x82] sm:$0x1] %vm4593, %v4834
  %4867 = vst.msk [vmem:[#allocation5 + $0x8a] sm:$0x1] %vm4593, %v4835
  %4868 = vst.msk [vmem:[#allocation5 + $0x92] sm:$0x1] %vm4593, %v4836
  %4869 = vst.msk [vmem:[#allocation5 + $0x9a] sm:$0x1] %vm4593, %v4837
  %4870 = vst.msk [vmem:[#allocation5 + $0xa2] sm:$0x1] %vm4593, %v4838
  %4871 = vst.msk [vmem:[#allocation5 + $0xaa] sm:$0x1] %vm4593, %v4839
  %4872 = vst.msk [vmem:[#allocation5 + $0xb2] sm:$0x1] %vm4593, %v4840
  %4873 = vst.msk [vmem:[#allocation5 + $0xba] sm:$0x1] %vm4593, %v4841
  %4874 = vst.msk [vmem:[#allocation5 + $0xc2] sm:$0x1] %vm4593, %v4842
  %4875 = vst.msk [vmem:[#allocation5 + $0xca] sm:$0x1] %vm4593, %v4843
  %4876 = vst.msk [vmem:[#allocation5 + $0xd2] sm:$0x1] %vm4593, %v4844
  %4877 = vst.msk [vmem:[#allocation5 + $0xda] sm:$0x1] %vm4593, %v4845
  %4878 = vst.msk [vmem:[#allocation5 + $0xe2] sm:$0x1] %vm4593, %v4846
  %4879 = vst.msk [vmem:[#allocation5 + $0xea] sm:$0x1] %vm4593, %v4847
  %4880 = vst.msk [vmem:[#allocation5 + $0xf2] sm:$0x1] %vm4593, %v4848
  %4881 = vst.msk [vmem:[#allocation5 + $0xfa] sm:$0x1] %vm4593, %v4849
  %v4882 = vld [vmem:[#allocation4 + $0x6] sm:$0x1]
  %v4883 = vld [vmem:[#allocation4 + $0x16] sm:$0x1]
  %v4884 = vld [vmem:[#allocation4 + $0x26] sm:$0x1]
  %v4885 = vld [vmem:[#allocation4 + $0x36] sm:$0x1]
  %v4886 = vld [vmem:[#allocation4 + $0x46] sm:$0x1]
  %v4887 = vld [vmem:[#allocation4 + $0x56] sm:$0x1]
  %v4888 = vld [vmem:[#allocation4 + $0x66] sm:$0x1]
  %v4889 = vld [vmem:[#allocation4 + $0x76] sm:$0x1]
  %v4890 = vld [vmem:[#allocation4 + $0x86] sm:$0x1]
  %v4891 = vld [vmem:[#allocation4 + $0x96] sm:$0x1]
  %v4892 = vld [vmem:[#allocation4 + $0xa6] sm:$0x1]
  %v4893 = vld [vmem:[#allocation4 + $0xb6] sm:$0x1]
  %v4894 = vld [vmem:[#allocation4 + $0xc6] sm:$0x1]
  %v4895 = vld [vmem:[#allocation4 + $0xd6] sm:$0x1]
  %v4896 = vld [vmem:[#allocation4 + $0xe6] sm:$0x1]
  %v4897 = vld [vmem:[#allocation4 + $0xf6] sm:$0x1]
  %v4898 = vld [vmem:[#allocation4 + $0x106] sm:$0x1]
  %v4899 = vld [vmem:[#allocation4 + $0x116] sm:$0x1]
  %v4900 = vld [vmem:[#allocation4 + $0x126] sm:$0x1]
  %v4901 = vld [vmem:[#allocation4 + $0x136] sm:$0x1]
  %v4902 = vld [vmem:[#allocation4 + $0x146] sm:$0x1]
  %v4903 = vld [vmem:[#allocation4 + $0x156] sm:$0x1]
  %v4904 = vld [vmem:[#allocation4 + $0x166] sm:$0x1]
  %v4905 = vld [vmem:[#allocation4 + $0x176] sm:$0x1]
  %v4906 = vld [vmem:[#allocation4 + $0x186] sm:$0x1]
  %v4907 = vld [vmem:[#allocation4 + $0x196] sm:$0x1]
  %v4908 = vld [vmem:[#allocation4 + $0x1a6] sm:$0x1]
  %v4909 = vld [vmem:[#allocation4 + $0x1b6] sm:$0x1]
  %v4910 = vld [vmem:[#allocation4 + $0x1c6] sm:$0x1]
  %v4911 = vld [vmem:[#allocation4 + $0x1d6] sm:$0x1]
  %v4912 = vld [vmem:[#allocation4 + $0x1e6] sm:$0x1]
  %v4913 = vld [vmem:[#allocation4 + $0x1f6] sm:$0x1]
  %v4914 = vld [vmem:[#allocation4 + $0x7] sm:$0x1]
  %v4915 = vld [vmem:[#allocation4 + $0x17] sm:$0x1]
  %v4916 = vld [vmem:[#allocation4 + $0x27] sm:$0x1]
  %v4917 = vld [vmem:[#allocation4 + $0x37] sm:$0x1]
  %v4918 = vld [vmem:[#allocation4 + $0x47] sm:$0x1]
  %v4919 = vld [vmem:[#allocation4 + $0x57] sm:$0x1]
  %v4920 = vld [vmem:[#allocation4 + $0x67] sm:$0x1]
  %v4921 = vld [vmem:[#allocation4 + $0x77] sm:$0x1]
  %v4922 = vld [vmem:[#allocation4 + $0x87] sm:$0x1]
  %v4923 = vld [vmem:[#allocation4 + $0x97] sm:$0x1]
  %v4924 = vld [vmem:[#allocation4 + $0xa7] sm:$0x1]
  %v4925 = vld [vmem:[#allocation4 + $0xb7] sm:$0x1]
  %v4926 = vld [vmem:[#allocation4 + $0xc7] sm:$0x1]
  %v4927 = vld [vmem:[#allocation4 + $0xd7] sm:$0x1]
  %v4928 = vld [vmem:[#allocation4 + $0xe7] sm:$0x1]
  %v4929 = vld [vmem:[#allocation4 + $0xf7] sm:$0x1]
  %v4930 = vld [vmem:[#allocation4 + $0x107] sm:$0x1]
  %v4931 = vld [vmem:[#allocation4 + $0x117] sm:$0x1]
  %v4932 = vld [vmem:[#allocation4 + $0x127] sm:$0x1]
  %v4933 = vld [vmem:[#allocation4 + $0x137] sm:$0x1]
  %v4934 = vld [vmem:[#allocation4 + $0x147] sm:$0x1]
  %v4935 = vld [vmem:[#allocation4 + $0x157] sm:$0x1]
  %v4936 = vld [vmem:[#allocation4 + $0x167] sm:$0x1]
  %v4937 = vld [vmem:[#allocation4 + $0x177] sm:$0x1]
  %v4938 = vld [vmem:[#allocation4 + $0x187] sm:$0x1]
  %v4939 = vld [vmem:[#allocation4 + $0x197] sm:$0x1]
  %v4940 = vld [vmem:[#allocation4 + $0x1a7] sm:$0x1]
  %v4941 = vld [vmem:[#allocation4 + $0x1b7] sm:$0x1]
  %v4942 = vld [vmem:[#allocation4 + $0x1c7] sm:$0x1]
  %v4943 = vld [vmem:[#allocation4 + $0x1d7] sm:$0x1]
  %v4944 = vld [vmem:[#allocation4 + $0x1e7] sm:$0x1]
  %v4945 = vld [vmem:[#allocation4 + $0x1f7] sm:$0x1]
  %v4946 = vmax.f32 %v4882, %v4914
  %v4947 = vmax.f32 %v4883, %v4915
  %v4948 = vmax.f32 %v4884, %v4916
  %v4949 = vmax.f32 %v4885, %v4917
  %v4950 = vmax.f32 %v4886, %v4918
  %v4951 = vmax.f32 %v4887, %v4919
  %v4952 = vmax.f32 %v4888, %v4920
  %v4953 = vmax.f32 %v4889, %v4921
  %v4954 = vmax.f32 %v4890, %v4922
  %v4955 = vmax.f32 %v4891, %v4923
  %v4956 = vmax.f32 %v4892, %v4924
  %v4957 = vmax.f32 %v4893, %v4925
  %v4958 = vmax.f32 %v4894, %v4926
  %v4959 = vmax.f32 %v4895, %v4927
  %v4960 = vmax.f32 %v4896, %v4928
  %v4961 = vmax.f32 %v4897, %v4929
  %v4962 = vmax.f32 %v4898, %v4930
  %v4963 = vmax.f32 %v4899, %v4931
  %v4964 = vmax.f32 %v4900, %v4932
  %v4965 = vmax.f32 %v4901, %v4933
  %v4966 = vmax.f32 %v4902, %v4934
  %v4967 = vmax.f32 %v4903, %v4935
  %v4968 = vmax.f32 %v4904, %v4936
  %v4969 = vmax.f32 %v4905, %v4937
  %v4970 = vmax.f32 %v4906, %v4938
  %v4971 = vmax.f32 %v4907, %v4939
  %v4972 = vmax.f32 %v4908, %v4940
  %v4973 = vmax.f32 %v4909, %v4941
  %v4974 = vmax.f32 %v4910, %v4942
  %v4975 = vmax.f32 %v4911, %v4943
  %v4976 = vmax.f32 %v4912, %v4944
  %v4977 = vmax.f32 %v4913, %v4945
  %4978 = vst.msk [vmem:[#allocation5 + $0x3] sm:$0x1] %vm4593, %v4946
  %4979 = vst.msk [vmem:[#allocation5 + $0xb] sm:$0x1] %vm4593, %v4947
  %4980 = vst.msk [vmem:[#allocation5 + $0x13] sm:$0x1] %vm4593, %v4948
  %4981 = vst.msk [vmem:[#allocation5 + $0x1b] sm:$0x1] %vm4593, %v4949
  %4982 = vst.msk [vmem:[#allocation5 + $0x23] sm:$0x1] %vm4593, %v4950
  %4983 = vst.msk [vmem:[#allocation5 + $0x2b] sm:$0x1] %vm4593, %v4951
  %4984 = vst.msk [vmem:[#allocation5 + $0x33] sm:$0x1] %vm4593, %v4952
  %4985 = vst.msk [vmem:[#allocation5 + $0x3b] sm:$0x1] %vm4593, %v4953
  %4986 = vst.msk [vmem:[#allocation5 + $0x43] sm:$0x1] %vm4593, %v4954
  %4987 = vst.msk [vmem:[#allocation5 + $0x4b] sm:$0x1] %vm4593, %v4955
  %4988 = vst.msk [vmem:[#allocation5 + $0x53] sm:$0x1] %vm4593, %v4956
  %4989 = vst.msk [vmem:[#allocation5 + $0x5b] sm:$0x1] %vm4593, %v4957
  %4990 = vst.msk [vmem:[#allocation5 + $0x63] sm:$0x1] %vm4593, %v4958
  %4991 = vst.msk [vmem:[#allocation5 + $0x6b] sm:$0x1] %vm4593, %v4959
  %4992 = vst.msk [vmem:[#allocation5 + $0x73] sm:$0x1] %vm4593, %v4960
  %4993 = vst.msk [vmem:[#allocation5 + $0x7b] sm:$0x1] %vm4593, %v4961
  %4994 = vst.msk [vmem:[#allocation5 + $0x83] sm:$0x1] %vm4593, %v4962
  %4995 = vst.msk [vmem:[#allocation5 + $0x8b] sm:$0x1] %vm4593, %v4963
  %4996 = vst.msk [vmem:[#allocation5 + $0x93] sm:$0x1] %vm4593, %v4964
  %4997 = vst.msk [vmem:[#allocation5 + $0x9b] sm:$0x1] %vm4593, %v4965
  %4998 = vst.msk [vmem:[#allocation5 + $0xa3] sm:$0x1] %vm4593, %v4966
  %4999 = vst.msk [vmem:[#allocation5 + $0xab] sm:$0x1] %vm4593, %v4967
  %5000 = vst.msk [vmem:[#allocation5 + $0xb3] sm:$0x1] %vm4593, %v4968
  %5001 = vst.msk [vmem:[#allocation5 + $0xbb] sm:$0x1] %vm4593, %v4969
  %5002 = vst.msk [vmem:[#allocation5 + $0xc3] sm:$0x1] %vm4593, %v4970
  %5003 = vst.msk [vmem:[#allocation5 + $0xcb] sm:$0x1] %vm4593, %v4971
  %5004 = vst.msk [vmem:[#allocation5 + $0xd3] sm:$0x1] %vm4593, %v4972
  %5005 = vst.msk [vmem:[#allocation5 + $0xdb] sm:$0x1] %vm4593, %v4973
  %5006 = vst.msk [vmem:[#allocation5 + $0xe3] sm:$0x1] %vm4593, %v4974
  %5007 = vst.msk [vmem:[#allocation5 + $0xeb] sm:$0x1] %vm4593, %v4975
  %5008 = vst.msk [vmem:[#allocation5 + $0xf3] sm:$0x1] %vm4593, %v4976
  %5009 = vst.msk [vmem:[#allocation5 + $0xfb] sm:$0x1] %vm4593, %v4977
  %v5010 = vld [vmem:[#allocation4 + $0x8] sm:$0x1]
  %v5011 = vld [vmem:[#allocation4 + $0x18] sm:$0x1]
  %v5012 = vld [vmem:[#allocation4 + $0x28] sm:$0x1]
  %v5013 = vld [vmem:[#allocation4 + $0x38] sm:$0x1]
  %v5014 = vld [vmem:[#allocation4 + $0x48] sm:$0x1]
  %v5015 = vld [vmem:[#allocation4 + $0x58] sm:$0x1]
  %v5016 = vld [vmem:[#allocation4 + $0x68] sm:$0x1]
  %v5017 = vld [vmem:[#allocation4 + $0x78] sm:$0x1]
  %v5018 = vld [vmem:[#allocation4 + $0x88] sm:$0x1]
  %v5019 = vld [vmem:[#allocation4 + $0x98] sm:$0x1]
  %v5020 = vld [vmem:[#allocation4 + $0xa8] sm:$0x1]
  %v5021 = vld [vmem:[#allocation4 + $0xb8] sm:$0x1]
  %v5022 = vld [vmem:[#allocation4 + $0xc8] sm:$0x1]
  %v5023 = vld [vmem:[#allocation4 + $0xd8] sm:$0x1]
  %v5024 = vld [vmem:[#allocation4 + $0xe8] sm:$0x1]
  %v5025 = vld [vmem:[#allocation4 + $0xf8] sm:$0x1]
  %v5026 = vld [vmem:[#allocation4 + $0x108] sm:$0x1]
  %v5027 = vld [vmem:[#allocation4 + $0x118] sm:$0x1]
  %v5028 = vld [vmem:[#allocation4 + $0x128] sm:$0x1]
  %v5029 = vld [vmem:[#allocation4 + $0x138] sm:$0x1]
  %v5030 = vld [vmem:[#allocation4 + $0x148] sm:$0x1]
  %v5031 = vld [vmem:[#allocation4 + $0x158] sm:$0x1]
  %v5032 = vld [vmem:[#allocation4 + $0x168] sm:$0x1]
  %v5033 = vld [vmem:[#allocation4 + $0x178] sm:$0x1]
  %v5034 = vld [vmem:[#allocation4 + $0x188] sm:$0x1]
  %v5035 = vld [vmem:[#allocation4 + $0x198] sm:$0x1]
  %v5036 = vld [vmem:[#allocation4 + $0x1a8] sm:$0x1]
  %v5037 = vld [vmem:[#allocation4 + $0x1b8] sm:$0x1]
  %v5038 = vld [vmem:[#allocation4 + $0x1c8] sm:$0x1]
  %v5039 = vld [vmem:[#allocation4 + $0x1d8] sm:$0x1]
  %v5040 = vld [vmem:[#allocation4 + $0x1e8] sm:$0x1]
  %v5041 = vld [vmem:[#allocation4 + $0x1f8] sm:$0x1]
  %v5042 = vld [vmem:[#allocation4 + $0x9] sm:$0x1]
  %v5043 = vld [vmem:[#allocation4 + $0x19] sm:$0x1]
  %v5044 = vld [vmem:[#allocation4 + $0x29] sm:$0x1]
  %v5045 = vld [vmem:[#allocation4 + $0x39] sm:$0x1]
  %v5046 = vld [vmem:[#allocation4 + $0x49] sm:$0x1]
  %v5047 = vld [vmem:[#allocation4 + $0x59] sm:$0x1]
  %v5048 = vld [vmem:[#allocation4 + $0x69] sm:$0x1]
  %v5049 = vld [vmem:[#allocation4 + $0x79] sm:$0x1]
  %v5050 = vld [vmem:[#allocation4 + $0x89] sm:$0x1]
  %v5051 = vld [vmem:[#allocation4 + $0x99] sm:$0x1]
  %v5052 = vld [vmem:[#allocation4 + $0xa9] sm:$0x1]
  %v5053 = vld [vmem:[#allocation4 + $0xb9] sm:$0x1]
  %v5054 = vld [vmem:[#allocation4 + $0xc9] sm:$0x1]
  %v5055 = vld [vmem:[#allocation4 + $0xd9] sm:$0x1]
  %v5056 = vld [vmem:[#allocation4 + $0xe9] sm:$0x1]
  %v5057 = vld [vmem:[#allocation4 + $0xf9] sm:$0x1]
  %v5058 = vld [vmem:[#allocation4 + $0x109] sm:$0x1]
  %v5059 = vld [vmem:[#allocation4 + $0x119] sm:$0x1]
  %v5060 = vld [vmem:[#allocation4 + $0x129] sm:$0x1]
  %v5061 = vld [vmem:[#allocation4 + $0x139] sm:$0x1]
  %v5062 = vld [vmem:[#allocation4 + $0x149] sm:$0x1]
  %v5063 = vld [vmem:[#allocation4 + $0x159] sm:$0x1]
  %v5064 = vld [vmem:[#allocation4 + $0x169] sm:$0x1]
  %v5065 = vld [vmem:[#allocation4 + $0x179] sm:$0x1]
  %v5066 = vld [vmem:[#allocation4 + $0x189] sm:$0x1]
  %v5067 = vld [vmem:[#allocation4 + $0x199] sm:$0x1]
  %v5068 = vld [vmem:[#allocation4 + $0x1a9] sm:$0x1]
  %v5069 = vld [vmem:[#allocation4 + $0x1b9] sm:$0x1]
  %v5070 = vld [vmem:[#allocation4 + $0x1c9] sm:$0x1]
  %v5071 = vld [vmem:[#allocation4 + $0x1d9] sm:$0x1]
  %v5072 = vld [vmem:[#allocation4 + $0x1e9] sm:$0x1]
  %v5073 = vld [vmem:[#allocation4 + $0x1f9] sm:$0x1]
  %v5074 = vmax.f32 %v5010, %v5042
  %v5075 = vmax.f32 %v5011, %v5043
  %v5076 = vmax.f32 %v5012, %v5044
  %v5077 = vmax.f32 %v5013, %v5045
  %v5078 = vmax.f32 %v5014, %v5046
  %v5079 = vmax.f32 %v5015, %v5047
  %v5080 = vmax.f32 %v5016, %v5048
  %v5081 = vmax.f32 %v5017, %v5049
  %v5082 = vmax.f32 %v5018, %v5050
  %v5083 = vmax.f32 %v5019, %v5051
  %v5084 = vmax.f32 %v5020, %v5052
  %v5085 = vmax.f32 %v5021, %v5053
  %v5086 = vmax.f32 %v5022, %v5054
  %v5087 = vmax.f32 %v5023, %v5055
  %v5088 = vmax.f32 %v5024, %v5056
  %v5089 = vmax.f32 %v5025, %v5057
  %v5090 = vmax.f32 %v5026, %v5058
  %v5091 = vmax.f32 %v5027, %v5059
  %v5092 = vmax.f32 %v5028, %v5060
  %v5093 = vmax.f32 %v5029, %v5061
  %v5094 = vmax.f32 %v5030, %v5062
  %v5095 = vmax.f32 %v5031, %v5063
  %v5096 = vmax.f32 %v5032, %v5064
  %v5097 = vmax.f32 %v5033, %v5065
  %v5098 = vmax.f32 %v5034, %v5066
  %v5099 = vmax.f32 %v5035, %v5067
  %v5100 = vmax.f32 %v5036, %v5068
  %v5101 = vmax.f32 %v5037, %v5069
  %v5102 = vmax.f32 %v5038, %v5070
  %v5103 = vmax.f32 %v5039, %v5071
  %v5104 = vmax.f32 %v5040, %v5072
  %v5105 = vmax.f32 %v5041, %v5073
  %5106 = vst.msk [vmem:[#allocation5 + $0x4] sm:$0x1] %vm4593, %v5074
  %5107 = vst.msk [vmem:[#allocation5 + $0xc] sm:$0x1] %vm4593, %v5075
  %5108 = vst.msk [vmem:[#allocation5 + $0x14] sm:$0x1] %vm4593, %v5076
  %5109 = vst.msk [vmem:[#allocation5 + $0x1c] sm:$0x1] %vm4593, %v5077
  %5110 = vst.msk [vmem:[#allocation5 + $0x24] sm:$0x1] %vm4593, %v5078
  %5111 = vst.msk [vmem:[#allocation5 + $0x2c] sm:$0x1] %vm4593, %v5079
  %5112 = vst.msk [vmem:[#allocation5 + $0x34] sm:$0x1] %vm4593, %v5080
  %5113 = vst.msk [vmem:[#allocation5 + $0x3c] sm:$0x1] %vm4593, %v5081
  %5114 = vst.msk [vmem:[#allocation5 + $0x44] sm:$0x1] %vm4593, %v5082
  %5115 = vst.msk [vmem:[#allocation5 + $0x4c] sm:$0x1] %vm4593, %v5083
  %5116 = vst.msk [vmem:[#allocation5 + $0x54] sm:$0x1] %vm4593, %v5084
  %5117 = vst.msk [vmem:[#allocation5 + $0x5c] sm:$0x1] %vm4593, %v5085
  %5118 = vst.msk [vmem:[#allocation5 + $0x64] sm:$0x1] %vm4593, %v5086
  %5119 = vst.msk [vmem:[#allocation5 + $0x6c] sm:$0x1] %vm4593, %v5087
  %5120 = vst.msk [vmem:[#allocation5 + $0x74] sm:$0x1] %vm4593, %v5088
  %5121 = vst.msk [vmem:[#allocation5 + $0x7c] sm:$0x1] %vm4593, %v5089
  %5122 = vst.msk [vmem:[#allocation5 + $0x84] sm:$0x1] %vm4593, %v5090
  %5123 = vst.msk [vmem:[#allocation5 + $0x8c] sm:$0x1] %vm4593, %v5091
  %5124 = vst.msk [vmem:[#allocation5 + $0x94] sm:$0x1] %vm4593, %v5092
  %5125 = vst.msk [vmem:[#allocation5 + $0x9c] sm:$0x1] %vm4593, %v5093
  %5126 = vst.msk [vmem:[#allocation5 + $0xa4] sm:$0x1] %vm4593, %v5094
  %5127 = vst.msk [vmem:[#allocation5 + $0xac] sm:$0x1] %vm4593, %v5095
  %5128 = vst.msk [vmem:[#allocation5 + $0xb4] sm:$0x1] %vm4593, %v5096
  %5129 = vst.msk [vmem:[#allocation5 + $0xbc] sm:$0x1] %vm4593, %v5097
  %5130 = vst.msk [vmem:[#allocation5 + $0xc4] sm:$0x1] %vm4593, %v5098
  %5131 = vst.msk [vmem:[#allocation5 + $0xcc] sm:$0x1] %vm4593, %v5099
  %5132 = vst.msk [vmem:[#allocation5 + $0xd4] sm:$0x1] %vm4593, %v5100
  %5133 = vst.msk [vmem:[#allocation5 + $0xdc] sm:$0x1] %vm4593, %v5101
  %5134 = vst.msk [vmem:[#allocation5 + $0xe4] sm:$0x1] %vm4593, %v5102
  %5135 = vst.msk [vmem:[#allocation5 + $0xec] sm:$0x1] %vm4593, %v5103
  %5136 = vst.msk [vmem:[#allocation5 + $0xf4] sm:$0x1] %vm4593, %v5104
  %5137 = vst.msk [vmem:[#allocation5 + $0xfc] sm:$0x1] %vm4593, %v5105
  %v5138 = vld [vmem:[#allocation4 + $0xa] sm:$0x1]
  %v5139 = vld [vmem:[#allocation4 + $0x1a] sm:$0x1]
  %v5140 = vld [vmem:[#allocation4 + $0x2a] sm:$0x1]
  %v5141 = vld [vmem:[#allocation4 + $0x3a] sm:$0x1]
  %v5142 = vld [vmem:[#allocation4 + $0x4a] sm:$0x1]
  %v5143 = vld [vmem:[#allocation4 + $0x5a] sm:$0x1]
  %v5144 = vld [vmem:[#allocation4 + $0x6a] sm:$0x1]
  %v5145 = vld [vmem:[#allocation4 + $0x7a] sm:$0x1]
  %v5146 = vld [vmem:[#allocation4 + $0x8a] sm:$0x1]
  %v5147 = vld [vmem:[#allocation4 + $0x9a] sm:$0x1]
  %v5148 = vld [vmem:[#allocation4 + $0xaa] sm:$0x1]
  %v5149 = vld [vmem:[#allocation4 + $0xba] sm:$0x1]
  %v5150 = vld [vmem:[#allocation4 + $0xca] sm:$0x1]
  %v5151 = vld [vmem:[#allocation4 + $0xda] sm:$0x1]
  %v5152 = vld [vmem:[#allocation4 + $0xea] sm:$0x1]
  %v5153 = vld [vmem:[#allocation4 + $0xfa] sm:$0x1]
  %v5154 = vld [vmem:[#allocation4 + $0x10a] sm:$0x1]
  %v5155 = vld [vmem:[#allocation4 + $0x11a] sm:$0x1]
  %v5156 = vld [vmem:[#allocation4 + $0x12a] sm:$0x1]
  %v5157 = vld [vmem:[#allocation4 + $0x13a] sm:$0x1]
  %v5158 = vld [vmem:[#allocation4 + $0x14a] sm:$0x1]
  %v5159 = vld [vmem:[#allocation4 + $0x15a] sm:$0x1]
  %v5160 = vld [vmem:[#allocation4 + $0x16a] sm:$0x1]
  %v5161 = vld [vmem:[#allocation4 + $0x17a] sm:$0x1]
  %v5162 = vld [vmem:[#allocation4 + $0x18a] sm:$0x1]
  %v5163 = vld [vmem:[#allocation4 + $0x19a] sm:$0x1]
  %v5164 = vld [vmem:[#allocation4 + $0x1aa] sm:$0x1]
  %v5165 = vld [vmem:[#allocation4 + $0x1ba] sm:$0x1]
  %v5166 = vld [vmem:[#allocation4 + $0x1ca] sm:$0x1]
  %v5167 = vld [vmem:[#allocation4 + $0x1da] sm:$0x1]
  %v5168 = vld [vmem:[#allocation4 + $0x1ea] sm:$0x1]
  %v5169 = vld [vmem:[#allocation4 + $0x1fa] sm:$0x1]
  %v5170 = vld [vmem:[#allocation4 + $0xb] sm:$0x1]
  %v5171 = vld [vmem:[#allocation4 + $0x1b] sm:$0x1]
  %v5172 = vld [vmem:[#allocation4 + $0x2b] sm:$0x1]
  %v5173 = vld [vmem:[#allocation4 + $0x3b] sm:$0x1]
  %v5174 = vld [vmem:[#allocation4 + $0x4b] sm:$0x1]
  %v5175 = vld [vmem:[#allocation4 + $0x5b] sm:$0x1]
  %v5176 = vld [vmem:[#allocation4 + $0x6b] sm:$0x1]
  %v5177 = vld [vmem:[#allocation4 + $0x7b] sm:$0x1]
  %v5178 = vld [vmem:[#allocation4 + $0x8b] sm:$0x1]
  %v5179 = vld [vmem:[#allocation4 + $0x9b] sm:$0x1]
  %v5180 = vld [vmem:[#allocation4 + $0xab] sm:$0x1]
  %v5181 = vld [vmem:[#allocation4 + $0xbb] sm:$0x1]
  %v5182 = vld [vmem:[#allocation4 + $0xcb] sm:$0x1]
  %v5183 = vld [vmem:[#allocation4 + $0xdb] sm:$0x1]
  %v5184 = vld [vmem:[#allocation4 + $0xeb] sm:$0x1]
  %v5185 = vld [vmem:[#allocation4 + $0xfb] sm:$0x1]
  %v5186 = vld [vmem:[#allocation4 + $0x10b] sm:$0x1]
  %v5187 = vld [vmem:[#allocation4 + $0x11b] sm:$0x1]
  %v5188 = vld [vmem:[#allocation4 + $0x12b] sm:$0x1]
  %v5189 = vld [vmem:[#allocation4 + $0x13b] sm:$0x1]
  %v5190 = vld [vmem:[#allocation4 + $0x14b] sm:$0x1]
  %v5191 = vld [vmem:[#allocation4 + $0x15b] sm:$0x1]
  %v5192 = vld [vmem:[#allocation4 + $0x16b] sm:$0x1]
  %v5193 = vld [vmem:[#allocation4 + $0x17b] sm:$0x1]
  %v5194 = vld [vmem:[#allocation4 + $0x18b] sm:$0x1]
  %v5195 = vld [vmem:[#allocation4 + $0x19b] sm:$0x1]
  %v5196 = vld [vmem:[#allocation4 + $0x1ab] sm:$0x1]
  %v5197 = vld [vmem:[#allocation4 + $0x1bb] sm:$0x1]
  %v5198 = vld [vmem:[#allocation4 + $0x1cb] sm:$0x1]
  %v5199 = vld [vmem:[#allocation4 + $0x1db] sm:$0x1]
  %v5200 = vld [vmem:[#allocation4 + $0x1eb] sm:$0x1]
  %v5201 = vld [vmem:[#allocation4 + $0x1fb] sm:$0x1]
  %v5202 = vmax.f32 %v5138, %v5170
  %v5203 = vmax.f32 %v5139, %v5171
  %v5204 = vmax.f32 %v5140, %v5172
  %v5205 = vmax.f32 %v5141, %v5173
  %v5206 = vmax.f32 %v5142, %v5174
  %v5207 = vmax.f32 %v5143, %v5175
  %v5208 = vmax.f32 %v5144, %v5176
  %v5209 = vmax.f32 %v5145, %v5177
  %v5210 = vmax.f32 %v5146, %v5178
  %v5211 = vmax.f32 %v5147, %v5179
  %v5212 = vmax.f32 %v5148, %v5180
  %v5213 = vmax.f32 %v5149, %v5181
  %v5214 = vmax.f32 %v5150, %v5182
  %v5215 = vmax.f32 %v5151, %v5183
  %v5216 = vmax.f32 %v5152, %v5184
  %v5217 = vmax.f32 %v5153, %v5185
  %v5218 = vmax.f32 %v5154, %v5186
  %v5219 = vmax.f32 %v5155, %v5187
  %v5220 = vmax.f32 %v5156, %v5188
  %v5221 = vmax.f32 %v5157, %v5189
  %v5222 = vmax.f32 %v5158, %v5190
  %v5223 = vmax.f32 %v5159, %v5191
  %v5224 = vmax.f32 %v5160, %v5192
  %v5225 = vmax.f32 %v5161, %v5193
  %v5226 = vmax.f32 %v5162, %v5194
  %v5227 = vmax.f32 %v5163, %v5195
  %v5228 = vmax.f32 %v5164, %v5196
  %v5229 = vmax.f32 %v5165, %v5197
  %v5230 = vmax.f32 %v5166, %v5198
  %v5231 = vmax.f32 %v5167, %v5199
  %v5232 = vmax.f32 %v5168, %v5200
  %v5233 = vmax.f32 %v5169, %v5201
  %5234 = vst.msk [vmem:[#allocation5 + $0x5] sm:$0x1] %vm4593, %v5202
  %5235 = vst.msk [vmem:[#allocation5 + $0xd] sm:$0x1] %vm4593, %v5203
  %5236 = vst.msk [vmem:[#allocation5 + $0x15] sm:$0x1] %vm4593, %v5204
  %5237 = vst.msk [vmem:[#allocation5 + $0x1d] sm:$0x1] %vm4593, %v5205
  %5238 = vst.msk [vmem:[#allocation5 + $0x25] sm:$0x1] %vm4593, %v5206
  %5239 = vst.msk [vmem:[#allocation5 + $0x2d] sm:$0x1] %vm4593, %v5207
  %5240 = vst.msk [vmem:[#allocation5 + $0x35] sm:$0x1] %vm4593, %v5208
  %5241 = vst.msk [vmem:[#allocation5 + $0x3d] sm:$0x1] %vm4593, %v5209
  %5242 = vst.msk [vmem:[#allocation5 + $0x45] sm:$0x1] %vm4593, %v5210
  %5243 = vst.msk [vmem:[#allocation5 + $0x4d] sm:$0x1] %vm4593, %v5211
  %5244 = vst.msk [vmem:[#allocation5 + $0x55] sm:$0x1] %vm4593, %v5212
  %5245 = vst.msk [vmem:[#allocation5 + $0x5d] sm:$0x1] %vm4593, %v5213
  %5246 = vst.msk [vmem:[#allocation5 + $0x65] sm:$0x1] %vm4593, %v5214
  %5247 = vst.msk [vmem:[#allocation5 + $0x6d] sm:$0x1] %vm4593, %v5215
  %5248 = vst.msk [vmem:[#allocation5 + $0x75] sm:$0x1] %vm4593, %v5216
  %5249 = vst.msk [vmem:[#allocation5 + $0x7d] sm:$0x1] %vm4593, %v5217
  %5250 = vst.msk [vmem:[#allocation5 + $0x85] sm:$0x1] %vm4593, %v5218
  %5251 = vst.msk [vmem:[#allocation5 + $0x8d] sm:$0x1] %vm4593, %v5219
  %5252 = vst.msk [vmem:[#allocation5 + $0x95] sm:$0x1] %vm4593, %v5220
  %5253 = vst.msk [vmem:[#allocation5 + $0x9d] sm:$0x1] %vm4593, %v5221
  %5254 = vst.msk [vmem:[#allocation5 + $0xa5] sm:$0x1] %vm4593, %v5222
  %5255 = vst.msk [vmem:[#allocation5 + $0xad] sm:$0x1] %vm4593, %v5223
  %5256 = vst.msk [vmem:[#allocation5 + $0xb5] sm:$0x1] %vm4593, %v5224
  %5257 = vst.msk [vmem:[#allocation5 + $0xbd] sm:$0x1] %vm4593, %v5225
  %5258 = vst.msk [vmem:[#allocation5 + $0xc5] sm:$0x1] %vm4593, %v5226
  %5259 = vst.msk [vmem:[#allocation5 + $0xcd] sm:$0x1] %vm4593, %v5227
  %5260 = vst.msk [vmem:[#allocation5 + $0xd5] sm:$0x1] %vm4593, %v5228
  %5261 = vst.msk [vmem:[#allocation5 + $0xdd] sm:$0x1] %vm4593, %v5229
  %5262 = vst.msk [vmem:[#allocation5 + $0xe5] sm:$0x1] %vm4593, %v5230
  %5263 = vst.msk [vmem:[#allocation5 + $0xed] sm:$0x1] %vm4593, %v5231
  %5264 = vst.msk [vmem:[#allocation5 + $0xf5] sm:$0x1] %vm4593, %v5232
  %5265 = vst.msk [vmem:[#allocation5 + $0xfd] sm:$0x1] %vm4593, %v5233
  %v5266 = vld [vmem:[#allocation4 + $0xc] sm:$0x1]
  %v5267 = vld [vmem:[#allocation4 + $0x1c] sm:$0x1]
  %v5268 = vld [vmem:[#allocation4 + $0x2c] sm:$0x1]
  %v5269 = vld [vmem:[#allocation4 + $0x3c] sm:$0x1]
  %v5270 = vld [vmem:[#allocation4 + $0x4c] sm:$0x1]
  %v5271 = vld [vmem:[#allocation4 + $0x5c] sm:$0x1]
  %v5272 = vld [vmem:[#allocation4 + $0x6c] sm:$0x1]
  %v5273 = vld [vmem:[#allocation4 + $0x7c] sm:$0x1]
  %v5274 = vld [vmem:[#allocation4 + $0x8c] sm:$0x1]
  %v5275 = vld [vmem:[#allocation4 + $0x9c] sm:$0x1]
  %v5276 = vld [vmem:[#allocation4 + $0xac] sm:$0x1]
  %v5277 = vld [vmem:[#allocation4 + $0xbc] sm:$0x1]
  %v5278 = vld [vmem:[#allocation4 + $0xcc] sm:$0x1]
  %v5279 = vld [vmem:[#allocation4 + $0xdc] sm:$0x1]
  %v5280 = vld [vmem:[#allocation4 + $0xec] sm:$0x1]
  %v5281 = vld [vmem:[#allocation4 + $0xfc] sm:$0x1]
  %v5282 = vld [vmem:[#allocation4 + $0x10c] sm:$0x1]
  %v5283 = vld [vmem:[#allocation4 + $0x11c] sm:$0x1]
  %v5284 = vld [vmem:[#allocation4 + $0x12c] sm:$0x1]
  %v5285 = vld [vmem:[#allocation4 + $0x13c] sm:$0x1]
  %v5286 = vld [vmem:[#allocation4 + $0x14c] sm:$0x1]
  %v5287 = vld [vmem:[#allocation4 + $0x15c] sm:$0x1]
  %v5288 = vld [vmem:[#allocation4 + $0x16c] sm:$0x1]
  %v5289 = vld [vmem:[#allocation4 + $0x17c] sm:$0x1]
  %v5290 = vld [vmem:[#allocation4 + $0x18c] sm:$0x1]
  %v5291 = vld [vmem:[#allocation4 + $0x19c] sm:$0x1]
  %v5292 = vld [vmem:[#allocation4 + $0x1ac] sm:$0x1]
  %v5293 = vld [vmem:[#allocation4 + $0x1bc] sm:$0x1]
  %v5294 = vld [vmem:[#allocation4 + $0x1cc] sm:$0x1]
  %v5295 = vld [vmem:[#allocation4 + $0x1dc] sm:$0x1]
  %v5296 = vld [vmem:[#allocation4 + $0x1ec] sm:$0x1]
  %v5297 = vld [vmem:[#allocation4 + $0x1fc] sm:$0x1]
  %v5298 = vld [vmem:[#allocation4 + $0xd] sm:$0x1]
  %v5299 = vld [vmem:[#allocation4 + $0x1d] sm:$0x1]
  %v5300 = vld [vmem:[#allocation4 + $0x2d] sm:$0x1]
  %v5301 = vld [vmem:[#allocation4 + $0x3d] sm:$0x1]
  %v5302 = vld [vmem:[#allocation4 + $0x4d] sm:$0x1]
  %v5303 = vld [vmem:[#allocation4 + $0x5d] sm:$0x1]
  %v5304 = vld [vmem:[#allocation4 + $0x6d] sm:$0x1]
  %v5305 = vld [vmem:[#allocation4 + $0x7d] sm:$0x1]
  %v5306 = vld [vmem:[#allocation4 + $0x8d] sm:$0x1]
  %v5307 = vld [vmem:[#allocation4 + $0x9d] sm:$0x1]
  %v5308 = vld [vmem:[#allocation4 + $0xad] sm:$0x1]
  %v5309 = vld [vmem:[#allocation4 + $0xbd] sm:$0x1]
  %v5310 = vld [vmem:[#allocation4 + $0xcd] sm:$0x1]
  %v5311 = vld [vmem:[#allocation4 + $0xdd] sm:$0x1]
  %v5312 = vld [vmem:[#allocation4 + $0xed] sm:$0x1]
  %v5313 = vld [vmem:[#allocation4 + $0xfd] sm:$0x1]
  %v5314 = vld [vmem:[#allocation4 + $0x10d] sm:$0x1]
  %v5315 = vld [vmem:[#allocation4 + $0x11d] sm:$0x1]
  %v5316 = vld [vmem:[#allocation4 + $0x12d] sm:$0x1]
  %v5317 = vld [vmem:[#allocation4 + $0x13d] sm:$0x1]
  %v5318 = vld [vmem:[#allocation4 + $0x14d] sm:$0x1]
  %v5319 = vld [vmem:[#allocation4 + $0x15d] sm:$0x1]
  %v5320 = vld [vmem:[#allocation4 + $0x16d] sm:$0x1]
  %v5321 = vld [vmem:[#allocation4 + $0x17d] sm:$0x1]
  %v5322 = vld [vmem:[#allocation4 + $0x18d] sm:$0x1]
  %v5323 = vld [vmem:[#allocation4 + $0x19d] sm:$0x1]
  %v5324 = vld [vmem:[#allocation4 + $0x1ad] sm:$0x1]
  %v5325 = vld [vmem:[#allocation4 + $0x1bd] sm:$0x1]
  %v5326 = vld [vmem:[#allocation4 + $0x1cd] sm:$0x1]
  %v5327 = vld [vmem:[#allocation4 + $0x1dd] sm:$0x1]
  %v5328 = vld [vmem:[#allocation4 + $0x1ed] sm:$0x1]
  %v5329 = vld [vmem:[#allocation4 + $0x1fd] sm:$0x1]
  %v5330 = vmax.f32 %v5266, %v5298
  %v5331 = vmax.f32 %v5267, %v5299
  %v5332 = vmax.f32 %v5268, %v5300
  %v5333 = vmax.f32 %v5269, %v5301
  %v5334 = vmax.f32 %v5270, %v5302
  %v5335 = vmax.f32 %v5271, %v5303
  %v5336 = vmax.f32 %v5272, %v5304
  %v5337 = vmax.f32 %v5273, %v5305
  %v5338 = vmax.f32 %v5274, %v5306
  %v5339 = vmax.f32 %v5275, %v5307
  %v5340 = vmax.f32 %v5276, %v5308
  %v5341 = vmax.f32 %v5277, %v5309
  %v5342 = vmax.f32 %v5278, %v5310
  %v5343 = vmax.f32 %v5279, %v5311
  %v5344 = vmax.f32 %v5280, %v5312
  %v5345 = vmax.f32 %v5281, %v5313
  %v5346 = vmax.f32 %v5282, %v5314
  %v5347 = vmax.f32 %v5283, %v5315
  %v5348 = vmax.f32 %v5284, %v5316
  %v5349 = vmax.f32 %v5285, %v5317
  %v5350 = vmax.f32 %v5286, %v5318
  %v5351 = vmax.f32 %v5287, %v5319
  %v5352 = vmax.f32 %v5288, %v5320
  %v5353 = vmax.f32 %v5289, %v5321
  %v5354 = vmax.f32 %v5290, %v5322
  %v5355 = vmax.f32 %v5291, %v5323
  %v5356 = vmax.f32 %v5292, %v5324
  %v5357 = vmax.f32 %v5293, %v5325
  %v5358 = vmax.f32 %v5294, %v5326
  %v5359 = vmax.f32 %v5295, %v5327
  %v5360 = vmax.f32 %v5296, %v5328
  %v5361 = vmax.f32 %v5297, %v5329
  %5362 = vst.msk [vmem:[#allocation5 + $0x6] sm:$0x1] %vm4593, %v5330
  %5363 = vst.msk [vmem:[#allocation5 + $0xe] sm:$0x1] %vm4593, %v5331
  %5364 = vst.msk [vmem:[#allocation5 + $0x16] sm:$0x1] %vm4593, %v5332
  %5365 = vst.msk [vmem:[#allocation5 + $0x1e] sm:$0x1] %vm4593, %v5333
  %5366 = vst.msk [vmem:[#allocation5 + $0x26] sm:$0x1] %vm4593, %v5334
  %5367 = vst.msk [vmem:[#allocation5 + $0x2e] sm:$0x1] %vm4593, %v5335
  %5368 = vst.msk [vmem:[#allocation5 + $0x36] sm:$0x1] %vm4593, %v5336
  %5369 = vst.msk [vmem:[#allocation5 + $0x3e] sm:$0x1] %vm4593, %v5337
  %5370 = vst.msk [vmem:[#allocation5 + $0x46] sm:$0x1] %vm4593, %v5338
  %5371 = vst.msk [vmem:[#allocation5 + $0x4e] sm:$0x1] %vm4593, %v5339
  %5372 = vst.msk [vmem:[#allocation5 + $0x56] sm:$0x1] %vm4593, %v5340
  %5373 = vst.msk [vmem:[#allocation5 + $0x5e] sm:$0x1] %vm4593, %v5341
  %5374 = vst.msk [vmem:[#allocation5 + $0x66] sm:$0x1] %vm4593, %v5342
  %5375 = vst.msk [vmem:[#allocation5 + $0x6e] sm:$0x1] %vm4593, %v5343
  %5376 = vst.msk [vmem:[#allocation5 + $0x76] sm:$0x1] %vm4593, %v5344
  %5377 = vst.msk [vmem:[#allocation5 + $0x7e] sm:$0x1] %vm4593, %v5345
  %5378 = vst.msk [vmem:[#allocation5 + $0x86] sm:$0x1] %vm4593, %v5346
  %5379 = vst.msk [vmem:[#allocation5 + $0x8e] sm:$0x1] %vm4593, %v5347
  %5380 = vst.msk [vmem:[#allocation5 + $0x96] sm:$0x1] %vm4593, %v5348
  %5381 = vst.msk [vmem:[#allocation5 + $0x9e] sm:$0x1] %vm4593, %v5349
  %5382 = vst.msk [vmem:[#allocation5 + $0xa6] sm:$0x1] %vm4593, %v5350
  %5383 = vst.msk [vmem:[#allocation5 + $0xae] sm:$0x1] %vm4593, %v5351
  %5384 = vst.msk [vmem:[#allocation5 + $0xb6] sm:$0x1] %vm4593, %v5352
  %5385 = vst.msk [vmem:[#allocation5 + $0xbe] sm:$0x1] %vm4593, %v5353
  %5386 = vst.msk [vmem:[#allocation5 + $0xc6] sm:$0x1] %vm4593, %v5354
  %5387 = vst.msk [vmem:[#allocation5 + $0xce] sm:$0x1] %vm4593, %v5355
  %5388 = vst.msk [vmem:[#allocation5 + $0xd6] sm:$0x1] %vm4593, %v5356
  %5389 = vst.msk [vmem:[#allocation5 + $0xde] sm:$0x1] %vm4593, %v5357
  %5390 = vst.msk [vmem:[#allocation5 + $0xe6] sm:$0x1] %vm4593, %v5358
  %5391 = vst.msk [vmem:[#allocation5 + $0xee] sm:$0x1] %vm4593, %v5359
  %5392 = vst.msk [vmem:[#allocation5 + $0xf6] sm:$0x1] %vm4593, %v5360
  %5393 = vst.msk [vmem:[#allocation5 + $0xfe] sm:$0x1] %vm4593, %v5361
  %v5394 = vld [vmem:[#allocation4 + $0xe] sm:$0x1]
  %v5395 = vld [vmem:[#allocation4 + $0x1e] sm:$0x1]
  %v5396 = vld [vmem:[#allocation4 + $0x2e] sm:$0x1]
  %v5397 = vld [vmem:[#allocation4 + $0x3e] sm:$0x1]
  %v5398 = vld [vmem:[#allocation4 + $0x4e] sm:$0x1]
  %v5399 = vld [vmem:[#allocation4 + $0x5e] sm:$0x1]
  %v5400 = vld [vmem:[#allocation4 + $0x6e] sm:$0x1]
  %v5401 = vld [vmem:[#allocation4 + $0x7e] sm:$0x1]
  %v5402 = vld [vmem:[#allocation4 + $0x8e] sm:$0x1]
  %v5403 = vld [vmem:[#allocation4 + $0x9e] sm:$0x1]
  %v5404 = vld [vmem:[#allocation4 + $0xae] sm:$0x1]
  %v5405 = vld [vmem:[#allocation4 + $0xbe] sm:$0x1]
  %v5406 = vld [vmem:[#allocation4 + $0xce] sm:$0x1]
  %v5407 = vld [vmem:[#allocation4 + $0xde] sm:$0x1]
  %v5408 = vld [vmem:[#allocation4 + $0xee] sm:$0x1]
  %v5409 = vld [vmem:[#allocation4 + $0xfe] sm:$0x1]
  %v5410 = vld [vmem:[#allocation4 + $0x10e] sm:$0x1]
  %v5411 = vld [vmem:[#allocation4 + $0x11e] sm:$0x1]
  %v5412 = vld [vmem:[#allocation4 + $0x12e] sm:$0x1]
  %v5413 = vld [vmem:[#allocation4 + $0x13e] sm:$0x1]
  %v5414 = vld [vmem:[#allocation4 + $0x14e] sm:$0x1]
  %v5415 = vld [vmem:[#allocation4 + $0x15e] sm:$0x1]
  %v5416 = vld [vmem:[#allocation4 + $0x16e] sm:$0x1]
  %v5417 = vld [vmem:[#allocation4 + $0x17e] sm:$0x1]
  %v5418 = vld [vmem:[#allocation4 + $0x18e] sm:$0x1]
  %v5419 = vld [vmem:[#allocation4 + $0x19e] sm:$0x1]
  %v5420 = vld [vmem:[#allocation4 + $0x1ae] sm:$0x1]
  %v5421 = vld [vmem:[#allocation4 + $0x1be] sm:$0x1]
  %v5422 = vld [vmem:[#allocation4 + $0x1ce] sm:$0x1]
  %v5423 = vld [vmem:[#allocation4 + $0x1de] sm:$0x1]
  %v5424 = vld [vmem:[#allocation4 + $0x1ee] sm:$0x1]
  %v5425 = vld [vmem:[#allocation4 + $0x1fe] sm:$0x1]
  %v5426 = vld [vmem:[#allocation4 + $0xf] sm:$0x1]
  %v5427 = vld [vmem:[#allocation4 + $0x1f] sm:$0x1]
  %v5428 = vld [vmem:[#allocation4 + $0x2f] sm:$0x1]
  %v5429 = vld [vmem:[#allocation4 + $0x3f] sm:$0x1]
  %v5430 = vld [vmem:[#allocation4 + $0x4f] sm:$0x1]
  %v5431 = vld [vmem:[#allocation4 + $0x5f] sm:$0x1]
  %v5432 = vld [vmem:[#allocation4 + $0x6f] sm:$0x1]
  %v5433 = vld [vmem:[#allocation4 + $0x7f] sm:$0x1]
  %v5434 = vld [vmem:[#allocation4 + $0x8f] sm:$0x1]
  %v5435 = vld [vmem:[#allocation4 + $0x9f] sm:$0x1]
  %v5436 = vld [vmem:[#allocation4 + $0xaf] sm:$0x1]
  %v5437 = vld [vmem:[#allocation4 + $0xbf] sm:$0x1]
  %v5438 = vld [vmem:[#allocation4 + $0xcf] sm:$0x1]
  %v5439 = vld [vmem:[#allocation4 + $0xdf] sm:$0x1]
  %v5440 = vld [vmem:[#allocation4 + $0xef] sm:$0x1]
  %v5441 = vld [vmem:[#allocation4 + $0xff] sm:$0x1]
  %v5442 = vld [vmem:[#allocation4 + $0x10f] sm:$0x1]
  %v5443 = vld [vmem:[#allocation4 + $0x11f] sm:$0x1]
  %v5444 = vld [vmem:[#allocation4 + $0x12f] sm:$0x1]
  %v5445 = vld [vmem:[#allocation4 + $0x13f] sm:$0x1]
  %v5446 = vld [vmem:[#allocation4 + $0x14f] sm:$0x1]
  %v5447 = vld [vmem:[#allocation4 + $0x15f] sm:$0x1]
  %v5448 = vld [vmem:[#allocation4 + $0x16f] sm:$0x1]
  %v5449 = vld [vmem:[#allocation4 + $0x17f] sm:$0x1]
  %v5450 = vld [vmem:[#allocation4 + $0x18f] sm:$0x1]
  %v5451 = vld [vmem:[#allocation4 + $0x19f] sm:$0x1]
  %v5452 = vld [vmem:[#allocation4 + $0x1af] sm:$0x1]
  %v5453 = vld [vmem:[#allocation4 + $0x1bf] sm:$0x1]
  %v5454 = vld [vmem:[#allocation4 + $0x1cf] sm:$0x1]
  %v5455 = vld [vmem:[#allocation4 + $0x1df] sm:$0x1]
  %v5456 = vld [vmem:[#allocation4 + $0x1ef] sm:$0x1]
  %v5457 = vld [vmem:[#allocation4 + $0x1ff] sm:$0x1]
  %v5458 = vmax.f32 %v5394, %v5426
  %v5459 = vmax.f32 %v5395, %v5427
  %v5460 = vmax.f32 %v5396, %v5428
  %v5461 = vmax.f32 %v5397, %v5429
  %v5462 = vmax.f32 %v5398, %v5430
  %v5463 = vmax.f32 %v5399, %v5431
  %v5464 = vmax.f32 %v5400, %v5432
  %v5465 = vmax.f32 %v5401, %v5433
  %v5466 = vmax.f32 %v5402, %v5434
  %v5467 = vmax.f32 %v5403, %v5435
  %v5468 = vmax.f32 %v5404, %v5436
  %v5469 = vmax.f32 %v5405, %v5437
  %v5470 = vmax.f32 %v5406, %v5438
  %v5471 = vmax.f32 %v5407, %v5439
  %v5472 = vmax.f32 %v5408, %v5440
  %v5473 = vmax.f32 %v5409, %v5441
  %v5474 = vmax.f32 %v5410, %v5442
  %v5475 = vmax.f32 %v5411, %v5443
  %v5476 = vmax.f32 %v5412, %v5444
  %v5477 = vmax.f32 %v5413, %v5445
  %v5478 = vmax.f32 %v5414, %v5446
  %v5479 = vmax.f32 %v5415, %v5447
  %v5480 = vmax.f32 %v5416, %v5448
  %v5481 = vmax.f32 %v5417, %v5449
  %v5482 = vmax.f32 %v5418, %v5450
  %v5483 = vmax.f32 %v5419, %v5451
  %v5484 = vmax.f32 %v5420, %v5452
  %v5485 = vmax.f32 %v5421, %v5453
  %v5486 = vmax.f32 %v5422, %v5454
  %v5487 = vmax.f32 %v5423, %v5455
  %v5488 = vmax.f32 %v5424, %v5456
  %v5489 = vmax.f32 %v5425, %v5457
  %5490 = vst.msk [vmem:[#allocation5 + $0x7] sm:$0x1] %vm4593, %v5458
  %5491 = vst.msk [vmem:[#allocation5 + $0xf] sm:$0x1] %vm4593, %v5459
  %5492 = vst.msk [vmem:[#allocation5 + $0x17] sm:$0x1] %vm4593, %v5460
  %5493 = vst.msk [vmem:[#allocation5 + $0x1f] sm:$0x1] %vm4593, %v5461
  %5494 = vst.msk [vmem:[#allocation5 + $0x27] sm:$0x1] %vm4593, %v5462
  %5495 = vst.msk [vmem:[#allocation5 + $0x2f] sm:$0x1] %vm4593, %v5463
  %5496 = vst.msk [vmem:[#allocation5 + $0x37] sm:$0x1] %vm4593, %v5464
  %5497 = vst.msk [vmem:[#allocation5 + $0x3f] sm:$0x1] %vm4593, %v5465
  %5498 = vst.msk [vmem:[#allocation5 + $0x47] sm:$0x1] %vm4593, %v5466
  %5499 = vst.msk [vmem:[#allocation5 + $0x4f] sm:$0x1] %vm4593, %v5467
  %5500 = vst.msk [vmem:[#allocation5 + $0x57] sm:$0x1] %vm4593, %v5468
  %5501 = vst.msk [vmem:[#allocation5 + $0x5f] sm:$0x1] %vm4593, %v5469
  %5502 = vst.msk [vmem:[#allocation5 + $0x67] sm:$0x1] %vm4593, %v5470
  %5503 = vst.msk [vmem:[#allocation5 + $0x6f] sm:$0x1] %vm4593, %v5471
  %5504 = vst.msk [vmem:[#allocation5 + $0x77] sm:$0x1] %vm4593, %v5472
  %5505 = vst.msk [vmem:[#allocation5 + $0x7f] sm:$0x1] %vm4593, %v5473
  %5506 = vst.msk [vmem:[#allocation5 + $0x87] sm:$0x1] %vm4593, %v5474
  %5507 = vst.msk [vmem:[#allocation5 + $0x8f] sm:$0x1] %vm4593, %v5475
  %5508 = vst.msk [vmem:[#allocation5 + $0x97] sm:$0x1] %vm4593, %v5476
  %5509 = vst.msk [vmem:[#allocation5 + $0x9f] sm:$0x1] %vm4593, %v5477
  %5510 = vst.msk [vmem:[#allocation5 + $0xa7] sm:$0x1] %vm4593, %v5478
  %5511 = vst.msk [vmem:[#allocation5 + $0xaf] sm:$0x1] %vm4593, %v5479
  %5512 = vst.msk [vmem:[#allocation5 + $0xb7] sm:$0x1] %vm4593, %v5480
  %5513 = vst.msk [vmem:[#allocation5 + $0xbf] sm:$0x1] %vm4593, %v5481
  %5514 = vst.msk [vmem:[#allocation5 + $0xc7] sm:$0x1] %vm4593, %v5482
  %5515 = vst.msk [vmem:[#allocation5 + $0xcf] sm:$0x1] %vm4593, %v5483
  %5516 = vst.msk [vmem:[#allocation5 + $0xd7] sm:$0x1] %vm4593, %v5484
  %5517 = vst.msk [vmem:[#allocation5 + $0xdf] sm:$0x1] %vm4593, %v5485
  %5518 = vst.msk [vmem:[#allocation5 + $0xe7] sm:$0x1] %vm4593, %v5486
  %5519 = vst.msk [vmem:[#allocation5 + $0xef] sm:$0x1] %vm4593, %v5487
  %5520 = vst.msk [vmem:[#allocation5 + $0xf7] sm:$0x1] %vm4593, %v5488
  %5521 = vst.msk [vmem:[#allocation5 + $0xff] sm:$0x1] %vm4593, %v5489
  %v5522 = vld [vmem:[#allocation5] sm:$0xff]
  %s5523 = scalar_lea.vmem [#allocation5], 8
  %v5524 = vld [vmem:[%s5523] sm:$0xff]
  %v5525 = vmax.f32 %v5522, %v5524
  %s5526 = scalar_lea.vmem [#allocation6], 16
  %5527 = vst.msk [vmem:[%s5526 + $0x1] sm:$0xff] %vm125, %v5525
  %s5528 = scalar_lea.vmem [#allocation5], 16
  %v5529 = vld [vmem:[%s5528] sm:$0xff]
  %s5530 = scalar_lea.vmem [#allocation5], 24
  %v5531 = vld [vmem:[%s5530] sm:$0xff]
  %v5532 = vmax.f32 %v5529, %v5531
  %s5533 = scalar_lea.vmem [#allocation6], 32
  %5534 = vst.msk [vmem:[%s5533 + $0x1] sm:$0xff] %vm125, %v5532
  %s5535 = scalar_lea.vmem [#allocation5], 32
  %v5536 = vld [vmem:[%s5535] sm:$0xff]
  %s5537 = scalar_lea.vmem [#allocation5], 40
  %v5538 = vld [vmem:[%s5537] sm:$0xff]
  %v5539 = vmax.f32 %v5536, %v5538
  %s5540 = scalar_lea.vmem [#allocation6], 48
  %5541 = vst.msk [vmem:[%s5540 + $0x1] sm:$0xff] %vm125, %v5539
  %s5542 = scalar_lea.vmem [#allocation5], 48
  %v5543 = vld [vmem:[%s5542] sm:$0xff]
  %s5544 = scalar_lea.vmem [#allocation5], 56
  %v5545 = vld [vmem:[%s5544] sm:$0xff]
  %v5546 = vmax.f32 %v5543, %v5545
  %s5547 = scalar_lea.vmem [#allocation6], 64
  %5548 = vst.msk [vmem:[%s5547 + $0x1] sm:$0xff] %vm125, %v5546
  %s5549 = scalar_lea.vmem [#allocation5], 64
  %v5550 = vld [vmem:[%s5549] sm:$0xff]
  %s5551 = scalar_lea.vmem [#allocation5], 72
  %v5552 = vld [vmem:[%s5551] sm:$0xff]
  %v5553 = vmax.f32 %v5550, %v5552
  %s5554 = scalar_lea.vmem [#allocation6], 80
  %5555 = vst.msk [vmem:[%s5554 + $0x1] sm:$0xff] %vm125, %v5553
  %s5556 = scalar_lea.vmem [#allocation5], 80
  %v5557 = vld [vmem:[%s5556] sm:$0xff]
  %s5558 = scalar_lea.vmem [#allocation5], 88
  %v5559 = vld [vmem:[%s5558] sm:$0xff]
  %v5560 = vmax.f32 %v5557, %v5559
  %s5561 = scalar_lea.vmem [#allocation6], 96
  %5562 = vst.msk [vmem:[%s5561 + $0x1] sm:$0xff] %vm125, %v5560
  %s5563 = scalar_lea.vmem [#allocation5], 96
  %v5564 = vld [vmem:[%s5563] sm:$0xff]
  %s5565 = scalar_lea.vmem [#allocation5], 104
  %v5566 = vld [vmem:[%s5565] sm:$0xff]
  %v5567 = vmax.f32 %v5564, %v5566
  %s5568 = scalar_lea.vmem [#allocation6], 112
  %5569 = vst.msk [vmem:[%s5568 + $0x1] sm:$0xff] %vm125, %v5567
  %s5570 = scalar_lea.vmem [#allocation5], 112
  %v5571 = vld [vmem:[%s5570] sm:$0xff]
  %s5572 = scalar_lea.vmem [#allocation5], 120
  %v5573 = vld [vmem:[%s5572] sm:$0xff]
  %v5574 = vmax.f32 %v5571, %v5573
  %s5575 = scalar_lea.vmem [#allocation6], 128
  %5576 = vst.msk [vmem:[%s5575 + $0x1] sm:$0xff] %vm125, %v5574
  %s5577 = scalar_lea.vmem [#allocation5], 128
  %v5578 = vld [vmem:[%s5577] sm:$0xff]
  %s5579 = scalar_lea.vmem [#allocation5], 136
  %v5580 = vld [vmem:[%s5579] sm:$0xff]
  %v5581 = vmax.f32 %v5578, %v5580
  %s5582 = scalar_lea.vmem [#allocation6], 176
  %5583 = vst.msk [vmem:[%s5582 + $0x1] sm:$0xff] %vm125, %v5581
  %s5584 = scalar_lea.vmem [#allocation5], 144
  %v5585 = vld [vmem:[%s5584] sm:$0xff]
  %s5586 = scalar_lea.vmem [#allocation5], 152
  %v5587 = vld [vmem:[%s5586] sm:$0xff]
  %v5588 = vmax.f32 %v5585, %v5587
  %s5589 = scalar_lea.vmem [#allocation6], 192
  %5590 = vst.msk [vmem:[%s5589 + $0x1] sm:$0xff] %vm125, %v5588
  %s5591 = scalar_lea.vmem [#allocation5], 160
  %v5592 = vld [vmem:[%s5591] sm:$0xff]
  %s5593 = scalar_lea.vmem [#allocation5], 168
  %v5594 = vld [vmem:[%s5593] sm:$0xff]
  %v5595 = vmax.f32 %v5592, %v5594
  %s5596 = scalar_lea.vmem [#allocation6], 208
  %5597 = vst.msk [vmem:[%s5596 + $0x1] sm:$0xff] %vm125, %v5595
  %s5598 = scalar_lea.vmem [#allocation5], 176
  %v5599 = vld [vmem:[%s5598] sm:$0xff]
  %s5600 = scalar_lea.vmem [#allocation5], 184
  %v5601 = vld [vmem:[%s5600] sm:$0xff]
  %v5602 = vmax.f32 %v5599, %v5601
  %s5603 = scalar_lea.vmem [#allocation6], 224
  %5604 = vst.msk [vmem:[%s5603 + $0x1] sm:$0xff] %vm125, %v5602
  %s5605 = scalar_lea.vmem [#allocation5], 192
  %v5606 = vld [vmem:[%s5605] sm:$0xff]
  %s5607 = scalar_lea.vmem [#allocation5], 200
  %v5608 = vld [vmem:[%s5607] sm:$0xff]
  %v5609 = vmax.f32 %v5606, %v5608
  %s5610 = scalar_lea.vmem [#allocation6], 240
  %5611 = vst.msk [vmem:[%s5610 + $0x1] sm:$0xff] %vm125, %v5609
  %s5612 = scalar_lea.vmem [#allocation5], 208
  %v5613 = vld [vmem:[%s5612] sm:$0xff]
  %s5614 = scalar_lea.vmem [#allocation5], 216
  %v5615 = vld [vmem:[%s5614] sm:$0xff]
  %v5616 = vmax.f32 %v5613, %v5615
  %s5617 = scalar_lea.vmem [#allocation6], 256
  %5618 = vst.msk [vmem:[%s5617 + $0x1] sm:$0xff] %vm125, %v5616
  %s5619 = scalar_lea.vmem [#allocation5], 224
  %v5620 = vld [vmem:[%s5619] sm:$0xff]
  %s5621 = scalar_lea.vmem [#allocation5], 232
  %v5622 = vld [vmem:[%s5621] sm:$0xff]
  %v5623 = vmax.f32 %v5620, %v5622
  %s5624 = scalar_lea.vmem [#allocation6], 272
  %5625 = vst.msk [vmem:[%s5624 + $0x1] sm:$0xff] %vm125, %v5623
  %s5626 = scalar_lea.vmem [#allocation5], 240
  %v5627 = vld [vmem:[%s5626] sm:$0xff]
  %s5628 = scalar_lea.vmem [#allocation5], 248
  %v5629 = vld [vmem:[%s5628] sm:$0xff]
  %v5630 = vmax.f32 %v5627, %v5629
  %s5631 = scalar_lea.vmem [#allocation6], 288
  %5632 = vst.msk [vmem:[%s5631 + $0x1] sm:$0xff] %vm125, %v5630
  %v5633 = vld [vmem:[#allocation6] sm:$0xff]
  %v5634 = vld [vmem:[#allocation6 + $0x10] sm:$0xff]
  %v5635 = vld [vmem:[#allocation6 + $0x20] sm:$0xff]
  %v5636 = vld [vmem:[#allocation6 + $0x30] sm:$0xff]
  %v5637 = vld [vmem:[#allocation6 + $0x40] sm:$0xff]
  %v5638 = vld [vmem:[#allocation6 + $0x50] sm:$0xff]
  %v5639 = vld [vmem:[#allocation6 + $0x60] sm:$0xff]
  %v5640 = vld [vmem:[#allocation6 + $0x70] sm:$0xff]
  %v5641 = vld [vmem:[#allocation6 + $0xa0] sm:$0xff]
  %v5642 = vld [vmem:[#allocation6 + $0xb0] sm:$0xff]
  %v5643 = vld [vmem:[#allocation6 + $0xc0] sm:$0xff]
  %v5644 = vld [vmem:[#allocation6 + $0xd0] sm:$0xff]
  %v5645 = vld [vmem:[#allocation6 + $0xe0] sm:$0xff]
  %v5646 = vld [vmem:[#allocation6 + $0xf0] sm:$0xff]
  %v5647 = vld [vmem:[#allocation6 + $0x100] sm:$0xff]
  %v5648 = vld [vmem:[#allocation6 + $0x110] sm:$0xff]
  %5649 = vst.msk [vmem:[#allocation7] sm:$0xff] %vm125, %v5633
  %5650 = vst.msk [vmem:[#allocation7 + $0x8] sm:$0xff] %vm125, %v5634
  %5651 = vst.msk [vmem:[#allocation7 + $0x10] sm:$0xff] %vm125, %v5635
  %5652 = vst.msk [vmem:[#allocation7 + $0x18] sm:$0xff] %vm125, %v5636
  %5653 = vst.msk [vmem:[#allocation7 + $0x20] sm:$0xff] %vm125, %v5637
  %5654 = vst.msk [vmem:[#allocation7 + $0x28] sm:$0xff] %vm125, %v5638
  %5655 = vst.msk [vmem:[#allocation7 + $0x30] sm:$0xff] %vm125, %v5639
  %5656 = vst.msk [vmem:[#allocation7 + $0x38] sm:$0xff] %vm125, %v5640
  %5657 = vst.msk [vmem:[#allocation7 + $0x40] sm:$0xff] %vm125, %v5641
  %5658 = vst.msk [vmem:[#allocation7 + $0x48] sm:$0xff] %vm125, %v5642
  %5659 = vst.msk [vmem:[#allocation7 + $0x50] sm:$0xff] %vm125, %v5643
  %5660 = vst.msk [vmem:[#allocation7 + $0x58] sm:$0xff] %vm125, %v5644
  %5661 = vst.msk [vmem:[#allocation7 + $0x60] sm:$0xff] %vm125, %v5645
  %5662 = vst.msk [vmem:[#allocation7 + $0x68] sm:$0xff] %vm125, %v5646
  %5663 = vst.msk [vmem:[#allocation7 + $0x70] sm:$0xff] %vm125, %v5647
  %5664 = vst.msk [vmem:[#allocation7 + $0x78] sm:$0xff] %vm125, %v5648
  %v5665 = vld [vmem:[#allocation6 + $0x1] sm:$0xff]
  %v5666 = vld [vmem:[#allocation6 + $0x11] sm:$0xff]
  %v5667 = vld [vmem:[#allocation6 + $0x21] sm:$0xff]
  %v5668 = vld [vmem:[#allocation6 + $0x31] sm:$0xff]
  %v5669 = vld [vmem:[#allocation6 + $0x41] sm:$0xff]
  %v5670 = vld [vmem:[#allocation6 + $0x51] sm:$0xff]
  %v5671 = vld [vmem:[#allocation6 + $0x61] sm:$0xff]
  %v5672 = vld [vmem:[#allocation6 + $0x71] sm:$0xff]
  %v5673 = vld [vmem:[#allocation6 + $0xa1] sm:$0xff]
  %v5674 = vld [vmem:[#allocation6 + $0xb1] sm:$0xff]
  %v5675 = vld [vmem:[#allocation6 + $0xc1] sm:$0xff]
  %v5676 = vld [vmem:[#allocation6 + $0xd1] sm:$0xff]
  %v5677 = vld [vmem:[#allocation6 + $0xe1] sm:$0xff]
  %v5678 = vld [vmem:[#allocation6 + $0xf1] sm:$0xff]
  %v5679 = vld [vmem:[#allocation6 + $0x101] sm:$0xff]
  %v5680 = vld [vmem:[#allocation6 + $0x111] sm:$0xff]
  %5697 = vrot.lane.b32.xlu0 %v5665, 8
  %v5698 = vpop.permute.xlu0 %5697
  %5699 = vrot.lane.b32.xlu0 %v5666, 8
  %v5700 = vpop.permute.xlu0 %5699
  %5701 = vrot.lane.b32.xlu0 %v5667, 8
  %v5702 = vpop.permute.xlu0 %5701
  %5703 = vrot.lane.b32.xlu0 %v5668, 8
  %v5704 = vpop.permute.xlu0 %5703
  %5705 = vrot.lane.b32.xlu0 %v5669, 8
  %v5706 = vpop.permute.xlu0 %5705
  %5707 = vrot.lane.b32.xlu0 %v5670, 8
  %v5708 = vpop.permute.xlu0 %5707
  %5709 = vrot.lane.b32.xlu0 %v5671, 8
  %v5710 = vpop.permute.xlu0 %5709
  %5711 = vrot.lane.b32.xlu0 %v5672, 8
  %v5712 = vpop.permute.xlu0 %5711
  %5713 = vrot.lane.b32.xlu0 %v5673, 8
  %v5714 = vpop.permute.xlu0 %5713
  %5715 = vrot.lane.b32.xlu0 %v5674, 8
  %v5716 = vpop.permute.xlu0 %5715
  %5717 = vrot.lane.b32.xlu0 %v5675, 8
  %v5718 = vpop.permute.xlu0 %5717
  %5719 = vrot.lane.b32.xlu0 %v5676, 8
  %v5720 = vpop.permute.xlu0 %5719
  %5721 = vrot.lane.b32.xlu0 %v5677, 8
  %v5722 = vpop.permute.xlu0 %5721
  %5723 = vrot.lane.b32.xlu0 %v5678, 8
  %v5724 = vpop.permute.xlu0 %5723
  %5725 = vrot.lane.b32.xlu0 %v5679, 8
  %v5726 = vpop.permute.xlu0 %5725
  %5727 = vrot.lane.b32.xlu0 %v5680, 8
  %v5728 = vpop.permute.xlu0 %5727
  %vm5745 = vcmask 130112
  %5746 = vst.msk [vmem:[#allocation7] sm:$0xff] %vm5745, %v5698
  %5747 = vst.msk [vmem:[#allocation7 + $0x8] sm:$0xff] %vm5745, %v5700
  %5748 = vst.msk [vmem:[#allocation7 + $0x10] sm:$0xff] %vm5745, %v5702
  %5749 = vst.msk [vmem:[#allocation7 + $0x18] sm:$0xff] %vm5745, %v5704
  %5750 = vst.msk [vmem:[#allocation7 + $0x20] sm:$0xff] %vm5745, %v5706
  %5751 = vst.msk [vmem:[#allocation7 + $0x28] sm:$0xff] %vm5745, %v5708
  %5752 = vst.msk [vmem:[#allocation7 + $0x30] sm:$0xff] %vm5745, %v5710
  %5753 = vst.msk [vmem:[#allocation7 + $0x38] sm:$0xff] %vm5745, %v5712
  %5754 = vst.msk [vmem:[#allocation7 + $0x40] sm:$0xff] %vm5745, %v5714
  %5755 = vst.msk [vmem:[#allocation7 + $0x48] sm:$0xff] %vm5745, %v5716
  %5756 = vst.msk [vmem:[#allocation7 + $0x50] sm:$0xff] %vm5745, %v5718
  %5757 = vst.msk [vmem:[#allocation7 + $0x58] sm:$0xff] %vm5745, %v5720
  %5758 = vst.msk [vmem:[#allocation7 + $0x60] sm:$0xff] %vm5745, %v5722
  %5759 = vst.msk [vmem:[#allocation7 + $0x68] sm:$0xff] %vm5745, %v5724
  %5760 = vst.msk [vmem:[#allocation7 + $0x70] sm:$0xff] %vm5745, %v5726
  %5761 = vst.msk [vmem:[#allocation7 + $0x78] sm:$0xff] %vm5745, %v5728
  %v5762 = vld [vmem:[#allocation6 + $0x2] sm:$0xff]
  %v5763 = vld [vmem:[#allocation6 + $0x12] sm:$0xff]
  %v5764 = vld [vmem:[#allocation6 + $0x22] sm:$0xff]
  %v5765 = vld [vmem:[#allocation6 + $0x32] sm:$0xff]
  %v5766 = vld [vmem:[#allocation6 + $0x42] sm:$0xff]
  %v5767 = vld [vmem:[#allocation6 + $0x52] sm:$0xff]
  %v5768 = vld [vmem:[#allocation6 + $0x62] sm:$0xff]
  %v5769 = vld [vmem:[#allocation6 + $0x72] sm:$0xff]
  %v5770 = vld [vmem:[#allocation6 + $0xa2] sm:$0xff]
  %v5771 = vld [vmem:[#allocation6 + $0xb2] sm:$0xff]
  %v5772 = vld [vmem:[#allocation6 + $0xc2] sm:$0xff]
  %v5773 = vld [vmem:[#allocation6 + $0xd2] sm:$0xff]
  %v5774 = vld [vmem:[#allocation6 + $0xe2] sm:$0xff]
  %v5775 = vld [vmem:[#allocation6 + $0xf2] sm:$0xff]
  %v5776 = vld [vmem:[#allocation6 + $0x102] sm:$0xff]
  %v5777 = vld [vmem:[#allocation6 + $0x112] sm:$0xff]
  %5794 = vrot.lane.b32.xlu0 %v5762, 16
  %v5795 = vpop.permute.xlu0 %5794
  %5796 = vrot.lane.b32.xlu0 %v5763, 16
  %v5797 = vpop.permute.xlu0 %5796
  %5798 = vrot.lane.b32.xlu0 %v5764, 16
  %v5799 = vpop.permute.xlu0 %5798
  %5800 = vrot.lane.b32.xlu0 %v5765, 16
  %v5801 = vpop.permute.xlu0 %5800
  %5802 = vrot.lane.b32.xlu0 %v5766, 16
  %v5803 = vpop.permute.xlu0 %5802
  %5804 = vrot.lane.b32.xlu0 %v5767, 16
  %v5805 = vpop.permute.xlu0 %5804
  %5806 = vrot.lane.b32.xlu0 %v5768, 16
  %v5807 = vpop.permute.xlu0 %5806
  %5808 = vrot.lane.b32.xlu0 %v5769, 16
  %v5809 = vpop.permute.xlu0 %5808
  %5810 = vrot.lane.b32.xlu0 %v5770, 16
  %v5811 = vpop.permute.xlu0 %5810
  %5812 = vrot.lane.b32.xlu0 %v5771, 16
  %v5813 = vpop.permute.xlu0 %5812
  %5814 = vrot.lane.b32.xlu0 %v5772, 16
  %v5815 = vpop.permute.xlu0 %5814
  %5816 = vrot.lane.b32.xlu0 %v5773, 16
  %v5817 = vpop.permute.xlu0 %5816
  %5818 = vrot.lane.b32.xlu0 %v5774, 16
  %v5819 = vpop.permute.xlu0 %5818
  %5820 = vrot.lane.b32.xlu0 %v5775, 16
  %v5821 = vpop.permute.xlu0 %5820
  %5822 = vrot.lane.b32.xlu0 %v5776, 16
  %v5823 = vpop.permute.xlu0 %5822
  %5824 = vrot.lane.b32.xlu0 %v5777, 16
  %v5825 = vpop.permute.xlu0 %5824
  %vm5842 = vcmask 195712
  %5843 = vst.msk [vmem:[#allocation7] sm:$0xff] %vm5842, %v5795
  %5844 = vst.msk [vmem:[#allocation7 + $0x8] sm:$0xff] %vm5842, %v5797
  %5845 = vst.msk [vmem:[#allocation7 + $0x10] sm:$0xff] %vm5842, %v5799
  %5846 = vst.msk [vmem:[#allocation7 + $0x18] sm:$0xff] %vm5842, %v5801
  %5847 = vst.msk [vmem:[#allocation7 + $0x20] sm:$0xff] %vm5842, %v5803
  %5848 = vst.msk [vmem:[#allocation7 + $0x28] sm:$0xff] %vm5842, %v5805
  %5849 = vst.msk [vmem:[#allocation7 + $0x30] sm:$0xff] %vm5842, %v5807
  %5850 = vst.msk [vmem:[#allocation7 + $0x38] sm:$0xff] %vm5842, %v5809
  %5851 = vst.msk [vmem:[#allocation7 + $0x40] sm:$0xff] %vm5842, %v5811
  %5852 = vst.msk [vmem:[#allocation7 + $0x48] sm:$0xff] %vm5842, %v5813
  %5853 = vst.msk [vmem:[#allocation7 + $0x50] sm:$0xff] %vm5842, %v5815
  %5854 = vst.msk [vmem:[#allocation7 + $0x58] sm:$0xff] %vm5842, %v5817
  %5855 = vst.msk [vmem:[#allocation7 + $0x60] sm:$0xff] %vm5842, %v5819
  %5856 = vst.msk [vmem:[#allocation7 + $0x68] sm:$0xff] %vm5842, %v5821
  %5857 = vst.msk [vmem:[#allocation7 + $0x70] sm:$0xff] %vm5842, %v5823
  %5858 = vst.msk [vmem:[#allocation7 + $0x78] sm:$0xff] %vm5842, %v5825
  %v5859 = vld [vmem:[%s5526] sm:$0xff]
  %v5860 = vld [vmem:[%s5526 + $0x10] sm:$0xff]
  %v5861 = vld [vmem:[%s5526 + $0x20] sm:$0xff]
  %v5862 = vld [vmem:[%s5526 + $0x30] sm:$0xff]
  %v5863 = vld [vmem:[%s5526 + $0x40] sm:$0xff]
  %v5864 = vld [vmem:[%s5526 + $0x50] sm:$0xff]
  %v5865 = vld [vmem:[%s5526 + $0x60] sm:$0xff]
  %v5866 = vld [vmem:[%s5526 + $0x70] sm:$0xff]
  %v5867 = vld [vmem:[%s5526 + $0xa0] sm:$0xff]
  %v5868 = vld [vmem:[%s5526 + $0xb0] sm:$0xff]
  %v5869 = vld [vmem:[%s5526 + $0xc0] sm:$0xff]
  %v5870 = vld [vmem:[%s5526 + $0xd0] sm:$0xff]
  %v5871 = vld [vmem:[%s5526 + $0xe0] sm:$0xff]
  %v5872 = vld [vmem:[%s5526 + $0xf0] sm:$0xff]
  %v5873 = vld [vmem:[%s5526 + $0x100] sm:$0xff]
  %v5874 = vld [vmem:[%s5526 + $0x110] sm:$0xff]
  %5891 = vrot.lane.b32.xlu0 %v5859, 24
  %v5892 = vpop.permute.xlu0 %5891
  %5893 = vrot.lane.b32.xlu0 %v5860, 24
  %v5894 = vpop.permute.xlu0 %5893
  %5895 = vrot.lane.b32.xlu0 %v5861, 24
  %v5896 = vpop.permute.xlu0 %5895
  %5897 = vrot.lane.b32.xlu0 %v5862, 24
  %v5898 = vpop.permute.xlu0 %5897
  %5899 = vrot.lane.b32.xlu0 %v5863, 24
  %v5900 = vpop.permute.xlu0 %5899
  %5901 = vrot.lane.b32.xlu0 %v5864, 24
  %v5902 = vpop.permute.xlu0 %5901
  %5903 = vrot.lane.b32.xlu0 %v5865, 24
  %v5904 = vpop.permute.xlu0 %5903
  %5905 = vrot.lane.b32.xlu0 %v5866, 24
  %v5906 = vpop.permute.xlu0 %5905
  %5907 = vrot.lane.b32.xlu0 %v5867, 24
  %v5908 = vpop.permute.xlu0 %5907
  %5909 = vrot.lane.b32.xlu0 %v5868, 24
  %v5910 = vpop.permute.xlu0 %5909
  %5911 = vrot.lane.b32.xlu0 %v5869, 24
  %v5912 = vpop.permute.xlu0 %5911
  %5913 = vrot.lane.b32.xlu0 %v5870, 24
  %v5914 = vpop.permute.xlu0 %5913
  %5915 = vrot.lane.b32.xlu0 %v5871, 24
  %v5916 = vpop.permute.xlu0 %5915
  %5917 = vrot.lane.b32.xlu0 %v5872, 24
  %v5918 = vpop.permute.xlu0 %5917
  %5919 = vrot.lane.b32.xlu0 %v5873, 24
  %v5920 = vpop.permute.xlu0 %5919
  %5921 = vrot.lane.b32.xlu0 %v5874, 24
  %v5922 = vpop.permute.xlu0 %5921
  %vm5939 = vcmask 261312
  %5940 = vst.msk [vmem:[#allocation7] sm:$0xff] %vm5939, %v5892
  %5941 = vst.msk [vmem:[#allocation7 + $0x8] sm:$0xff] %vm5939, %v5894
  %5942 = vst.msk [vmem:[#allocation7 + $0x10] sm:$0xff] %vm5939, %v5896
  %5943 = vst.msk [vmem:[#allocation7 + $0x18] sm:$0xff] %vm5939, %v5898
  %5944 = vst.msk [vmem:[#allocation7 + $0x20] sm:$0xff] %vm5939, %v5900
  %5945 = vst.msk [vmem:[#allocation7 + $0x28] sm:$0xff] %vm5939, %v5902
  %5946 = vst.msk [vmem:[#allocation7 + $0x30] sm:$0xff] %vm5939, %v5904
  %5947 = vst.msk [vmem:[#allocation7 + $0x38] sm:$0xff] %vm5939, %v5906
  %5948 = vst.msk [vmem:[#allocation7 + $0x40] sm:$0xff] %vm5939, %v5908
  %5949 = vst.msk [vmem:[#allocation7 + $0x48] sm:$0xff] %vm5939, %v5910
  %5950 = vst.msk [vmem:[#allocation7 + $0x50] sm:$0xff] %vm5939, %v5912
  %5951 = vst.msk [vmem:[#allocation7 + $0x58] sm:$0xff] %vm5939, %v5914
  %5952 = vst.msk [vmem:[#allocation7 + $0x60] sm:$0xff] %vm5939, %v5916
  %5953 = vst.msk [vmem:[#allocation7 + $0x68] sm:$0xff] %vm5939, %v5918
  %5954 = vst.msk [vmem:[#allocation7 + $0x70] sm:$0xff] %vm5939, %v5920
  %5955 = vst.msk [vmem:[#allocation7 + $0x78] sm:$0xff] %vm5939, %v5922
  %v5956 = vld [vmem:[%s5526 + $0x1] sm:$0xff]
  %v5957 = vld [vmem:[%s5526 + $0x11] sm:$0xff]
  %v5958 = vld [vmem:[%s5526 + $0x21] sm:$0xff]
  %v5959 = vld [vmem:[%s5526 + $0x31] sm:$0xff]
  %v5960 = vld [vmem:[%s5526 + $0x41] sm:$0xff]
  %v5961 = vld [vmem:[%s5526 + $0x51] sm:$0xff]
  %v5962 = vld [vmem:[%s5526 + $0x61] sm:$0xff]
  %v5963 = vld [vmem:[%s5526 + $0x71] sm:$0xff]
  %v5964 = vld [vmem:[%s5526 + $0xa1] sm:$0xff]
  %v5965 = vld [vmem:[%s5526 + $0xb1] sm:$0xff]
  %v5966 = vld [vmem:[%s5526 + $0xc1] sm:$0xff]
  %v5967 = vld [vmem:[%s5526 + $0xd1] sm:$0xff]
  %v5968 = vld [vmem:[%s5526 + $0xe1] sm:$0xff]
  %v5969 = vld [vmem:[%s5526 + $0xf1] sm:$0xff]
  %v5970 = vld [vmem:[%s5526 + $0x101] sm:$0xff]
  %v5971 = vld [vmem:[%s5526 + $0x111] sm:$0xff]
  %5988 = vrot.lane.b32.xlu0 %v5956, 32
  %v5989 = vpop.permute.xlu0 %5988
  %5990 = vrot.lane.b32.xlu0 %v5957, 32
  %v5991 = vpop.permute.xlu0 %5990
  %5992 = vrot.lane.b32.xlu0 %v5958, 32
  %v5993 = vpop.permute.xlu0 %5992
  %5994 = vrot.lane.b32.xlu0 %v5959, 32
  %v5995 = vpop.permute.xlu0 %5994
  %5996 = vrot.lane.b32.xlu0 %v5960, 32
  %v5997 = vpop.permute.xlu0 %5996
  %5998 = vrot.lane.b32.xlu0 %v5961, 32
  %v5999 = vpop.permute.xlu0 %5998
  %6000 = vrot.lane.b32.xlu0 %v5962, 32
  %v6001 = vpop.permute.xlu0 %6000
  %6002 = vrot.lane.b32.xlu0 %v5963, 32
  %v6003 = vpop.permute.xlu0 %6002
  %6004 = vrot.lane.b32.xlu0 %v5964, 32
  %v6005 = vpop.permute.xlu0 %6004
  %6006 = vrot.lane.b32.xlu0 %v5965, 32
  %v6007 = vpop.permute.xlu0 %6006
  %6008 = vrot.lane.b32.xlu0 %v5966, 32
  %v6009 = vpop.permute.xlu0 %6008
  %6010 = vrot.lane.b32.xlu0 %v5967, 32
  %v6011 = vpop.permute.xlu0 %6010
  %6012 = vrot.lane.b32.xlu0 %v5968, 32
  %v6013 = vpop.permute.xlu0 %6012
  %6014 = vrot.lane.b32.xlu0 %v5969, 32
  %v6015 = vpop.permute.xlu0 %6014
  %6016 = vrot.lane.b32.xlu0 %v5970, 32
  %v6017 = vpop.permute.xlu0 %6016
  %6018 = vrot.lane.b32.xlu0 %v5971, 32
  %v6019 = vpop.permute.xlu0 %6018
  %vm6036 = vcmask 326912
  %6037 = vst.msk [vmem:[#allocation7] sm:$0xff] %vm6036, %v5989
  %6038 = vst.msk [vmem:[#allocation7 + $0x8] sm:$0xff] %vm6036, %v5991
  %6039 = vst.msk [vmem:[#allocation7 + $0x10] sm:$0xff] %vm6036, %v5993
  %6040 = vst.msk [vmem:[#allocation7 + $0x18] sm:$0xff] %vm6036, %v5995
  %6041 = vst.msk [vmem:[#allocation7 + $0x20] sm:$0xff] %vm6036, %v5997
  %6042 = vst.msk [vmem:[#allocation7 + $0x28] sm:$0xff] %vm6036, %v5999
  %6043 = vst.msk [vmem:[#allocation7 + $0x30] sm:$0xff] %vm6036, %v6001
  %6044 = vst.msk [vmem:[#allocation7 + $0x38] sm:$0xff] %vm6036, %v6003
  %6045 = vst.msk [vmem:[#allocation7 + $0x40] sm:$0xff] %vm6036, %v6005
  %6046 = vst.msk [vmem:[#allocation7 + $0x48] sm:$0xff] %vm6036, %v6007
  %6047 = vst.msk [vmem:[#allocation7 + $0x50] sm:$0xff] %vm6036, %v6009
  %6048 = vst.msk [vmem:[#allocation7 + $0x58] sm:$0xff] %vm6036, %v6011
  %6049 = vst.msk [vmem:[#allocation7 + $0x60] sm:$0xff] %vm6036, %v6013
  %6050 = vst.msk [vmem:[#allocation7 + $0x68] sm:$0xff] %vm6036, %v6015
  %6051 = vst.msk [vmem:[#allocation7 + $0x70] sm:$0xff] %vm6036, %v6017
  %6052 = vst.msk [vmem:[#allocation7 + $0x78] sm:$0xff] %vm6036, %v6019
  %v6053 = vld [vmem:[%s5526 + $0x2] sm:$0xff]
  %v6054 = vld [vmem:[%s5526 + $0x12] sm:$0xff]
  %v6055 = vld [vmem:[%s5526 + $0x22] sm:$0xff]
  %v6056 = vld [vmem:[%s5526 + $0x32] sm:$0xff]
  %v6057 = vld [vmem:[%s5526 + $0x42] sm:$0xff]
  %v6058 = vld [vmem:[%s5526 + $0x52] sm:$0xff]
  %v6059 = vld [vmem:[%s5526 + $0x62] sm:$0xff]
  %v6060 = vld [vmem:[%s5526 + $0x72] sm:$0xff]
  %v6061 = vld [vmem:[%s5526 + $0xa2] sm:$0xff]
  %v6062 = vld [vmem:[%s5526 + $0xb2] sm:$0xff]
  %v6063 = vld [vmem:[%s5526 + $0xc2] sm:$0xff]
  %v6064 = vld [vmem:[%s5526 + $0xd2] sm:$0xff]
  %v6065 = vld [vmem:[%s5526 + $0xe2] sm:$0xff]
  %v6066 = vld [vmem:[%s5526 + $0xf2] sm:$0xff]
  %v6067 = vld [vmem:[%s5526 + $0x102] sm:$0xff]
  %v6068 = vld [vmem:[%s5526 + $0x112] sm:$0xff]
  %6085 = vrot.lane.b32.xlu0 %v6053, 40
  %v6086 = vpop.permute.xlu0 %6085
  %6087 = vrot.lane.b32.xlu0 %v6054, 40
  %v6088 = vpop.permute.xlu0 %6087
  %6089 = vrot.lane.b32.xlu0 %v6055, 40
  %v6090 = vpop.permute.xlu0 %6089
  %6091 = vrot.lane.b32.xlu0 %v6056, 40
  %v6092 = vpop.permute.xlu0 %6091
  %6093 = vrot.lane.b32.xlu0 %v6057, 40
  %v6094 = vpop.permute.xlu0 %6093
  %6095 = vrot.lane.b32.xlu0 %v6058, 40
  %v6096 = vpop.permute.xlu0 %6095
  %6097 = vrot.lane.b32.xlu0 %v6059, 40
  %v6098 = vpop.permute.xlu0 %6097
  %6099 = vrot.lane.b32.xlu0 %v6060, 40
  %v6100 = vpop.permute.xlu0 %6099
  %6101 = vrot.lane.b32.xlu0 %v6061, 40
  %v6102 = vpop.permute.xlu0 %6101
  %6103 = vrot.lane.b32.xlu0 %v6062, 40
  %v6104 = vpop.permute.xlu0 %6103
  %6105 = vrot.lane.b32.xlu0 %v6063, 40
  %v6106 = vpop.permute.xlu0 %6105
  %6107 = vrot.lane.b32.xlu0 %v6064, 40
  %v6108 = vpop.permute.xlu0 %6107
  %6109 = vrot.lane.b32.xlu0 %v6065, 40
  %v6110 = vpop.permute.xlu0 %6109
  %6111 = vrot.lane.b32.xlu0 %v6066, 40
  %v6112 = vpop.permute.xlu0 %6111
  %6113 = vrot.lane.b32.xlu0 %v6067, 40
  %v6114 = vpop.permute.xlu0 %6113
  %6115 = vrot.lane.b32.xlu0 %v6068, 40
  %v6116 = vpop.permute.xlu0 %6115
  %vm6133 = vcmask 392512
  %6134 = vst.msk [vmem:[#allocation7] sm:$0xff] %vm6133, %v6086
  %6135 = vst.msk [vmem:[#allocation7 + $0x8] sm:$0xff] %vm6133, %v6088
  %6136 = vst.msk [vmem:[#allocation7 + $0x10] sm:$0xff] %vm6133, %v6090
  %6137 = vst.msk [vmem:[#allocation7 + $0x18] sm:$0xff] %vm6133, %v6092
  %6138 = vst.msk [vmem:[#allocation7 + $0x20] sm:$0xff] %vm6133, %v6094
  %6139 = vst.msk [vmem:[#allocation7 + $0x28] sm:$0xff] %vm6133, %v6096
  %6140 = vst.msk [vmem:[#allocation7 + $0x30] sm:$0xff] %vm6133, %v6098
  %6141 = vst.msk [vmem:[#allocation7 + $0x38] sm:$0xff] %vm6133, %v6100
  %6142 = vst.msk [vmem:[#allocation7 + $0x40] sm:$0xff] %vm6133, %v6102
  %6143 = vst.msk [vmem:[#allocation7 + $0x48] sm:$0xff] %vm6133, %v6104
  %6144 = vst.msk [vmem:[#allocation7 + $0x50] sm:$0xff] %vm6133, %v6106
  %6145 = vst.msk [vmem:[#allocation7 + $0x58] sm:$0xff] %vm6133, %v6108
  %6146 = vst.msk [vmem:[#allocation7 + $0x60] sm:$0xff] %vm6133, %v6110
  %6147 = vst.msk [vmem:[#allocation7 + $0x68] sm:$0xff] %vm6133, %v6112
  %6148 = vst.msk [vmem:[#allocation7 + $0x70] sm:$0xff] %vm6133, %v6114
  %6149 = vst.msk [vmem:[#allocation7 + $0x78] sm:$0xff] %vm6133, %v6116
  %v6150 = vld [vmem:[%s5533] sm:$0xff]
  %v6151 = vld [vmem:[%s5533 + $0x10] sm:$0xff]
  %v6152 = vld [vmem:[%s5533 + $0x20] sm:$0xff]
  %v6153 = vld [vmem:[%s5533 + $0x30] sm:$0xff]
  %v6154 = vld [vmem:[%s5533 + $0x40] sm:$0xff]
  %v6155 = vld [vmem:[%s5533 + $0x50] sm:$0xff]
  %v6156 = vld [vmem:[%s5533 + $0x60] sm:$0xff]
  %v6157 = vld [vmem:[%s5533 + $0x70] sm:$0xff]
  %v6158 = vld [vmem:[%s5533 + $0xa0] sm:$0xff]
  %v6159 = vld [vmem:[%s5533 + $0xb0] sm:$0xff]
  %v6160 = vld [vmem:[%s5533 + $0xc0] sm:$0xff]
  %v6161 = vld [vmem:[%s5533 + $0xd0] sm:$0xff]
  %v6162 = vld [vmem:[%s5533 + $0xe0] sm:$0xff]
  %v6163 = vld [vmem:[%s5533 + $0xf0] sm:$0xff]
  %v6164 = vld [vmem:[%s5533 + $0x100] sm:$0xff]
  %v6165 = vld [vmem:[%s5533 + $0x110] sm:$0xff]
  %6182 = vrot.lane.b32.xlu0 %v6150, 48
  %v6183 = vpop.permute.xlu0 %6182
  %6184 = vrot.lane.b32.xlu0 %v6151, 48
  %v6185 = vpop.permute.xlu0 %6184
  %6186 = vrot.lane.b32.xlu0 %v6152, 48
  %v6187 = vpop.permute.xlu0 %6186
  %6188 = vrot.lane.b32.xlu0 %v6153, 48
  %v6189 = vpop.permute.xlu0 %6188
  %6190 = vrot.lane.b32.xlu0 %v6154, 48
  %v6191 = vpop.permute.xlu0 %6190
  %6192 = vrot.lane.b32.xlu0 %v6155, 48
  %v6193 = vpop.permute.xlu0 %6192
  %6194 = vrot.lane.b32.xlu0 %v6156, 48
  %v6195 = vpop.permute.xlu0 %6194
  %6196 = vrot.lane.b32.xlu0 %v6157, 48
  %v6197 = vpop.permute.xlu0 %6196
  %6198 = vrot.lane.b32.xlu0 %v6158, 48
  %v6199 = vpop.permute.xlu0 %6198
  %6200 = vrot.lane.b32.xlu0 %v6159, 48
  %v6201 = vpop.permute.xlu0 %6200
  %6202 = vrot.lane.b32.xlu0 %v6160, 48
  %v6203 = vpop.permute.xlu0 %6202
  %6204 = vrot.lane.b32.xlu0 %v6161, 48
  %v6205 = vpop.permute.xlu0 %6204
  %6206 = vrot.lane.b32.xlu0 %v6162, 48
  %v6207 = vpop.permute.xlu0 %6206
  %6208 = vrot.lane.b32.xlu0 %v6163, 48
  %v6209 = vpop.permute.xlu0 %6208
  %6210 = vrot.lane.b32.xlu0 %v6164, 48
  %v6211 = vpop.permute.xlu0 %6210
  %6212 = vrot.lane.b32.xlu0 %v6165, 48
  %v6213 = vpop.permute.xlu0 %6212
  %vm6230 = vcmask 458112
  %6231 = vst.msk [vmem:[#allocation7] sm:$0xff] %vm6230, %v6183
  %6232 = vst.msk [vmem:[#allocation7 + $0x8] sm:$0xff] %vm6230, %v6185
  %6233 = vst.msk [vmem:[#allocation7 + $0x10] sm:$0xff] %vm6230, %v6187
  %6234 = vst.msk [vmem:[#allocation7 + $0x18] sm:$0xff] %vm6230, %v6189
  %6235 = vst.msk [vmem:[#allocation7 + $0x20] sm:$0xff] %vm6230, %v6191
  %6236 = vst.msk [vmem:[#allocation7 + $0x28] sm:$0xff] %vm6230, %v6193
  %6237 = vst.msk [vmem:[#allocation7 + $0x30] sm:$0xff] %vm6230, %v6195
  %6238 = vst.msk [vmem:[#allocation7 + $0x38] sm:$0xff] %vm6230, %v6197
  %6239 = vst.msk [vmem:[#allocation7 + $0x40] sm:$0xff] %vm6230, %v6199
  %6240 = vst.msk [vmem:[#allocation7 + $0x48] sm:$0xff] %vm6230, %v6201
  %6241 = vst.msk [vmem:[#allocation7 + $0x50] sm:$0xff] %vm6230, %v6203
  %6242 = vst.msk [vmem:[#allocation7 + $0x58] sm:$0xff] %vm6230, %v6205
  %6243 = vst.msk [vmem:[#allocation7 + $0x60] sm:$0xff] %vm6230, %v6207
  %6244 = vst.msk [vmem:[#allocation7 + $0x68] sm:$0xff] %vm6230, %v6209
  %6245 = vst.msk [vmem:[#allocation7 + $0x70] sm:$0xff] %vm6230, %v6211
  %6246 = vst.msk [vmem:[#allocation7 + $0x78] sm:$0xff] %vm6230, %v6213
  %v6247 = vld [vmem:[%s5533 + $0x1] sm:$0xff]
  %v6248 = vld [vmem:[%s5533 + $0x11] sm:$0xff]
  %v6249 = vld [vmem:[%s5533 + $0x21] sm:$0xff]
  %v6250 = vld [vmem:[%s5533 + $0x31] sm:$0xff]
  %v6251 = vld [vmem:[%s5533 + $0x41] sm:$0xff]
  %v6252 = vld [vmem:[%s5533 + $0x51] sm:$0xff]
  %v6253 = vld [vmem:[%s5533 + $0x61] sm:$0xff]
  %v6254 = vld [vmem:[%s5533 + $0x71] sm:$0xff]
  %v6255 = vld [vmem:[%s5533 + $0xa1] sm:$0xff]
  %v6256 = vld [vmem:[%s5533 + $0xb1] sm:$0xff]
  %v6257 = vld [vmem:[%s5533 + $0xc1] sm:$0xff]
  %v6258 = vld [vmem:[%s5533 + $0xd1] sm:$0xff]
  %v6259 = vld [vmem:[%s5533 + $0xe1] sm:$0xff]
  %v6260 = vld [vmem:[%s5533 + $0xf1] sm:$0xff]
  %v6261 = vld [vmem:[%s5533 + $0x101] sm:$0xff]
  %v6262 = vld [vmem:[%s5533 + $0x111] sm:$0xff]
  %6279 = vrot.lane.b32.xlu0 %v6247, 56
  %v6280 = vpop.permute.xlu0 %6279
  %6281 = vrot.lane.b32.xlu0 %v6248, 56
  %v6282 = vpop.permute.xlu0 %6281
  %6283 = vrot.lane.b32.xlu0 %v6249, 56
  %v6284 = vpop.permute.xlu0 %6283
  %6285 = vrot.lane.b32.xlu0 %v6250, 56
  %v6286 = vpop.permute.xlu0 %6285
  %6287 = vrot.lane.b32.xlu0 %v6251, 56
  %v6288 = vpop.permute.xlu0 %6287
  %6289 = vrot.lane.b32.xlu0 %v6252, 56
  %v6290 = vpop.permute.xlu0 %6289
  %6291 = vrot.lane.b32.xlu0 %v6253, 56
  %v6292 = vpop.permute.xlu0 %6291
  %6293 = vrot.lane.b32.xlu0 %v6254, 56
  %v6294 = vpop.permute.xlu0 %6293
  %6295 = vrot.lane.b32.xlu0 %v6255, 56
  %v6296 = vpop.permute.xlu0 %6295
  %6297 = vrot.lane.b32.xlu0 %v6256, 56
  %v6298 = vpop.permute.xlu0 %6297
  %6299 = vrot.lane.b32.xlu0 %v6257, 56
  %v6300 = vpop.permute.xlu0 %6299
  %6301 = vrot.lane.b32.xlu0 %v6258, 56
  %v6302 = vpop.permute.xlu0 %6301
  %6303 = vrot.lane.b32.xlu0 %v6259, 56
  %v6304 = vpop.permute.xlu0 %6303
  %6305 = vrot.lane.b32.xlu0 %v6260, 56
  %v6306 = vpop.permute.xlu0 %6305
  %6307 = vrot.lane.b32.xlu0 %v6261, 56
  %v6308 = vpop.permute.xlu0 %6307
  %6309 = vrot.lane.b32.xlu0 %v6262, 56
  %v6310 = vpop.permute.xlu0 %6309
  %vm6327 = vcmask 523712
  %6328 = vst.msk [vmem:[#allocation7] sm:$0xff] %vm6327, %v6280
  %6329 = vst.msk [vmem:[#allocation7 + $0x8] sm:$0xff] %vm6327, %v6282
  %6330 = vst.msk [vmem:[#allocation7 + $0x10] sm:$0xff] %vm6327, %v6284
  %6331 = vst.msk [vmem:[#allocation7 + $0x18] sm:$0xff] %vm6327, %v6286
  %6332 = vst.msk [vmem:[#allocation7 + $0x20] sm:$0xff] %vm6327, %v6288
  %6333 = vst.msk [vmem:[#allocation7 + $0x28] sm:$0xff] %vm6327, %v6290
  %6334 = vst.msk [vmem:[#allocation7 + $0x30] sm:$0xff] %vm6327, %v6292
  %6335 = vst.msk [vmem:[#allocation7 + $0x38] sm:$0xff] %vm6327, %v6294
  %6336 = vst.msk [vmem:[#allocation7 + $0x40] sm:$0xff] %vm6327, %v6296
  %6337 = vst.msk [vmem:[#allocation7 + $0x48] sm:$0xff] %vm6327, %v6298
  %6338 = vst.msk [vmem:[#allocation7 + $0x50] sm:$0xff] %vm6327, %v6300
  %6339 = vst.msk [vmem:[#allocation7 + $0x58] sm:$0xff] %vm6327, %v6302
  %6340 = vst.msk [vmem:[#allocation7 + $0x60] sm:$0xff] %vm6327, %v6304
  %6341 = vst.msk [vmem:[#allocation7 + $0x68] sm:$0xff] %vm6327, %v6306
  %6342 = vst.msk [vmem:[#allocation7 + $0x70] sm:$0xff] %vm6327, %v6308
  %6343 = vst.msk [vmem:[#allocation7 + $0x78] sm:$0xff] %vm6327, %v6310
  %v6344 = vld [vmem:[%s5533 + $0x2] sm:$0xff]
  %v6345 = vld [vmem:[%s5533 + $0x12] sm:$0xff]
  %v6346 = vld [vmem:[%s5533 + $0x22] sm:$0xff]
  %v6347 = vld [vmem:[%s5533 + $0x32] sm:$0xff]
  %v6348 = vld [vmem:[%s5533 + $0x42] sm:$0xff]
  %v6349 = vld [vmem:[%s5533 + $0x52] sm:$0xff]
  %v6350 = vld [vmem:[%s5533 + $0x62] sm:$0xff]
  %v6351 = vld [vmem:[%s5533 + $0x72] sm:$0xff]
  %v6352 = vld [vmem:[%s5533 + $0xa2] sm:$0xff]
  %v6353 = vld [vmem:[%s5533 + $0xb2] sm:$0xff]
  %v6354 = vld [vmem:[%s5533 + $0xc2] sm:$0xff]
  %v6355 = vld [vmem:[%s5533 + $0xd2] sm:$0xff]
  %v6356 = vld [vmem:[%s5533 + $0xe2] sm:$0xff]
  %v6357 = vld [vmem:[%s5533 + $0xf2] sm:$0xff]
  %v6358 = vld [vmem:[%s5533 + $0x102] sm:$0xff]
  %v6359 = vld [vmem:[%s5533 + $0x112] sm:$0xff]
  %6376 = vrot.lane.b32.xlu0 %v6344, 64
  %v6377 = vpop.permute.xlu0 %6376
  %6378 = vrot.lane.b32.xlu0 %v6345, 64
  %v6379 = vpop.permute.xlu0 %6378
  %6380 = vrot.lane.b32.xlu0 %v6346, 64
  %v6381 = vpop.permute.xlu0 %6380
  %6382 = vrot.lane.b32.xlu0 %v6347, 64
  %v6383 = vpop.permute.xlu0 %6382
  %6384 = vrot.lane.b32.xlu0 %v6348, 64
  %v6385 = vpop.permute.xlu0 %6384
  %6386 = vrot.lane.b32.xlu0 %v6349, 64
  %v6387 = vpop.permute.xlu0 %6386
  %6388 = vrot.lane.b32.xlu0 %v6350, 64
  %v6389 = vpop.permute.xlu0 %6388
  %6390 = vrot.lane.b32.xlu0 %v6351, 64
  %v6391 = vpop.permute.xlu0 %6390
  %6392 = vrot.lane.b32.xlu0 %v6352, 64
  %v6393 = vpop.permute.xlu0 %6392
  %6394 = vrot.lane.b32.xlu0 %v6353, 64
  %v6395 = vpop.permute.xlu0 %6394
  %6396 = vrot.lane.b32.xlu0 %v6354, 64
  %v6397 = vpop.permute.xlu0 %6396
  %6398 = vrot.lane.b32.xlu0 %v6355, 64
  %v6399 = vpop.permute.xlu0 %6398
  %6400 = vrot.lane.b32.xlu0 %v6356, 64
  %v6401 = vpop.permute.xlu0 %6400
  %6402 = vrot.lane.b32.xlu0 %v6357, 64
  %v6403 = vpop.permute.xlu0 %6402
  %6404 = vrot.lane.b32.xlu0 %v6358, 64
  %v6405 = vpop.permute.xlu0 %6404
  %6406 = vrot.lane.b32.xlu0 %v6359, 64
  %v6407 = vpop.permute.xlu0 %6406
  %vm6424 = vcmask 589312
  %6425 = vst.msk [vmem:[#allocation7] sm:$0xff] %vm6424, %v6377
  %6426 = vst.msk [vmem:[#allocation7 + $0x8] sm:$0xff] %vm6424, %v6379
  %6427 = vst.msk [vmem:[#allocation7 + $0x10] sm:$0xff] %vm6424, %v6381
  %6428 = vst.msk [vmem:[#allocation7 + $0x18] sm:$0xff] %vm6424, %v6383
  %6429 = vst.msk [vmem:[#allocation7 + $0x20] sm:$0xff] %vm6424, %v6385
  %6430 = vst.msk [vmem:[#allocation7 + $0x28] sm:$0xff] %vm6424, %v6387
  %6431 = vst.msk [vmem:[#allocation7 + $0x30] sm:$0xff] %vm6424, %v6389
  %6432 = vst.msk [vmem:[#allocation7 + $0x38] sm:$0xff] %vm6424, %v6391
  %6433 = vst.msk [vmem:[#allocation7 + $0x40] sm:$0xff] %vm6424, %v6393
  %6434 = vst.msk [vmem:[#allocation7 + $0x48] sm:$0xff] %vm6424, %v6395
  %6435 = vst.msk [vmem:[#allocation7 + $0x50] sm:$0xff] %vm6424, %v6397
  %6436 = vst.msk [vmem:[#allocation7 + $0x58] sm:$0xff] %vm6424, %v6399
  %6437 = vst.msk [vmem:[#allocation7 + $0x60] sm:$0xff] %vm6424, %v6401
  %6438 = vst.msk [vmem:[#allocation7 + $0x68] sm:$0xff] %vm6424, %v6403
  %6439 = vst.msk [vmem:[#allocation7 + $0x70] sm:$0xff] %vm6424, %v6405
  %6440 = vst.msk [vmem:[#allocation7 + $0x78] sm:$0xff] %vm6424, %v6407
  %v6441 = vld [vmem:[#allocation7] sm:$0xff]
  %v6442 = vld [vmem:[#allocation7 + $0x8] sm:$0xff]
  %v6443 = vld [vmem:[#allocation7 + $0x10] sm:$0xff]
  %v6444 = vld [vmem:[#allocation7 + $0x18] sm:$0xff]
  %v6445 = vld [vmem:[#allocation7 + $0x20] sm:$0xff]
  %v6446 = vld [vmem:[#allocation7 + $0x28] sm:$0xff]
  %v6447 = vld [vmem:[#allocation7 + $0x30] sm:$0xff]
  %v6448 = vld [vmem:[#allocation7 + $0x38] sm:$0xff]
  %v6449 = vld [vmem:[#allocation7 + $0x40] sm:$0xff]
  %v6450 = vld [vmem:[#allocation7 + $0x48] sm:$0xff]
  %v6451 = vld [vmem:[#allocation7 + $0x50] sm:$0xff]
  %v6452 = vld [vmem:[#allocation7 + $0x58] sm:$0xff]
  %v6453 = vld [vmem:[#allocation7 + $0x60] sm:$0xff]
  %v6454 = vld [vmem:[#allocation7 + $0x68] sm:$0xff]
  %v6455 = vld [vmem:[#allocation7 + $0x70] sm:$0xff]
  %v6456 = vld [vmem:[#allocation7 + $0x78] sm:$0xff]
  %v6457 = vpack.c.bf16 %v6442, %v6441
  %v6458 = vpack.c.bf16 %v6444, %v6443
  %v6459 = vpack.c.bf16 %v6446, %v6445
  %v6460 = vpack.c.bf16 %v6448, %v6447
  %v6461 = vpack.c.bf16 %v6450, %v6449
  %v6462 = vpack.c.bf16 %v6452, %v6451
  %v6463 = vpack.c.bf16 %v6454, %v6453
  %v6464 = vpack.c.bf16 %v6456, %v6455
  %v6465 = vld [vmem:[%s2] sm:$0xf]
  %v6466 = vld [vmem:[%s2 + $0x4] sm:$0xf]
  %v6467 = vld [vmem:[%s2 + $0x8] sm:$0xf]
  %v6468 = vld [vmem:[%s2 + $0xc] sm:$0xf]
  %v6469 = vld [vmem:[%s2 + $0x10] sm:$0xf]
  %v6470 = vld [vmem:[%s2 + $0x14] sm:$0xf]
  %v6471 = vld [vmem:[%s2 + $0x18] sm:$0xf]
  %v6472 = vld [vmem:[%s2 + $0x1c] sm:$0xf]
  %v6473 = vld [vmem:[%s2 + $0x20] sm:$0xf]
  %v6483 = vunpack.c.l.b16 %v6465
  %v6484 = vunpack.c.l.b16 %v6466
  %v6485 = vunpack.c.l.b16 %v6467
  %v6486 = vunpack.c.l.b16 %v6468
  %v6487 = vunpack.c.l.b16 %v6469
  %v6488 = vunpack.c.l.b16 %v6470
  %v6489 = vunpack.c.l.b16 %v6471
  %v6490 = vunpack.c.l.b16 %v6472
  %v6491 = vunpack.c.l.b16 %v6473
  %v6492 = vpack.c.b16 %v6484, %v6483
  %v6493 = vpack.c.b16 %v6486, %v6485
  %v6494 = vpack.c.b16 %v6488, %v6487
  %v6495 = vpack.c.b16 %v6490, %v6489
  %v6496 = vpack.c.b16 %v6491, %v6491
  %vm6501 = vcmask 588800
  %v6503 = vsel %vm6501, %v6457, 0
  %v6506 = vsel %vm6501, %v6458, 0
  %v6509 = vsel %vm6501, %v6459, 0
  %v6512 = vsel %vm6501, %v6460, 0
  %v6515 = vsel %vm6501, %v6461, 0
  %v6518 = vsel %vm6501, %v6462, 0
  %v6521 = vsel %vm6501, %v6463, 0
  %v6524 = vsel %vm6501, %v6464, 0
  %vm6526 = vcmask 1043456
  %v6528 = vsel %vm6526, %v6496, 0
  %6530 = vmatpush.bf16.msra.mxu0 0
  %6531 = vmatpush.bf16.msra.mxu0 0
  %6532 = vmatpush.bf16.msra.mxu0 0
  %6533 = vmatpush.bf16.msra.mxu0 %v6528
  %6534 = vmatpush.bf16.msra.mxu0 %v6495
  %6535 = vmatpush.bf16.msra.mxu0 %v6494
  %6536 = vmatpush.bf16.msra.mxu0 %v6493
  %6537 = vmatpush.bf16.msra.mxu0 %v6492
  %6538 = vmatmul.bf16.gmra.mxu0 %v6503
  %v6539 = vpop.f32.mrf.mxu0
  %v6540 = vadd.f32 0.0, %v6539
  %v6541 = vpop.f32.mrf.mxu0
  %v6542 = vadd.f32 0.0, %v6541
  %6543 = vmatmul.bf16.gmra.mxu0 %v6506
  %v6544 = vpop.f32.mrf.mxu0
  %v6545 = vadd.f32 0.0, %v6544
  %v6546 = vpop.f32.mrf.mxu0
  %v6547 = vadd.f32 0.0, %v6546
  %6548 = vmatmul.bf16.gmra.mxu0 %v6509
  %v6549 = vpop.f32.mrf.mxu0
  %v6550 = vadd.f32 0.0, %v6549
  %v6551 = vpop.f32.mrf.mxu0
  %v6552 = vadd.f32 0.0, %v6551
  %6553 = vmatmul.bf16.gmra.mxu0 %v6512
  %v6554 = vpop.f32.mrf.mxu0
  %v6555 = vadd.f32 0.0, %v6554
  %v6556 = vpop.f32.mrf.mxu0
  %v6557 = vadd.f32 0.0, %v6556
  %6558 = vmatmul.bf16.gmra.mxu0 %v6515
  %v6559 = vpop.f32.mrf.mxu0
  %v6560 = vadd.f32 0.0, %v6559
  %v6561 = vpop.f32.mrf.mxu0
  %v6562 = vadd.f32 0.0, %v6561
  %6563 = vmatmul.bf16.gmra.mxu0 %v6518
  %v6564 = vpop.f32.mrf.mxu0
  %v6565 = vadd.f32 0.0, %v6564
  %v6566 = vpop.f32.mrf.mxu0
  %v6567 = vadd.f32 0.0, %v6566
  %6568 = vmatmul.bf16.gmra.mxu0 %v6521
  %v6569 = vpop.f32.mrf.mxu0
  %v6570 = vadd.f32 0.0, %v6569
  %v6571 = vpop.f32.mrf.mxu0
  %v6572 = vadd.f32 0.0, %v6571
  %6573 = vmatmul.bf16.gmra.mxu0 %v6524
  %v6574 = vpop.f32.mrf.mxu0
  %v6575 = vadd.f32 0.0, %v6574
  %v6576 = vpop.f32.mrf.mxu0
  %v6577 = vadd.f32 0.0, %v6576
  %6578 = vdwg.mxu0
  %vm6579 = vcmask 130048
  %v6580 = vsel %vm6579, %v6540, 0.0
  %v6581 = vsel %vm6579, %v6542, 0.0
  %v6582 = vadd.f32 %v6580, %v6581
  %v6583 = vsel %vm6579, %v6545, 0.0
  %v6584 = vadd.f32 %v6582, %v6583
  %v6585 = vsel %vm6579, %v6547, 0.0
  %v6586 = vadd.f32 %v6584, %v6585
  %v6587 = vsel %vm6579, %v6550, 0.0
  %v6588 = vadd.f32 %v6586, %v6587
  %v6589 = vsel %vm6579, %v6552, 0.0
  %v6590 = vadd.f32 %v6588, %v6589
  %v6591 = vsel %vm6579, %v6555, 0.0
  %v6592 = vadd.f32 %v6590, %v6591
  %v6593 = vsel %vm6579, %v6557, 0.0
  %v6594 = vadd.f32 %v6592, %v6593
  %v6595 = vsel %vm6579, %v6560, 0.0
  %v6596 = vadd.f32 %v6594, %v6595
  %v6597 = vsel %vm6579, %v6562, 0.0
  %v6598 = vadd.f32 %v6596, %v6597
  %v6599 = vsel %vm6579, %v6565, 0.0
  %v6600 = vadd.f32 %v6598, %v6599
  %v6601 = vsel %vm6579, %v6567, 0.0
  %v6602 = vadd.f32 %v6600, %v6601
  %v6603 = vsel %vm6579, %v6570, 0.0
  %v6604 = vadd.f32 %v6602, %v6603
  %v6605 = vsel %vm6579, %v6572, 0.0
  %v6606 = vadd.f32 %v6604, %v6605
  %v6607 = vsel %vm6579, %v6575, 0.0
  %v6608 = vadd.f32 %v6606, %v6607
  %v6609 = vsel %vm6579, %v6577, 0.0
  %v6610 = vadd.f32 %v6608, %v6609
  %v6611 = vrot.slane %v6610, 4
  %v6612 = vadd.f32 %v6610, %v6611
  %v6613 = vrot.slane %v6612, 2
  %v6614 = vadd.f32 %v6612, %v6613
  %v6615 = vrot.slane %v6614, 1
  %v6616 = vadd.f32 %v6614, %v6615
  %v6617 = vrcp.pop 128.0
  %v6618 = vmul.f32 128.0, %v6617
  %v6619 = vsub.f32 1.0, %v6618
  %v6620 = vmul.f32 %v6617, %v6619
  %v6621 = vadd.f32 %v6617, %v6620
  %vm6622 = vweird.f32 %v6617
  %v6623 = vsel %vm6622, %v6617, %v6621
  %v6624 = vmul.f32 %v6616, %v6623
  %v6625 = vmul.f32 %v6540, %v6540
  %v6626 = vmul.f32 %v6542, %v6542
  %v6627 = vmul.f32 %v6545, %v6545
  %v6628 = vmul.f32 %v6547, %v6547
  %v6629 = vmul.f32 %v6550, %v6550
  %v6630 = vmul.f32 %v6552, %v6552
  %v6631 = vmul.f32 %v6555, %v6555
  %v6632 = vmul.f32 %v6557, %v6557
  %v6633 = vmul.f32 %v6560, %v6560
  %v6634 = vmul.f32 %v6562, %v6562
  %v6635 = vmul.f32 %v6565, %v6565
  %v6636 = vmul.f32 %v6567, %v6567
  %v6637 = vmul.f32 %v6570, %v6570
  %v6638 = vmul.f32 %v6572, %v6572
  %v6639 = vmul.f32 %v6575, %v6575
  %v6640 = vmul.f32 %v6577, %v6577
  %v6641 = vsel %vm6579, %v6625, 0.0
  %v6642 = vsel %vm6579, %v6626, 0.0
  %v6643 = vadd.f32 %v6641, %v6642
  %v6644 = vsel %vm6579, %v6627, 0.0
  %v6645 = vadd.f32 %v6643, %v6644
  %v6646 = vsel %vm6579, %v6628, 0.0
  %v6647 = vadd.f32 %v6645, %v6646
  %v6648 = vsel %vm6579, %v6629, 0.0
  %v6649 = vadd.f32 %v6647, %v6648
  %v6650 = vsel %vm6579, %v6630, 0.0
  %v6651 = vadd.f32 %v6649, %v6650
  %v6652 = vsel %vm6579, %v6631, 0.0
  %v6653 = vadd.f32 %v6651, %v6652
  %v6654 = vsel %vm6579, %v6632, 0.0
  %v6655 = vadd.f32 %v6653, %v6654
  %v6656 = vsel %vm6579, %v6633, 0.0
  %v6657 = vadd.f32 %v6655, %v6656
  %v6658 = vsel %vm6579, %v6634, 0.0
  %v6659 = vadd.f32 %v6657, %v6658
  %v6660 = vsel %vm6579, %v6635, 0.0
  %v6661 = vadd.f32 %v6659, %v6660
  %v6662 = vsel %vm6579, %v6636, 0.0
  %v6663 = vadd.f32 %v6661, %v6662
  %v6664 = vsel %vm6579, %v6637, 0.0
  %v6665 = vadd.f32 %v6663, %v6664
  %v6666 = vsel %vm6579, %v6638, 0.0
  %v6667 = vadd.f32 %v6665, %v6666
  %v6668 = vsel %vm6579, %v6639, 0.0
  %v6669 = vadd.f32 %v6667, %v6668
  %v6670 = vsel %vm6579, %v6640, 0.0
  %v6671 = vadd.f32 %v6669, %v6670
  %v6672 = vrot.slane %v6671, 4
  %v6673 = vadd.f32 %v6671, %v6672
  %v6674 = vrot.slane %v6673, 2
  %v6675 = vadd.f32 %v6673, %v6674
  %v6676 = vrot.slane %v6675, 1
  %v6677 = vadd.f32 %v6675, %v6676
  %v6678 = vmul.f32 %v6677, %v6623
  %v6679 = vmul.f32 %v6624, %v6624
  %v6680 = vsub.f32 %v6678, %v6679
  %v6681 = vsub.f32 %v6540, %v6624
  %v6682 = vsub.f32 %v6542, %v6624
  %v6683 = vsub.f32 %v6545, %v6624
  %v6684 = vsub.f32 %v6547, %v6624
  %v6685 = vsub.f32 %v6550, %v6624
  %v6686 = vsub.f32 %v6552, %v6624
  %v6687 = vsub.f32 %v6555, %v6624
  %v6688 = vsub.f32 %v6557, %v6624
  %v6689 = vsub.f32 %v6560, %v6624
  %v6690 = vsub.f32 %v6562, %v6624
  %v6691 = vsub.f32 %v6565, %v6624
  %v6692 = vsub.f32 %v6567, %v6624
  %v6693 = vsub.f32 %v6570, %v6624
  %v6694 = vsub.f32 %v6572, %v6624
  %v6695 = vsub.f32 %v6575, %v6624
  %v6696 = vsub.f32 %v6577, %v6624
  %v6697 = vadd.f32 %v6680, 1e-05
  %v6698 = vrsqrt.pop %v6697
  %v6699 = vmul.f32 %v6698, %v6697
  %v6700 = vmul.f32 %v6699, %v6698
  %v6701 = vmul.f32 0.5, %v6700
  %v6702 = vsub.f32 1.5, %v6701
  %v6703 = vmul.f32 %v6698, %v6702
  %vm6704 = vweird.f32 %v6697
  %vm6705 = vweird.f32 %v6698
  %vm6706 = vmor %vm6704, %vm6705
  %v6707 = vsel %vm6706, %v6698, %v6703
  %v6708 = vmul.f32 %v6681, %v6707
  %v6709 = vmul.f32 %v6682, %v6707
  %v6710 = vmul.f32 %v6683, %v6707
  %v6711 = vmul.f32 %v6684, %v6707
  %v6712 = vmul.f32 %v6685, %v6707
  %v6713 = vmul.f32 %v6686, %v6707
  %v6714 = vmul.f32 %v6687, %v6707
  %v6715 = vmul.f32 %v6688, %v6707
  %v6716 = vmul.f32 %v6689, %v6707
  %v6717 = vmul.f32 %v6690, %v6707
  %v6718 = vmul.f32 %v6691, %v6707
  %v6719 = vmul.f32 %v6692, %v6707
  %v6720 = vmul.f32 %v6693, %v6707
  %v6721 = vmul.f32 %v6694, %v6707
  %v6722 = vmul.f32 %v6695, %v6707
  %v6723 = vmul.f32 %v6696, %v6707
  %v6724 = vmax.f32 %v6708, 0.0
  %v6725 = vmax.f32 %v6709, 0.0
  %v6726 = vmax.f32 %v6710, 0.0
  %v6727 = vmax.f32 %v6711, 0.0
  %v6728 = vmax.f32 %v6712, 0.0
  %v6729 = vmax.f32 %v6713, 0.0
  %v6730 = vmax.f32 %v6714, 0.0
  %v6731 = vmax.f32 %v6715, 0.0
  %v6732 = vmax.f32 %v6716, 0.0
  %v6733 = vmax.f32 %v6717, 0.0
  %v6734 = vmax.f32 %v6718, 0.0
  %v6735 = vmax.f32 %v6719, 0.0
  %v6736 = vmax.f32 %v6720, 0.0
  %v6737 = vmax.f32 %v6721, 0.0
  %v6738 = vmax.f32 %v6722, 0.0
  %v6739 = vmax.f32 %v6723, 0.0
  %6740 = vst.msk [vmem:[#allocation8] sm:$0xff] %vm6579, %v6724
  %6741 = vst.msk [vmem:[#allocation8 + $0x8] sm:$0xff] %vm6579, %v6725
  %6742 = vst.msk [vmem:[#allocation8 + $0x10] sm:$0xff] %vm6579, %v6726
  %6743 = vst.msk [vmem:[#allocation8 + $0x18] sm:$0xff] %vm6579, %v6727
  %6744 = vst.msk [vmem:[#allocation8 + $0x20] sm:$0xff] %vm6579, %v6728
  %6745 = vst.msk [vmem:[#allocation8 + $0x28] sm:$0xff] %vm6579, %v6729
  %6746 = vst.msk [vmem:[#allocation8 + $0x30] sm:$0xff] %vm6579, %v6730
  %6747 = vst.msk [vmem:[#allocation8 + $0x38] sm:$0xff] %vm6579, %v6731
  %6748 = vst.msk [vmem:[#allocation8 + $0x40] sm:$0xff] %vm6579, %v6732
  %6749 = vst.msk [vmem:[#allocation8 + $0x48] sm:$0xff] %vm6579, %v6733
  %6750 = vst.msk [vmem:[#allocation8 + $0x50] sm:$0xff] %vm6579, %v6734
  %6751 = vst.msk [vmem:[#allocation8 + $0x58] sm:$0xff] %vm6579, %v6735
  %6752 = vst.msk [vmem:[#allocation8 + $0x60] sm:$0xff] %vm6579, %v6736
  %6753 = vst.msk [vmem:[#allocation8 + $0x68] sm:$0xff] %vm6579, %v6737
  %6754 = vst.msk [vmem:[#allocation8 + $0x70] sm:$0xff] %vm6579, %v6738
  %6755 = vst.msk [vmem:[#allocation8 + $0x78] sm:$0xff] %vm6579, %v6739
  %v6756 = vld [vmem:[#allocation8] sm:$0x1]
  %v6757 = vld [vmem:[#allocation8 + $0x8] sm:$0x1]
  %v6758 = vld [vmem:[#allocation8 + $0x10] sm:$0x1]
  %v6759 = vld [vmem:[#allocation8 + $0x18] sm:$0x1]
  %v6760 = vld [vmem:[#allocation8 + $0x20] sm:$0x1]
  %v6761 = vld [vmem:[#allocation8 + $0x28] sm:$0x1]
  %v6762 = vld [vmem:[#allocation8 + $0x30] sm:$0x1]
  %v6763 = vld [vmem:[#allocation8 + $0x38] sm:$0x1]
  %v6764 = vld [vmem:[#allocation8 + $0x40] sm:$0x1]
  %v6765 = vld [vmem:[#allocation8 + $0x48] sm:$0x1]
  %v6766 = vld [vmem:[#allocation8 + $0x50] sm:$0x1]
  %v6767 = vld [vmem:[#allocation8 + $0x58] sm:$0x1]
  %v6768 = vld [vmem:[#allocation8 + $0x60] sm:$0x1]
  %v6769 = vld [vmem:[#allocation8 + $0x68] sm:$0x1]
  %v6770 = vld [vmem:[#allocation8 + $0x70] sm:$0x1]
  %v6771 = vld [vmem:[#allocation8 + $0x78] sm:$0x1]
  %v6772 = vld [vmem:[#allocation8 + $0x1] sm:$0x1]
  %v6773 = vld [vmem:[#allocation8 + $0x9] sm:$0x1]
  %v6774 = vld [vmem:[#allocation8 + $0x11] sm:$0x1]
  %v6775 = vld [vmem:[#allocation8 + $0x19] sm:$0x1]
  %v6776 = vld [vmem:[#allocation8 + $0x21] sm:$0x1]
  %v6777 = vld [vmem:[#allocation8 + $0x29] sm:$0x1]
  %v6778 = vld [vmem:[#allocation8 + $0x31] sm:$0x1]
  %v6779 = vld [vmem:[#allocation8 + $0x39] sm:$0x1]
  %v6780 = vld [vmem:[#allocation8 + $0x41] sm:$0x1]
  %v6781 = vld [vmem:[#allocation8 + $0x49] sm:$0x1]
  %v6782 = vld [vmem:[#allocation8 + $0x51] sm:$0x1]
  %v6783 = vld [vmem:[#allocation8 + $0x59] sm:$0x1]
  %v6784 = vld [vmem:[#allocation8 + $0x61] sm:$0x1]
  %v6785 = vld [vmem:[#allocation8 + $0x69] sm:$0x1]
  %v6786 = vld [vmem:[#allocation8 + $0x71] sm:$0x1]
  %v6787 = vld [vmem:[#allocation8 + $0x79] sm:$0x1]
  %v6788 = vmax.f32 %v6756, %v6772
  %v6789 = vmax.f32 %v6757, %v6773
  %v6790 = vmax.f32 %v6758, %v6774
  %v6791 = vmax.f32 %v6759, %v6775
  %v6792 = vmax.f32 %v6760, %v6776
  %v6793 = vmax.f32 %v6761, %v6777
  %v6794 = vmax.f32 %v6762, %v6778
  %v6795 = vmax.f32 %v6763, %v6779
  %v6796 = vmax.f32 %v6764, %v6780
  %v6797 = vmax.f32 %v6765, %v6781
  %v6798 = vmax.f32 %v6766, %v6782
  %v6799 = vmax.f32 %v6767, %v6783
  %v6800 = vmax.f32 %v6768, %v6784
  %v6801 = vmax.f32 %v6769, %v6785
  %v6802 = vmax.f32 %v6770, %v6786
  %v6803 = vmax.f32 %v6771, %v6787
  %vm6804 = vcmask 122880
  %6805 = vst.msk [vmem:[#allocation9] sm:$0x1] %vm6804, %v6788
  %6806 = vst.msk [vmem:[#allocation9 + $0x4] sm:$0x1] %vm6804, %v6789
  %6807 = vst.msk [vmem:[#allocation9 + $0x8] sm:$0x1] %vm6804, %v6790
  %6808 = vst.msk [vmem:[#allocation9 + $0xc] sm:$0x1] %vm6804, %v6791
  %6809 = vst.msk [vmem:[#allocation9 + $0x10] sm:$0x1] %vm6804, %v6792
  %6810 = vst.msk [vmem:[#allocation9 + $0x14] sm:$0x1] %vm6804, %v6793
  %6811 = vst.msk [vmem:[#allocation9 + $0x18] sm:$0x1] %vm6804, %v6794
  %6812 = vst.msk [vmem:[#allocation9 + $0x1c] sm:$0x1] %vm6804, %v6795
  %6813 = vst.msk [vmem:[#allocation9 + $0x20] sm:$0x1] %vm6804, %v6796
  %6814 = vst.msk [vmem:[#allocation9 + $0x24] sm:$0x1] %vm6804, %v6797
  %6815 = vst.msk [vmem:[#allocation9 + $0x28] sm:$0x1] %vm6804, %v6798
  %6816 = vst.msk [vmem:[#allocation9 + $0x2c] sm:$0x1] %vm6804, %v6799
  %6817 = vst.msk [vmem:[#allocation9 + $0x30] sm:$0x1] %vm6804, %v6800
  %6818 = vst.msk [vmem:[#allocation9 + $0x34] sm:$0x1] %vm6804, %v6801
  %6819 = vst.msk [vmem:[#allocation9 + $0x38] sm:$0x1] %vm6804, %v6802
  %6820 = vst.msk [vmem:[#allocation9 + $0x3c] sm:$0x1] %vm6804, %v6803
  %v6821 = vld [vmem:[#allocation8 + $0x2] sm:$0x1]
  %v6822 = vld [vmem:[#allocation8 + $0xa] sm:$0x1]
  %v6823 = vld [vmem:[#allocation8 + $0x12] sm:$0x1]
  %v6824 = vld [vmem:[#allocation8 + $0x1a] sm:$0x1]
  %v6825 = vld [vmem:[#allocation8 + $0x22] sm:$0x1]
  %v6826 = vld [vmem:[#allocation8 + $0x2a] sm:$0x1]
  %v6827 = vld [vmem:[#allocation8 + $0x32] sm:$0x1]
  %v6828 = vld [vmem:[#allocation8 + $0x3a] sm:$0x1]
  %v6829 = vld [vmem:[#allocation8 + $0x42] sm:$0x1]
  %v6830 = vld [vmem:[#allocation8 + $0x4a] sm:$0x1]
  %v6831 = vld [vmem:[#allocation8 + $0x52] sm:$0x1]
  %v6832 = vld [vmem:[#allocation8 + $0x5a] sm:$0x1]
  %v6833 = vld [vmem:[#allocation8 + $0x62] sm:$0x1]
  %v6834 = vld [vmem:[#allocation8 + $0x6a] sm:$0x1]
  %v6835 = vld [vmem:[#allocation8 + $0x72] sm:$0x1]
  %v6836 = vld [vmem:[#allocation8 + $0x7a] sm:$0x1]
  %v6837 = vld [vmem:[#allocation8 + $0x3] sm:$0x1]
  %v6838 = vld [vmem:[#allocation8 + $0xb] sm:$0x1]
  %v6839 = vld [vmem:[#allocation8 + $0x13] sm:$0x1]
  %v6840 = vld [vmem:[#allocation8 + $0x1b] sm:$0x1]
  %v6841 = vld [vmem:[#allocation8 + $0x23] sm:$0x1]
  %v6842 = vld [vmem:[#allocation8 + $0x2b] sm:$0x1]
  %v6843 = vld [vmem:[#allocation8 + $0x33] sm:$0x1]
  %v6844 = vld [vmem:[#allocation8 + $0x3b] sm:$0x1]
  %v6845 = vld [vmem:[#allocation8 + $0x43] sm:$0x1]
  %v6846 = vld [vmem:[#allocation8 + $0x4b] sm:$0x1]
  %v6847 = vld [vmem:[#allocation8 + $0x53] sm:$0x1]
  %v6848 = vld [vmem:[#allocation8 + $0x5b] sm:$0x1]
  %v6849 = vld [vmem:[#allocation8 + $0x63] sm:$0x1]
  %v6850 = vld [vmem:[#allocation8 + $0x6b] sm:$0x1]
  %v6851 = vld [vmem:[#allocation8 + $0x73] sm:$0x1]
  %v6852 = vld [vmem:[#allocation8 + $0x7b] sm:$0x1]
  %v6853 = vmax.f32 %v6821, %v6837
  %v6854 = vmax.f32 %v6822, %v6838
  %v6855 = vmax.f32 %v6823, %v6839
  %v6856 = vmax.f32 %v6824, %v6840
  %v6857 = vmax.f32 %v6825, %v6841
  %v6858 = vmax.f32 %v6826, %v6842
  %v6859 = vmax.f32 %v6827, %v6843
  %v6860 = vmax.f32 %v6828, %v6844
  %v6861 = vmax.f32 %v6829, %v6845
  %v6862 = vmax.f32 %v6830, %v6846
  %v6863 = vmax.f32 %v6831, %v6847
  %v6864 = vmax.f32 %v6832, %v6848
  %v6865 = vmax.f32 %v6833, %v6849
  %v6866 = vmax.f32 %v6834, %v6850
  %v6867 = vmax.f32 %v6835, %v6851
  %v6868 = vmax.f32 %v6836, %v6852
  %6869 = vst.msk [vmem:[#allocation9 + $0x1] sm:$0x1] %vm6804, %v6853
  %6870 = vst.msk [vmem:[#allocation9 + $0x5] sm:$0x1] %vm6804, %v6854
  %6871 = vst.msk [vmem:[#allocation9 + $0x9] sm:$0x1] %vm6804, %v6855
  %6872 = vst.msk [vmem:[#allocation9 + $0xd] sm:$0x1] %vm6804, %v6856
  %6873 = vst.msk [vmem:[#allocation9 + $0x11] sm:$0x1] %vm6804, %v6857
  %6874 = vst.msk [vmem:[#allocation9 + $0x15] sm:$0x1] %vm6804, %v6858
  %6875 = vst.msk [vmem:[#allocation9 + $0x19] sm:$0x1] %vm6804, %v6859
  %6876 = vst.msk [vmem:[#allocation9 + $0x1d] sm:$0x1] %vm6804, %v6860
  %6877 = vst.msk [vmem:[#allocation9 + $0x21] sm:$0x1] %vm6804, %v6861
  %6878 = vst.msk [vmem:[#allocation9 + $0x25] sm:$0x1] %vm6804, %v6862
  %6879 = vst.msk [vmem:[#allocation9 + $0x29] sm:$0x1] %vm6804, %v6863
  %6880 = vst.msk [vmem:[#allocation9 + $0x2d] sm:$0x1] %vm6804, %v6864
  %6881 = vst.msk [vmem:[#allocation9 + $0x31] sm:$0x1] %vm6804, %v6865
  %6882 = vst.msk [vmem:[#allocation9 + $0x35] sm:$0x1] %vm6804, %v6866
  %6883 = vst.msk [vmem:[#allocation9 + $0x39] sm:$0x1] %vm6804, %v6867
  %6884 = vst.msk [vmem:[#allocation9 + $0x3d] sm:$0x1] %vm6804, %v6868
  %v6885 = vld [vmem:[#allocation8 + $0x4] sm:$0x1]
  %v6886 = vld [vmem:[#allocation8 + $0xc] sm:$0x1]
  %v6887 = vld [vmem:[#allocation8 + $0x14] sm:$0x1]
  %v6888 = vld [vmem:[#allocation8 + $0x1c] sm:$0x1]
  %v6889 = vld [vmem:[#allocation8 + $0x24] sm:$0x1]
  %v6890 = vld [vmem:[#allocation8 + $0x2c] sm:$0x1]
  %v6891 = vld [vmem:[#allocation8 + $0x34] sm:$0x1]
  %v6892 = vld [vmem:[#allocation8 + $0x3c] sm:$0x1]
  %v6893 = vld [vmem:[#allocation8 + $0x44] sm:$0x1]
  %v6894 = vld [vmem:[#allocation8 + $0x4c] sm:$0x1]
  %v6895 = vld [vmem:[#allocation8 + $0x54] sm:$0x1]
  %v6896 = vld [vmem:[#allocation8 + $0x5c] sm:$0x1]
  %v6897 = vld [vmem:[#allocation8 + $0x64] sm:$0x1]
  %v6898 = vld [vmem:[#allocation8 + $0x6c] sm:$0x1]
  %v6899 = vld [vmem:[#allocation8 + $0x74] sm:$0x1]
  %v6900 = vld [vmem:[#allocation8 + $0x7c] sm:$0x1]
  %v6901 = vld [vmem:[#allocation8 + $0x5] sm:$0x1]
  %v6902 = vld [vmem:[#allocation8 + $0xd] sm:$0x1]
  %v6903 = vld [vmem:[#allocation8 + $0x15] sm:$0x1]
  %v6904 = vld [vmem:[#allocation8 + $0x1d] sm:$0x1]
  %v6905 = vld [vmem:[#allocation8 + $0x25] sm:$0x1]
  %v6906 = vld [vmem:[#allocation8 + $0x2d] sm:$0x1]
  %v6907 = vld [vmem:[#allocation8 + $0x35] sm:$0x1]
  %v6908 = vld [vmem:[#allocation8 + $0x3d] sm:$0x1]
  %v6909 = vld [vmem:[#allocation8 + $0x45] sm:$0x1]
  %v6910 = vld [vmem:[#allocation8 + $0x4d] sm:$0x1]
  %v6911 = vld [vmem:[#allocation8 + $0x55] sm:$0x1]
  %v6912 = vld [vmem:[#allocation8 + $0x5d] sm:$0x1]
  %v6913 = vld [vmem:[#allocation8 + $0x65] sm:$0x1]
  %v6914 = vld [vmem:[#allocation8 + $0x6d] sm:$0x1]
  %v6915 = vld [vmem:[#allocation8 + $0x75] sm:$0x1]
  %v6916 = vld [vmem:[#allocation8 + $0x7d] sm:$0x1]
  %v6917 = vmax.f32 %v6885, %v6901
  %v6918 = vmax.f32 %v6886, %v6902
  %v6919 = vmax.f32 %v6887, %v6903
  %v6920 = vmax.f32 %v6888, %v6904
  %v6921 = vmax.f32 %v6889, %v6905
  %v6922 = vmax.f32 %v6890, %v6906
  %v6923 = vmax.f32 %v6891, %v6907
  %v6924 = vmax.f32 %v6892, %v6908
  %v6925 = vmax.f32 %v6893, %v6909
  %v6926 = vmax.f32 %v6894, %v6910
  %v6927 = vmax.f32 %v6895, %v6911
  %v6928 = vmax.f32 %v6896, %v6912
  %v6929 = vmax.f32 %v6897, %v6913
  %v6930 = vmax.f32 %v6898, %v6914
  %v6931 = vmax.f32 %v6899, %v6915
  %v6932 = vmax.f32 %v6900, %v6916
  %6933 = vst.msk [vmem:[#allocation9 + $0x2] sm:$0x1] %vm6804, %v6917
  %6934 = vst.msk [vmem:[#allocation9 + $0x6] sm:$0x1] %vm6804, %v6918
  %6935 = vst.msk [vmem:[#allocation9 + $0xa] sm:$0x1] %vm6804, %v6919
  %6936 = vst.msk [vmem:[#allocation9 + $0xe] sm:$0x1] %vm6804, %v6920
  %6937 = vst.msk [vmem:[#allocation9 + $0x12] sm:$0x1] %vm6804, %v6921
  %6938 = vst.msk [vmem:[#allocation9 + $0x16] sm:$0x1] %vm6804, %v6922
  %6939 = vst.msk [vmem:[#allocation9 + $0x1a] sm:$0x1] %vm6804, %v6923
  %6940 = vst.msk [vmem:[#allocation9 + $0x1e] sm:$0x1] %vm6804, %v6924
  %6941 = vst.msk [vmem:[#allocation9 + $0x22] sm:$0x1] %vm6804, %v6925
  %6942 = vst.msk [vmem:[#allocation9 + $0x26] sm:$0x1] %vm6804, %v6926
  %6943 = vst.msk [vmem:[#allocation9 + $0x2a] sm:$0x1] %vm6804, %v6927
  %6944 = vst.msk [vmem:[#allocation9 + $0x2e] sm:$0x1] %vm6804, %v6928
  %6945 = vst.msk [vmem:[#allocation9 + $0x32] sm:$0x1] %vm6804, %v6929
  %6946 = vst.msk [vmem:[#allocation9 + $0x36] sm:$0x1] %vm6804, %v6930
  %6947 = vst.msk [vmem:[#allocation9 + $0x3a] sm:$0x1] %vm6804, %v6931
  %6948 = vst.msk [vmem:[#allocation9 + $0x3e] sm:$0x1] %vm6804, %v6932
  %v6949 = vld [vmem:[#allocation8 + $0x6] sm:$0x1]
  %v6950 = vld [vmem:[#allocation8 + $0xe] sm:$0x1]
  %v6951 = vld [vmem:[#allocation8 + $0x16] sm:$0x1]
  %v6952 = vld [vmem:[#allocation8 + $0x1e] sm:$0x1]
  %v6953 = vld [vmem:[#allocation8 + $0x26] sm:$0x1]
  %v6954 = vld [vmem:[#allocation8 + $0x2e] sm:$0x1]
  %v6955 = vld [vmem:[#allocation8 + $0x36] sm:$0x1]
  %v6956 = vld [vmem:[#allocation8 + $0x3e] sm:$0x1]
  %v6957 = vld [vmem:[#allocation8 + $0x46] sm:$0x1]
  %v6958 = vld [vmem:[#allocation8 + $0x4e] sm:$0x1]
  %v6959 = vld [vmem:[#allocation8 + $0x56] sm:$0x1]
  %v6960 = vld [vmem:[#allocation8 + $0x5e] sm:$0x1]
  %v6961 = vld [vmem:[#allocation8 + $0x66] sm:$0x1]
  %v6962 = vld [vmem:[#allocation8 + $0x6e] sm:$0x1]
  %v6963 = vld [vmem:[#allocation8 + $0x76] sm:$0x1]
  %v6964 = vld [vmem:[#allocation8 + $0x7e] sm:$0x1]
  %v6965 = vld [vmem:[#allocation8 + $0x7] sm:$0x1]
  %v6966 = vld [vmem:[#allocation8 + $0xf] sm:$0x1]
  %v6967 = vld [vmem:[#allocation8 + $0x17] sm:$0x1]
  %v6968 = vld [vmem:[#allocation8 + $0x1f] sm:$0x1]
  %v6969 = vld [vmem:[#allocation8 + $0x27] sm:$0x1]
  %v6970 = vld [vmem:[#allocation8 + $0x2f] sm:$0x1]
  %v6971 = vld [vmem:[#allocation8 + $0x37] sm:$0x1]
  %v6972 = vld [vmem:[#allocation8 + $0x3f] sm:$0x1]
  %v6973 = vld [vmem:[#allocation8 + $0x47] sm:$0x1]
  %v6974 = vld [vmem:[#allocation8 + $0x4f] sm:$0x1]
  %v6975 = vld [vmem:[#allocation8 + $0x57] sm:$0x1]
  %v6976 = vld [vmem:[#allocation8 + $0x5f] sm:$0x1]
  %v6977 = vld [vmem:[#allocation8 + $0x67] sm:$0x1]
  %v6978 = vld [vmem:[#allocation8 + $0x6f] sm:$0x1]
  %v6979 = vld [vmem:[#allocation8 + $0x77] sm:$0x1]
  %v6980 = vld [vmem:[#allocation8 + $0x7f] sm:$0x1]
  %v6981 = vmax.f32 %v6949, %v6965
  %v6982 = vmax.f32 %v6950, %v6966
  %v6983 = vmax.f32 %v6951, %v6967
  %v6984 = vmax.f32 %v6952, %v6968
  %v6985 = vmax.f32 %v6953, %v6969
  %v6986 = vmax.f32 %v6954, %v6970
  %v6987 = vmax.f32 %v6955, %v6971
  %v6988 = vmax.f32 %v6956, %v6972
  %v6989 = vmax.f32 %v6957, %v6973
  %v6990 = vmax.f32 %v6958, %v6974
  %v6991 = vmax.f32 %v6959, %v6975
  %v6992 = vmax.f32 %v6960, %v6976
  %v6993 = vmax.f32 %v6961, %v6977
  %v6994 = vmax.f32 %v6962, %v6978
  %v6995 = vmax.f32 %v6963, %v6979
  %v6996 = vmax.f32 %v6964, %v6980
  %6997 = vst.msk [vmem:[#allocation9 + $0x3] sm:$0x1] %vm6804, %v6981
  %6998 = vst.msk [vmem:[#allocation9 + $0x7] sm:$0x1] %vm6804, %v6982
  %6999 = vst.msk [vmem:[#allocation9 + $0xb] sm:$0x1] %vm6804, %v6983
  %7000 = vst.msk [vmem:[#allocation9 + $0xf] sm:$0x1] %vm6804, %v6984
  %7001 = vst.msk [vmem:[#allocation9 + $0x13] sm:$0x1] %vm6804, %v6985
  %7002 = vst.msk [vmem:[#allocation9 + $0x17] sm:$0x1] %vm6804, %v6986
  %7003 = vst.msk [vmem:[#allocation9 + $0x1b] sm:$0x1] %vm6804, %v6987
  %7004 = vst.msk [vmem:[#allocation9 + $0x1f] sm:$0x1] %vm6804, %v6988
  %7005 = vst.msk [vmem:[#allocation9 + $0x23] sm:$0x1] %vm6804, %v6989
  %7006 = vst.msk [vmem:[#allocation9 + $0x27] sm:$0x1] %vm6804, %v6990
  %7007 = vst.msk [vmem:[#allocation9 + $0x2b] sm:$0x1] %vm6804, %v6991
  %7008 = vst.msk [vmem:[#allocation9 + $0x2f] sm:$0x1] %vm6804, %v6992
  %7009 = vst.msk [vmem:[#allocation9 + $0x33] sm:$0x1] %vm6804, %v6993
  %7010 = vst.msk [vmem:[#allocation9 + $0x37] sm:$0x1] %vm6804, %v6994
  %7011 = vst.msk [vmem:[#allocation9 + $0x3b] sm:$0x1] %vm6804, %v6995
  %7012 = vst.msk [vmem:[#allocation9 + $0x3f] sm:$0x1] %vm6804, %v6996
  %v7013 = vld [vmem:[#allocation9] sm:$0xf]
  %s7014 = scalar_lea.vmem [#allocation9], 4
  %v7015 = vld [vmem:[%s7014] sm:$0xf]
  %v7016 = vmax.f32 %v7013, %v7015
  %vm7017 = vcmask 125952
  %7018 = vst.msk [vmem:[%s3] sm:$0xf] %vm7017, %v7016
  %s7019 = scalar_lea.vmem [#allocation9], 8
  %v7020 = vld [vmem:[%s7019] sm:$0xf]
  %s7021 = scalar_lea.vmem [#allocation9], 12
  %v7022 = vld [vmem:[%s7021] sm:$0xf]
  %v7023 = vmax.f32 %v7020, %v7022
  %s7024 = scalar_lea.vmem %s3, 4
  %7025 = vst.msk [vmem:[%s7024] sm:$0xf] %vm7017, %v7023
  %s7026 = scalar_lea.vmem [#allocation9], 16
  %v7027 = vld [vmem:[%s7026] sm:$0xf]
  %s7028 = scalar_lea.vmem [#allocation9], 20
  %v7029 = vld [vmem:[%s7028] sm:$0xf]
  %v7030 = vmax.f32 %v7027, %v7029
  %s7031 = scalar_lea.vmem %s3, 8
  %7032 = vst.msk [vmem:[%s7031] sm:$0xf] %vm7017, %v7030
  %s7033 = scalar_lea.vmem [#allocation9], 24
  %v7034 = vld [vmem:[%s7033] sm:$0xf]
  %s7035 = scalar_lea.vmem [#allocation9], 28
  %v7036 = vld [vmem:[%s7035] sm:$0xf]
  %v7037 = vmax.f32 %v7034, %v7036
  %s7038 = scalar_lea.vmem %s3, 12
  %7039 = vst.msk [vmem:[%s7038] sm:$0xf] %vm7017, %v7037
  %s7040 = scalar_lea.vmem [#allocation9], 32
  %v7041 = vld [vmem:[%s7040] sm:$0xf]
  %s7042 = scalar_lea.vmem [#allocation9], 36
  %v7043 = vld [vmem:[%s7042] sm:$0xf]
  %v7044 = vmax.f32 %v7041, %v7043
  %s7045 = scalar_lea.vmem %s3, 16
  %7046 = vst.msk [vmem:[%s7045] sm:$0xf] %vm7017, %v7044
  %s7047 = scalar_lea.vmem [#allocation9], 40
  %v7048 = vld [vmem:[%s7047] sm:$0xf]
  %s7049 = scalar_lea.vmem [#allocation9], 44
  %v7050 = vld [vmem:[%s7049] sm:$0xf]
  %v7051 = vmax.f32 %v7048, %v7050
  %s7052 = scalar_lea.vmem %s3, 20
  %7053 = vst.msk [vmem:[%s7052] sm:$0xf] %vm7017, %v7051
  %s7054 = scalar_lea.vmem [#allocation9], 48
  %v7055 = vld [vmem:[%s7054] sm:$0xf]
  %s7056 = scalar_lea.vmem [#allocation9], 52
  %v7057 = vld [vmem:[%s7056] sm:$0xf]
  %v7058 = vmax.f32 %v7055, %v7057
  %s7059 = scalar_lea.vmem %s3, 24
  %7060 = vst.msk [vmem:[%s7059] sm:$0xf] %vm7017, %v7058
  %s7061 = scalar_lea.vmem [#allocation9], 56
  %v7062 = vld [vmem:[%s7061] sm:$0xf]
  %s7063 = scalar_lea.vmem [#allocation9], 60
  %v7064 = vld [vmem:[%s7063] sm:$0xf]
  %v7065 = vmax.f32 %v7062, %v7064
  %s7066 = scalar_lea.vmem %s3, 28
  %7067 = vst.msk [vmem:[%s7066] sm:$0xf] %vm7017, %v7065
  // Predicated region
  $region14: #{convnet_forward.1} parent=0 // pred_check
    _
  $region15: #{convnet_forward.1} parent=0 // pred_check_branch
    %7069 = sbr.rel (0) target = $region17
  $region16: #{convnet_forward.1} parent=0 // pred_region
    _
  $region17: #{convnet_forward.1} parent=0 // pred_fallthru
    _
  // Predicated region
  $region18: #{convnet_forward.1} parent=0 // pred_check
    _
  $region19: #{convnet_forward.1} parent=0 // pred_check_branch
    %7071 = sbr.rel (0) target = $region21
  $region20: #{convnet_forward.1} parent=0 // pred_region
    _
  $region21: #{convnet_forward.1} parent=0 // pred_fallthru
    _

</llo_original>
